<compile_context>
chip_gen: v6e
topology: v6e:2x2x1
jax: 0.10.0
libtpu: 0.0.40
codegen_flags: <defaults>
</compile_context>

<pallas_src>
import functools

import numpy as np
import jax
import jax.numpy as jnp
from jax import lax
from jax.experimental import pallas as pl
from jax.experimental.pallas import tpu as pltpu


MARGIN = 64          # zero columns on each side of a frame (>= 4 needed; 2*64 keeps WF % 128 == 0)
_SINGLE_BUFFER_OK = [True]   # flipped to False if pipeline_mode=pl.Buffered(1) is rejected


def _round_up(x, m):
    return (x + m - 1) // m * m


def msca_kernel(x_ref,
                w2_ref, b2_ref, w3_ref, b3_ref,
                w13_ref, b13_ref, w15_ref, b15_ref, w11_ref, b11_ref,
                w1_ref, b1_ref, wfc1_ref, wfc2_ref, w4_ref, b4_ref,
                g3mask_ref, mpmask_ref, redmask_ref, expmat_ref,
                out_ref, *, T):
    C = w2_ref.shape[0]
    W = out_ref.shape[1]           # lane-dense compute / output width
    WF = x_ref.shape[1]            # framed input width (W + 2*MARGIN)
    M = (WF - W) // 2
    Bb = redmask_ref.shape[1]

    xin = x_ref[...]               # (C, WF) in mxu dtype
    cdt = xin.dtype

    def dot32(a, b):
        return jnp.dot(a, b, preferred_element_type=jnp.float32)

    def win(arr, d):
        # (C, W) lane window of a (C, WF) frame, shifted by temporal offset d.
        return arr[:, M + d:M + d + W]

    # ---- branch 3: relu(conv1_1(x))  (k=7, pad 3): taps accumulate in the MXU -
    acc3 = dot32(w11_ref[0], win(xin, -3))
    for k in range(1, 7):
        acc3 = acc3 + dot32(w11_ref[k], win(xin, k - 3))
    x3 = jnp.maximum(acc3 + b11_ref[...], 0.0)                        # (C, W) f32

    # ---- branch 1: relu(conv1_3(relu(conv2(x))))  (k=3, no pad) ---------------
    g = jnp.maximum(dot32(w2_ref[...], xin) + b2_ref[...], 0.0)       # (C, WF) f32
    g = g.astype(cdt)
    acc1 = dot32(w13_ref[0], win(g, -1))
    acc1 = acc1 + dot32(w13_ref[1], win(g, 0))
    acc1 = acc1 + dot32(w13_ref[2], win(g, 1))
    x1 = jnp.maximum(acc1 + b13_ref[...], 0.0)

    # ---- branch 2: relu(conv1_5(relu(conv3(x))))  (k=5, dil 2, pad 3) ---------
    g3 = jnp.maximum(dot32(w3_ref[...], xin) + b3_ref[...], 0.0)      # (C, WF) f32
    g3 = g3.astype(cdt) * g3mask_ref[...]    # single mask = conv1_5's zero padding
    acc2 = dot32(w15_ref[0], win(g3, -4))
    for k in range(1, 5):
        acc2 = acc2 + dot32(w15_ref[k], win(g3, 2 * k - 4))
    x2 = jnp.maximum(acc2 + b15_ref[...], 0.0)

    # ---- branch 4: relu(conv1(maxpool(x))) -- VPU max over shifted windows ----
    xm = jnp.maximum(jnp.maximum(win(xin, -1), win(xin, 0)), win(xin, 1))
    xm = xm * mpmask_ref[...]                 # maxpool "VALID" range + conv1 pad=1
    x4 = jnp.maximum(dot32(w1_ref[...], xm) + b1_ref[...], 0.0)

    branches = (x1.astype(cdt), x2.astype(cdt), x3.astype(cdt), x4.astype(cdt))

    # ---- SE attention: stacked means -> fc1 -> fc2 -> per-branch gating -------
    redm = redmask_ref[...]                                            # (W, Bb) 0/1
    means = jnp.concatenate([dot32(xb, redm) for xb in branches], axis=0)
    means = means * (1.0 / T)                                          # (4C, Bb) f32
    y = jnp.maximum(dot32(wfc1_ref[...], means.astype(cdt)), 0.0)      # (H, Bb) f32
    gates = jax.nn.sigmoid(dot32(wfc2_ref[...], y.astype(cdt)))        # (4C, Bb) f32
    if Bb > 1:
        gates = dot32(gates.astype(cdt), expmat_ref[...])              # (4C, W) f32
    gates = gates.astype(cdt)

    # ---- conv1_4 on the gated branches, accumulated (no (4C, T) concat) -------
    res = dot32(w4_ref[0], branches[0] * gates[0:C])
    for i in range(1, 4):
        res = res + dot32(w4_ref[i], branches[i] * gates[i * C:(i + 1) * C])
    out_ref[...] = (res + b4_ref[...]).astype(out_ref.dtype)


def multi_scale_conv_attention(x, params, *, batch_block=None, mxu_dtype=jnp.bfloat16):
    B, C, T = x.shape
    Cout = params["conv14_w"].shape[0]
    H = params["fc1_w"].shape[0]
    if T < 3:
        raise ValueError("maxpool(kernel=3, valid) requires T >= 3")
    if H < 1:
        raise ValueError("fc hidden dim 4*C//64 must be >= 1 (C >= 16)")

    f32 = jnp.float32
    Ts = _round_up(T + 8, 8)        # per-element lane stride: >=4 zero cols between elements
    if batch_block is None:
        # One fat step by default (v5e/v6e); on v7x pass batch_block so that
        # ceil(B / batch_block) >= 2 (and even) to feed both TensorCores.
        batch_block = max(1, min(B, 1024 // Ts))
    Bb = batch_block
    n_steps = -(-B // Bb)
    Bpad = n_steps * Bb
    W = _round_up(Bb * Ts, 128)     # lane-dense compute / output width per grid step
    WF = W + 2 * MARGIN             # zero-framed input width per grid step

    # ---- framed input: batch packed tightly into the lane axis -----------------
    xt = jnp.transpose(x, (1, 0, 2))                                   # (C, B, T)
    xt = jnp.pad(xt, ((0, 0), (0, Bpad - B), (0, Ts - T)))             # (C, Bpad, Ts)
    xt = xt.reshape(C, n_steps, Bb * Ts)
    xt = jnp.pad(xt, ((0, 0), (0, 0), (MARGIN, MARGIN + W - Bb * Ts)))  # (C, n_steps, WF)
    xg = xt.reshape(C, n_steps * WF).astype(mxu_dtype)

    # ---- host-precomputed masks (hoisted out of the kernel) --------------------
    g3mask = np.zeros((1, WF), np.float32)   # conv1_5 zero-padding validity on g3
    mpmask = np.zeros((1, W), np.float32)    # maxpool VALID range + conv1 zero pad
    redmask = np.zeros((W, Bb), np.float32)  # 0/1 per-element mean mask (1/T applied in-kernel)
    expmat = np.zeros((Bb, W), np.float32)   # per-element gate broadcast
    for b in range(Bb):
        s = b * Ts
        g3mask[0, MARGIN + s - 1: MARGIN + s + T + 1] = 1.0
        mpmask[0, s + 1: s + T - 1] = 1.0
        redmask[s: s + T, b] = 1.0
        expmat[b, s: s + Ts] = 1.0
    g3mask = jnp.asarray(g3mask).astype(mxu_dtype)
    mpmask = jnp.asarray(mpmask).astype(mxu_dtype)
    redmask = jnp.asarray(redmask).astype(mxu_dtype)
    expmat = jnp.asarray(expmat).astype(mxu_dtype)

    # ---- weights: 1x1 convs as (C,C); k-tap convs stacked as (K,C,C) -----------
    def colv(v):                    # bias column, kept f32 (added to f32 accumulators)
        return v[:, None].astype(f32)

    def tapstack(w):                # (Co, Ci, K) -> (K, Co, Ci)
        return jnp.transpose(w, (2, 0, 1)).astype(mxu_dtype)

    w2 = params["conv2_w"][:, :, 0].astype(mxu_dtype)
    w3 = params["conv3_w"][:, :, 0].astype(mxu_dtype)
    w1 = params["conv1_w"][:, :, 0].astype(mxu_dtype)
    w13 = tapstack(params["conv13_w"])
    w15 = tapstack(params["conv15_w"])
    w11 = tapstack(params["conv11_w"])
    wfc1 = params["fc1_w"].astype(mxu_dtype)                           # (H, 4C)
    wfc2 = params["fc2_w"].astype(mxu_dtype)                           # (4C, H)
    w4 = (params["conv14_w"][:, :, 0].reshape(Cout, 4, C)
          .transpose(1, 0, 2).astype(mxu_dtype))                       # (4, Cout, C)

    inputs = (xg,
              w2, colv(params["conv2_b"]), w3, colv(params["conv3_b"]),
              w13, colv(params["conv13_b"]), w15, colv(params["conv15_b"]),
              w11, colv(params["conv11_b"]),
              w1, colv(params["conv1_b"]), wfc1, wfc2, w4, colv(params["conv14_b"]),
              g3mask, mpmask, redmask, expmat)

    # ---- explicit VMEM budget: never below the 32 MiB scoped default -----------
    isz = jnp.dtype(mxu_dtype).itemsize
    weight_bytes = sum(int(np.prod(a.shape)) * jnp.dtype(a.dtype).itemsize
                       for a in inputs[1:])
    live_bytes = 16 * C * WF * 4 + (4 * C + Cout) * W * 4   # rough in-kernel live set
    est = 2 * weight_bytes + 2 * C * WF * isz + 2 * Cout * W * 4 + live_bytes
    vmem_limit = int(min(max(est + (8 << 20), 32 << 20), 128 << 20))

    kernel = functools.partial(msca_kernel, T=T)
    out_shape = jax.ShapeDtypeStruct((Cout, n_steps * W), f32)

    def build_call(single_buffer):
        def fixed(shape):
            n = len(shape)
            idx = lambda i, n=n: (0,) * n
            if single_buffer:
                # grid-invariant input: single-buffer it (halves resident VMEM)
                return pl.BlockSpec(shape, idx, pipeline_mode=pl.Buffered(1))
            return pl.BlockSpec(shape, idx)

        in_specs = ([pl.BlockSpec((C, WF), lambda i: (0, i))]
                    + [fixed(tuple(a.shape)) for a in inputs[1:]])
        return pl.pallas_call(
            kernel,
            out_shape=out_shape,
            grid_spec=pltpu.PrefetchScalarGridSpec(
                num_scalar_prefetch=0,
                grid=(n_steps,),
                in_specs=in_specs,
                out_specs=pl.BlockSpec((Cout, W), lambda i: (0, i)),
            ),
            compiler_params=pltpu.CompilerParams(
                # independent batch-frame steps -> megacore sharding on v7x
                dimension_semantics=("parallel",),
                vmem_limit_bytes=vmem_limit,
            ),
        )

    if _SINGLE_BUFFER_OK[0]:
        try:
            out = jax.block_until_ready(build_call(True)(*inputs))
        except Exception:
            _SINGLE_BUFFER_OK[0] = False
            out = jax.block_until_ready(build_call(False)(*inputs))
    else:
        out = jax.block_until_ready(build_call(False)(*inputs))

    # ---- unfold batch from the lane axis: (Cout, n_steps*W) -> (B, Cout, T) ----
    out = out.reshape(Cout, n_steps, W)[:, :, :Bb * Ts]
    out = out.reshape(Cout, n_steps, Bb, Ts).transpose(1, 2, 0, 3)
    out = out.reshape(Bpad, Cout, Ts)
    return out[:B, :, :T]


# ----------------------- pure-JAX reference (for checking) -----------------------
def _conv1d_ref(x, w, b, padding, dilation):
    out = lax.conv_general_dilated(
        x, w, window_strides=(1,), padding=[(padding, padding)],
        rhs_dilation=(dilation,), dimension_numbers=("NCH", "OIH", "NCH"))
    return out + b[None, :, None]


def ref_forward(x, p):
    relu = jax.nn.relu
    x1 = relu(_conv1d_ref(relu(_conv1d_ref(x, p["conv2_w"], p["conv2_b"], 1, 1)),
                          p["conv13_w"], p["conv13_b"], 0, 1))
    x2 = relu(_conv1d_ref(relu(_conv1d_ref(x, p["conv3_w"], p["conv3_b"], 1, 1)),
                          p["conv15_w"], p["conv15_b"], 3, 2))
    x3 = relu(_conv1d_ref(x, p["conv11_w"], p["conv11_b"], 3, 1))
    mp = lax.reduce_window(x, -jnp.inf, lax.max, (1, 1, 3), (1, 1, 1), "VALID")
    x4 = relu(_conv1d_ref(mp, p["conv1_w"], p["conv1_b"], 1, 1))
    xcat = jnp.concatenate([x1, x2, x3, x4], axis=1)
    y = jnp.mean(xcat, axis=2)
    y = relu(y @ p["fc1_w"].T) @ p["fc2_w"].T
    x_att = xcat * jax.nn.sigmoid(y)[:, :, None]
    return _conv1d_ref(x_att, p["conv14_w"], p["conv14_b"], 0, 1)


if __name__ == "__main__":
    B, C, T, Cout = 4, 16, 16, 8      # in_channels=16 -> fc hidden = 4*16//64 = 1
    H = 4 * C // 64

    key = jax.random.PRNGKey(0)
    ks = jax.random.split(key, 17)

    def w(k, shape, scale=0.1):
        return jax.random.normal(k, shape, jnp.float32) * scale

    params = {
        "conv2_w": w(ks[0], (C, C, 1)),  "conv2_b": w(ks[1], (C,)),
        "conv3_w": w(ks[2], (C, C, 1)),  "conv3_b": w(ks[3], (C,)),
        "conv13_w": w(ks[4], (C, C, 3)), "conv13_b": w(ks[5], (C,)),
        "conv15_w": w(ks[6], (C, C, 5)), "conv15_b": w(ks[7], (C,)),
        "conv11_w": w(ks[8], (C, C, 7)), "conv11_b": w(ks[9], (C,)),
        "conv1_w": w(ks[10], (C, C, 1)), "conv1_b": w(ks[11], (C,)),
        "fc1_w": w(ks[12], (H, 4 * C)),
        "fc2_w": w(ks[13], (4 * C, H)),
        "conv14_w": w(ks[14], (Cout, 4 * C, 1)), "conv14_b": w(ks[15], (Cout,)),
    }
    x = jax.random.normal(ks[16], (B, C, T), jnp.float32)

    ref = jax.block_until_ready(ref_forward(x, params))

    # exact-parity path: f32 MXU operands (2 batch elems/step, 2 parallel steps).
    out_f32 = multi_scale_conv_attention(x, params, batch_block=2,
                                         mxu_dtype=jnp.float32)
    np.testing.assert_allclose(np.asarray(out_f32), np.asarray(ref),
                               rtol=1e-4, atol=1e-4)

    # default fast path: bf16 MXU operands / masks / gating, f32 accumulation.
    out_bf16 = multi_scale_conv_attention(x, params, batch_block=2)
    np.testing.assert_allclose(np.asarray(out_bf16), np.asarray(ref),
                               rtol=5e-2, atol=5e-2)

    print("KERNEL_OK")
</pallas_src>

<mosaic_0001>
module attributes {stable_mosaic.version = 11 : i64} {
  func.func @msca_kernel(%arg0: i32, %arg1: memref<16x256xf32, #tpu.memory_space<vmem>>, %arg2: memref<16x16xf32, #tpu.memory_space<vmem>>, %arg3: memref<16x1xf32, #tpu.memory_space<vmem>>, %arg4: memref<16x16xf32, #tpu.memory_space<vmem>>, %arg5: memref<16x1xf32, #tpu.memory_space<vmem>>, %arg6: memref<3x16x16xf32, #tpu.memory_space<vmem>>, %arg7: memref<16x1xf32, #tpu.memory_space<vmem>>, %arg8: memref<5x16x16xf32, #tpu.memory_space<vmem>>, %arg9: memref<16x1xf32, #tpu.memory_space<vmem>>, %arg10: memref<7x16x16xf32, #tpu.memory_space<vmem>>, %arg11: memref<16x1xf32, #tpu.memory_space<vmem>>, %arg12: memref<16x16xf32, #tpu.memory_space<vmem>>, %arg13: memref<16x1xf32, #tpu.memory_space<vmem>>, %arg14: memref<1x64xf32, #tpu.memory_space<vmem>>, %arg15: memref<64x1xf32, #tpu.memory_space<vmem>>, %arg16: memref<4x8x16xf32, #tpu.memory_space<vmem>>, %arg17: memref<8x1xf32, #tpu.memory_space<vmem>>, %arg18: memref<1x256xf32, #tpu.memory_space<vmem>>, %arg19: memref<1x128xf32, #tpu.memory_space<vmem>>, %arg20: memref<128x2xf32, #tpu.memory_space<vmem>>, %arg21: memref<2x128xf32, #tpu.memory_space<vmem>>, %arg22: memref<8x128xf32, #tpu.memory_space<vmem>>) attributes {dimension_semantics = [#tpu.dimension_semantics<parallel>], iteration_bounds = array<i64: 2>, scalar_prefetch = 0 : i64, scratch_operands = 0 : i64, tpu.core_type = #tpu.core_type<tc>, window_params = [{transform_indices = @transform_0, window_bounds = array<i64: 16, 256>}, {pipeline_mode = #tpu.pipeline_mode<synchronous>, transform_indices = @transform_1, window_bounds = array<i64: 16, 16>}, {pipeline_mode = #tpu.pipeline_mode<synchronous>, transform_indices = @transform_2, window_bounds = array<i64: 16, 1>}, {pipeline_mode = #tpu.pipeline_mode<synchronous>, transform_indices = @transform_3, window_bounds = array<i64: 16, 16>}, {pipeline_mode = #tpu.pipeline_mode<synchronous>, transform_indices = @transform_4, window_bounds = array<i64: 16, 1>}, {pipeline_mode = #tpu.pipeline_mode<synchronous>, transform_indices = @transform_5, window_bounds = array<i64: 3, 16, 16>}, {pipeline_mode = #tpu.pipeline_mode<synchronous>, transform_indices = @transform_6, window_bounds = array<i64: 16, 1>}, {pipeline_mode = #tpu.pipeline_mode<synchronous>, transform_indices = @transform_7, window_bounds = array<i64: 5, 16, 16>}, {pipeline_mode = #tpu.pipeline_mode<synchronous>, transform_indices = @transform_8, window_bounds = array<i64: 16, 1>}, {pipeline_mode = #tpu.pipeline_mode<synchronous>, transform_indices = @transform_9, window_bounds = array<i64: 7, 16, 16>}, {pipeline_mode = #tpu.pipeline_mode<synchronous>, transform_indices = @transform_10, window_bounds = array<i64: 16, 1>}, {pipeline_mode = #tpu.pipeline_mode<synchronous>, transform_indices = @transform_11, window_bounds = array<i64: 16, 16>}, {pipeline_mode = #tpu.pipeline_mode<synchronous>, transform_indices = @transform_12, window_bounds = array<i64: 16, 1>}, {pipeline_mode = #tpu.pipeline_mode<synchronous>, transform_indices = @transform_13, window_bounds = array<i64: 1, 64>}, {pipeline_mode = #tpu.pipeline_mode<synchronous>, transform_indices = @transform_14, window_bounds = array<i64: 64, 1>}, {pipeline_mode = #tpu.pipeline_mode<synchronous>, transform_indices = @transform_15, window_bounds = array<i64: 4, 8, 16>}, {pipeline_mode = #tpu.pipeline_mode<synchronous>, transform_indices = @transform_16, window_bounds = array<i64: 8, 1>}, {pipeline_mode = #tpu.pipeline_mode<synchronous>, transform_indices = @transform_17, window_bounds = array<i64: 1, 256>}, {pipeline_mode = #tpu.pipeline_mode<synchronous>, transform_indices = @transform_18, window_bounds = array<i64: 1, 128>}, {pipeline_mode = #tpu.pipeline_mode<synchronous>, transform_indices = @transform_19, window_bounds = array<i64: 128, 2>}, {pipeline_mode = #tpu.pipeline_mode<synchronous>, transform_indices = @transform_20, window_bounds = array<i64: 2, 128>}, {transform_indices = @transform_21, window_bounds = array<i64: 8, 128>}]} {
    %c0 = arith.constant 0 : index
    %c0_0 = arith.constant 0 : index
    %0 = vector.load %arg1[%c0, %c0_0] : memref<16x256xf32, #tpu.memory_space<vmem>>, vector<16x256xf32>
    %c0_1 = arith.constant 0 : index
    %c0_2 = arith.constant 0 : index
    %c0_3 = arith.constant 0 : index
    %1 = vector.load %arg10[%c0_1, %c0_2, %c0_3] : memref<7x16x16xf32, #tpu.memory_space<vmem>>, vector<1x16x16xf32>
    %2 = vector.shape_cast %1 : vector<1x16x16xf32> to vector<16x16xf32>
    %3 = vector.extract_strided_slice %0 {offsets = [0, 61], sizes = [16, 128], strides = [1, 1]} : vector<16x256xf32> to vector<16x128xf32>
    %cst = arith.constant dense<0.000000e+00> : vector<16x128xf32>
    %4 = tpu.matmul %2, %3, %cst {dimension_numbers = #tpu.dot_dimension_numbers<[1], [0], [0], [1], [0, 0, 1, 1], [], []>} : vector<16x16xf32>, vector<16x128xf32>, vector<16x128xf32> -> vector<16x128xf32>
    %c1 = arith.constant 1 : index
    %c0_4 = arith.constant 0 : index
    %c0_5 = arith.constant 0 : index
    %5 = vector.load %arg10[%c1, %c0_4, %c0_5] : memref<7x16x16xf32, #tpu.memory_space<vmem>>, vector<1x16x16xf32>
    %6 = vector.shape_cast %5 : vector<1x16x16xf32> to vector<16x16xf32>
    %7 = vector.extract_strided_slice %0 {offsets = [0, 62], sizes = [16, 128], strides = [1, 1]} : vector<16x256xf32> to vector<16x128xf32>
    %cst_6 = arith.constant dense<0.000000e+00> : vector<16x128xf32>
    %8 = tpu.matmul %6, %7, %cst_6 {dimension_numbers = #tpu.dot_dimension_numbers<[1], [0], [0], [1], [0, 0, 1, 1], [], []>} : vector<16x16xf32>, vector<16x128xf32>, vector<16x128xf32> -> vector<16x128xf32>
    %9 = arith.addf %4, %8 : vector<16x128xf32>
    %c2 = arith.constant 2 : index
    %c0_7 = arith.constant 0 : index
    %c0_8 = arith.constant 0 : index
    %10 = vector.load %arg10[%c2, %c0_7, %c0_8] : memref<7x16x16xf32, #tpu.memory_space<vmem>>, vector<1x16x16xf32>
    %11 = vector.shape_cast %10 : vector<1x16x16xf32> to vector<16x16xf32>
    %12 = vector.extract_strided_slice %0 {offsets = [0, 63], sizes = [16, 128], strides = [1, 1]} : vector<16x256xf32> to vector<16x128xf32>
    %cst_9 = arith.constant dense<0.000000e+00> : vector<16x128xf32>
    %13 = tpu.matmul %11, %12, %cst_9 {dimension_numbers = #tpu.dot_dimension_numbers<[1], [0], [0], [1], [0, 0, 1, 1], [], []>} : vector<16x16xf32>, vector<16x128xf32>, vector<16x128xf32> -> vector<16x128xf32>
    %14 = arith.addf %9, %13 : vector<16x128xf32>
    %c3 = arith.constant 3 : index
    %c0_10 = arith.constant 0 : index
    %c0_11 = arith.constant 0 : index
    %15 = vector.load %arg10[%c3, %c0_10, %c0_11] : memref<7x16x16xf32, #tpu.memory_space<vmem>>, vector<1x16x16xf32>
    %16 = vector.shape_cast %15 : vector<1x16x16xf32> to vector<16x16xf32>
    %17 = vector.extract_strided_slice %0 {offsets = [0, 64], sizes = [16, 128], strides = [1, 1]} : vector<16x256xf32> to vector<16x128xf32>
    %cst_12 = arith.constant dense<0.000000e+00> : vector<16x128xf32>
    %18 = tpu.matmul %16, %17, %cst_12 {dimension_numbers = #tpu.dot_dimension_numbers<[1], [0], [0], [1], [0, 0, 1, 1], [], []>} : vector<16x16xf32>, vector<16x128xf32>, vector<16x128xf32> -> vector<16x128xf32>
    %19 = arith.addf %14, %18 : vector<16x128xf32>
    %c4 = arith.constant 4 : index
    %c0_13 = arith.constant 0 : index
    %c0_14 = arith.constant 0 : index
    %20 = vector.load %arg10[%c4, %c0_13, %c0_14] : memref<7x16x16xf32, #tpu.memory_space<vmem>>, vector<1x16x16xf32>
    %21 = vector.shape_cast %20 : vector<1x16x16xf32> to vector<16x16xf32>
    %22 = vector.extract_strided_slice %0 {offsets = [0, 65], sizes = [16, 128], strides = [1, 1]} : vector<16x256xf32> to vector<16x128xf32>
    %cst_15 = arith.constant dense<0.000000e+00> : vector<16x128xf32>
    %23 = tpu.matmul %21, %22, %cst_15 {dimension_numbers = #tpu.dot_dimension_numbers<[1], [0], [0], [1], [0, 0, 1, 1], [], []>} : vector<16x16xf32>, vector<16x128xf32>, vector<16x128xf32> -> vector<16x128xf32>
    %24 = arith.addf %19, %23 : vector<16x128xf32>
    %c5 = arith.constant 5 : index
    %c0_16 = arith.constant 0 : index
    %c0_17 = arith.constant 0 : index
    %25 = vector.load %arg10[%c5, %c0_16, %c0_17] : memref<7x16x16xf32, #tpu.memory_space<vmem>>, vector<1x16x16xf32>
    %26 = vector.shape_cast %25 : vector<1x16x16xf32> to vector<16x16xf32>
    %27 = vector.extract_strided_slice %0 {offsets = [0, 66], sizes = [16, 128], strides = [1, 1]} : vector<16x256xf32> to vector<16x128xf32>
    %cst_18 = arith.constant dense<0.000000e+00> : vector<16x128xf32>
    %28 = tpu.matmul %26, %27, %cst_18 {dimension_numbers = #tpu.dot_dimension_numbers<[1], [0], [0], [1], [0, 0, 1, 1], [], []>} : vector<16x16xf32>, vector<16x128xf32>, vector<16x128xf32> -> vector<16x128xf32>
    %29 = arith.addf %24, %28 : vector<16x128xf32>
    %c6 = arith.constant 6 : index
    %c0_19 = arith.constant 0 : index
    %c0_20 = arith.constant 0 : index
    %30 = vector.load %arg10[%c6, %c0_19, %c0_20] : memref<7x16x16xf32, #tpu.memory_space<vmem>>, vector<1x16x16xf32>
    %31 = vector.shape_cast %30 : vector<1x16x16xf32> to vector<16x16xf32>
    %32 = vector.extract_strided_slice %0 {offsets = [0, 67], sizes = [16, 128], strides = [1, 1]} : vector<16x256xf32> to vector<16x128xf32>
    %cst_21 = arith.constant dense<0.000000e+00> : vector<16x128xf32>
    %33 = tpu.matmul %31, %32, %cst_21 {dimension_numbers = #tpu.dot_dimension_numbers<[1], [0], [0], [1], [0, 0, 1, 1], [], []>} : vector<16x16xf32>, vector<16x128xf32>, vector<16x128xf32> -> vector<16x128xf32>
    %34 = arith.addf %29, %33 : vector<16x128xf32>
    %c0_22 = arith.constant 0 : index
    %c0_23 = arith.constant 0 : index
    %35 = vector.load %arg11[%c0_22, %c0_23] : memref<16x1xf32, #tpu.memory_space<vmem>>, vector<16x1xf32>
    %36 = vector.broadcast %35 : vector<16x1xf32> to vector<16x128xf32>
    %37 = arith.addf %34, %36 : vector<16x128xf32>
    %cst_24 = arith.constant 0.000000e+00 : f32
    %38 = vector.broadcast %cst_24 : f32 to vector<16x128xf32>
    %39 = arith.maximumf %37, %38 : vector<16x128xf32>
    %c0_25 = arith.constant 0 : index
    %c0_26 = arith.constant 0 : index
    %40 = vector.load %arg2[%c0_25, %c0_26] : memref<16x16xf32, #tpu.memory_space<vmem>>, vector<16x16xf32>
    %cst_27 = arith.constant dense<0.000000e+00> : vector<16x256xf32>
    %41 = tpu.matmul %40, %0, %cst_27 {dimension_numbers = #tpu.dot_dimension_numbers<[1], [0], [0], [1], [0, 0, 1, 1], [], []>} : vector<16x16xf32>, vector<16x256xf32>, vector<16x256xf32> -> vector<16x256xf32>
    %c0_28 = arith.constant 0 : index
    %c0_29 = arith.constant 0 : index
    %42 = vector.load %arg3[%c0_28, %c0_29] : memref<16x1xf32, #tpu.memory_space<vmem>>, vector<16x1xf32>
    %43 = vector.broadcast %42 : vector<16x1xf32> to vector<16x256xf32>
    %44 = arith.addf %41, %43 : vector<16x256xf32>
    %cst_30 = arith.constant 0.000000e+00 : f32
    %45 = vector.broadcast %cst_30 : f32 to vector<16x256xf32>
    %46 = arith.maximumf %44, %45 : vector<16x256xf32>
    %c0_31 = arith.constant 0 : index
    %c0_32 = arith.constant 0 : index
    %c0_33 = arith.constant 0 : index
    %47 = vector.load %arg6[%c0_31, %c0_32, %c0_33] : memref<3x16x16xf32, #tpu.memory_space<vmem>>, vector<1x16x16xf32>
    %48 = vector.shape_cast %47 : vector<1x16x16xf32> to vector<16x16xf32>
    %49 = vector.extract_strided_slice %46 {offsets = [0, 63], sizes = [16, 128], strides = [1, 1]} : vector<16x256xf32> to vector<16x128xf32>
    %cst_34 = arith.constant dense<0.000000e+00> : vector<16x128xf32>
    %50 = tpu.matmul %48, %49, %cst_34 {dimension_numbers = #tpu.dot_dimension_numbers<[1], [0], [0], [1], [0, 0, 1, 1], [], []>} : vector<16x16xf32>, vector<16x128xf32>, vector<16x128xf32> -> vector<16x128xf32>
    %c1_35 = arith.constant 1 : index
    %c0_36 = arith.constant 0 : index
    %c0_37 = arith.constant 0 : index
    %51 = vector.load %arg6[%c1_35, %c0_36, %c0_37] : memref<3x16x16xf32, #tpu.memory_space<vmem>>, vector<1x16x16xf32>
    %52 = vector.shape_cast %51 : vector<1x16x16xf32> to vector<16x16xf32>
    %53 = vector.extract_strided_slice %46 {offsets = [0, 64], sizes = [16, 128], strides = [1, 1]} : vector<16x256xf32> to vector<16x128xf32>
    %cst_38 = arith.constant dense<0.000000e+00> : vector<16x128xf32>
    %54 = tpu.matmul %52, %53, %cst_38 {dimension_numbers = #tpu.dot_dimension_numbers<[1], [0], [0], [1], [0, 0, 1, 1], [], []>} : vector<16x16xf32>, vector<16x128xf32>, vector<16x128xf32> -> vector<16x128xf32>
    %55 = arith.addf %50, %54 : vector<16x128xf32>
    %c2_39 = arith.constant 2 : index
    %c0_40 = arith.constant 0 : index
    %c0_41 = arith.constant 0 : index
    %56 = vector.load %arg6[%c2_39, %c0_40, %c0_41] : memref<3x16x16xf32, #tpu.memory_space<vmem>>, vector<1x16x16xf32>
    %57 = vector.shape_cast %56 : vector<1x16x16xf32> to vector<16x16xf32>
    %58 = vector.extract_strided_slice %46 {offsets = [0, 65], sizes = [16, 128], strides = [1, 1]} : vector<16x256xf32> to vector<16x128xf32>
    %cst_42 = arith.constant dense<0.000000e+00> : vector<16x128xf32>
    %59 = tpu.matmul %57, %58, %cst_42 {dimension_numbers = #tpu.dot_dimension_numbers<[1], [0], [0], [1], [0, 0, 1, 1], [], []>} : vector<16x16xf32>, vector<16x128xf32>, vector<16x128xf32> -> vector<16x128xf32>
    %60 = arith.addf %55, %59 : vector<16x128xf32>
    %c0_43 = arith.constant 0 : index
    %c0_44 = arith.constant 0 : index
    %61 = vector.load %arg7[%c0_43, %c0_44] : memref<16x1xf32, #tpu.memory_space<vmem>>, vector<16x1xf32>
    %62 = vector.broadcast %61 : vector<16x1xf32> to vector<16x128xf32>
    %63 = arith.addf %60, %62 : vector<16x128xf32>
    %cst_45 = arith.constant 0.000000e+00 : f32
    %64 = vector.broadcast %cst_45 : f32 to vector<16x128xf32>
    %65 = arith.maximumf %63, %64 : vector<16x128xf32>
    %c0_46 = arith.constant 0 : index
    %c0_47 = arith.constant 0 : index
    %66 = vector.load %arg4[%c0_46, %c0_47] : memref<16x16xf32, #tpu.memory_space<vmem>>, vector<16x16xf32>
    %cst_48 = arith.constant dense<0.000000e+00> : vector<16x256xf32>
    %67 = tpu.matmul %66, %0, %cst_48 {dimension_numbers = #tpu.dot_dimension_numbers<[1], [0], [0], [1], [0, 0, 1, 1], [], []>} : vector<16x16xf32>, vector<16x256xf32>, vector<16x256xf32> -> vector<16x256xf32>
    %c0_49 = arith.constant 0 : index
    %c0_50 = arith.constant 0 : index
    %68 = vector.load %arg5[%c0_49, %c0_50] : memref<16x1xf32, #tpu.memory_space<vmem>>, vector<16x1xf32>
    %69 = vector.broadcast %68 : vector<16x1xf32> to vector<16x256xf32>
    %70 = arith.addf %67, %69 : vector<16x256xf32>
    %cst_51 = arith.constant 0.000000e+00 : f32
    %71 = vector.broadcast %cst_51 : f32 to vector<16x256xf32>
    %72 = arith.maximumf %70, %71 : vector<16x256xf32>
    %c0_52 = arith.constant 0 : index
    %c0_53 = arith.constant 0 : index
    %73 = vector.load %arg18[%c0_52, %c0_53] : memref<1x256xf32, #tpu.memory_space<vmem>>, vector<1x256xf32>
    %74 = vector.broadcast %73 : vector<1x256xf32> to vector<16x256xf32>
    %75 = arith.mulf %72, %74 : vector<16x256xf32>
    %c0_54 = arith.constant 0 : index
    %c0_55 = arith.constant 0 : index
    %c0_56 = arith.constant 0 : index
    %76 = vector.load %arg8[%c0_54, %c0_55, %c0_56] : memref<5x16x16xf32, #tpu.memory_space<vmem>>, vector<1x16x16xf32>
    %77 = vector.shape_cast %76 : vector<1x16x16xf32> to vector<16x16xf32>
    %78 = vector.extract_strided_slice %75 {offsets = [0, 60], sizes = [16, 128], strides = [1, 1]} : vector<16x256xf32> to vector<16x128xf32>
    %cst_57 = arith.constant dense<0.000000e+00> : vector<16x128xf32>
    %79 = tpu.matmul %77, %78, %cst_57 {dimension_numbers = #tpu.dot_dimension_numbers<[1], [0], [0], [1], [0, 0, 1, 1], [], []>} : vector<16x16xf32>, vector<16x128xf32>, vector<16x128xf32> -> vector<16x128xf32>
    %c1_58 = arith.constant 1 : index
    %c0_59 = arith.constant 0 : index
    %c0_60 = arith.constant 0 : index
    %80 = vector.load %arg8[%c1_58, %c0_59, %c0_60] : memref<5x16x16xf32, #tpu.memory_space<vmem>>, vector<1x16x16xf32>
    %81 = vector.shape_cast %80 : vector<1x16x16xf32> to vector<16x16xf32>
    %82 = vector.extract_strided_slice %75 {offsets = [0, 62], sizes = [16, 128], strides = [1, 1]} : vector<16x256xf32> to vector<16x128xf32>
    %cst_61 = arith.constant dense<0.000000e+00> : vector<16x128xf32>
    %83 = tpu.matmul %81, %82, %cst_61 {dimension_numbers = #tpu.dot_dimension_numbers<[1], [0], [0], [1], [0, 0, 1, 1], [], []>} : vector<16x16xf32>, vector<16x128xf32>, vector<16x128xf32> -> vector<16x128xf32>
    %84 = arith.addf %79, %83 : vector<16x128xf32>
    %c2_62 = arith.constant 2 : index
    %c0_63 = arith.constant 0 : index
    %c0_64 = arith.constant 0 : index
    %85 = vector.load %arg8[%c2_62, %c0_63, %c0_64] : memref<5x16x16xf32, #tpu.memory_space<vmem>>, vector<1x16x16xf32>
    %86 = vector.shape_cast %85 : vector<1x16x16xf32> to vector<16x16xf32>
    %87 = vector.extract_strided_slice %75 {offsets = [0, 64], sizes = [16, 128], strides = [1, 1]} : vector<16x256xf32> to vector<16x128xf32>
    %cst_65 = arith.constant dense<0.000000e+00> : vector<16x128xf32>
    %88 = tpu.matmul %86, %87, %cst_65 {dimension_numbers = #tpu.dot_dimension_numbers<[1], [0], [0], [1], [0, 0, 1, 1], [], []>} : vector<16x16xf32>, vector<16x128xf32>, vector<16x128xf32> -> vector<16x128xf32>
    %89 = arith.addf %84, %88 : vector<16x128xf32>
    %c3_66 = arith.constant 3 : index
    %c0_67 = arith.constant 0 : index
    %c0_68 = arith.constant 0 : index
    %90 = vector.load %arg8[%c3_66, %c0_67, %c0_68] : memref<5x16x16xf32, #tpu.memory_space<vmem>>, vector<1x16x16xf32>
    %91 = vector.shape_cast %90 : vector<1x16x16xf32> to vector<16x16xf32>
    %92 = vector.extract_strided_slice %75 {offsets = [0, 66], sizes = [16, 128], strides = [1, 1]} : vector<16x256xf32> to vector<16x128xf32>
    %cst_69 = arith.constant dense<0.000000e+00> : vector<16x128xf32>
    %93 = tpu.matmul %91, %92, %cst_69 {dimension_numbers = #tpu.dot_dimension_numbers<[1], [0], [0], [1], [0, 0, 1, 1], [], []>} : vector<16x16xf32>, vector<16x128xf32>, vector<16x128xf32> -> vector<16x128xf32>
    %94 = arith.addf %89, %93 : vector<16x128xf32>
    %c4_70 = arith.constant 4 : index
    %c0_71 = arith.constant 0 : index
    %c0_72 = arith.constant 0 : index
    %95 = vector.load %arg8[%c4_70, %c0_71, %c0_72] : memref<5x16x16xf32, #tpu.memory_space<vmem>>, vector<1x16x16xf32>
    %96 = vector.shape_cast %95 : vector<1x16x16xf32> to vector<16x16xf32>
    %97 = vector.extract_strided_slice %75 {offsets = [0, 68], sizes = [16, 128], strides = [1, 1]} : vector<16x256xf32> to vector<16x128xf32>
    %cst_73 = arith.constant dense<0.000000e+00> : vector<16x128xf32>
    %98 = tpu.matmul %96, %97, %cst_73 {dimension_numbers = #tpu.dot_dimension_numbers<[1], [0], [0], [1], [0, 0, 1, 1], [], []>} : vector<16x16xf32>, vector<16x128xf32>, vector<16x128xf32> -> vector<16x128xf32>
    %99 = arith.addf %94, %98 : vector<16x128xf32>
    %c0_74 = arith.constant 0 : index
    %c0_75 = arith.constant 0 : index
    %100 = vector.load %arg9[%c0_74, %c0_75] : memref<16x1xf32, #tpu.memory_space<vmem>>, vector<16x1xf32>
    %101 = vector.broadcast %100 : vector<16x1xf32> to vector<16x128xf32>
    %102 = arith.addf %99, %101 : vector<16x128xf32>
    %cst_76 = arith.constant 0.000000e+00 : f32
    %103 = vector.broadcast %cst_76 : f32 to vector<16x128xf32>
    %104 = arith.maximumf %102, %103 : vector<16x128xf32>
    %105 = vector.extract_strided_slice %0 {offsets = [0, 63], sizes = [16, 128], strides = [1, 1]} : vector<16x256xf32> to vector<16x128xf32>
    %106 = vector.extract_strided_slice %0 {offsets = [0, 64], sizes = [16, 128], strides = [1, 1]} : vector<16x256xf32> to vector<16x128xf32>
    %107 = arith.maximumf %105, %106 : vector<16x128xf32>
    %108 = vector.extract_strided_slice %0 {offsets = [0, 65], sizes = [16, 128], strides = [1, 1]} : vector<16x256xf32> to vector<16x128xf32>
    %109 = arith.maximumf %107, %108 : vector<16x128xf32>
    %c0_77 = arith.constant 0 : index
    %c0_78 = arith.constant 0 : index
    %110 = vector.load %arg19[%c0_77, %c0_78] : memref<1x128xf32, #tpu.memory_space<vmem>>, vector<1x128xf32>
    %111 = vector.broadcast %110 : vector<1x128xf32> to vector<16x128xf32>
    %112 = arith.mulf %109, %111 : vector<16x128xf32>
    %c0_79 = arith.constant 0 : index
    %c0_80 = arith.constant 0 : index
    %113 = vector.load %arg12[%c0_79, %c0_80] : memref<16x16xf32, #tpu.memory_space<vmem>>, vector<16x16xf32>
    %cst_81 = arith.constant dense<0.000000e+00> : vector<16x128xf32>
    %114 = tpu.matmul %113, %112, %cst_81 {dimension_numbers = #tpu.dot_dimension_numbers<[1], [0], [0], [1], [0, 0, 1, 1], [], []>} : vector<16x16xf32>, vector<16x128xf32>, vector<16x128xf32> -> vector<16x128xf32>
    %c0_82 = arith.constant 0 : index
    %c0_83 = arith.constant 0 : index
    %115 = vector.load %arg13[%c0_82, %c0_83] : memref<16x1xf32, #tpu.memory_space<vmem>>, vector<16x1xf32>
    %116 = vector.broadcast %115 : vector<16x1xf32> to vector<16x128xf32>
    %117 = arith.addf %114, %116 : vector<16x128xf32>
    %cst_84 = arith.constant 0.000000e+00 : f32
    %118 = vector.broadcast %cst_84 : f32 to vector<16x128xf32>
    %119 = arith.maximumf %117, %118 : vector<16x128xf32>
    %c0_85 = arith.constant 0 : index
    %c0_86 = arith.constant 0 : index
    %120 = vector.load %arg20[%c0_85, %c0_86] : memref<128x2xf32, #tpu.memory_space<vmem>>, vector<128x2xf32>
    %cst_87 = arith.constant dense<0.000000e+00> : vector<16x2xf32>
    %121 = tpu.matmul %65, %120, %cst_87 {dimension_numbers = #tpu.dot_dimension_numbers<[1], [0], [0], [1], [0, 0, 1, 1], [], []>} : vector<16x128xf32>, vector<128x2xf32>, vector<16x2xf32> -> vector<16x2xf32>
    %cst_88 = arith.constant dense<0.000000e+00> : vector<16x2xf32>
    %122 = tpu.matmul %104, %120, %cst_88 {dimension_numbers = #tpu.dot_dimension_numbers<[1], [0], [0], [1], [0, 0, 1, 1], [], []>} : vector<16x128xf32>, vector<128x2xf32>, vector<16x2xf32> -> vector<16x2xf32>
    %cst_89 = arith.constant dense<0.000000e+00> : vector<16x2xf32>
    %123 = tpu.matmul %39, %120, %cst_89 {dimension_numbers = #tpu.dot_dimension_numbers<[1], [0], [0], [1], [0, 0, 1, 1], [], []>} : vector<16x128xf32>, vector<128x2xf32>, vector<16x2xf32> -> vector<16x2xf32>
    %cst_90 = arith.constant dense<0.000000e+00> : vector<16x2xf32>
    %124 = tpu.matmul %119, %120, %cst_90 {dimension_numbers = #tpu.dot_dimension_numbers<[1], [0], [0], [1], [0, 0, 1, 1], [], []>} : vector<16x128xf32>, vector<128x2xf32>, vector<16x2xf32> -> vector<16x2xf32>
    %125 = tpu.concatenate %121, %122, %123, %124 in 0 : vector<16x2xf32>, vector<16x2xf32>, vector<16x2xf32>, vector<16x2xf32> -> vector<64x2xf32>
    %cst_91 = arith.constant 6.250000e-02 : f32
    %126 = vector.broadcast %cst_91 : f32 to vector<64x2xf32>
    %127 = arith.mulf %125, %126 : vector<64x2xf32>
    %c0_92 = arith.constant 0 : index
    %c0_93 = arith.constant 0 : index
    %128 = vector.load %arg14[%c0_92, %c0_93] : memref<1x64xf32, #tpu.memory_space<vmem>>, vector<1x64xf32>
    %cst_94 = arith.constant dense<0.000000e+00> : vector<1x2xf32>
    %129 = tpu.matmul %128, %127, %cst_94 {dimension_numbers = #tpu.dot_dimension_numbers<[1], [0], [0], [1], [0, 0, 1, 1], [], []>} : vector<1x64xf32>, vector<64x2xf32>, vector<1x2xf32> -> vector<1x2xf32>
    %cst_95 = arith.constant 0.000000e+00 : f32
    %130 = vector.broadcast %cst_95 : f32 to vector<1x2xf32>
    %131 = arith.maximumf %129, %130 : vector<1x2xf32>
    %c0_96 = arith.constant 0 : index
    %c0_97 = arith.constant 0 : index
    %132 = vector.load %arg15[%c0_96, %c0_97] : memref<64x1xf32, #tpu.memory_space<vmem>>, vector<64x1xf32>
    %cst_98 = arith.constant dense<0.000000e+00> : vector<64x2xf32>
    %133 = tpu.matmul %132, %131, %cst_98 {dimension_numbers = #tpu.dot_dimension_numbers<[1], [0], [0], [1], [0, 0, 1, 1], [], []>} : vector<64x1xf32>, vector<1x2xf32>, vector<64x2xf32> -> vector<64x2xf32>
    %134 = arith.negf %133 : vector<64x2xf32>
    %135 = math.exp %134 : vector<64x2xf32>
    %cst_99 = arith.constant 1.000000e+00 : f32
    %136 = vector.broadcast %cst_99 : f32 to vector<64x2xf32>
    %137 = arith.addf %136, %135 : vector<64x2xf32>
    %138 = arith.divf %136, %137 : vector<64x2xf32>
    %c0_100 = arith.constant 0 : index
    %c0_101 = arith.constant 0 : index
    %139 = vector.load %arg21[%c0_100, %c0_101] : memref<2x128xf32, #tpu.memory_space<vmem>>, vector<2x128xf32>
    %cst_102 = arith.constant dense<0.000000e+00> : vector<64x128xf32>
    %140 = tpu.matmul %138, %139, %cst_102 {dimension_numbers = #tpu.dot_dimension_numbers<[1], [0], [0], [1], [0, 0, 1, 1], [], []>} : vector<64x2xf32>, vector<2x128xf32>, vector<64x128xf32> -> vector<64x128xf32>
    %c0_103 = arith.constant 0 : index
    %c0_104 = arith.constant 0 : index
    %c0_105 = arith.constant 0 : index
    %141 = vector.load %arg16[%c0_103, %c0_104, %c0_105] : memref<4x8x16xf32, #tpu.memory_space<vmem>>, vector<1x8x16xf32>
    %142 = vector.shape_cast %141 : vector<1x8x16xf32> to vector<8x16xf32>
    %143 = vector.extract_strided_slice %140 {offsets = [0, 0], sizes = [16, 128], strides = [1, 1]} : vector<64x128xf32> to vector<16x128xf32>
    %144 = arith.mulf %65, %143 : vector<16x128xf32>
    %cst_106 = arith.constant dense<0.000000e+00> : vector<8x128xf32>
    %145 = tpu.matmul %142, %144, %cst_106 {dimension_numbers = #tpu.dot_dimension_numbers<[1], [0], [0], [1], [0, 0, 1, 1], [], []>} : vector<8x16xf32>, vector<16x128xf32>, vector<8x128xf32> -> vector<8x128xf32>
    %c1_107 = arith.constant 1 : index
    %c0_108 = arith.constant 0 : index
    %c0_109 = arith.constant 0 : index
    %146 = vector.load %arg16[%c1_107, %c0_108, %c0_109] : memref<4x8x16xf32, #tpu.memory_space<vmem>>, vector<1x8x16xf32>
    %147 = vector.shape_cast %146 : vector<1x8x16xf32> to vector<8x16xf32>
    %148 = vector.extract_strided_slice %140 {offsets = [16, 0], sizes = [16, 128], strides = [1, 1]} : vector<64x128xf32> to vector<16x128xf32>
    %149 = arith.mulf %104, %148 : vector<16x128xf32>
    %cst_110 = arith.constant dense<0.000000e+00> : vector<8x128xf32>
    %150 = tpu.matmul %147, %149, %cst_110 {dimension_numbers = #tpu.dot_dimension_numbers<[1], [0], [0], [1], [0, 0, 1, 1], [], []>} : vector<8x16xf32>, vector<16x128xf32>, vector<8x128xf32> -> vector<8x128xf32>
    %151 = arith.addf %145, %150 : vector<8x128xf32>
    %c2_111 = arith.constant 2 : index
    %c0_112 = arith.constant 0 : index
    %c0_113 = arith.constant 0 : index
    %152 = vector.load %arg16[%c2_111, %c0_112, %c0_113] : memref<4x8x16xf32, #tpu.memory_space<vmem>>, vector<1x8x16xf32>
    %153 = vector.shape_cast %152 : vector<1x8x16xf32> to vector<8x16xf32>
    %154 = vector.extract_strided_slice %140 {offsets = [32, 0], sizes = [16, 128], strides = [1, 1]} : vector<64x128xf32> to vector<16x128xf32>
    %155 = arith.mulf %39, %154 : vector<16x128xf32>
    %cst_114 = arith.constant dense<0.000000e+00> : vector<8x128xf32>
    %156 = tpu.matmul %153, %155, %cst_114 {dimension_numbers = #tpu.dot_dimension_numbers<[1], [0], [0], [1], [0, 0, 1, 1], [], []>} : vector<8x16xf32>, vector<16x128xf32>, vector<8x128xf32> -> vector<8x128xf32>
    %157 = arith.addf %151, %156 : vector<8x128xf32>
    %c3_115 = arith.constant 3 : index
    %c0_116 = arith.constant 0 : index
    %c0_117 = arith.constant 0 : index
    %158 = vector.load %arg16[%c3_115, %c0_116, %c0_117] : memref<4x8x16xf32, #tpu.memory_space<vmem>>, vector<1x8x16xf32>
    %159 = vector.shape_cast %158 : vector<1x8x16xf32> to vector<8x16xf32>
    %160 = vector.extract_strided_slice %140 {offsets = [48, 0], sizes = [16, 128], strides = [1, 1]} : vector<64x128xf32> to vector<16x128xf32>
    %161 = arith.mulf %119, %160 : vector<16x128xf32>
    %cst_118 = arith.constant dense<0.000000e+00> : vector<8x128xf32>
    %162 = tpu.matmul %159, %161, %cst_118 {dimension_numbers = #tpu.dot_dimension_numbers<[1], [0], [0], [1], [0, 0, 1, 1], [], []>} : vector<8x16xf32>, vector<16x128xf32>, vector<8x128xf32> -> vector<8x128xf32>
    %163 = arith.addf %157, %162 : vector<8x128xf32>
    %c0_119 = arith.constant 0 : index
    %c0_120 = arith.constant 0 : index
    %164 = vector.load %arg17[%c0_119, %c0_120] : memref<8x1xf32, #tpu.memory_space<vmem>>, vector<8x1xf32>
    %165 = vector.broadcast %164 : vector<8x1xf32> to vector<8x128xf32>
    %166 = arith.addf %163, %165 : vector<8x128xf32>
    %c0_121 = arith.constant 0 : index
    %c0_122 = arith.constant 0 : index
    %167 = vector.load %arg22[%c0_121, %c0_122] : memref<8x128xf32, #tpu.memory_space<vmem>>, vector<8x128xf32>
    tpu.vector_store %arg22[%c0_121, %c0_122], %166 {strides = array<i32>} : memref<8x128xf32, #tpu.memory_space<vmem>>, vector<8x128xf32>,
    return
  }
  func.func @transform_0(%arg0: i32) -> (i32, i32) {
    %c0_i32 = arith.constant 0 : i32
    %c0_i32_0 = arith.constant 0 : i32
    return %c0_i32, %arg0 : i32, i32
  }
  func.func @transform_1(%arg0: i32) -> (i32, i32) {
    %c0_i32 = arith.constant 0 : i32
    %c0_i32_0 = arith.constant 0 : i32
    %c0_i32_1 = arith.constant 0 : i32
    return %c0_i32, %c0_i32_0 : i32, i32
  }
  func.func @transform_2(%arg0: i32) -> (i32, i32) {
    %c0_i32 = arith.constant 0 : i32
    %c0_i32_0 = arith.constant 0 : i32
    %c0_i32_1 = arith.constant 0 : i32
    return %c0_i32, %c0_i32_0 : i32, i32
  }
  func.func @transform_3(%arg0: i32) -> (i32, i32) {
    %c0_i32 = arith.constant 0 : i32
    %c0_i32_0 = arith.constant 0 : i32
    %c0_i32_1 = arith.constant 0 : i32
    return %c0_i32, %c0_i32_0 : i32, i32
  }
  func.func @transform_4(%arg0: i32) -> (i32, i32) {
    %c0_i32 = arith.constant 0 : i32
    %c0_i32_0 = arith.constant 0 : i32
    %c0_i32_1 = arith.constant 0 : i32
    return %c0_i32, %c0_i32_0 : i32, i32
  }
  func.func @transform_5(%arg0: i32) -> (i32, i32, i32) {
    %c0_i32 = arith.constant 0 : i32
    %c0_i32_0 = arith.constant 0 : i32
    %c0_i32_1 = arith.constant 0 : i32
    %c0_i32_2 = arith.constant 0 : i32
    return %c0_i32, %c0_i32_0, %c0_i32_1 : i32, i32, i32
  }
  func.func @transform_6(%arg0: i32) -> (i32, i32) {
    %c0_i32 = arith.constant 0 : i32
    %c0_i32_0 = arith.constant 0 : i32
    %c0_i32_1 = arith.constant 0 : i32
    return %c0_i32, %c0_i32_0 : i32, i32
  }
  func.func @transform_7(%arg0: i32) -> (i32, i32, i32) {
    %c0_i32 = arith.constant 0 : i32
    %c0_i32_0 = arith.constant 0 : i32
    %c0_i32_1 = arith.constant 0 : i32
    %c0_i32_2 = arith.constant 0 : i32
    return %c0_i32, %c0_i32_0, %c0_i32_1 : i32, i32, i32
  }
  func.func @transform_8(%arg0: i32) -> (i32, i32) {
    %c0_i32 = arith.constant 0 : i32
    %c0_i32_0 = arith.constant 0 : i32
    %c0_i32_1 = arith.constant 0 : i32
    return %c0_i32, %c0_i32_0 : i32, i32
  }
  func.func @transform_9(%arg0: i32) -> (i32, i32, i32) {
    %c0_i32 = arith.constant 0 : i32
    %c0_i32_0 = arith.constant 0 : i32
    %c0_i32_1 = arith.constant 0 : i32
    %c0_i32_2 = arith.constant 0 : i32
    return %c0_i32, %c0_i32_0, %c0_i32_1 : i32, i32, i32
  }
  func.func @transform_10(%arg0: i32) -> (i32, i32) {
    %c0_i32 = arith.constant 0 : i32
    %c0_i32_0 = arith.constant 0 : i32
    %c0_i32_1 = arith.constant 0 : i32
    return %c0_i32, %c0_i32_0 : i32, i32
  }
  func.func @transform_11(%arg0: i32) -> (i32, i32) {
    %c0_i32 = arith.constant 0 : i32
    %c0_i32_0 = arith.constant 0 : i32
    %c0_i32_1 = arith.constant 0 : i32
    return %c0_i32, %c0_i32_0 : i32, i32
  }
  func.func @transform_12(%arg0: i32) -> (i32, i32) {
    %c0_i32 = arith.constant 0 : i32
    %c0_i32_0 = arith.constant 0 : i32
    %c0_i32_1 = arith.constant 0 : i32
    return %c0_i32, %c0_i32_0 : i32, i32
  }
  func.func @transform_13(%arg0: i32) -> (i32, i32) {
    %c0_i32 = arith.constant 0 : i32
    %c0_i32_0 = arith.constant 0 : i32
    %c0_i32_1 = arith.constant 0 : i32
    return %c0_i32, %c0_i32_0 : i32, i32
  }
  func.func @transform_14(%arg0: i32) -> (i32, i32) {
    %c0_i32 = arith.constant 0 : i32
    %c0_i32_0 = arith.constant 0 : i32
    %c0_i32_1 = arith.constant 0 : i32
    return %c0_i32, %c0_i32_0 : i32, i32
  }
  func.func @transform_15(%arg0: i32) -> (i32, i32, i32) {
    %c0_i32 = arith.constant 0 : i32
    %c0_i32_0 = arith.constant 0 : i32
    %c0_i32_1 = arith.constant 0 : i32
    %c0_i32_2 = arith.constant 0 : i32
    return %c0_i32, %c0_i32_0, %c0_i32_1 : i32, i32, i32
  }
  func.func @transform_16(%arg0: i32) -> (i32, i32) {
    %c0_i32 = arith.constant 0 : i32
    %c0_i32_0 = arith.constant 0 : i32
    %c0_i32_1 = arith.constant 0 : i32
    return %c0_i32, %c0_i32_0 : i32, i32
  }
  func.func @transform_17(%arg0: i32) -> (i32, i32) {
    %c0_i32 = arith.constant 0 : i32
    %c0_i32_0 = arith.constant 0 : i32
    %c0_i32_1 = arith.constant 0 : i32
    return %c0_i32, %c0_i32_0 : i32, i32
  }
  func.func @transform_18(%arg0: i32) -> (i32, i32) {
    %c0_i32 = arith.constant 0 : i32
    %c0_i32_0 = arith.constant 0 : i32
    %c0_i32_1 = arith.constant 0 : i32
    return %c0_i32, %c0_i32_0 : i32, i32
  }
  func.func @transform_19(%arg0: i32) -> (i32, i32) {
    %c0_i32 = arith.constant 0 : i32
    %c0_i32_0 = arith.constant 0 : i32
    %c0_i32_1 = arith.constant 0 : i32
    return %c0_i32, %c0_i32_0 : i32, i32
  }
  func.func @transform_20(%arg0: i32) -> (i32, i32) {
    %c0_i32 = arith.constant 0 : i32
    %c0_i32_0 = arith.constant 0 : i32
    %c0_i32_1 = arith.constant 0 : i32
    return %c0_i32, %c0_i32_0 : i32, i32
  }
  func.func @transform_21(%arg0: i32) -> (i32, i32) {
    %c0_i32 = arith.constant 0 : i32
    %c0_i32_0 = arith.constant 0 : i32
    return %c0_i32, %arg0 : i32, i32
  }
}

module attributes {stable_mosaic.version = 11 : i64} {
  func.func @msca_kernel(%arg0: i32, %arg1: memref<16x256xf32, #tpu.memory_space<vmem>>, %arg2: memref<16x16xf32, #tpu.memory_space<vmem>>, %arg3: memref<16x1xf32, #tpu.memory_space<vmem>>, %arg4: memref<16x16xf32, #tpu.memory_space<vmem>>, %arg5: memref<16x1xf32, #tpu.memory_space<vmem>>, %arg6: memref<3x16x16xf32, #tpu.memory_space<vmem>>, %arg7: memref<16x1xf32, #tpu.memory_space<vmem>>, %arg8: memref<5x16x16xf32, #tpu.memory_space<vmem>>, %arg9: memref<16x1xf32, #tpu.memory_space<vmem>>, %arg10: memref<7x16x16xf32, #tpu.memory_space<vmem>>, %arg11: memref<16x1xf32, #tpu.memory_space<vmem>>, %arg12: memref<16x16xf32, #tpu.memory_space<vmem>>, %arg13: memref<16x1xf32, #tpu.memory_space<vmem>>, %arg14: memref<1x64xf32, #tpu.memory_space<vmem>>, %arg15: memref<64x1xf32, #tpu.memory_space<vmem>>, %arg16: memref<4x8x16xf32, #tpu.memory_space<vmem>>, %arg17: memref<8x1xf32, #tpu.memory_space<vmem>>, %arg18: memref<1x256xf32, #tpu.memory_space<vmem>>, %arg19: memref<1x128xf32, #tpu.memory_space<vmem>>, %arg20: memref<128x2xf32, #tpu.memory_space<vmem>>, %arg21: memref<2x128xf32, #tpu.memory_space<vmem>>, %arg22: memref<8x128xf32, #tpu.memory_space<vmem>>) attributes {dimension_semantics = [#tpu.dimension_semantics<parallel>], iteration_bounds = array<i64: 2>, scalar_prefetch = 0 : i64, scratch_operands = 0 : i64, tpu.core_type = #tpu.core_type<tc>, window_params = [{transform_indices = @transform_0, window_bounds = array<i64: 16, 256>}, {pipeline_mode = #tpu.pipeline_mode<synchronous>, transform_indices = @transform_1, window_bounds = array<i64: 16, 16>}, {pipeline_mode = #tpu.pipeline_mode<synchronous>, transform_indices = @transform_2, window_bounds = array<i64: 16, 1>}, {pipeline_mode = #tpu.pipeline_mode<synchronous>, transform_indices = @transform_3, window_bounds = array<i64: 16, 16>}, {pipeline_mode = #tpu.pipeline_mode<synchronous>, transform_indices = @transform_4, window_bounds = array<i64: 16, 1>}, {pipeline_mode = #tpu.pipeline_mode<synchronous>, transform_indices = @transform_5, window_bounds = array<i64: 3, 16, 16>}, {pipeline_mode = #tpu.pipeline_mode<synchronous>, transform_indices = @transform_6, window_bounds = array<i64: 16, 1>}, {pipeline_mode = #tpu.pipeline_mode<synchronous>, transform_indices = @transform_7, window_bounds = array<i64: 5, 16, 16>}, {pipeline_mode = #tpu.pipeline_mode<synchronous>, transform_indices = @transform_8, window_bounds = array<i64: 16, 1>}, {pipeline_mode = #tpu.pipeline_mode<synchronous>, transform_indices = @transform_9, window_bounds = array<i64: 7, 16, 16>}, {pipeline_mode = #tpu.pipeline_mode<synchronous>, transform_indices = @transform_10, window_bounds = array<i64: 16, 1>}, {pipeline_mode = #tpu.pipeline_mode<synchronous>, transform_indices = @transform_11, window_bounds = array<i64: 16, 16>}, {pipeline_mode = #tpu.pipeline_mode<synchronous>, transform_indices = @transform_12, window_bounds = array<i64: 16, 1>}, {pipeline_mode = #tpu.pipeline_mode<synchronous>, transform_indices = @transform_13, window_bounds = array<i64: 1, 64>}, {pipeline_mode = #tpu.pipeline_mode<synchronous>, transform_indices = @transform_14, window_bounds = array<i64: 64, 1>}, {pipeline_mode = #tpu.pipeline_mode<synchronous>, transform_indices = @transform_15, window_bounds = array<i64: 4, 8, 16>}, {pipeline_mode = #tpu.pipeline_mode<synchronous>, transform_indices = @transform_16, window_bounds = array<i64: 8, 1>}, {pipeline_mode = #tpu.pipeline_mode<synchronous>, transform_indices = @transform_17, window_bounds = array<i64: 1, 256>}, {pipeline_mode = #tpu.pipeline_mode<synchronous>, transform_indices = @transform_18, window_bounds = array<i64: 1, 128>}, {pipeline_mode = #tpu.pipeline_mode<synchronous>, transform_indices = @transform_19, window_bounds = array<i64: 128, 2>}, {pipeline_mode = #tpu.pipeline_mode<synchronous>, transform_indices = @transform_20, window_bounds = array<i64: 2, 128>}, {transform_indices = @transform_21, window_bounds = array<i64: 8, 128>}]} {
    %c0 = arith.constant 0 : index
    %c0_0 = arith.constant 0 : index
    %0 = vector.load %arg1[%c0, %c0_0] : memref<16x256xf32, #tpu.memory_space<vmem>>, vector<16x256xf32>
    %c0_1 = arith.constant 0 : index
    %c0_2 = arith.constant 0 : index
    %c0_3 = arith.constant 0 : index
    %1 = vector.load %arg10[%c0_1, %c0_2, %c0_3] : memref<7x16x16xf32, #tpu.memory_space<vmem>>, vector<1x16x16xf32>
    %2 = vector.shape_cast %1 : vector<1x16x16xf32> to vector<16x16xf32>
    %3 = vector.extract_strided_slice %0 {offsets = [0, 61], sizes = [16, 128], strides = [1, 1]} : vector<16x256xf32> to vector<16x128xf32>
    %cst = arith.constant dense<0.000000e+00> : vector<16x128xf32>
    %4 = tpu.matmul %2, %3, %cst {dimension_numbers = #tpu.dot_dimension_numbers<[1], [0], [0], [1], [0, 0, 1, 1], [], []>} : vector<16x16xf32>, vector<16x128xf32>, vector<16x128xf32> -> vector<16x128xf32>
    %c1 = arith.constant 1 : index
    %c0_4 = arith.constant 0 : index
    %c0_5 = arith.constant 0 : index
    %5 = vector.load %arg10[%c1, %c0_4, %c0_5] : memref<7x16x16xf32, #tpu.memory_space<vmem>>, vector<1x16x16xf32>
    %6 = vector.shape_cast %5 : vector<1x16x16xf32> to vector<16x16xf32>
    %7 = vector.extract_strided_slice %0 {offsets = [0, 62], sizes = [16, 128], strides = [1, 1]} : vector<16x256xf32> to vector<16x128xf32>
    %cst_6 = arith.constant dense<0.000000e+00> : vector<16x128xf32>
    %8 = tpu.matmul %6, %7, %cst_6 {dimension_numbers = #tpu.dot_dimension_numbers<[1], [0], [0], [1], [0, 0, 1, 1], [], []>} : vector<16x16xf32>, vector<16x128xf32>, vector<16x128xf32> -> vector<16x128xf32>
    %9 = arith.addf %4, %8 : vector<16x128xf32>
    %c2 = arith.constant 2 : index
    %c0_7 = arith.constant 0 : index
    %c0_8 = arith.constant 0 : index
    %10 = vector.load %arg10[%c2, %c0_7, %c0_8] : memref<7x16x16xf32, #tpu.memory_space<vmem>>, vector<1x16x16xf32>
    %11 = vector.shape_cast %10 : vector<1x16x16xf32> to vector<16x16xf32>
    %12 = vector.extract_strided_slice %0 {offsets = [0, 63], sizes = [16, 128], strides = [1, 1]} : vector<16x256xf32> to vector<16x128xf32>
    %cst_9 = arith.constant dense<0.000000e+00> : vector<16x128xf32>
    %13 = tpu.matmul %11, %12, %cst_9 {dimension_numbers = #tpu.dot_dimension_numbers<[1], [0], [0], [1], [0, 0, 1, 1], [], []>} : vector<16x16xf32>, vector<16x128xf32>, vector<16x128xf32> -> vector<16x128xf32>
    %14 = arith.addf %9, %13 : vector<16x128xf32>
    %c3 = arith.constant 3 : index
    %c0_10 = arith.constant 0 : index
    %c0_11 = arith.constant 0 : index
    %15 = vector.load %arg10[%c3, %c0_10, %c0_11] : memref<7x16x16xf32, #tpu.memory_space<vmem>>, vector<1x16x16xf32>
    %16 = vector.shape_cast %15 : vector<1x16x16xf32> to vector<16x16xf32>
    %17 = vector.extract_strided_slice %0 {offsets = [0, 64], sizes = [16, 128], strides = [1, 1]} : vector<16x256xf32> to vector<16x128xf32>
    %cst_12 = arith.constant dense<0.000000e+00> : vector<16x128xf32>
    %18 = tpu.matmul %16, %17, %cst_12 {dimension_numbers = #tpu.dot_dimension_numbers<[1], [0], [0], [1], [0, 0, 1, 1], [], []>} : vector<16x16xf32>, vector<16x128xf32>, vector<16x128xf32> -> vector<16x128xf32>
    %19 = arith.addf %14, %18 : vector<16x128xf32>
    %c4 = arith.constant 4 : index
    %c0_13 = arith.constant 0 : index
    %c0_14 = arith.constant 0 : index
    %20 = vector.load %arg10[%c4, %c0_13, %c0_14] : memref<7x16x16xf32, #tpu.memory_space<vmem>>, vector<1x16x16xf32>
    %21 = vector.shape_cast %20 : vector<1x16x16xf32> to vector<16x16xf32>
    %22 = vector.extract_strided_slice %0 {offsets = [0, 65], sizes = [16, 128], strides = [1, 1]} : vector<16x256xf32> to vector<16x128xf32>
    %cst_15 = arith.constant dense<0.000000e+00> : vector<16x128xf32>
    %23 = tpu.matmul %21, %22, %cst_15 {dimension_numbers = #tpu.dot_dimension_numbers<[1], [0], [0], [1], [0, 0, 1, 1], [], []>} : vector<16x16xf32>, vector<16x128xf32>, vector<16x128xf32> -> vector<16x128xf32>
    %24 = arith.addf %19, %23 : vector<16x128xf32>
    %c5 = arith.constant 5 : index
    %c0_16 = arith.constant 0 : index
    %c0_17 = arith.constant 0 : index
    %25 = vector.load %arg10[%c5, %c0_16, %c0_17] : memref<7x16x16xf32, #tpu.memory_space<vmem>>, vector<1x16x16xf32>
    %26 = vector.shape_cast %25 : vector<1x16x16xf32> to vector<16x16xf32>
    %27 = vector.extract_strided_slice %0 {offsets = [0, 66], sizes = [16, 128], strides = [1, 1]} : vector<16x256xf32> to vector<16x128xf32>
    %cst_18 = arith.constant dense<0.000000e+00> : vector<16x128xf32>
    %28 = tpu.matmul %26, %27, %cst_18 {dimension_numbers = #tpu.dot_dimension_numbers<[1], [0], [0], [1], [0, 0, 1, 1], [], []>} : vector<16x16xf32>, vector<16x128xf32>, vector<16x128xf32> -> vector<16x128xf32>
    %29 = arith.addf %24, %28 : vector<16x128xf32>
    %c6 = arith.constant 6 : index
    %c0_19 = arith.constant 0 : index
    %c0_20 = arith.constant 0 : index
    %30 = vector.load %arg10[%c6, %c0_19, %c0_20] : memref<7x16x16xf32, #tpu.memory_space<vmem>>, vector<1x16x16xf32>
    %31 = vector.shape_cast %30 : vector<1x16x16xf32> to vector<16x16xf32>
    %32 = vector.extract_strided_slice %0 {offsets = [0, 67], sizes = [16, 128], strides = [1, 1]} : vector<16x256xf32> to vector<16x128xf32>
    %cst_21 = arith.constant dense<0.000000e+00> : vector<16x128xf32>
    %33 = tpu.matmul %31, %32, %cst_21 {dimension_numbers = #tpu.dot_dimension_numbers<[1], [0], [0], [1], [0, 0, 1, 1], [], []>} : vector<16x16xf32>, vector<16x128xf32>, vector<16x128xf32> -> vector<16x128xf32>
    %34 = arith.addf %29, %33 : vector<16x128xf32>
    %c0_22 = arith.constant 0 : index
    %c0_23 = arith.constant 0 : index
    %35 = vector.load %arg11[%c0_22, %c0_23] : memref<16x1xf32, #tpu.memory_space<vmem>>, vector<16x1xf32>
    %36 = vector.broadcast %35 : vector<16x1xf32> to vector<16x128xf32>
    %37 = arith.addf %34, %36 : vector<16x128xf32>
    %cst_24 = arith.constant 0.000000e+00 : f32
    %38 = vector.broadcast %cst_24 : f32 to vector<16x128xf32>
    %39 = arith.maximumf %37, %38 : vector<16x128xf32>
    %c0_25 = arith.constant 0 : index
    %c0_26 = arith.constant 0 : index
    %40 = vector.load %arg2[%c0_25, %c0_26] : memref<16x16xf32, #tpu.memory_space<vmem>>, vector<16x16xf32>
    %cst_27 = arith.constant dense<0.000000e+00> : vector<16x256xf32>
    %41 = tpu.matmul %40, %0, %cst_27 {dimension_numbers = #tpu.dot_dimension_numbers<[1], [0], [0], [1], [0, 0, 1, 1], [], []>} : vector<16x16xf32>, vector<16x256xf32>, vector<16x256xf32> -> vector<16x256xf32>
    %c0_28 = arith.constant 0 : index
    %c0_29 = arith.constant 0 : index
    %42 = vector.load %arg3[%c0_28, %c0_29] : memref<16x1xf32, #tpu.memory_space<vmem>>, vector<16x1xf32>
    %43 = vector.broadcast %42 : vector<16x1xf32> to vector<16x256xf32>
    %44 = arith.addf %41, %43 : vector<16x256xf32>
    %cst_30 = arith.constant 0.000000e+00 : f32
    %45 = vector.broadcast %cst_30 : f32 to vector<16x256xf32>
    %46 = arith.maximumf %44, %45 : vector<16x256xf32>
    %c0_31 = arith.constant 0 : index
    %c0_32 = arith.constant 0 : index
    %c0_33 = arith.constant 0 : index
    %47 = vector.load %arg6[%c0_31, %c0_32, %c0_33] : memref<3x16x16xf32, #tpu.memory_space<vmem>>, vector<1x16x16xf32>
    %48 = vector.shape_cast %47 : vector<1x16x16xf32> to vector<16x16xf32>
    %49 = vector.extract_strided_slice %46 {offsets = [0, 63], sizes = [16, 128], strides = [1, 1]} : vector<16x256xf32> to vector<16x128xf32>
    %cst_34 = arith.constant dense<0.000000e+00> : vector<16x128xf32>
    %50 = tpu.matmul %48, %49, %cst_34 {dimension_numbers = #tpu.dot_dimension_numbers<[1], [0], [0], [1], [0, 0, 1, 1], [], []>} : vector<16x16xf32>, vector<16x128xf32>, vector<16x128xf32> -> vector<16x128xf32>
    %c1_35 = arith.constant 1 : index
    %c0_36 = arith.constant 0 : index
    %c0_37 = arith.constant 0 : index
    %51 = vector.load %arg6[%c1_35, %c0_36, %c0_37] : memref<3x16x16xf32, #tpu.memory_space<vmem>>, vector<1x16x16xf32>
    %52 = vector.shape_cast %51 : vector<1x16x16xf32> to vector<16x16xf32>
    %53 = vector.extract_strided_slice %46 {offsets = [0, 64], sizes = [16, 128], strides = [1, 1]} : vector<16x256xf32> to vector<16x128xf32>
    %cst_38 = arith.constant dense<0.000000e+00> : vector<16x128xf32>
    %54 = tpu.matmul %52, %53, %cst_38 {dimension_numbers = #tpu.dot_dimension_numbers<[1], [0], [0], [1], [0, 0, 1, 1], [], []>} : vector<16x16xf32>, vector<16x128xf32>, vector<16x128xf32> -> vector<16x128xf32>
    %55 = arith.addf %50, %54 : vector<16x128xf32>
    %c2_39 = arith.constant 2 : index
    %c0_40 = arith.constant 0 : index
    %c0_41 = arith.constant 0 : index
    %56 = vector.load %arg6[%c2_39, %c0_40, %c0_41] : memref<3x16x16xf32, #tpu.memory_space<vmem>>, vector<1x16x16xf32>
    %57 = vector.shape_cast %56 : vector<1x16x16xf32> to vector<16x16xf32>
    %58 = vector.extract_strided_slice %46 {offsets = [0, 65], sizes = [16, 128], strides = [1, 1]} : vector<16x256xf32> to vector<16x128xf32>
    %cst_42 = arith.constant dense<0.000000e+00> : vector<16x128xf32>
    %59 = tpu.matmul %57, %58, %cst_42 {dimension_numbers = #tpu.dot_dimension_numbers<[1], [0], [0], [1], [0, 0, 1, 1], [], []>} : vector<16x16xf32>, vector<16x128xf32>, vector<16x128xf32> -> vector<16x128xf32>
    %60 = arith.addf %55, %59 : vector<16x128xf32>
    %c0_43 = arith.constant 0 : index
    %c0_44 = arith.constant 0 : index
    %61 = vector.load %arg7[%c0_43, %c0_44] : memref<16x1xf32, #tpu.memory_space<vmem>>, vector<16x1xf32>
    %62 = vector.broadcast %61 : vector<16x1xf32> to vector<16x128xf32>
    %63 = arith.addf %60, %62 : vector<16x128xf32>
    %cst_45 = arith.constant 0.000000e+00 : f32
    %64 = vector.broadcast %cst_45 : f32 to vector<16x128xf32>
    %65 = arith.maximumf %63, %64 : vector<16x128xf32>
    %c0_46 = arith.constant 0 : index
    %c0_47 = arith.constant 0 : index
    %66 = vector.load %arg4[%c0_46, %c0_47] : memref<16x16xf32, #tpu.memory_space<vmem>>, vector<16x16xf32>
    %cst_48 = arith.constant dense<0.000000e+00> : vector<16x256xf32>
    %67 = tpu.matmul %66, %0, %cst_48 {dimension_numbers = #tpu.dot_dimension_numbers<[1], [0], [0], [1], [0, 0, 1, 1], [], []>} : vector<16x16xf32>, vector<16x256xf32>, vector<16x256xf32> -> vector<16x256xf32>
    %c0_49 = arith.constant 0 : index
    %c0_50 = arith.constant 0 : index
    %68 = vector.load %arg5[%c0_49, %c0_50] : memref<16x1xf32, #tpu.memory_space<vmem>>, vector<16x1xf32>
    %69 = vector.broadcast %68 : vector<16x1xf32> to vector<16x256xf32>
    %70 = arith.addf %67, %69 : vector<16x256xf32>
    %cst_51 = arith.constant 0.000000e+00 : f32
    %71 = vector.broadcast %cst_51 : f32 to vector<16x256xf32>
    %72 = arith.maximumf %70, %71 : vector<16x256xf32>
    %c0_52 = arith.constant 0 : index
    %c0_53 = arith.constant 0 : index
    %73 = vector.load %arg18[%c0_52, %c0_53] : memref<1x256xf32, #tpu.memory_space<vmem>>, vector<1x256xf32>
    %74 = vector.broadcast %73 : vector<1x256xf32> to vector<16x256xf32>
    %75 = arith.mulf %72, %74 : vector<16x256xf32>
    %c0_54 = arith.constant 0 : index
    %c0_55 = arith.constant 0 : index
    %c0_56 = arith.constant 0 : index
    %76 = vector.load %arg8[%c0_54, %c0_55, %c0_56] : memref<5x16x16xf32, #tpu.memory_space<vmem>>, vector<1x16x16xf32>
    %77 = vector.shape_cast %76 : vector<1x16x16xf32> to vector<16x16xf32>
    %78 = vector.extract_strided_slice %75 {offsets = [0, 60], sizes = [16, 128], strides = [1, 1]} : vector<16x256xf32> to vector<16x128xf32>
    %cst_57 = arith.constant dense<0.000000e+00> : vector<16x128xf32>
    %79 = tpu.matmul %77, %78, %cst_57 {dimension_numbers = #tpu.dot_dimension_numbers<[1], [0], [0], [1], [0, 0, 1, 1], [], []>} : vector<16x16xf32>, vector<16x128xf32>, vector<16x128xf32> -> vector<16x128xf32>
    %c1_58 = arith.constant 1 : index
    %c0_59 = arith.constant 0 : index
    %c0_60 = arith.constant 0 : index
    %80 = vector.load %arg8[%c1_58, %c0_59, %c0_60] : memref<5x16x16xf32, #tpu.memory_space<vmem>>, vector<1x16x16xf32>
    %81 = vector.shape_cast %80 : vector<1x16x16xf32> to vector<16x16xf32>
    %82 = vector.extract_strided_slice %75 {offsets = [0, 62], sizes = [16, 128], strides = [1, 1]} : vector<16x256xf32> to vector<16x128xf32>
    %cst_61 = arith.constant dense<0.000000e+00> : vector<16x128xf32>
    %83 = tpu.matmul %81, %82, %cst_61 {dimension_numbers = #tpu.dot_dimension_numbers<[1], [0], [0], [1], [0, 0, 1, 1], [], []>} : vector<16x16xf32>, vector<16x128xf32>, vector<16x128xf32> -> vector<16x128xf32>
    %84 = arith.addf %79, %83 : vector<16x128xf32>
    %c2_62 = arith.constant 2 : index
    %c0_63 = arith.constant 0 : index
    %c0_64 = arith.constant 0 : index
    %85 = vector.load %arg8[%c2_62, %c0_63, %c0_64] : memref<5x16x16xf32, #tpu.memory_space<vmem>>, vector<1x16x16xf32>
    %86 = vector.shape_cast %85 : vector<1x16x16xf32> to vector<16x16xf32>
    %87 = vector.extract_strided_slice %75 {offsets = [0, 64], sizes = [16, 128], strides = [1, 1]} : vector<16x256xf32> to vector<16x128xf32>
    %cst_65 = arith.constant dense<0.000000e+00> : vector<16x128xf32>
    %88 = tpu.matmul %86, %87, %cst_65 {dimension_numbers = #tpu.dot_dimension_numbers<[1], [0], [0], [1], [0, 0, 1, 1], [], []>} : vector<16x16xf32>, vector<16x128xf32>, vector<16x128xf32> -> vector<16x128xf32>
    %89 = arith.addf %84, %88 : vector<16x128xf32>
    %c3_66 = arith.constant 3 : index
    %c0_67 = arith.constant 0 : index
    %c0_68 = arith.constant 0 : index
    %90 = vector.load %arg8[%c3_66, %c0_67, %c0_68] : memref<5x16x16xf32, #tpu.memory_space<vmem>>, vector<1x16x16xf32>
    %91 = vector.shape_cast %90 : vector<1x16x16xf32> to vector<16x16xf32>
    %92 = vector.extract_strided_slice %75 {offsets = [0, 66], sizes = [16, 128], strides = [1, 1]} : vector<16x256xf32> to vector<16x128xf32>
    %cst_69 = arith.constant dense<0.000000e+00> : vector<16x128xf32>
    %93 = tpu.matmul %91, %92, %cst_69 {dimension_numbers = #tpu.dot_dimension_numbers<[1], [0], [0], [1], [0, 0, 1, 1], [], []>} : vector<16x16xf32>, vector<16x128xf32>, vector<16x128xf32> -> vector<16x128xf32>
    %94 = arith.addf %89, %93 : vector<16x128xf32>
    %c4_70 = arith.constant 4 : index
    %c0_71 = arith.constant 0 : index
    %c0_72 = arith.constant 0 : index
    %95 = vector.load %arg8[%c4_70, %c0_71, %c0_72] : memref<5x16x16xf32, #tpu.memory_space<vmem>>, vector<1x16x16xf32>
    %96 = vector.shape_cast %95 : vector<1x16x16xf32> to vector<16x16xf32>
    %97 = vector.extract_strided_slice %75 {offsets = [0, 68], sizes = [16, 128], strides = [1, 1]} : vector<16x256xf32> to vector<16x128xf32>
    %cst_73 = arith.constant dense<0.000000e+00> : vector<16x128xf32>
    %98 = tpu.matmul %96, %97, %cst_73 {dimension_numbers = #tpu.dot_dimension_numbers<[1], [0], [0], [1], [0, 0, 1, 1], [], []>} : vector<16x16xf32>, vector<16x128xf32>, vector<16x128xf32> -> vector<16x128xf32>
    %99 = arith.addf %94, %98 : vector<16x128xf32>
    %c0_74 = arith.constant 0 : index
    %c0_75 = arith.constant 0 : index
    %100 = vector.load %arg9[%c0_74, %c0_75] : memref<16x1xf32, #tpu.memory_space<vmem>>, vector<16x1xf32>
    %101 = vector.broadcast %100 : vector<16x1xf32> to vector<16x128xf32>
    %102 = arith.addf %99, %101 : vector<16x128xf32>
    %cst_76 = arith.constant 0.000000e+00 : f32
    %103 = vector.broadcast %cst_76 : f32 to vector<16x128xf32>
    %104 = arith.maximumf %102, %103 : vector<16x128xf32>
    %105 = vector.extract_strided_slice %0 {offsets = [0, 63], sizes = [16, 128], strides = [1, 1]} : vector<16x256xf32> to vector<16x128xf32>
    %106 = vector.extract_strided_slice %0 {offsets = [0, 64], sizes = [16, 128], strides = [1, 1]} : vector<16x256xf32> to vector<16x128xf32>
    %107 = arith.maximumf %105, %106 : vector<16x128xf32>
    %108 = vector.extract_strided_slice %0 {offsets = [0, 65], sizes = [16, 128], strides = [1, 1]} : vector<16x256xf32> to vector<16x128xf32>
    %109 = arith.maximumf %107, %108 : vector<16x128xf32>
    %c0_77 = arith.constant 0 : index
    %c0_78 = arith.constant 0 : index
    %110 = vector.load %arg19[%c0_77, %c0_78] : memref<1x128xf32, #tpu.memory_space<vmem>>, vector<1x128xf32>
    %111 = vector.broadcast %110 : vector<1x128xf32> to vector<16x128xf32>
    %112 = arith.mulf %109, %111 : vector<16x128xf32>
    %c0_79 = arith.constant 0 : index
    %c0_80 = arith.constant 0 : index
    %113 = vector.load %arg12[%c0_79, %c0_80] : memref<16x16xf32, #tpu.memory_space<vmem>>, vector<16x16xf32>
    %cst_81 = arith.constant dense<0.000000e+00> : vector<16x128xf32>
    %114 = tpu.matmul %113, %112, %cst_81 {dimension_numbers = #tpu.dot_dimension_numbers<[1], [0], [0], [1], [0, 0, 1, 1], [], []>} : vector<16x16xf32>, vector<16x128xf32>, vector<16x128xf32> -> vector<16x128xf32>
    %c0_82 = arith.constant 0 : index
    %c0_83 = arith.constant 0 : index
    %115 = vector.load %arg13[%c0_82, %c0_83] : memref<16x1xf32, #tpu.memory_space<vmem>>, vector<16x1xf32>
    %116 = vector.broadcast %115 : vector<16x1xf32> to vector<16x128xf32>
    %117 = arith.addf %114, %116 : vector<16x128xf32>
    %cst_84 = arith.constant 0.000000e+00 : f32
    %118 = vector.broadcast %cst_84 : f32 to vector<16x128xf32>
    %119 = arith.maximumf %117, %118 : vector<16x128xf32>
    %c0_85 = arith.constant 0 : index
    %c0_86 = arith.constant 0 : index
    %120 = vector.load %arg20[%c0_85, %c0_86] : memref<128x2xf32, #tpu.memory_space<vmem>>, vector<128x2xf32>
    %cst_87 = arith.constant dense<0.000000e+00> : vector<16x2xf32>
    %121 = tpu.matmul %65, %120, %cst_87 {dimension_numbers = #tpu.dot_dimension_numbers<[1], [0], [0], [1], [0, 0, 1, 1], [], []>} : vector<16x128xf32>, vector<128x2xf32>, vector<16x2xf32> -> vector<16x2xf32>
    %cst_88 = arith.constant dense<0.000000e+00> : vector<16x2xf32>
    %122 = tpu.matmul %104, %120, %cst_88 {dimension_numbers = #tpu.dot_dimension_numbers<[1], [0], [0], [1], [0, 0, 1, 1], [], []>} : vector<16x128xf32>, vector<128x2xf32>, vector<16x2xf32> -> vector<16x2xf32>
    %cst_89 = arith.constant dense<0.000000e+00> : vector<16x2xf32>
    %123 = tpu.matmul %39, %120, %cst_89 {dimension_numbers = #tpu.dot_dimension_numbers<[1], [0], [0], [1], [0, 0, 1, 1], [], []>} : vector<16x128xf32>, vector<128x2xf32>, vector<16x2xf32> -> vector<16x2xf32>
    %cst_90 = arith.constant dense<0.000000e+00> : vector<16x2xf32>
    %124 = tpu.matmul %119, %120, %cst_90 {dimension_numbers = #tpu.dot_dimension_numbers<[1], [0], [0], [1], [0, 0, 1, 1], [], []>} : vector<16x128xf32>, vector<128x2xf32>, vector<16x2xf32> -> vector<16x2xf32>
    %125 = tpu.concatenate %121, %122, %123, %124 in 0 : vector<16x2xf32>, vector<16x2xf32>, vector<16x2xf32>, vector<16x2xf32> -> vector<64x2xf32>
    %cst_91 = arith.constant 6.250000e-02 : f32
    %126 = vector.broadcast %cst_91 : f32 to vector<64x2xf32>
    %127 = arith.mulf %125, %126 : vector<64x2xf32>
    %c0_92 = arith.constant 0 : index
    %c0_93 = arith.constant 0 : index
    %128 = vector.load %arg14[%c0_92, %c0_93] : memref<1x64xf32, #tpu.memory_space<vmem>>, vector<1x64xf32>
    %cst_94 = arith.constant dense<0.000000e+00> : vector<1x2xf32>
    %129 = tpu.matmul %128, %127, %cst_94 {dimension_numbers = #tpu.dot_dimension_numbers<[1], [0], [0], [1], [0, 0, 1, 1], [], []>} : vector<1x64xf32>, vector<64x2xf32>, vector<1x2xf32> -> vector<1x2xf32>
    %cst_95 = arith.constant 0.000000e+00 : f32
    %130 = vector.broadcast %cst_95 : f32 to vector<1x2xf32>
    %131 = arith.maximumf %129, %130 : vector<1x2xf32>
    %c0_96 = arith.constant 0 : index
    %c0_97 = arith.constant 0 : index
    %132 = vector.load %arg15[%c0_96, %c0_97] : memref<64x1xf32, #tpu.memory_space<vmem>>, vector<64x1xf32>
    %cst_98 = arith.constant dense<0.000000e+00> : vector<64x2xf32>
    %133 = tpu.matmul %132, %131, %cst_98 {dimension_numbers = #tpu.dot_dimension_numbers<[1], [0], [0], [1], [0, 0, 1, 1], [], []>} : vector<64x1xf32>, vector<1x2xf32>, vector<64x2xf32> -> vector<64x2xf32>
    %134 = arith.negf %133 : vector<64x2xf32>
    %135 = math.exp %134 : vector<64x2xf32>
    %cst_99 = arith.constant 1.000000e+00 : f32
    %136 = vector.broadcast %cst_99 : f32 to vector<64x2xf32>
    %137 = arith.addf %136, %135 : vector<64x2xf32>
    %138 = arith.divf %136, %137 : vector<64x2xf32>
    %c0_100 = arith.constant 0 : index
    %c0_101 = arith.constant 0 : index
    %139 = vector.load %arg21[%c0_100, %c0_101] : memref<2x128xf32, #tpu.memory_space<vmem>>, vector<2x128xf32>
    %cst_102 = arith.constant dense<0.000000e+00> : vector<64x128xf32>
    %140 = tpu.matmul %138, %139, %cst_102 {dimension_numbers = #tpu.dot_dimension_numbers<[1], [0], [0], [1], [0, 0, 1, 1], [], []>} : vector<64x2xf32>, vector<2x128xf32>, vector<64x128xf32> -> vector<64x128xf32>
    %c0_103 = arith.constant 0 : index
    %c0_104 = arith.constant 0 : index
    %c0_105 = arith.constant 0 : index
    %141 = vector.load %arg16[%c0_103, %c0_104, %c0_105] : memref<4x8x16xf32, #tpu.memory_space<vmem>>, vector<1x8x16xf32>
    %142 = vector.shape_cast %141 : vector<1x8x16xf32> to vector<8x16xf32>
    %143 = vector.extract_strided_slice %140 {offsets = [0, 0], sizes = [16, 128], strides = [1, 1]} : vector<64x128xf32> to vector<16x128xf32>
    %144 = arith.mulf %65, %143 : vector<16x128xf32>
    %cst_106 = arith.constant dense<0.000000e+00> : vector<8x128xf32>
    %145 = tpu.matmul %142, %144, %cst_106 {dimension_numbers = #tpu.dot_dimension_numbers<[1], [0], [0], [1], [0, 0, 1, 1], [], []>} : vector<8x16xf32>, vector<16x128xf32>, vector<8x128xf32> -> vector<8x128xf32>
    %c1_107 = arith.constant 1 : index
    %c0_108 = arith.constant 0 : index
    %c0_109 = arith.constant 0 : index
    %146 = vector.load %arg16[%c1_107, %c0_108, %c0_109] : memref<4x8x16xf32, #tpu.memory_space<vmem>>, vector<1x8x16xf32>
    %147 = vector.shape_cast %146 : vector<1x8x16xf32> to vector<8x16xf32>
    %148 = vector.extract_strided_slice %140 {offsets = [16, 0], sizes = [16, 128], strides = [1, 1]} : vector<64x128xf32> to vector<16x128xf32>
    %149 = arith.mulf %104, %148 : vector<16x128xf32>
    %cst_110 = arith.constant dense<0.000000e+00> : vector<8x128xf32>
    %150 = tpu.matmul %147, %149, %cst_110 {dimension_numbers = #tpu.dot_dimension_numbers<[1], [0], [0], [1], [0, 0, 1, 1], [], []>} : vector<8x16xf32>, vector<16x128xf32>, vector<8x128xf32> -> vector<8x128xf32>
    %151 = arith.addf %145, %150 : vector<8x128xf32>
    %c2_111 = arith.constant 2 : index
    %c0_112 = arith.constant 0 : index
    %c0_113 = arith.constant 0 : index
    %152 = vector.load %arg16[%c2_111, %c0_112, %c0_113] : memref<4x8x16xf32, #tpu.memory_space<vmem>>, vector<1x8x16xf32>
    %153 = vector.shape_cast %152 : vector<1x8x16xf32> to vector<8x16xf32>
    %154 = vector.extract_strided_slice %140 {offsets = [32, 0], sizes = [16, 128], strides = [1, 1]} : vector<64x128xf32> to vector<16x128xf32>
    %155 = arith.mulf %39, %154 : vector<16x128xf32>
    %cst_114 = arith.constant dense<0.000000e+00> : vector<8x128xf32>
    %156 = tpu.matmul %153, %155, %cst_114 {dimension_numbers = #tpu.dot_dimension_numbers<[1], [0], [0], [1], [0, 0, 1, 1], [], []>} : vector<8x16xf32>, vector<16x128xf32>, vector<8x128xf32> -> vector<8x128xf32>
    %157 = arith.addf %151, %156 : vector<8x128xf32>
    %c3_115 = arith.constant 3 : index
    %c0_116 = arith.constant 0 : index
    %c0_117 = arith.constant 0 : index
    %158 = vector.load %arg16[%c3_115, %c0_116, %c0_117] : memref<4x8x16xf32, #tpu.memory_space<vmem>>, vector<1x8x16xf32>
    %159 = vector.shape_cast %158 : vector<1x8x16xf32> to vector<8x16xf32>
    %160 = vector.extract_strided_slice %140 {offsets = [48, 0], sizes = [16, 128], strides = [1, 1]} : vector<64x128xf32> to vector<16x128xf32>
    %161 = arith.mulf %119, %160 : vector<16x128xf32>
    %cst_118 = arith.constant dense<0.000000e+00> : vector<8x128xf32>
    %162 = tpu.matmul %159, %161, %cst_118 {dimension_numbers = #tpu.dot_dimension_numbers<[1], [0], [0], [1], [0, 0, 1, 1], [], []>} : vector<8x16xf32>, vector<16x128xf32>, vector<8x128xf32> -> vector<8x128xf32>
    %163 = arith.addf %157, %162 : vector<8x128xf32>
    %c0_119 = arith.constant 0 : index
    %c0_120 = arith.constant 0 : index
    %164 = vector.load %arg17[%c0_119, %c0_120] : memref<8x1xf32, #tpu.memory_space<vmem>>, vector<8x1xf32>
    %165 = vector.broadcast %164 : vector<8x1xf32> to vector<8x128xf32>
    %166 = arith.addf %163, %165 : vector<8x128xf32>
    %c0_121 = arith.constant 0 : index
    %c0_122 = arith.constant 0 : index
    %167 = vector.load %arg22[%c0_121, %c0_122] : memref<8x128xf32, #tpu.memory_space<vmem>>, vector<8x128xf32>
    tpu.vector_store %arg22[%c0_121, %c0_122], %166 {strides = array<i32>} : memref<8x128xf32, #tpu.memory_space<vmem>>, vector<8x128xf32>,
    return
  }
  func.func @transform_0(%arg0: i32) -> (i32, i32) {
    %c0_i32 = arith.constant 0 : i32
    %c0_i32_0 = arith.constant 0 : i32
    return %c0_i32, %arg0 : i32, i32
  }
  func.func @transform_1(%arg0: i32) -> (i32, i32) {
    %c0_i32 = arith.constant 0 : i32
    %c0_i32_0 = arith.constant 0 : i32
    %c0_i32_1 = arith.constant 0 : i32
    return %c0_i32, %c0_i32_0 : i32, i32
  }
  func.func @transform_2(%arg0: i32) -> (i32, i32) {
    %c0_i32 = arith.constant 0 : i32
    %c0_i32_0 = arith.constant 0 : i32
    %c0_i32_1 = arith.constant 0 : i32
    return %c0_i32, %c0_i32_0 : i32, i32
  }
  func.func @transform_3(%arg0: i32) -> (i32, i32) {
    %c0_i32 = arith.constant 0 : i32
    %c0_i32_0 = arith.constant 0 : i32
    %c0_i32_1 = arith.constant 0 : i32
    return %c0_i32, %c0_i32_0 : i32, i32
  }
  func.func @transform_4(%arg0: i32) -> (i32, i32) {
    %c0_i32 = arith.constant 0 : i32
    %c0_i32_0 = arith.constant 0 : i32
    %c0_i32_1 = arith.constant 0 : i32
    return %c0_i32, %c0_i32_0 : i32, i32
  }
  func.func @transform_5(%arg0: i32) -> (i32, i32, i32) {
    %c0_i32 = arith.constant 0 : i32
    %c0_i32_0 = arith.constant 0 : i32
    %c0_i32_1 = arith.constant 0 : i32
    %c0_i32_2 = arith.constant 0 : i32
    return %c0_i32, %c0_i32_0, %c0_i32_1 : i32, i32, i32
  }
  func.func @transform_6(%arg0: i32) -> (i32, i32) {
    %c0_i32 = arith.constant 0 : i32
    %c0_i32_0 = arith.constant 0 : i32
    %c0_i32_1 = arith.constant 0 : i32
    return %c0_i32, %c0_i32_0 : i32, i32
  }
  func.func @transform_7(%arg0: i32) -> (i32, i32, i32) {
    %c0_i32 = arith.constant 0 : i32
    %c0_i32_0 = arith.constant 0 : i32
    %c0_i32_1 = arith.constant 0 : i32
    %c0_i32_2 = arith.constant 0 : i32
    return %c0_i32, %c0_i32_0, %c0_i32_1 : i32, i32, i32
  }
  func.func @transform_8(%arg0: i32) -> (i32, i32) {
    %c0_i32 = arith.constant 0 : i32
    %c0_i32_0 = arith.constant 0 : i32
    %c0_i32_1 = arith.constant 0 : i32
    return %c0_i32, %c0_i32_0 : i32, i32
  }
  func.func @transform_9(%arg0: i32) -> (i32, i32, i32) {
    %c0_i32 = arith.constant 0 : i32
    %c0_i32_0 = arith.constant 0 : i32
    %c0_i32_1 = arith.constant 0 : i32
    %c0_i32_2 = arith.constant 0 : i32
    return %c0_i32, %c0_i32_0, %c0_i32_1 : i32, i32, i32
  }
  func.func @transform_10(%arg0: i32) -> (i32, i32) {
    %c0_i32 = arith.constant 0 : i32
    %c0_i32_0 = arith.constant 0 : i32
    %c0_i32_1 = arith.constant 0 : i32
    return %c0_i32, %c0_i32_0 : i32, i32
  }
  func.func @transform_11(%arg0: i32) -> (i32, i32) {
    %c0_i32 = arith.constant 0 : i32
    %c0_i32_0 = arith.constant 0 : i32
    %c0_i32_1 = arith.constant 0 : i32
    return %c0_i32, %c0_i32_0 : i32, i32
  }
  func.func @transform_12(%arg0: i32) -> (i32, i32) {
    %c0_i32 = arith.constant 0 : i32
    %c0_i32_0 = arith.constant 0 : i32
    %c0_i32_1 = arith.constant 0 : i32
    return %c0_i32, %c0_i32_0 : i32, i32
  }
  func.func @transform_13(%arg0: i32) -> (i32, i32) {
    %c0_i32 = arith.constant 0 : i32
    %c0_i32_0 = arith.constant 0 : i32
    %c0_i32_1 = arith.constant 0 : i32
    return %c0_i32, %c0_i32_0 : i32, i32
  }
  func.func @transform_14(%arg0: i32) -> (i32, i32) {
    %c0_i32 = arith.constant 0 : i32
    %c0_i32_0 = arith.constant 0 : i32
    %c0_i32_1 = arith.constant 0 : i32
    return %c0_i32, %c0_i32_0 : i32, i32
  }
  func.func @transform_15(%arg0: i32) -> (i32, i32, i32) {
    %c0_i32 = arith.constant 0 : i32
    %c0_i32_0 = arith.constant 0 : i32
    %c0_i32_1 = arith.constant 0 : i32
    %c0_i32_2 = arith.constant 0 : i32
    return %c0_i32, %c0_i32_0, %c0_i32_1 : i32, i32, i32
  }
  func.func @transform_16(%arg0: i32) -> (i32, i32) {
    %c0_i32 = arith.constant 0 : i32
    %c0_i32_0 = arith.constant 0 : i32
    %c0_i32_1 = arith.constant 0 : i32
    return %c0_i32, %c0_i32_0 : i32, i32
  }
  func.func @transform_17(%arg0: i32) -> (i32, i32) {
    %c0_i32 = arith.constant 0 : i32
    %c0_i32_0 = arith.constant 0 : i32
    %c0_i32_1 = arith.constant 0 : i32
    return %c0_i32, %c0_i32_0 : i32, i32
  }
  func.func @transform_18(%arg0: i32) -> (i32, i32) {
    %c0_i32 = arith.constant 0 : i32
    %c0_i32_0 = arith.constant 0 : i32
    %c0_i32_1 = arith.constant 0 : i32
    return %c0_i32, %c0_i32_0 : i32, i32
  }
  func.func @transform_19(%arg0: i32) -> (i32, i32) {
    %c0_i32 = arith.constant 0 : i32
    %c0_i32_0 = arith.constant 0 : i32
    %c0_i32_1 = arith.constant 0 : i32
    return %c0_i32, %c0_i32_0 : i32, i32
  }
  func.func @transform_20(%arg0: i32) -> (i32, i32) {
    %c0_i32 = arith.constant 0 : i32
    %c0_i32_0 = arith.constant 0 : i32
    %c0_i32_1 = arith.constant 0 : i32
    return %c0_i32, %c0_i32_0 : i32, i32
  }
  func.func @transform_21(%arg0: i32) -> (i32, i32) {
    %c0_i32 = arith.constant 0 : i32
    %c0_i32_0 = arith.constant 0 : i32
    return %c0_i32, %arg0 : i32, i32
  }
}

</mosaic_0001>

<llo_original>
// kernel: tpu_custom_call.1
$region0: #{tpu_custom_call.1}
  #allocation0 [shape = 'u32[]', space=smem, size = 0x4, offset = 0x4, fixed_abs, tag = 'smem constant byte address 0x4 - core index']
  #allocation1 [shape = 'u32[144,128]{1,0:T(1,128)}', space=vmem, size = 0x12000, scoped, tag = 'internal scratch']
  %s0 = inlined_call_operand.vmem [shape: f32[16,512], index: 0, kind: input, shape index: {}]
  %s1 = inlined_call_operand.hbm [shape: f32[16,16], index: 1, kind: input, shape index: {}]
  %s2 = inlined_call_operand.vmem [shape: f32[16,1], index: 2, kind: input, shape index: {}]
  %s3 = inlined_call_operand.hbm [shape: f32[16,16], index: 3, kind: input, shape index: {}]
  %s4 = inlined_call_operand.vmem [shape: f32[16,1], index: 4, kind: input, shape index: {}]
  %s5 = inlined_call_operand.vmem [shape: f32[3,16,16], index: 5, kind: input, shape index: {}]
  %s6 = inlined_call_operand.vmem [shape: f32[16,1], index: 6, kind: input, shape index: {}]
  %s7 = inlined_call_operand.vmem [shape: f32[5,16,16], index: 7, kind: input, shape index: {}]
  %s8 = inlined_call_operand.vmem [shape: f32[16,1], index: 8, kind: input, shape index: {}]
  %s9 = inlined_call_operand.vmem [shape: f32[7,16,16], index: 9, kind: input, shape index: {}]
  %s10 = inlined_call_operand.vmem [shape: f32[16,1], index: 10, kind: input, shape index: {}]
  %s11 = inlined_call_operand.vmem [shape: f32[16,16], index: 11, kind: input, shape index: {}]
  %s12 = inlined_call_operand.vmem [shape: f32[16,1], index: 12, kind: input, shape index: {}]
  %s13 = inlined_call_operand.vmem [shape: f32[1,64], index: 13, kind: input, shape index: {}]
  %s14 = inlined_call_operand.vmem [shape: f32[64,1], index: 14, kind: input, shape index: {}]
  %s15 = inlined_call_operand.hbm [shape: f32[4,8,16], index: 15, kind: input, shape index: {}]
  %s16 = inlined_call_operand.vmem [shape: f32[8,1], index: 16, kind: input, shape index: {}]
  %s17 = inlined_call_operand.vmem [shape: f32[1,256], index: 17, kind: input, shape index: {}]
  %s18 = inlined_call_operand.vmem [shape: f32[1,128], index: 18, kind: input, shape index: {}]
  %s19 = inlined_call_operand.vmem [shape: f32[128,2], index: 19, kind: input, shape index: {}]
  %s20 = inlined_call_operand.vmem [shape: f32[2,128], index: 20, kind: input, shape index: {}]
  %s21 = inlined_call_operand.hbm [shape: f32[8,256], index: 21, kind: output, shape index: {}]
  %s22 = sld [smem:[#allocation0]]
  $region152: #{tpu_custom_call.1} parent=0
    _
  %s24 = ssub.s32 1, %s22
  %s25 = scalar_select 0, %s24, %s22
  $region1: #{tpu_custom_call.1} parent=0
    #allocation2 [shape = 'u8[32768]{0}', space=vmem, size = 0x8000, scoped, tag = 'input window, operand 0']
    #allocation3 [shape = 'u8[8192]{0}', space=vmem, size = 0x2000, scoped, tag = 'input window, operand 1, single buffered']
    #allocation4 [shape = 's32[2]{0}', space=sflag, size = 0x8, scoped, tag = 'scoped memory for tpu_custom_call.1']
    #allocation5 [shape = 's32[2]{0}', space=sflag, size = 0x8, scoped, tag = 'scoped memory for tpu_custom_call.1']
    #allocation6 [shape = 'u8[8192]{0}', space=vmem, size = 0x2000, scoped, tag = 'input window, operand 3, single buffered']
    #allocation7 [shape = 's32[1]{0}', space=sflag, size = 0x4, scoped, tag = 'scoped memory for tpu_custom_call.1']
    #allocation8 [shape = 'u8[16384]{0}', space=vmem, size = 0x4000, scoped, tag = 'input window, operand 15, single buffered']
    #allocation9 [shape = 'u8[8192]{0}', space=vmem, size = 0x2000, scoped, tag = 'output window, operand 0']
    %26 = vsyncpa [#allocation4], 0
    %27 = vsyncpa [#allocation7], 0
    %28 = vsyncpa [#allocation5], 0
    %s29 = scalar_lea.sflag [#allocation5], 1
    %30 = vsyncpa %s29, 0
    loop: start=0, step=1, limit=4
    $region2: #{tpu_custom_call.1} parent=1 // loop_pre_header
      _
    $region3: #{tpu_custom_call.1} parent=1 // loop_header
      %s32 = sphi 0, %s36
      %p33 = scmp.ge.s32.totalorder %s32, 4
      %s42 = sphi 0, %s44
      %s45 = sphi 0, %s42
      %s46 = sphi 0, %s45
      %s62 = sphi 0, %s46
      %s66 = sphi 0, %s66
      %s68 = sphi 0, %s66
      %s69 = sphi 0, %s68
      %s83 = sphi 0, %s69
      %s87 = sphi 0, %s87
      %s89 = sphi 0, %s87
      %s90 = sphi 0, %s89
      %s104 = sphi 0, %s90
      %s108 = sphi 0, %s108
      %s110 = sphi 0, %s108
      %s111 = sphi 0, %s110
      %s125 = sphi 0, %s111
      %s129 = sphi 0, %s129
      %s131 = sphi 0, %s129
      %s132 = sphi 0, %s131
      %s146 = sphi 0, %s132
      %s150 = sphi 0, %s150
      %s152 = sphi 0, %s150
      %s153 = sphi 0, %s152
      %s167 = sphi 0, %s153
      %s171 = sphi 0, %s171
      %s173 = sphi 0, %s171
      %s174 = sphi 0, %s173
      %s188 = sphi 0, %s174
      %s192 = sphi 0, %s192
      %s194 = sphi 0, %s192
      %s195 = sphi 0, %s194
      %s209 = sphi 0, %s195
      %s213 = sphi 0, %s213
      %s215 = sphi 0, %s213
      %s216 = sphi 0, %s215
      %s230 = sphi 0, %s216
      %s234 = sphi 0, %s234
      %s236 = sphi 0, %s234
      %s237 = sphi 0, %s236
      %s251 = sphi 0, %s237
      %s255 = sphi 0, %s255
      %s257 = sphi 0, %s255
      %s258 = sphi 0, %s257
      %s272 = sphi 0, %s258
      %s276 = sphi 0, %s276
      %s278 = sphi 0, %s276
      %s279 = sphi 0, %s278
      %s293 = sphi 0, %s279
      %s297 = sphi 0, %s297
      %s299 = sphi 0, %s297
      %s300 = sphi 0, %s299
      %s314 = sphi 0, %s300
      %s318 = sphi 0, %s318
      %s320 = sphi 0, %s318
      %s321 = sphi 0, %s320
      %s335 = sphi 0, %s321
      %s339 = sphi 0, %s339
      %s341 = sphi 0, %s339
      %s342 = sphi 0, %s341
      %s356 = sphi 0, %s342
      %s360 = sphi 0, %s360
      %s362 = sphi 0, %s360
      %s363 = sphi 0, %s362
      %s377 = sphi 0, %s363
      %s381 = sphi 0, %s381
      %s383 = sphi 0, %s381
      %s384 = sphi 0, %s383
      %s398 = sphi 0, %s384
      %s402 = sphi 0, %s402
      %s404 = sphi 0, %s402
      %s405 = sphi 0, %s404
      %s419 = sphi 0, %s405
      %s423 = sphi 0, %s423
      %s425 = sphi 0, %s423
      %s426 = sphi 0, %s425
      %s440 = sphi 0, %s426
      %s444 = sphi 0, %s444
      %s446 = sphi 0, %s444
      %s447 = sphi 0, %s446
      %s461 = sphi 0, %s447
      %s465 = sphi 0, %s465
      %s467 = sphi 0, %s465
      %s468 = sphi 0, %s467
      %s482 = sphi 0, %s468
      %s488 = sphi 0, %s490
      %s491 = sphi 0, %s488
      %s492 = sphi 0, %s491
      %s508 = sphi 0, %s492
    $region4: #{tpu_custom_call.1} parent=1 // loop_header_branch
      %35 = sbr.rel (%p33) target = $region8
    $region5: #{tpu_custom_call.1} parent=1 // loop_body
      %s37 = ssub.s32 %s32, 1
      %s38 = ssub.s32 %s32, 2
      %s39 = sadd.s32 %s32, 1
      %s40 = ssub.s32 %s32, %s39
      %p41 = scmp.eq.s32.totalorder %s40, 0
      %s43 = sadd.s32 %s42, 1
      %s44 = scalar_select %p41, %s42, %s43
      %p47 = pneg %p41
      %p48 = scmp.eq.s32.totalorder %s32, 1
      %p49 = por %p47, %p48
      %p50 = scmp.ne.s32.totalorder %s42, %s45
      %p51 = scmp.eq.s32.totalorder %s32, 0
      %p52 = por %p50, %p51
      %p53 = scmp.ne.s32.totalorder %s42, %s45
      %p54 = scmp.eq.s32.totalorder %s37, 1
      %p55 = por %p53, %p54
      %p56 = scmp.ne.s32.totalorder %s45, %s46
      %p57 = scmp.eq.s32.totalorder %s37, 0
      %p58 = por %p56, %p57
      %p59 = scmp.ne.s32.totalorder %s45, %s46
      %p60 = scmp.eq.s32.totalorder %s38, 1
      %p61 = por %p59, %p60
      %p63 = scmp.ne.s32.totalorder %s46, %s62
      %p64 = scmp.eq.s32.totalorder %s38, 0
      %p65 = por %p63, %p64
      %s67 = sadd.s32 %s66, 1
      %p70 = scmp.eq.s32.totalorder %s32, 1
      %p71 = scmp.ne.s32.totalorder %s66, %s68
      %p72 = scmp.eq.s32.totalorder %s32, 0
      %p73 = por %p71, %p72
      %p74 = scmp.ne.s32.totalorder %s66, %s68
      %p75 = scmp.eq.s32.totalorder %s37, 1
      %p76 = por %p74, %p75
      %p77 = scmp.ne.s32.totalorder %s68, %s69
      %p78 = scmp.eq.s32.totalorder %s37, 0
      %p79 = por %p77, %p78
      %p80 = scmp.ne.s32.totalorder %s68, %s69
      %p81 = scmp.eq.s32.totalorder %s38, 1
      %p82 = por %p80, %p81
      %p84 = scmp.ne.s32.totalorder %s69, %s83
      %p85 = scmp.eq.s32.totalorder %s38, 0
      %p86 = por %p84, %p85
      %s88 = sadd.s32 %s87, 1
      %p91 = scmp.eq.s32.totalorder %s32, 1
      %p92 = scmp.ne.s32.totalorder %s87, %s89
      %p93 = scmp.eq.s32.totalorder %s32, 0
      %p94 = por %p92, %p93
      %p95 = scmp.ne.s32.totalorder %s87, %s89
      %p96 = scmp.eq.s32.totalorder %s37, 1
      %p97 = por %p95, %p96
      %p98 = scmp.ne.s32.totalorder %s89, %s90
      %p99 = scmp.eq.s32.totalorder %s37, 0
      %p100 = por %p98, %p99
      %p101 = scmp.ne.s32.totalorder %s89, %s90
      %p102 = scmp.eq.s32.totalorder %s38, 1
      %p103 = por %p101, %p102
      %p105 = scmp.ne.s32.totalorder %s90, %s104
      %p106 = scmp.eq.s32.totalorder %s38, 0
      %p107 = por %p105, %p106
      %s109 = sadd.s32 %s108, 1
      %p112 = scmp.eq.s32.totalorder %s32, 1
      %p113 = scmp.ne.s32.totalorder %s108, %s110
      %p114 = scmp.eq.s32.totalorder %s32, 0
      %p115 = por %p113, %p114
      %p116 = scmp.ne.s32.totalorder %s108, %s110
      %p117 = scmp.eq.s32.totalorder %s37, 1
      %p118 = por %p116, %p117
      %p119 = scmp.ne.s32.totalorder %s110, %s111
      %p120 = scmp.eq.s32.totalorder %s37, 0
      %p121 = por %p119, %p120
      %p122 = scmp.ne.s32.totalorder %s110, %s111
      %p123 = scmp.eq.s32.totalorder %s38, 1
      %p124 = por %p122, %p123
      %p126 = scmp.ne.s32.totalorder %s111, %s125
      %p127 = scmp.eq.s32.totalorder %s38, 0
      %p128 = por %p126, %p127
      %s130 = sadd.s32 %s129, 1
      %p133 = scmp.eq.s32.totalorder %s32, 1
      %p134 = scmp.ne.s32.totalorder %s129, %s131
      %p135 = scmp.eq.s32.totalorder %s32, 0
      %p136 = por %p134, %p135
      %p137 = scmp.ne.s32.totalorder %s129, %s131
      %p138 = scmp.eq.s32.totalorder %s37, 1
      %p139 = por %p137, %p138
      %p140 = scmp.ne.s32.totalorder %s131, %s132
      %p141 = scmp.eq.s32.totalorder %s37, 0
      %p142 = por %p140, %p141
      %p143 = scmp.ne.s32.totalorder %s131, %s132
      %p144 = scmp.eq.s32.totalorder %s38, 1
      %p145 = por %p143, %p144
      %p147 = scmp.ne.s32.totalorder %s132, %s146
      %p148 = scmp.eq.s32.totalorder %s38, 0
      %p149 = por %p147, %p148
      %s151 = sadd.s32 %s150, 1
      %p154 = scmp.eq.s32.totalorder %s32, 1
      %p155 = scmp.ne.s32.totalorder %s150, %s152
      %p156 = scmp.eq.s32.totalorder %s32, 0
      %p157 = por %p155, %p156
      %p158 = scmp.ne.s32.totalorder %s150, %s152
      %p159 = scmp.eq.s32.totalorder %s37, 1
      %p160 = por %p158, %p159
      %p161 = scmp.ne.s32.totalorder %s152, %s153
      %p162 = scmp.eq.s32.totalorder %s37, 0
      %p163 = por %p161, %p162
      %p164 = scmp.ne.s32.totalorder %s152, %s153
      %p165 = scmp.eq.s32.totalorder %s38, 1
      %p166 = por %p164, %p165
      %p168 = scmp.ne.s32.totalorder %s153, %s167
      %p169 = scmp.eq.s32.totalorder %s38, 0
      %p170 = por %p168, %p169
      %s172 = sadd.s32 %s171, 1
      %p175 = scmp.eq.s32.totalorder %s32, 1
      %p176 = scmp.ne.s32.totalorder %s171, %s173
      %p177 = scmp.eq.s32.totalorder %s32, 0
      %p178 = por %p176, %p177
      %p179 = scmp.ne.s32.totalorder %s171, %s173
      %p180 = scmp.eq.s32.totalorder %s37, 1
      %p181 = por %p179, %p180
      %p182 = scmp.ne.s32.totalorder %s173, %s174
      %p183 = scmp.eq.s32.totalorder %s37, 0
      %p184 = por %p182, %p183
      %p185 = scmp.ne.s32.totalorder %s173, %s174
      %p186 = scmp.eq.s32.totalorder %s38, 1
      %p187 = por %p185, %p186
      %p189 = scmp.ne.s32.totalorder %s174, %s188
      %p190 = scmp.eq.s32.totalorder %s38, 0
      %p191 = por %p189, %p190
      %s193 = sadd.s32 %s192, 1
      %p196 = scmp.eq.s32.totalorder %s32, 1
      %p197 = scmp.ne.s32.totalorder %s192, %s194
      %p198 = scmp.eq.s32.totalorder %s32, 0
      %p199 = por %p197, %p198
      %p200 = scmp.ne.s32.totalorder %s192, %s194
      %p201 = scmp.eq.s32.totalorder %s37, 1
      %p202 = por %p200, %p201
      %p203 = scmp.ne.s32.totalorder %s194, %s195
      %p204 = scmp.eq.s32.totalorder %s37, 0
      %p205 = por %p203, %p204
      %p206 = scmp.ne.s32.totalorder %s194, %s195
      %p207 = scmp.eq.s32.totalorder %s38, 1
      %p208 = por %p206, %p207
      %p210 = scmp.ne.s32.totalorder %s195, %s209
      %p211 = scmp.eq.s32.totalorder %s38, 0
      %p212 = por %p210, %p211
      %s214 = sadd.s32 %s213, 1
      %p217 = scmp.eq.s32.totalorder %s32, 1
      %p218 = scmp.ne.s32.totalorder %s213, %s215
      %p219 = scmp.eq.s32.totalorder %s32, 0
      %p220 = por %p218, %p219
      %p221 = scmp.ne.s32.totalorder %s213, %s215
      %p222 = scmp.eq.s32.totalorder %s37, 1
      %p223 = por %p221, %p222
      %p224 = scmp.ne.s32.totalorder %s215, %s216
      %p225 = scmp.eq.s32.totalorder %s37, 0
      %p226 = por %p224, %p225
      %p227 = scmp.ne.s32.totalorder %s215, %s216
      %p228 = scmp.eq.s32.totalorder %s38, 1
      %p229 = por %p227, %p228
      %p231 = scmp.ne.s32.totalorder %s216, %s230
      %p232 = scmp.eq.s32.totalorder %s38, 0
      %p233 = por %p231, %p232
      %s235 = sadd.s32 %s234, 1
      %p238 = scmp.eq.s32.totalorder %s32, 1
      %p239 = scmp.ne.s32.totalorder %s234, %s236
      %p240 = scmp.eq.s32.totalorder %s32, 0
      %p241 = por %p239, %p240
      %p242 = scmp.ne.s32.totalorder %s234, %s236
      %p243 = scmp.eq.s32.totalorder %s37, 1
      %p244 = por %p242, %p243
      %p245 = scmp.ne.s32.totalorder %s236, %s237
      %p246 = scmp.eq.s32.totalorder %s37, 0
      %p247 = por %p245, %p246
      %p248 = scmp.ne.s32.totalorder %s236, %s237
      %p249 = scmp.eq.s32.totalorder %s38, 1
      %p250 = por %p248, %p249
      %p252 = scmp.ne.s32.totalorder %s237, %s251
      %p253 = scmp.eq.s32.totalorder %s38, 0
      %p254 = por %p252, %p253
      %s256 = sadd.s32 %s255, 1
      %p259 = scmp.eq.s32.totalorder %s32, 1
      %p260 = scmp.ne.s32.totalorder %s255, %s257
      %p261 = scmp.eq.s32.totalorder %s32, 0
      %p262 = por %p260, %p261
      %p263 = scmp.ne.s32.totalorder %s255, %s257
      %p264 = scmp.eq.s32.totalorder %s37, 1
      %p265 = por %p263, %p264
      %p266 = scmp.ne.s32.totalorder %s257, %s258
      %p267 = scmp.eq.s32.totalorder %s37, 0
      %p268 = por %p266, %p267
      %p269 = scmp.ne.s32.totalorder %s257, %s258
      %p270 = scmp.eq.s32.totalorder %s38, 1
      %p271 = por %p269, %p270
      %p273 = scmp.ne.s32.totalorder %s258, %s272
      %p274 = scmp.eq.s32.totalorder %s38, 0
      %p275 = por %p273, %p274
      %s277 = sadd.s32 %s276, 1
      %p280 = scmp.eq.s32.totalorder %s32, 1
      %p281 = scmp.ne.s32.totalorder %s276, %s278
      %p282 = scmp.eq.s32.totalorder %s32, 0
      %p283 = por %p281, %p282
      %p284 = scmp.ne.s32.totalorder %s276, %s278
      %p285 = scmp.eq.s32.totalorder %s37, 1
      %p286 = por %p284, %p285
      %p287 = scmp.ne.s32.totalorder %s278, %s279
      %p288 = scmp.eq.s32.totalorder %s37, 0
      %p289 = por %p287, %p288
      %p290 = scmp.ne.s32.totalorder %s278, %s279
      %p291 = scmp.eq.s32.totalorder %s38, 1
      %p292 = por %p290, %p291
      %p294 = scmp.ne.s32.totalorder %s279, %s293
      %p295 = scmp.eq.s32.totalorder %s38, 0
      %p296 = por %p294, %p295
      %s298 = sadd.s32 %s297, 1
      %p301 = scmp.eq.s32.totalorder %s32, 1
      %p302 = scmp.ne.s32.totalorder %s297, %s299
      %p303 = scmp.eq.s32.totalorder %s32, 0
      %p304 = por %p302, %p303
      %p305 = scmp.ne.s32.totalorder %s297, %s299
      %p306 = scmp.eq.s32.totalorder %s37, 1
      %p307 = por %p305, %p306
      %p308 = scmp.ne.s32.totalorder %s299, %s300
      %p309 = scmp.eq.s32.totalorder %s37, 0
      %p310 = por %p308, %p309
      %p311 = scmp.ne.s32.totalorder %s299, %s300
      %p312 = scmp.eq.s32.totalorder %s38, 1
      %p313 = por %p311, %p312
      %p315 = scmp.ne.s32.totalorder %s300, %s314
      %p316 = scmp.eq.s32.totalorder %s38, 0
      %p317 = por %p315, %p316
      %s319 = sadd.s32 %s318, 1
      %p322 = scmp.eq.s32.totalorder %s32, 1
      %p323 = scmp.ne.s32.totalorder %s318, %s320
      %p324 = scmp.eq.s32.totalorder %s32, 0
      %p325 = por %p323, %p324
      %p326 = scmp.ne.s32.totalorder %s318, %s320
      %p327 = scmp.eq.s32.totalorder %s37, 1
      %p328 = por %p326, %p327
      %p329 = scmp.ne.s32.totalorder %s320, %s321
      %p330 = scmp.eq.s32.totalorder %s37, 0
      %p331 = por %p329, %p330
      %p332 = scmp.ne.s32.totalorder %s320, %s321
      %p333 = scmp.eq.s32.totalorder %s38, 1
      %p334 = por %p332, %p333
      %p336 = scmp.ne.s32.totalorder %s321, %s335
      %p337 = scmp.eq.s32.totalorder %s38, 0
      %p338 = por %p336, %p337
      %s340 = sadd.s32 %s339, 1
      %p343 = scmp.eq.s32.totalorder %s32, 1
      %p344 = scmp.ne.s32.totalorder %s339, %s341
      %p345 = scmp.eq.s32.totalorder %s32, 0
      %p346 = por %p344, %p345
      %p347 = scmp.ne.s32.totalorder %s339, %s341
      %p348 = scmp.eq.s32.totalorder %s37, 1
      %p349 = por %p347, %p348
      %p350 = scmp.ne.s32.totalorder %s341, %s342
      %p351 = scmp.eq.s32.totalorder %s37, 0
      %p352 = por %p350, %p351
      %p353 = scmp.ne.s32.totalorder %s341, %s342
      %p354 = scmp.eq.s32.totalorder %s38, 1
      %p355 = por %p353, %p354
      %p357 = scmp.ne.s32.totalorder %s342, %s356
      %p358 = scmp.eq.s32.totalorder %s38, 0
      %p359 = por %p357, %p358
      %s361 = sadd.s32 %s360, 1
      %p364 = scmp.eq.s32.totalorder %s32, 1
      %p365 = scmp.ne.s32.totalorder %s360, %s362
      %p366 = scmp.eq.s32.totalorder %s32, 0
      %p367 = por %p365, %p366
      %p368 = scmp.ne.s32.totalorder %s360, %s362
      %p369 = scmp.eq.s32.totalorder %s37, 1
      %p370 = por %p368, %p369
      %p371 = scmp.ne.s32.totalorder %s362, %s363
      %p372 = scmp.eq.s32.totalorder %s37, 0
      %p373 = por %p371, %p372
      %p374 = scmp.ne.s32.totalorder %s362, %s363
      %p375 = scmp.eq.s32.totalorder %s38, 1
      %p376 = por %p374, %p375
      %p378 = scmp.ne.s32.totalorder %s363, %s377
      %p379 = scmp.eq.s32.totalorder %s38, 0
      %p380 = por %p378, %p379
      %s382 = sadd.s32 %s381, 1
      %p385 = scmp.eq.s32.totalorder %s32, 1
      %p386 = scmp.ne.s32.totalorder %s381, %s383
      %p387 = scmp.eq.s32.totalorder %s32, 0
      %p388 = por %p386, %p387
      %p389 = scmp.ne.s32.totalorder %s381, %s383
      %p390 = scmp.eq.s32.totalorder %s37, 1
      %p391 = por %p389, %p390
      %p392 = scmp.ne.s32.totalorder %s383, %s384
      %p393 = scmp.eq.s32.totalorder %s37, 0
      %p394 = por %p392, %p393
      %p395 = scmp.ne.s32.totalorder %s383, %s384
      %p396 = scmp.eq.s32.totalorder %s38, 1
      %p397 = por %p395, %p396
      %p399 = scmp.ne.s32.totalorder %s384, %s398
      %p400 = scmp.eq.s32.totalorder %s38, 0
      %p401 = por %p399, %p400
      %s403 = sadd.s32 %s402, 1
      %p406 = scmp.eq.s32.totalorder %s32, 1
      %p407 = scmp.ne.s32.totalorder %s402, %s404
      %p408 = scmp.eq.s32.totalorder %s32, 0
      %p409 = por %p407, %p408
      %p410 = scmp.ne.s32.totalorder %s402, %s404
      %p411 = scmp.eq.s32.totalorder %s37, 1
      %p412 = por %p410, %p411
      %p413 = scmp.ne.s32.totalorder %s404, %s405
      %p414 = scmp.eq.s32.totalorder %s37, 0
      %p415 = por %p413, %p414
      %p416 = scmp.ne.s32.totalorder %s404, %s405
      %p417 = scmp.eq.s32.totalorder %s38, 1
      %p418 = por %p416, %p417
      %p420 = scmp.ne.s32.totalorder %s405, %s419
      %p421 = scmp.eq.s32.totalorder %s38, 0
      %p422 = por %p420, %p421
      %s424 = sadd.s32 %s423, 1
      %p427 = scmp.eq.s32.totalorder %s32, 1
      %p428 = scmp.ne.s32.totalorder %s423, %s425
      %p429 = scmp.eq.s32.totalorder %s32, 0
      %p430 = por %p428, %p429
      %p431 = scmp.ne.s32.totalorder %s423, %s425
      %p432 = scmp.eq.s32.totalorder %s37, 1
      %p433 = por %p431, %p432
      %p434 = scmp.ne.s32.totalorder %s425, %s426
      %p435 = scmp.eq.s32.totalorder %s37, 0
      %p436 = por %p434, %p435
      %p437 = scmp.ne.s32.totalorder %s425, %s426
      %p438 = scmp.eq.s32.totalorder %s38, 1
      %p439 = por %p437, %p438
      %p441 = scmp.ne.s32.totalorder %s426, %s440
      %p442 = scmp.eq.s32.totalorder %s38, 0
      %p443 = por %p441, %p442
      %s445 = sadd.s32 %s444, 1
      %p448 = scmp.eq.s32.totalorder %s32, 1
      %p449 = scmp.ne.s32.totalorder %s444, %s446
      %p450 = scmp.eq.s32.totalorder %s32, 0
      %p451 = por %p449, %p450
      %p452 = scmp.ne.s32.totalorder %s444, %s446
      %p453 = scmp.eq.s32.totalorder %s37, 1
      %p454 = por %p452, %p453
      %p455 = scmp.ne.s32.totalorder %s446, %s447
      %p456 = scmp.eq.s32.totalorder %s37, 0
      %p457 = por %p455, %p456
      %p458 = scmp.ne.s32.totalorder %s446, %s447
      %p459 = scmp.eq.s32.totalorder %s38, 1
      %p460 = por %p458, %p459
      %p462 = scmp.ne.s32.totalorder %s447, %s461
      %p463 = scmp.eq.s32.totalorder %s38, 0
      %p464 = por %p462, %p463
      %s466 = sadd.s32 %s465, 1
      %p469 = scmp.eq.s32.totalorder %s32, 1
      %p470 = scmp.ne.s32.totalorder %s465, %s467
      %p471 = scmp.eq.s32.totalorder %s32, 0
      %p472 = por %p470, %p471
      %p473 = scmp.ne.s32.totalorder %s465, %s467
      %p474 = scmp.eq.s32.totalorder %s37, 1
      %p475 = por %p473, %p474
      %p476 = scmp.ne.s32.totalorder %s467, %s468
      %p477 = scmp.eq.s32.totalorder %s37, 0
      %p478 = por %p476, %p477
      %p479 = scmp.ne.s32.totalorder %s467, %s468
      %p480 = scmp.eq.s32.totalorder %s38, 1
      %p481 = por %p479, %p480
      %p483 = scmp.ne.s32.totalorder %s468, %s482
      %p484 = scmp.eq.s32.totalorder %s38, 0
      %p485 = por %p483, %p484
      %s486 = ssub.s32 %s32, %s39
      %p487 = scmp.eq.s32.totalorder %s486, 0
      %s489 = sadd.s32 %s488, 1
      %s490 = scalar_select %p487, %s488, %s489
      %p493 = pneg %p487
      %p494 = scmp.eq.s32.totalorder %s32, 1
      %p495 = por %p493, %p494
      %p496 = scmp.ne.s32.totalorder %s488, %s491
      %p497 = scmp.eq.s32.totalorder %s32, 0
      %p498 = por %p496, %p497
      %p499 = scmp.ne.s32.totalorder %s488, %s491
      %p500 = scmp.eq.s32.totalorder %s37, 1
      %p501 = por %p499, %p500
      %p502 = scmp.ne.s32.totalorder %s491, %s492
      %p503 = scmp.eq.s32.totalorder %s37, 0
      %p504 = por %p502, %p503
      %p505 = scmp.ne.s32.totalorder %s491, %s492
      %p506 = scmp.eq.s32.totalorder %s38, 1
      %p507 = por %p505, %p506
      %p509 = scmp.ne.s32.totalorder %s492, %s508
      %p510 = scmp.eq.s32.totalorder %s38, 0
      %p511 = por %p509, %p510
      %p512 = scmp.le.s32.totalorder 1, %s32
      %p513 = scmp.lt.s32.totalorder %s32, 3
      %p514 = pnand %p512, %p513
      %p515 = pneg %p514
      // Predicated region
      $region9: #{tpu_custom_call.1} parent=5 // pred_check
        _
      $region10: #{tpu_custom_call.1} parent=5 // pred_check_branch
        %517 = sbr.rel (%p514) target = $region12
      $region11: #{tpu_custom_call.1} parent=5 // pred_region
        %s518 = ssub.s32 %s32, 1
        // Predicated region
        $region13: #{tpu_custom_call.1} parent=11 // pred_check
          %p519 = pneg %p79
        $region14: #{tpu_custom_call.1} parent=11 // pred_check_branch
          %521 = sbr.rel (%p519) target = $region16
        $region15: #{tpu_custom_call.1} parent=11 // pred_region
          %s523 = ssub.s32 256, 256
          %524 = vsyncadd [#allocation4], %s523
          %s525 = sshll.u32 [#allocation3], 4
          %s526 = int_to_ptr.vmem [resolvable:$true] %s525
          %531 = dma.hbm_to_vmem [thread:$0]  %s1, 256, %s526, [#allocation4], 128, 128, 8
        $region16: #{tpu_custom_call.1} parent=11 // pred_fallthru
          _
        // Predicated region
        $region17: #{tpu_custom_call.1} parent=11 // pred_check
          %p532 = pneg %p100
        $region18: #{tpu_custom_call.1} parent=11 // pred_check_branch
          %534 = sbr.rel (%p532) target = $region20
        $region19: #{tpu_custom_call.1} parent=11 // pred_region
          _
        $region20: #{tpu_custom_call.1} parent=11 // pred_fallthru
          _
        // Predicated region
        $region21: #{tpu_custom_call.1} parent=11 // pred_check
          %p535 = pneg %p121
        $region22: #{tpu_custom_call.1} parent=11 // pred_check_branch
          %537 = sbr.rel (%p535) target = $region24
        $region23: #{tpu_custom_call.1} parent=11 // pred_region
          %s539 = ssub.s32 256, 256
          %540 = vsyncadd [#allocation7], %s539
          %s541 = sshll.u32 [#allocation6], 4
          %s542 = int_to_ptr.vmem [resolvable:$true] %s541
          %547 = dma.hbm_to_vmem [thread:$0]  %s3, 256, %s542, [#allocation7], 128, 128, 8
        $region24: #{tpu_custom_call.1} parent=11 // pred_fallthru
          _
        // Predicated region
        $region25: #{tpu_custom_call.1} parent=11 // pred_check
          %p548 = pneg %p142
        $region26: #{tpu_custom_call.1} parent=11 // pred_check_branch
          %550 = sbr.rel (%p548) target = $region28
        $region27: #{tpu_custom_call.1} parent=11 // pred_region
          _
        $region28: #{tpu_custom_call.1} parent=11 // pred_fallthru
          _
        // Predicated region
        $region29: #{tpu_custom_call.1} parent=11 // pred_check
          %p551 = pneg %p163
        $region30: #{tpu_custom_call.1} parent=11 // pred_check_branch
          %553 = sbr.rel (%p551) target = $region32
        $region31: #{tpu_custom_call.1} parent=11 // pred_region
          _
        $region32: #{tpu_custom_call.1} parent=11 // pred_fallthru
          _
        // Predicated region
        $region33: #{tpu_custom_call.1} parent=11 // pred_check
          %p554 = pneg %p184
        $region34: #{tpu_custom_call.1} parent=11 // pred_check_branch
          %556 = sbr.rel (%p554) target = $region36
        $region35: #{tpu_custom_call.1} parent=11 // pred_region
          _
        $region36: #{tpu_custom_call.1} parent=11 // pred_fallthru
          _
        // Predicated region
        $region37: #{tpu_custom_call.1} parent=11 // pred_check
          %p557 = pneg %p205
        $region38: #{tpu_custom_call.1} parent=11 // pred_check_branch
          %559 = sbr.rel (%p557) target = $region40
        $region39: #{tpu_custom_call.1} parent=11 // pred_region
          _
        $region40: #{tpu_custom_call.1} parent=11 // pred_fallthru
          _
        // Predicated region
        $region41: #{tpu_custom_call.1} parent=11 // pred_check
          %p560 = pneg %p226
        $region42: #{tpu_custom_call.1} parent=11 // pred_check_branch
          %562 = sbr.rel (%p560) target = $region44
        $region43: #{tpu_custom_call.1} parent=11 // pred_region
          _
        $region44: #{tpu_custom_call.1} parent=11 // pred_fallthru
          _
        // Predicated region
        $region45: #{tpu_custom_call.1} parent=11 // pred_check
          %p563 = pneg %p247
        $region46: #{tpu_custom_call.1} parent=11 // pred_check_branch
          %565 = sbr.rel (%p563) target = $region48
        $region47: #{tpu_custom_call.1} parent=11 // pred_region
          _
        $region48: #{tpu_custom_call.1} parent=11 // pred_fallthru
          _
        // Predicated region
        $region49: #{tpu_custom_call.1} parent=11 // pred_check
          %p566 = pneg %p268
        $region50: #{tpu_custom_call.1} parent=11 // pred_check_branch
          %568 = sbr.rel (%p566) target = $region52
        $region51: #{tpu_custom_call.1} parent=11 // pred_region
          _
        $region52: #{tpu_custom_call.1} parent=11 // pred_fallthru
          _
        // Predicated region
        $region53: #{tpu_custom_call.1} parent=11 // pred_check
          %p569 = pneg %p289
        $region54: #{tpu_custom_call.1} parent=11 // pred_check_branch
          %571 = sbr.rel (%p569) target = $region56
        $region55: #{tpu_custom_call.1} parent=11 // pred_region
          _
        $region56: #{tpu_custom_call.1} parent=11 // pred_fallthru
          _
        // Predicated region
        $region57: #{tpu_custom_call.1} parent=11 // pred_check
          %p572 = pneg %p310
        $region58: #{tpu_custom_call.1} parent=11 // pred_check_branch
          %574 = sbr.rel (%p572) target = $region60
        $region59: #{tpu_custom_call.1} parent=11 // pred_region
          _
        $region60: #{tpu_custom_call.1} parent=11 // pred_fallthru
          _
        // Predicated region
        $region61: #{tpu_custom_call.1} parent=11 // pred_check
          %p575 = pneg %p331
        $region62: #{tpu_custom_call.1} parent=11 // pred_check_branch
          %577 = sbr.rel (%p575) target = $region64
        $region63: #{tpu_custom_call.1} parent=11 // pred_region
          _
        $region64: #{tpu_custom_call.1} parent=11 // pred_fallthru
          _
        // Predicated region
        $region65: #{tpu_custom_call.1} parent=11 // pred_check
          %p578 = pneg %p352
        $region66: #{tpu_custom_call.1} parent=11 // pred_check_branch
          %580 = sbr.rel (%p578) target = $region68
        $region67: #{tpu_custom_call.1} parent=11 // pred_region
          _
        $region68: #{tpu_custom_call.1} parent=11 // pred_fallthru
          _
        // Predicated region
        $region69: #{tpu_custom_call.1} parent=11 // pred_check
          %p581 = pneg %p373
        $region70: #{tpu_custom_call.1} parent=11 // pred_check_branch
          %583 = sbr.rel (%p581) target = $region72
        $region71: #{tpu_custom_call.1} parent=11 // pred_region
          %s585 = ssub.s32 512, 512
          %586 = vsyncadd [#allocation7], %s585
          %s587 = sshll.u32 [#allocation8], 4
          %s588 = int_to_ptr.vmem [resolvable:$true] %s587
          %593 = dma.hbm_to_vmem [thread:$0]  %s15, 512, %s588, [#allocation7], 128, 128, 8
        $region72: #{tpu_custom_call.1} parent=11 // pred_fallthru
          _
        // Predicated region
        $region73: #{tpu_custom_call.1} parent=11 // pred_check
          %p594 = pneg %p394
        $region74: #{tpu_custom_call.1} parent=11 // pred_check_branch
          %596 = sbr.rel (%p594) target = $region76
        $region75: #{tpu_custom_call.1} parent=11 // pred_region
          _
        $region76: #{tpu_custom_call.1} parent=11 // pred_fallthru
          _
        // Predicated region
        $region77: #{tpu_custom_call.1} parent=11 // pred_check
          %p597 = pneg %p415
        $region78: #{tpu_custom_call.1} parent=11 // pred_check_branch
          %599 = sbr.rel (%p597) target = $region80
        $region79: #{tpu_custom_call.1} parent=11 // pred_region
          _
        $region80: #{tpu_custom_call.1} parent=11 // pred_fallthru
          _
        // Predicated region
        $region81: #{tpu_custom_call.1} parent=11 // pred_check
          %p600 = pneg %p436
        $region82: #{tpu_custom_call.1} parent=11 // pred_check_branch
          %602 = sbr.rel (%p600) target = $region84
        $region83: #{tpu_custom_call.1} parent=11 // pred_region
          _
        $region84: #{tpu_custom_call.1} parent=11 // pred_fallthru
          _
        // Predicated region
        $region85: #{tpu_custom_call.1} parent=11 // pred_check
          %p603 = pneg %p457
        $region86: #{tpu_custom_call.1} parent=11 // pred_check_branch
          %605 = sbr.rel (%p603) target = $region88
        $region87: #{tpu_custom_call.1} parent=11 // pred_region
          _
        $region88: #{tpu_custom_call.1} parent=11 // pred_fallthru
          _
        // Predicated region
        $region89: #{tpu_custom_call.1} parent=11 // pred_check
          %p606 = pneg %p478
        $region90: #{tpu_custom_call.1} parent=11 // pred_check_branch
          %608 = sbr.rel (%p606) target = $region92
        $region91: #{tpu_custom_call.1} parent=11 // pred_region
          _
        $region92: #{tpu_custom_call.1} parent=11 // pred_fallthru
          _
      $region12: #{tpu_custom_call.1} parent=5 // pred_fallthru
        _
      %p609 = scmp.lt.s32.totalorder %s32, 2
      // Predicated region
      $region93: #{tpu_custom_call.1} parent=5 // pred_check
        %p610 = pneg %p609
      $region94: #{tpu_custom_call.1} parent=5 // pred_check_branch
        %612 = sbr.rel (%p610) target = $region96
      $region95: #{tpu_custom_call.1} parent=5 // pred_region
        // Predicated region
        $region97: #{tpu_custom_call.1} parent=95 // pred_check
          %p613 = pneg %p52
        $region98: #{tpu_custom_call.1} parent=95 // pred_check_branch
          %615 = sbr.rel (%p613) target = $region100
        $region99: #{tpu_custom_call.1} parent=95 // pred_region
          %s616 = sand.u32 %s42, 1
          %s617 = sand.u32 %s42, 1
          %s618 = smul.addr %s617, 32
          %s619 = scalar_lea.vmem [#allocation2], %s618
          %s620 = smul.u32 2, %s32
          %s621 = smul.addr %s620, 8
          %s622 = scalar_lea.vmem %s0, %s621
          // Predicated region
          $region101: #{tpu_custom_call.1} parent=99 // pred_check
            _
          $region102: #{tpu_custom_call.1} parent=99 // pred_check_branch
            %624 = sbr.rel (0) target = $region104
          $region103: #{tpu_custom_call.1} parent=99 // pred_region
            // Predicated region
            $region105: #{tpu_custom_call.1} parent=103 // pred_check
              _
            $region106: #{tpu_custom_call.1} parent=103 // pred_check_branch
              %626 = sbr.rel (0) target = $region108
            $region107: #{tpu_custom_call.1} parent=103 // pred_region
              loop: start=0, step=1, limit=1
              $region109: #{tpu_custom_call.1} parent=107 // loop_pre_header
                _
              $region110: #{tpu_custom_call.1} parent=107 // loop_header
                %s628 = sphi 0, %s632
                %p629 = scmp.ge.s32.totalorder %s628, 1
                %s633 = sphi %s622, %s622
                %s634 = sphi %s619, %s619
              $region111: #{tpu_custom_call.1} parent=107 // loop_header_branch
                %631 = sbr.rel (%p629) target = $region115
              $region112: #{tpu_custom_call.1} parent=107 // loop_body
                %v635 = vld [vmem:[%s633] sm:$0xff]
                %636 = vst [vmem:[%s634] sm:$0xff] %v635
                %v637 = vld [vmem:[%s633 + $0x8] sm:$0xff]
                %638 = vst [vmem:[%s634 + $0x8] sm:$0xff] %v637
                %v639 = vld [vmem:[%s633 + $0x20] sm:$0xff]
                %640 = vst [vmem:[%s634 + $0x10] sm:$0xff] %v639
                %v641 = vld [vmem:[%s633 + $0x28] sm:$0xff]
                %642 = vst [vmem:[%s634 + $0x18] sm:$0xff] %v641
              $region113: #{tpu_custom_call.1} parent=107 // loop_footer
                %s632 = sadd.s32 1, %s628
              $region114: #{tpu_custom_call.1} parent=107 // loop_footer_branch
                %627 = sbr.rel target = $region110
              $region115: #{tpu_custom_call.1} parent=107 // loop_exit
                _
            $region108: #{tpu_custom_call.1} parent=103 // pred_fallthru
              _
            // Predicated region
            $region116: #{tpu_custom_call.1} parent=103 // pred_check
              _
            $region117: #{tpu_custom_call.1} parent=103 // pred_check_branch
              %644 = sbr.rel target = $region119
            $region118: #{tpu_custom_call.1} parent=103 // pred_region
              _
            $region119: #{tpu_custom_call.1} parent=103 // pred_fallthru
              _
          $region104: #{tpu_custom_call.1} parent=99 // pred_fallthru
            _
          %645 = vnop
        $region100: #{tpu_custom_call.1} parent=95 // pred_fallthru
          _
      $region96: #{tpu_custom_call.1} parent=5 // pred_fallthru
        _
      %p646 = scmp.le.s32.totalorder 1, %s32
      %p647 = scmp.lt.s32.totalorder %s32, 3
      %p648 = pnand %p646, %p647
      %p649 = pneg %p648
      // Predicated region
      $region120: #{tpu_custom_call.1} parent=5 // pred_check
        _
      $region121: #{tpu_custom_call.1} parent=5 // pred_check_branch
        %651 = sbr.rel (%p648) target = $region123
      $region122: #{tpu_custom_call.1} parent=5 // pred_region
        %s652 = ssub.s32 %s32, 1
        %s653 = sand.u32 %s45, 1
        %s654 = sand.u32 %s45, 1
        %s655 = smul.addr %s654, 32
        %s656 = scalar_lea.vmem [#allocation2], %s655
        // Predicated region
        $region124: #{tpu_custom_call.1} parent=122 // pred_check
          %p657 = pneg %p58
        $region125: #{tpu_custom_call.1} parent=122 // pred_check_branch
          %659 = sbr.rel (%p657) target = $region127
        $region126: #{tpu_custom_call.1} parent=122 // pred_region
          _
        $region127: #{tpu_custom_call.1} parent=122 // pred_fallthru
          _
        // Predicated region
        $region128: #{tpu_custom_call.1} parent=122 // pred_check
          %p660 = pneg %p79
        $region129: #{tpu_custom_call.1} parent=122 // pred_check_branch
          %662 = sbr.rel (%p660) target = $region131
        $region130: #{tpu_custom_call.1} parent=122 // pred_region
          %663 = dma.done [#allocation4], 256
        $region131: #{tpu_custom_call.1} parent=122 // pred_fallthru
          _
        // Predicated region
        $region132: #{tpu_custom_call.1} parent=122 // pred_check
          %p664 = pneg %p121
        $region133: #{tpu_custom_call.1} parent=122 // pred_check_branch
          %666 = sbr.rel (%p664) target = $region135
        $region134: #{tpu_custom_call.1} parent=122 // pred_region
          %667 = dma.done [#allocation7], 256
        $region135: #{tpu_custom_call.1} parent=122 // pred_fallthru
          _
        // Predicated region
        $region136: #{tpu_custom_call.1} parent=122 // pred_check
          %p668 = pneg %p373
        $region137: #{tpu_custom_call.1} parent=122 // pred_check_branch
          %670 = sbr.rel (%p668) target = $region139
        $region138: #{tpu_custom_call.1} parent=122 // pred_region
          %671 = dma.done [#allocation7], 512
        $region139: #{tpu_custom_call.1} parent=122 // pred_fallthru
          _
        %s672 = sand.u32 %s45, 1
        %s673 = sand.u32 %s45, 1
        %s674 = smul.addr %s673, 32
        %s675 = scalar_lea.vmem [#allocation2], %s674
        %p676 = pneg %p58
        %p677 = pneg %p55
        %p678 = pneg %p79
        %p679 = pneg %p76
        %p680 = pneg %p100
        %p681 = pneg %p97
        %p682 = pneg %p121
        %p683 = pneg %p118
        %p684 = pneg %p142
        %p685 = pneg %p139
        %p686 = pneg %p163
        %p687 = pneg %p160
        %p688 = pneg %p184
        %p689 = pneg %p181
        %p690 = pneg %p205
        %p691 = pneg %p202
        %p692 = pneg %p226
        %p693 = pneg %p223
        %p694 = pneg %p247
        %p695 = pneg %p244
        %p696 = pneg %p268
        %p697 = pneg %p265
        %p698 = pneg %p289
        %p699 = pneg %p286
        %p700 = pneg %p310
        %p701 = pneg %p307
        %p702 = pneg %p331
        %p703 = pneg %p328
        %p704 = pneg %p352
        %p705 = pneg %p349
        %p706 = pneg %p373
        %p707 = pneg %p370
        %p708 = pneg %p394
        %p709 = pneg %p391
        %p710 = pneg %p415
        %p711 = pneg %p412
        %p712 = pneg %p436
        %p713 = pneg %p433
        %p714 = pneg %p457
        %p715 = pneg %p454
        %p716 = pneg %p478
        %p717 = pneg %p475
        %p718 = pneg %p504
        %p719 = pneg %p501
        %s720 = sand.u32 %s491, 1
        %s721 = scalar_lea.sflag [#allocation5], %s720
        %s722 = sand.u32 %s491, 1
        %s723 = smul.addr %s722, 8
        %s724 = scalar_lea.vmem [#allocation9], %s723
        %s725 = smul.u32 2, %s37
        %v726 = vld [vmem:[%s656] sm:$0xff]
        %v727 = vld [vmem:[%s656 + $0x8] sm:$0xff]
        %v728 = vld [vmem:[%s656 + $0x10] sm:$0xff]
        %v729 = vld [vmem:[%s656 + $0x18] sm:$0xff]
        %v730 = vld [vmem:[%s9] sm:$0xff]
        %v731 = vld [vmem:[%s9 + $0x8] sm:$0xff]
        %s732 = scalar_lea.vmem %s9, 16
        %v733 = vld [vmem:[%s732] sm:$0xff]
        %v734 = vld [vmem:[%s732 + $0x8] sm:$0xff]
        %739 = vrot.lane.b32.xlu0 %v726, 66
        %v740 = vpop.permute.xlu0 %739
        %741 = vrot.lane.b32.xlu0 %v727, 66
        %v742 = vpop.permute.xlu0 %741
        %743 = vrot.lane.b32.xlu0 %v728, 66
        %v744 = vpop.permute.xlu0 %743
        %745 = vrot.lane.b32.xlu0 %v729, 66
        %v746 = vpop.permute.xlu0 %745
        %vm747 = vcmask 539648
        %v748 = vsel %vm747, %v740, %v742
        %v749 = vsel %vm747, %v744, %v746
        %vm752 = vcmask 130048
        %v754 = vsel %vm752, %v733, 0
        %v757 = vsel %vm752, %v734, 0
        %759 = vmatprep.subr.mxu0 0.0
        %760 = vmatpush1.msra.mxu0 0.0
        %761 = vmatprep.subr.mxu0 0.0
        %762 = vmatpush1.msra.mxu0 0.0
        %763 = vmatprep.subr.mxu0 0.0
        %764 = vmatpush1.msra.mxu0 0.0
        %765 = vmatprep.subr.mxu0 0.0
        %766 = vmatpush1.msra.mxu0 0.0
        %767 = vmatprep.subr.mxu0 0.0
        %768 = vmatpush1.msra.mxu0 0.0
        %769 = vmatprep.subr.mxu0 0.0
        %770 = vmatpush1.msra.mxu0 0.0
        %771 = vmatprep.subr.mxu0 0.0
        %772 = vmatpush1.msra.mxu0 0.0
        %773 = vmatprep.subr.mxu0 0.0
        %774 = vmatpush1.msra.mxu0 0.0
        %775 = vmatprep.subr.mxu0 0.0
        %776 = vmatpush1.msra.mxu0 0.0
        %777 = vmatprep.subr.mxu0 0.0
        %778 = vmatpush1.msra.mxu0 0.0
        %779 = vmatprep.subr.mxu0 0.0
        %780 = vmatpush1.msra.mxu0 0.0
        %781 = vmatprep.subr.mxu0 0.0
        %782 = vmatpush1.msra.mxu0 0.0
        %783 = vmatprep.subr.mxu0 0.0
        %784 = vmatpush1.msra.mxu0 0.0
        %785 = vmatprep.subr.mxu0 0.0
        %786 = vmatpush1.msra.mxu0 0.0
        %787 = vmatprep.subr.mxu0 0.0
        %788 = vmatpush1.msra.mxu0 %v749
        %789 = vmatprep.subr.mxu0 0.0
        %790 = vmatpush1.msra.mxu0 %v748
        %791 = vmatprep.subr.mxu0 0.0
        %792 = vmatpush2.msra.mxu0 0.0
        %793 = vmatprep.subr.mxu0 0.0
        %794 = vmatpush2.msra.mxu0 0.0
        %795 = vmatprep.subr.mxu0 0.0
        %796 = vmatpush2.msra.mxu0 0.0
        %797 = vmatprep.subr.mxu0 0.0
        %798 = vmatpush2.msra.mxu0 0.0
        %799 = vmatprep.subr.mxu0 0.0
        %800 = vmatpush2.msra.mxu0 0.0
        %801 = vmatprep.subr.mxu0 0.0
        %802 = vmatpush2.msra.mxu0 0.0
        %803 = vmatprep.subr.mxu0 0.0
        %804 = vmatpush2.msra.mxu0 0.0
        %805 = vmatprep.subr.mxu0 0.0
        %806 = vmatpush2.msra.mxu0 0.0
        %807 = vmatprep.subr.mxu0 0.0
        %808 = vmatpush2.msra.mxu0 0.0
        %809 = vmatprep.subr.mxu0 0.0
        %810 = vmatpush2.msra.mxu0 0.0
        %811 = vmatprep.subr.mxu0 0.0
        %812 = vmatpush2.msra.mxu0 0.0
        %813 = vmatprep.subr.mxu0 0.0
        %814 = vmatpush2.msra.mxu0 0.0
        %815 = vmatprep.subr.mxu0 0.0
        %816 = vmatpush2.msra.mxu0 0.0
        %817 = vmatprep.subr.mxu0 0.0
        %818 = vmatpush2.msra.mxu0 0.0
        %819 = vmatprep.subr.mxu0 0.0
        %820 = vmatpush2.msra.mxu0 0.0
        %821 = vmatprep.subr.mxu0 0.0
        %822 = vmatpush2.msra.mxu0 0.0
        %823 = vmatprep.mubr.f32.mxu0 0.0
        %824 = vmatmul.mubr.f32.gmra.mxu0 %v754
        %v825 = vpop.f32.mrf.mxu0
        %v826 = vadd.f32 0.0, %v825
        %v827 = vpop.f32.mrf.mxu0
        %828 = vmatprep.mubr.f32.mxu0 0.0
        %829 = vmatmul.mubr.f32.gmra.mxu0 %v757
        %v830 = vpop.f32.mrf.mxu0
        %v831 = vadd.f32 0.0, %v830
        %v832 = vpop.f32.mrf.mxu0
        %833 = vdwg.mxu0
        %834 = vrot.lane.b32.xlu0 %v726, 67
        %v835 = vpop.permute.xlu0 %834
        %836 = vrot.lane.b32.xlu0 %v727, 67
        %v837 = vpop.permute.xlu0 %836
        %838 = vrot.lane.b32.xlu0 %v728, 67
        %v839 = vpop.permute.xlu0 %838
        %840 = vrot.lane.b32.xlu0 %v729, 67
        %v841 = vpop.permute.xlu0 %840
        %vm842 = vcmask 547840
        %v843 = vsel %vm842, %v835, %v837
        %v844 = vsel %vm842, %v839, %v841
        %v848 = vsel %vm752, %v730, 0
        %v851 = vsel %vm752, %v731, 0
        %853 = vmatprep.subr.mxu0 0.0
        %854 = vmatpush1.msra.mxu0 0.0
        %855 = vmatprep.subr.mxu0 0.0
        %856 = vmatpush1.msra.mxu0 0.0
        %857 = vmatprep.subr.mxu0 0.0
        %858 = vmatpush1.msra.mxu0 0.0
        %859 = vmatprep.subr.mxu0 0.0
        %860 = vmatpush1.msra.mxu0 0.0
        %861 = vmatprep.subr.mxu0 0.0
        %862 = vmatpush1.msra.mxu0 0.0
        %863 = vmatprep.subr.mxu0 0.0
        %864 = vmatpush1.msra.mxu0 0.0
        %865 = vmatprep.subr.mxu0 0.0
        %866 = vmatpush1.msra.mxu0 0.0
        %867 = vmatprep.subr.mxu0 0.0
        %868 = vmatpush1.msra.mxu0 0.0
        %869 = vmatprep.subr.mxu0 0.0
        %870 = vmatpush1.msra.mxu0 0.0
        %871 = vmatprep.subr.mxu0 0.0
        %872 = vmatpush1.msra.mxu0 0.0
        %873 = vmatprep.subr.mxu0 0.0
        %874 = vmatpush1.msra.mxu0 0.0
        %875 = vmatprep.subr.mxu0 0.0
        %876 = vmatpush1.msra.mxu0 0.0
        %877 = vmatprep.subr.mxu0 0.0
        %878 = vmatpush1.msra.mxu0 0.0
        %879 = vmatprep.subr.mxu0 0.0
        %880 = vmatpush1.msra.mxu0 0.0
        %881 = vmatprep.subr.mxu0 0.0
        %882 = vmatpush1.msra.mxu0 %v844
        %883 = vmatprep.subr.mxu0 0.0
        %884 = vmatpush1.msra.mxu0 %v843
        %885 = vmatprep.subr.mxu0 0.0
        %886 = vmatpush2.msra.mxu0 0.0
        %887 = vmatprep.subr.mxu0 0.0
        %888 = vmatpush2.msra.mxu0 0.0
        %889 = vmatprep.subr.mxu0 0.0
        %890 = vmatpush2.msra.mxu0 0.0
        %891 = vmatprep.subr.mxu0 0.0
        %892 = vmatpush2.msra.mxu0 0.0
        %893 = vmatprep.subr.mxu0 0.0
        %894 = vmatpush2.msra.mxu0 0.0
        %895 = vmatprep.subr.mxu0 0.0
        %896 = vmatpush2.msra.mxu0 0.0
        %897 = vmatprep.subr.mxu0 0.0
        %898 = vmatpush2.msra.mxu0 0.0
        %899 = vmatprep.subr.mxu0 0.0
        %900 = vmatpush2.msra.mxu0 0.0
        %901 = vmatprep.subr.mxu0 0.0
        %902 = vmatpush2.msra.mxu0 0.0
        %903 = vmatprep.subr.mxu0 0.0
        %904 = vmatpush2.msra.mxu0 0.0
        %905 = vmatprep.subr.mxu0 0.0
        %906 = vmatpush2.msra.mxu0 0.0
        %907 = vmatprep.subr.mxu0 0.0
        %908 = vmatpush2.msra.mxu0 0.0
        %909 = vmatprep.subr.mxu0 0.0
        %910 = vmatpush2.msra.mxu0 0.0
        %911 = vmatprep.subr.mxu0 0.0
        %912 = vmatpush2.msra.mxu0 0.0
        %913 = vmatprep.subr.mxu0 0.0
        %914 = vmatpush2.msra.mxu0 0.0
        %915 = vmatprep.subr.mxu0 0.0
        %916 = vmatpush2.msra.mxu0 0.0
        %917 = vmatprep.mubr.f32.mxu0 0.0
        %918 = vmatmul.mubr.f32.gmra.mxu0 %v848
        %v919 = vpop.f32.mrf.mxu0
        %v920 = vadd.f32 %v826, %v919
        %v921 = vpop.f32.mrf.mxu0
        %922 = vmatprep.mubr.f32.mxu0 0.0
        %923 = vmatmul.mubr.f32.gmra.mxu0 %v851
        %v924 = vpop.f32.mrf.mxu0
        %v925 = vadd.f32 %v831, %v924
        %v926 = vpop.f32.mrf.mxu0
        %927 = vdwg.mxu0
        %s928 = scalar_lea.vmem %s9, 32
        %v929 = vld [vmem:[%s928] sm:$0xff]
        %v930 = vld [vmem:[%s928 + $0x8] sm:$0xff]
        %931 = vrot.lane.b32.xlu0 %v726, 65
        %v932 = vpop.permute.xlu0 %931
        %933 = vrot.lane.b32.xlu0 %v727, 65
        %v934 = vpop.permute.xlu0 %933
        %935 = vrot.lane.b32.xlu0 %v728, 65
        %v936 = vpop.permute.xlu0 %935
        %937 = vrot.lane.b32.xlu0 %v729, 65
        %v938 = vpop.permute.xlu0 %937
        %vm939 = vcmask 531456
        %v940 = vsel %vm939, %v932, %v934
        %v941 = vsel %vm939, %v936, %v938
        %v945 = vsel %vm752, %v929, 0
        %v948 = vsel %vm752, %v930, 0
        %950 = vmatprep.subr.mxu0 0.0
        %951 = vmatpush1.msra.mxu0 0.0
        %952 = vmatprep.subr.mxu0 0.0
        %953 = vmatpush1.msra.mxu0 0.0
        %954 = vmatprep.subr.mxu0 0.0
        %955 = vmatpush1.msra.mxu0 0.0
        %956 = vmatprep.subr.mxu0 0.0
        %957 = vmatpush1.msra.mxu0 0.0
        %958 = vmatprep.subr.mxu0 0.0
        %959 = vmatpush1.msra.mxu0 0.0
        %960 = vmatprep.subr.mxu0 0.0
        %961 = vmatpush1.msra.mxu0 0.0
        %962 = vmatprep.subr.mxu0 0.0
        %963 = vmatpush1.msra.mxu0 0.0
        %964 = vmatprep.subr.mxu0 0.0
        %965 = vmatpush1.msra.mxu0 0.0
        %966 = vmatprep.subr.mxu0 0.0
        %967 = vmatpush1.msra.mxu0 0.0
        %968 = vmatprep.subr.mxu0 0.0
        %969 = vmatpush1.msra.mxu0 0.0
        %970 = vmatprep.subr.mxu0 0.0
        %971 = vmatpush1.msra.mxu0 0.0
        %972 = vmatprep.subr.mxu0 0.0
        %973 = vmatpush1.msra.mxu0 0.0
        %974 = vmatprep.subr.mxu0 0.0
        %975 = vmatpush1.msra.mxu0 0.0
        %976 = vmatprep.subr.mxu0 0.0
        %977 = vmatpush1.msra.mxu0 0.0
        %978 = vmatprep.subr.mxu0 0.0
        %979 = vmatpush1.msra.mxu0 %v941
        %980 = vmatprep.subr.mxu0 0.0
        %981 = vmatpush1.msra.mxu0 %v940
        %982 = vmatprep.subr.mxu0 0.0
        %983 = vmatpush2.msra.mxu0 0.0
        %984 = vmatprep.subr.mxu0 0.0
        %985 = vmatpush2.msra.mxu0 0.0
        %986 = vmatprep.subr.mxu0 0.0
        %987 = vmatpush2.msra.mxu0 0.0
        %988 = vmatprep.subr.mxu0 0.0
        %989 = vmatpush2.msra.mxu0 0.0
        %990 = vmatprep.subr.mxu0 0.0
        %991 = vmatpush2.msra.mxu0 0.0
        %992 = vmatprep.subr.mxu0 0.0
        %993 = vmatpush2.msra.mxu0 0.0
        %994 = vmatprep.subr.mxu0 0.0
        %995 = vmatpush2.msra.mxu0 0.0
        %996 = vmatprep.subr.mxu0 0.0
        %997 = vmatpush2.msra.mxu0 0.0
        %998 = vmatprep.subr.mxu0 0.0
        %999 = vmatpush2.msra.mxu0 0.0
        %1000 = vmatprep.subr.mxu0 0.0
        %1001 = vmatpush2.msra.mxu0 0.0
        %1002 = vmatprep.subr.mxu0 0.0
        %1003 = vmatpush2.msra.mxu0 0.0
        %1004 = vmatprep.subr.mxu0 0.0
        %1005 = vmatpush2.msra.mxu0 0.0
        %1006 = vmatprep.subr.mxu0 0.0
        %1007 = vmatpush2.msra.mxu0 0.0
        %1008 = vmatprep.subr.mxu0 0.0
        %1009 = vmatpush2.msra.mxu0 0.0
        %1010 = vmatprep.subr.mxu0 0.0
        %1011 = vmatpush2.msra.mxu0 0.0
        %1012 = vmatprep.subr.mxu0 0.0
        %1013 = vmatpush2.msra.mxu0 0.0
        %1014 = vmatprep.mubr.f32.mxu0 0.0
        %1015 = vmatmul.mubr.f32.gmra.mxu0 %v945
        %v1016 = vpop.f32.mrf.mxu0
        %v1017 = vadd.f32 0.0, %v1016
        %v1018 = vpop.f32.mrf.mxu0
        %1019 = vmatprep.mubr.f32.mxu0 0.0
        %1020 = vmatmul.mubr.f32.gmra.mxu0 %v948
        %v1021 = vpop.f32.mrf.mxu0
        %v1022 = vadd.f32 0.0, %v1021
        %v1023 = vpop.f32.mrf.mxu0
        %1024 = vdwg.mxu0
        %v1025 = vadd.f32 %v920, %v1017
        %v1026 = vadd.f32 %v925, %v1022
        %s1027 = scalar_lea.vmem %s9, 48
        %v1028 = vld [vmem:[%s1027] sm:$0xff]
        %v1029 = vld [vmem:[%s1027 + $0x8] sm:$0xff]
        %1030 = vrot.lane.b32.xlu0 %v726, 64
        %v1031 = vpop.permute.xlu0 %1030
        %1032 = vrot.lane.b32.xlu0 %v727, 64
        %v1033 = vpop.permute.xlu0 %1032
        %1034 = vrot.lane.b32.xlu0 %v728, 64
        %v1035 = vpop.permute.xlu0 %1034
        %1036 = vrot.lane.b32.xlu0 %v729, 64
        %v1037 = vpop.permute.xlu0 %1036
        %vm1038 = vcmask 523264
        %v1039 = vsel %vm1038, %v1031, %v1033
        %v1040 = vsel %vm1038, %v1035, %v1037
        %v1044 = vsel %vm752, %v1028, 0
        %v1047 = vsel %vm752, %v1029, 0
        %1049 = vmatprep.subr.mxu0 0.0
        %1050 = vmatpush1.msra.mxu0 0.0
        %1051 = vmatprep.subr.mxu0 0.0
        %1052 = vmatpush1.msra.mxu0 0.0
        %1053 = vmatprep.subr.mxu0 0.0
        %1054 = vmatpush1.msra.mxu0 0.0
        %1055 = vmatprep.subr.mxu0 0.0
        %1056 = vmatpush1.msra.mxu0 0.0
        %1057 = vmatprep.subr.mxu0 0.0
        %1058 = vmatpush1.msra.mxu0 0.0
        %1059 = vmatprep.subr.mxu0 0.0
        %1060 = vmatpush1.msra.mxu0 0.0
        %1061 = vmatprep.subr.mxu0 0.0
        %1062 = vmatpush1.msra.mxu0 0.0
        %1063 = vmatprep.subr.mxu0 0.0
        %1064 = vmatpush1.msra.mxu0 0.0
        %1065 = vmatprep.subr.mxu0 0.0
        %1066 = vmatpush1.msra.mxu0 0.0
        %1067 = vmatprep.subr.mxu0 0.0
        %1068 = vmatpush1.msra.mxu0 0.0
        %1069 = vmatprep.subr.mxu0 0.0
        %1070 = vmatpush1.msra.mxu0 0.0
        %1071 = vmatprep.subr.mxu0 0.0
        %1072 = vmatpush1.msra.mxu0 0.0
        %1073 = vmatprep.subr.mxu0 0.0
        %1074 = vmatpush1.msra.mxu0 0.0
        %1075 = vmatprep.subr.mxu0 0.0
        %1076 = vmatpush1.msra.mxu0 0.0
        %1077 = vmatprep.subr.mxu0 0.0
        %1078 = vmatpush1.msra.mxu0 %v1040
        %1079 = vmatprep.subr.mxu0 0.0
        %1080 = vmatpush1.msra.mxu0 %v1039
        %1081 = vmatprep.subr.mxu0 0.0
        %1082 = vmatpush2.msra.mxu0 0.0
        %1083 = vmatprep.subr.mxu0 0.0
        %1084 = vmatpush2.msra.mxu0 0.0
        %1085 = vmatprep.subr.mxu0 0.0
        %1086 = vmatpush2.msra.mxu0 0.0
        %1087 = vmatprep.subr.mxu0 0.0
        %1088 = vmatpush2.msra.mxu0 0.0
        %1089 = vmatprep.subr.mxu0 0.0
        %1090 = vmatpush2.msra.mxu0 0.0
        %1091 = vmatprep.subr.mxu0 0.0
        %1092 = vmatpush2.msra.mxu0 0.0
        %1093 = vmatprep.subr.mxu0 0.0
        %1094 = vmatpush2.msra.mxu0 0.0
        %1095 = vmatprep.subr.mxu0 0.0
        %1096 = vmatpush2.msra.mxu0 0.0
        %1097 = vmatprep.subr.mxu0 0.0
        %1098 = vmatpush2.msra.mxu0 0.0
        %1099 = vmatprep.subr.mxu0 0.0
        %1100 = vmatpush2.msra.mxu0 0.0
        %1101 = vmatprep.subr.mxu0 0.0
        %1102 = vmatpush2.msra.mxu0 0.0
        %1103 = vmatprep.subr.mxu0 0.0
        %1104 = vmatpush2.msra.mxu0 0.0
        %1105 = vmatprep.subr.mxu0 0.0
        %1106 = vmatpush2.msra.mxu0 0.0
        %1107 = vmatprep.subr.mxu0 0.0
        %1108 = vmatpush2.msra.mxu0 0.0
        %1109 = vmatprep.subr.mxu0 0.0
        %1110 = vmatpush2.msra.mxu0 0.0
        %1111 = vmatprep.subr.mxu0 0.0
        %1112 = vmatpush2.msra.mxu0 0.0
        %1113 = vmatprep.mubr.f32.mxu0 0.0
        %1114 = vmatmul.mubr.f32.gmra.mxu0 %v1044
        %v1115 = vpop.f32.mrf.mxu0
        %v1116 = vadd.f32 0.0, %v1115
        %v1117 = vpop.f32.mrf.mxu0
        %1118 = vmatprep.mubr.f32.mxu0 0.0
        %1119 = vmatmul.mubr.f32.gmra.mxu0 %v1047
        %v1120 = vpop.f32.mrf.mxu0
        %v1121 = vadd.f32 0.0, %v1120
        %v1122 = vpop.f32.mrf.mxu0
        %1123 = vdwg.mxu0
        %v1124 = vadd.f32 %v1025, %v1116
        %v1125 = vadd.f32 %v1026, %v1121
        %s1126 = scalar_lea.vmem %s9, 64
        %v1127 = vld [vmem:[%s1126] sm:$0xff]
        %v1128 = vld [vmem:[%s1126 + $0x8] sm:$0xff]
        %1129 = vrot.lane.b32.xlu0 %v726, 63
        %v1130 = vpop.permute.xlu0 %1129
        %1131 = vrot.lane.b32.xlu0 %v727, 63
        %v1132 = vpop.permute.xlu0 %1131
        %1133 = vrot.lane.b32.xlu0 %v728, 63
        %v1134 = vpop.permute.xlu0 %1133
        %1135 = vrot.lane.b32.xlu0 %v729, 63
        %v1136 = vpop.permute.xlu0 %1135
        %vm1137 = vcmask 515072
        %v1138 = vsel %vm1137, %v1130, %v1132
        %v1139 = vsel %vm1137, %v1134, %v1136
        %v1143 = vsel %vm752, %v1127, 0
        %v1146 = vsel %vm752, %v1128, 0
        %1148 = vmatprep.subr.mxu0 0.0
        %1149 = vmatpush1.msra.mxu0 0.0
        %1150 = vmatprep.subr.mxu0 0.0
        %1151 = vmatpush1.msra.mxu0 0.0
        %1152 = vmatprep.subr.mxu0 0.0
        %1153 = vmatpush1.msra.mxu0 0.0
        %1154 = vmatprep.subr.mxu0 0.0
        %1155 = vmatpush1.msra.mxu0 0.0
        %1156 = vmatprep.subr.mxu0 0.0
        %1157 = vmatpush1.msra.mxu0 0.0
        %1158 = vmatprep.subr.mxu0 0.0
        %1159 = vmatpush1.msra.mxu0 0.0
        %1160 = vmatprep.subr.mxu0 0.0
        %1161 = vmatpush1.msra.mxu0 0.0
        %1162 = vmatprep.subr.mxu0 0.0
        %1163 = vmatpush1.msra.mxu0 0.0
        %1164 = vmatprep.subr.mxu0 0.0
        %1165 = vmatpush1.msra.mxu0 0.0
        %1166 = vmatprep.subr.mxu0 0.0
        %1167 = vmatpush1.msra.mxu0 0.0
        %1168 = vmatprep.subr.mxu0 0.0
        %1169 = vmatpush1.msra.mxu0 0.0
        %1170 = vmatprep.subr.mxu0 0.0
        %1171 = vmatpush1.msra.mxu0 0.0
        %1172 = vmatprep.subr.mxu0 0.0
        %1173 = vmatpush1.msra.mxu0 0.0
        %1174 = vmatprep.subr.mxu0 0.0
        %1175 = vmatpush1.msra.mxu0 0.0
        %1176 = vmatprep.subr.mxu0 0.0
        %1177 = vmatpush1.msra.mxu0 %v1139
        %1178 = vmatprep.subr.mxu0 0.0
        %1179 = vmatpush1.msra.mxu0 %v1138
        %1180 = vmatprep.subr.mxu0 0.0
        %1181 = vmatpush2.msra.mxu0 0.0
        %1182 = vmatprep.subr.mxu0 0.0
        %1183 = vmatpush2.msra.mxu0 0.0
        %1184 = vmatprep.subr.mxu0 0.0
        %1185 = vmatpush2.msra.mxu0 0.0
        %1186 = vmatprep.subr.mxu0 0.0
        %1187 = vmatpush2.msra.mxu0 0.0
        %1188 = vmatprep.subr.mxu0 0.0
        %1189 = vmatpush2.msra.mxu0 0.0
        %1190 = vmatprep.subr.mxu0 0.0
        %1191 = vmatpush2.msra.mxu0 0.0
        %1192 = vmatprep.subr.mxu0 0.0
        %1193 = vmatpush2.msra.mxu0 0.0
        %1194 = vmatprep.subr.mxu0 0.0
        %1195 = vmatpush2.msra.mxu0 0.0
        %1196 = vmatprep.subr.mxu0 0.0
        %1197 = vmatpush2.msra.mxu0 0.0
        %1198 = vmatprep.subr.mxu0 0.0
        %1199 = vmatpush2.msra.mxu0 0.0
        %1200 = vmatprep.subr.mxu0 0.0
        %1201 = vmatpush2.msra.mxu0 0.0
        %1202 = vmatprep.subr.mxu0 0.0
        %1203 = vmatpush2.msra.mxu0 0.0
        %1204 = vmatprep.subr.mxu0 0.0
        %1205 = vmatpush2.msra.mxu0 0.0
        %1206 = vmatprep.subr.mxu0 0.0
        %1207 = vmatpush2.msra.mxu0 0.0
        %1208 = vmatprep.subr.mxu0 0.0
        %1209 = vmatpush2.msra.mxu0 0.0
        %1210 = vmatprep.subr.mxu0 0.0
        %1211 = vmatpush2.msra.mxu0 0.0
        %1212 = vmatprep.mubr.f32.mxu0 0.0
        %1213 = vmatmul.mubr.f32.gmra.mxu0 %v1143
        %v1214 = vpop.f32.mrf.mxu0
        %v1215 = vadd.f32 0.0, %v1214
        %v1216 = vpop.f32.mrf.mxu0
        %1217 = vmatprep.mubr.f32.mxu0 0.0
        %1218 = vmatmul.mubr.f32.gmra.mxu0 %v1146
        %v1219 = vpop.f32.mrf.mxu0
        %v1220 = vadd.f32 0.0, %v1219
        %v1221 = vpop.f32.mrf.mxu0
        %1222 = vdwg.mxu0
        %v1223 = vadd.f32 %v1124, %v1215
        %v1224 = vadd.f32 %v1125, %v1220
        %s1225 = scalar_lea.vmem %s9, 80
        %v1226 = vld [vmem:[%s1225] sm:$0xff]
        %v1227 = vld [vmem:[%s1225 + $0x8] sm:$0xff]
        %1228 = vrot.lane.b32.xlu0 %v726, 62
        %v1229 = vpop.permute.xlu0 %1228
        %1230 = vrot.lane.b32.xlu0 %v727, 62
        %v1231 = vpop.permute.xlu0 %1230
        %1232 = vrot.lane.b32.xlu0 %v728, 62
        %v1233 = vpop.permute.xlu0 %1232
        %1234 = vrot.lane.b32.xlu0 %v729, 62
        %v1235 = vpop.permute.xlu0 %1234
        %vm1236 = vcmask 506880
        %v1237 = vsel %vm1236, %v1229, %v1231
        %v1238 = vsel %vm1236, %v1233, %v1235
        %v1242 = vsel %vm752, %v1226, 0
        %v1245 = vsel %vm752, %v1227, 0
        %1247 = vmatprep.subr.mxu0 0.0
        %1248 = vmatpush1.msra.mxu0 0.0
        %1249 = vmatprep.subr.mxu0 0.0
        %1250 = vmatpush1.msra.mxu0 0.0
        %1251 = vmatprep.subr.mxu0 0.0
        %1252 = vmatpush1.msra.mxu0 0.0
        %1253 = vmatprep.subr.mxu0 0.0
        %1254 = vmatpush1.msra.mxu0 0.0
        %1255 = vmatprep.subr.mxu0 0.0
        %1256 = vmatpush1.msra.mxu0 0.0
        %1257 = vmatprep.subr.mxu0 0.0
        %1258 = vmatpush1.msra.mxu0 0.0
        %1259 = vmatprep.subr.mxu0 0.0
        %1260 = vmatpush1.msra.mxu0 0.0
        %1261 = vmatprep.subr.mxu0 0.0
        %1262 = vmatpush1.msra.mxu0 0.0
        %1263 = vmatprep.subr.mxu0 0.0
        %1264 = vmatpush1.msra.mxu0 0.0
        %1265 = vmatprep.subr.mxu0 0.0
        %1266 = vmatpush1.msra.mxu0 0.0
        %1267 = vmatprep.subr.mxu0 0.0
        %1268 = vmatpush1.msra.mxu0 0.0
        %1269 = vmatprep.subr.mxu0 0.0
        %1270 = vmatpush1.msra.mxu0 0.0
        %1271 = vmatprep.subr.mxu0 0.0
        %1272 = vmatpush1.msra.mxu0 0.0
        %1273 = vmatprep.subr.mxu0 0.0
        %1274 = vmatpush1.msra.mxu0 0.0
        %1275 = vmatprep.subr.mxu0 0.0
        %1276 = vmatpush1.msra.mxu0 %v1238
        %1277 = vmatprep.subr.mxu0 0.0
        %1278 = vmatpush1.msra.mxu0 %v1237
        %1279 = vmatprep.subr.mxu0 0.0
        %1280 = vmatpush2.msra.mxu0 0.0
        %1281 = vmatprep.subr.mxu0 0.0
        %1282 = vmatpush2.msra.mxu0 0.0
        %1283 = vmatprep.subr.mxu0 0.0
        %1284 = vmatpush2.msra.mxu0 0.0
        %1285 = vmatprep.subr.mxu0 0.0
        %1286 = vmatpush2.msra.mxu0 0.0
        %1287 = vmatprep.subr.mxu0 0.0
        %1288 = vmatpush2.msra.mxu0 0.0
        %1289 = vmatprep.subr.mxu0 0.0
        %1290 = vmatpush2.msra.mxu0 0.0
        %1291 = vmatprep.subr.mxu0 0.0
        %1292 = vmatpush2.msra.mxu0 0.0
        %1293 = vmatprep.subr.mxu0 0.0
        %1294 = vmatpush2.msra.mxu0 0.0
        %1295 = vmatprep.subr.mxu0 0.0
        %1296 = vmatpush2.msra.mxu0 0.0
        %1297 = vmatprep.subr.mxu0 0.0
        %1298 = vmatpush2.msra.mxu0 0.0
        %1299 = vmatprep.subr.mxu0 0.0
        %1300 = vmatpush2.msra.mxu0 0.0
        %1301 = vmatprep.subr.mxu0 0.0
        %1302 = vmatpush2.msra.mxu0 0.0
        %1303 = vmatprep.subr.mxu0 0.0
        %1304 = vmatpush2.msra.mxu0 0.0
        %1305 = vmatprep.subr.mxu0 0.0
        %1306 = vmatpush2.msra.mxu0 0.0
        %1307 = vmatprep.subr.mxu0 0.0
        %1308 = vmatpush2.msra.mxu0 0.0
        %1309 = vmatprep.subr.mxu0 0.0
        %1310 = vmatpush2.msra.mxu0 0.0
        %1311 = vmatprep.mubr.f32.mxu0 0.0
        %1312 = vmatmul.mubr.f32.gmra.mxu0 %v1242
        %v1313 = vpop.f32.mrf.mxu0
        %v1314 = vadd.f32 0.0, %v1313
        %v1315 = vpop.f32.mrf.mxu0
        %1316 = vmatprep.mubr.f32.mxu0 0.0
        %1317 = vmatmul.mubr.f32.gmra.mxu0 %v1245
        %v1318 = vpop.f32.mrf.mxu0
        %v1319 = vadd.f32 0.0, %v1318
        %v1320 = vpop.f32.mrf.mxu0
        %1321 = vdwg.mxu0
        %v1322 = vadd.f32 %v1223, %v1314
        %v1323 = vadd.f32 %v1224, %v1319
        %s1324 = scalar_lea.vmem %s9, 96
        %v1325 = vld [vmem:[%s1324] sm:$0xff]
        %v1326 = vld [vmem:[%s1324 + $0x8] sm:$0xff]
        %1327 = vrot.lane.b32.xlu0 %v726, 61
        %v1328 = vpop.permute.xlu0 %1327
        %1329 = vrot.lane.b32.xlu0 %v727, 61
        %v1330 = vpop.permute.xlu0 %1329
        %1331 = vrot.lane.b32.xlu0 %v728, 61
        %v1332 = vpop.permute.xlu0 %1331
        %1333 = vrot.lane.b32.xlu0 %v729, 61
        %v1334 = vpop.permute.xlu0 %1333
        %vm1335 = vcmask 498688
        %v1336 = vsel %vm1335, %v1328, %v1330
        %v1337 = vsel %vm1335, %v1332, %v1334
        %v1341 = vsel %vm752, %v1325, 0
        %v1344 = vsel %vm752, %v1326, 0
        %1346 = vmatprep.subr.mxu0 0.0
        %1347 = vmatpush1.msra.mxu0 0.0
        %1348 = vmatprep.subr.mxu0 0.0
        %1349 = vmatpush1.msra.mxu0 0.0
        %1350 = vmatprep.subr.mxu0 0.0
        %1351 = vmatpush1.msra.mxu0 0.0
        %1352 = vmatprep.subr.mxu0 0.0
        %1353 = vmatpush1.msra.mxu0 0.0
        %1354 = vmatprep.subr.mxu0 0.0
        %1355 = vmatpush1.msra.mxu0 0.0
        %1356 = vmatprep.subr.mxu0 0.0
        %1357 = vmatpush1.msra.mxu0 0.0
        %1358 = vmatprep.subr.mxu0 0.0
        %1359 = vmatpush1.msra.mxu0 0.0
        %1360 = vmatprep.subr.mxu0 0.0
        %1361 = vmatpush1.msra.mxu0 0.0
        %1362 = vmatprep.subr.mxu0 0.0
        %1363 = vmatpush1.msra.mxu0 0.0
        %1364 = vmatprep.subr.mxu0 0.0
        %1365 = vmatpush1.msra.mxu0 0.0
        %1366 = vmatprep.subr.mxu0 0.0
        %1367 = vmatpush1.msra.mxu0 0.0
        %1368 = vmatprep.subr.mxu0 0.0
        %1369 = vmatpush1.msra.mxu0 0.0
        %1370 = vmatprep.subr.mxu0 0.0
        %1371 = vmatpush1.msra.mxu0 0.0
        %1372 = vmatprep.subr.mxu0 0.0
        %1373 = vmatpush1.msra.mxu0 0.0
        %1374 = vmatprep.subr.mxu0 0.0
        %1375 = vmatpush1.msra.mxu0 %v1337
        %1376 = vmatprep.subr.mxu0 0.0
        %1377 = vmatpush1.msra.mxu0 %v1336
        %1378 = vmatprep.subr.mxu0 0.0
        %1379 = vmatpush2.msra.mxu0 0.0
        %1380 = vmatprep.subr.mxu0 0.0
        %1381 = vmatpush2.msra.mxu0 0.0
        %1382 = vmatprep.subr.mxu0 0.0
        %1383 = vmatpush2.msra.mxu0 0.0
        %1384 = vmatprep.subr.mxu0 0.0
        %1385 = vmatpush2.msra.mxu0 0.0
        %1386 = vmatprep.subr.mxu0 0.0
        %1387 = vmatpush2.msra.mxu0 0.0
        %1388 = vmatprep.subr.mxu0 0.0
        %1389 = vmatpush2.msra.mxu0 0.0
        %1390 = vmatprep.subr.mxu0 0.0
        %1391 = vmatpush2.msra.mxu0 0.0
        %1392 = vmatprep.subr.mxu0 0.0
        %1393 = vmatpush2.msra.mxu0 0.0
        %1394 = vmatprep.subr.mxu0 0.0
        %1395 = vmatpush2.msra.mxu0 0.0
        %1396 = vmatprep.subr.mxu0 0.0
        %1397 = vmatpush2.msra.mxu0 0.0
        %1398 = vmatprep.subr.mxu0 0.0
        %1399 = vmatpush2.msra.mxu0 0.0
        %1400 = vmatprep.subr.mxu0 0.0
        %1401 = vmatpush2.msra.mxu0 0.0
        %1402 = vmatprep.subr.mxu0 0.0
        %1403 = vmatpush2.msra.mxu0 0.0
        %1404 = vmatprep.subr.mxu0 0.0
        %1405 = vmatpush2.msra.mxu0 0.0
        %1406 = vmatprep.subr.mxu0 0.0
        %1407 = vmatpush2.msra.mxu0 0.0
        %1408 = vmatprep.subr.mxu0 0.0
        %1409 = vmatpush2.msra.mxu0 0.0
        %1410 = vmatprep.mubr.f32.mxu0 0.0
        %1411 = vmatmul.mubr.f32.gmra.mxu0 %v1341
        %v1412 = vpop.f32.mrf.mxu0
        %v1413 = vadd.f32 0.0, %v1412
        %v1414 = vpop.f32.mrf.mxu0
        %1415 = vmatprep.mubr.f32.mxu0 0.0
        %1416 = vmatmul.mubr.f32.gmra.mxu0 %v1344
        %v1417 = vpop.f32.mrf.mxu0
        %v1418 = vadd.f32 0.0, %v1417
        %v1419 = vpop.f32.mrf.mxu0
        %1420 = vdwg.mxu0
        %v1421 = vadd.f32 %v1322, %v1413
        %v1422 = vadd.f32 %v1323, %v1418
        %v1423 = vld [vmem:[%s10] sm:$0xff]
        %v1424 = vld [vmem:[%s10 + $0x8] sm:$0xff]
        %1426 = vset.pattern.permute.xlu0 0
        %1427 = vperm.xlu0 %1426, %v1423
        %v1428 = vpop.permute.xlu0 %1427
        %1431 = vset.pattern.permute.xlu0 0
        %1432 = vperm.xlu0 %1431, %v1424
        %v1433 = vpop.permute.xlu0 %1432
        %v1435 = vadd.f32 %v1421, %v1428
        %v1436 = vadd.f32 %v1422, %v1433
        %v1437 = vmax.f32 %v1435, 0.0
        %v1438 = vmax.f32 %v1436, 0.0
        %v1439 = vld [vmem:[#allocation3] sm:$0xff]
        %v1440 = vld [vmem:[#allocation3 + $0x8] sm:$0xff]
        %v1441 = vld [vmem:[%s2] sm:$0xff]
        %v1442 = vld [vmem:[%s2 + $0x8] sm:$0xff]
        %1444 = vset.pattern.permute.xlu0 0
        %1445 = vperm.xlu0 %1444, %v1441
        %v1446 = vpop.permute.xlu0 %1445
        %1449 = vset.pattern.permute.xlu0 0
        %1450 = vperm.xlu0 %1449, %v1442
        %v1451 = vpop.permute.xlu0 %1450
        %v1454 = vsel %vm752, %v1439, 0
        %v1457 = vsel %vm752, %v1440, 0
        %1459 = vmatprep.subr.mxu0 0.0
        %1460 = vmatpush1.msra.mxu0 0.0
        %1461 = vmatprep.subr.mxu0 0.0
        %1462 = vmatpush1.msra.mxu0 0.0
        %1463 = vmatprep.subr.mxu0 0.0
        %1464 = vmatpush1.msra.mxu0 0.0
        %1465 = vmatprep.subr.mxu0 0.0
        %1466 = vmatpush1.msra.mxu0 0.0
        %1467 = vmatprep.subr.mxu0 0.0
        %1468 = vmatpush1.msra.mxu0 0.0
        %1469 = vmatprep.subr.mxu0 0.0
        %1470 = vmatpush1.msra.mxu0 0.0
        %1471 = vmatprep.subr.mxu0 0.0
        %1472 = vmatpush1.msra.mxu0 0.0
        %1473 = vmatprep.subr.mxu0 0.0
        %1474 = vmatpush1.msra.mxu0 0.0
        %1475 = vmatprep.subr.mxu0 0.0
        %1476 = vmatpush1.msra.mxu0 0.0
        %1477 = vmatprep.subr.mxu0 0.0
        %1478 = vmatpush1.msra.mxu0 0.0
        %1479 = vmatprep.subr.mxu0 0.0
        %1480 = vmatpush1.msra.mxu0 0.0
        %1481 = vmatprep.subr.mxu0 0.0
        %1482 = vmatpush1.msra.mxu0 0.0
        %1483 = vmatprep.subr.mxu0 0.0
        %1484 = vmatpush1.msra.mxu0 0.0
        %1485 = vmatprep.subr.mxu0 0.0
        %1486 = vmatpush1.msra.mxu0 0.0
        %1487 = vmatprep.subr.mxu0 %v729
        %1488 = vmatpush1.msra.mxu0 %v728
        %1489 = vmatprep.subr.mxu0 %v727
        %1490 = vmatpush1.msra.mxu0 %v726
        %1491 = vmatprep.subr.mxu0 0.0
        %1492 = vmatpush2.msra.mxu0 0.0
        %1493 = vmatprep.subr.mxu0 0.0
        %1494 = vmatpush2.msra.mxu0 0.0
        %1495 = vmatprep.subr.mxu0 0.0
        %1496 = vmatpush2.msra.mxu0 0.0
        %1497 = vmatprep.subr.mxu0 0.0
        %1498 = vmatpush2.msra.mxu0 0.0
        %1499 = vmatprep.subr.mxu0 0.0
        %1500 = vmatpush2.msra.mxu0 0.0
        %1501 = vmatprep.subr.mxu0 0.0
        %1502 = vmatpush2.msra.mxu0 0.0
        %1503 = vmatprep.subr.mxu0 0.0
        %1504 = vmatpush2.msra.mxu0 0.0
        %1505 = vmatprep.subr.mxu0 0.0
        %1506 = vmatpush2.msra.mxu0 0.0
        %1507 = vmatprep.subr.mxu0 0.0
        %1508 = vmatpush2.msra.mxu0 0.0
        %1509 = vmatprep.subr.mxu0 0.0
        %1510 = vmatpush2.msra.mxu0 0.0
        %1511 = vmatprep.subr.mxu0 0.0
        %1512 = vmatpush2.msra.mxu0 0.0
        %1513 = vmatprep.subr.mxu0 0.0
        %1514 = vmatpush2.msra.mxu0 0.0
        %1515 = vmatprep.subr.mxu0 0.0
        %1516 = vmatpush2.msra.mxu0 0.0
        %1517 = vmatprep.subr.mxu0 0.0
        %1518 = vmatpush2.msra.mxu0 0.0
        %1519 = vmatprep.subr.mxu0 0.0
        %1520 = vmatpush2.msra.mxu0 0.0
        %1521 = vmatprep.subr.mxu0 0.0
        %1522 = vmatpush2.msra.mxu0 0.0
        %1523 = vmatprep.mubr.f32.mxu0 0.0
        %1524 = vmatmul.mubr.f32.gmra.mxu0 %v1454
        %v1525 = vpop.f32.mrf.mxu0
        %v1526 = vadd.f32 %v1446, %v1525
        %v1527 = vpop.f32.mrf.mxu0
        %v1528 = vadd.f32 %v1446, %v1527
        %1529 = vmatprep.mubr.f32.mxu0 0.0
        %1530 = vmatmul.mubr.f32.gmra.mxu0 %v1457
        %v1531 = vpop.f32.mrf.mxu0
        %v1532 = vadd.f32 %v1451, %v1531
        %v1533 = vpop.f32.mrf.mxu0
        %v1534 = vadd.f32 %v1451, %v1533
        %1535 = vdwg.mxu0
        %v1536 = vmax.f32 %v1526, 0.0
        %v1537 = vmax.f32 %v1528, 0.0
        %v1538 = vmax.f32 %v1532, 0.0
        %v1539 = vmax.f32 %v1534, 0.0
        %v1540 = vld [vmem:[%s5] sm:$0xff]
        %v1541 = vld [vmem:[%s5 + $0x8] sm:$0xff]
        %s1542 = scalar_lea.vmem %s5, 16
        %v1543 = vld [vmem:[%s1542] sm:$0xff]
        %v1544 = vld [vmem:[%s1542 + $0x8] sm:$0xff]
        %1549 = vrot.lane.b32.xlu0 %v1536, 64
        %v1550 = vpop.permute.xlu0 %1549
        %1551 = vrot.lane.b32.xlu0 %v1537, 64
        %v1552 = vpop.permute.xlu0 %1551
        %1553 = vrot.lane.b32.xlu0 %v1538, 64
        %v1554 = vpop.permute.xlu0 %1553
        %1555 = vrot.lane.b32.xlu0 %v1539, 64
        %v1556 = vpop.permute.xlu0 %1555
        %v1557 = vsel %vm1038, %v1550, %v1552
        %v1558 = vsel %vm1038, %v1554, %v1556
        %v1562 = vsel %vm752, %v1543, 0
        %v1565 = vsel %vm752, %v1544, 0
        %1567 = vmatprep.subr.mxu0 0.0
        %1568 = vmatpush1.msra.mxu0 0.0
        %1569 = vmatprep.subr.mxu0 0.0
        %1570 = vmatpush1.msra.mxu0 0.0
        %1571 = vmatprep.subr.mxu0 0.0
        %1572 = vmatpush1.msra.mxu0 0.0
        %1573 = vmatprep.subr.mxu0 0.0
        %1574 = vmatpush1.msra.mxu0 0.0
        %1575 = vmatprep.subr.mxu0 0.0
        %1576 = vmatpush1.msra.mxu0 0.0
        %1577 = vmatprep.subr.mxu0 0.0
        %1578 = vmatpush1.msra.mxu0 0.0
        %1579 = vmatprep.subr.mxu0 0.0
        %1580 = vmatpush1.msra.mxu0 0.0
        %1581 = vmatprep.subr.mxu0 0.0
        %1582 = vmatpush1.msra.mxu0 0.0
        %1583 = vmatprep.subr.mxu0 0.0
        %1584 = vmatpush1.msra.mxu0 0.0
        %1585 = vmatprep.subr.mxu0 0.0
        %1586 = vmatpush1.msra.mxu0 0.0
        %1587 = vmatprep.subr.mxu0 0.0
        %1588 = vmatpush1.msra.mxu0 0.0
        %1589 = vmatprep.subr.mxu0 0.0
        %1590 = vmatpush1.msra.mxu0 0.0
        %1591 = vmatprep.subr.mxu0 0.0
        %1592 = vmatpush1.msra.mxu0 0.0
        %1593 = vmatprep.subr.mxu0 0.0
        %1594 = vmatpush1.msra.mxu0 0.0
        %1595 = vmatprep.subr.mxu0 0.0
        %1596 = vmatpush1.msra.mxu0 %v1558
        %1597 = vmatprep.subr.mxu0 0.0
        %1598 = vmatpush1.msra.mxu0 %v1557
        %1599 = vmatprep.subr.mxu0 0.0
        %1600 = vmatpush2.msra.mxu0 0.0
        %1601 = vmatprep.subr.mxu0 0.0
        %1602 = vmatpush2.msra.mxu0 0.0
        %1603 = vmatprep.subr.mxu0 0.0
        %1604 = vmatpush2.msra.mxu0 0.0
        %1605 = vmatprep.subr.mxu0 0.0
        %1606 = vmatpush2.msra.mxu0 0.0
        %1607 = vmatprep.subr.mxu0 0.0
        %1608 = vmatpush2.msra.mxu0 0.0
        %1609 = vmatprep.subr.mxu0 0.0
        %1610 = vmatpush2.msra.mxu0 0.0
        %1611 = vmatprep.subr.mxu0 0.0
        %1612 = vmatpush2.msra.mxu0 0.0
        %1613 = vmatprep.subr.mxu0 0.0
        %1614 = vmatpush2.msra.mxu0 0.0
        %1615 = vmatprep.subr.mxu0 0.0
        %1616 = vmatpush2.msra.mxu0 0.0
        %1617 = vmatprep.subr.mxu0 0.0
        %1618 = vmatpush2.msra.mxu0 0.0
        %1619 = vmatprep.subr.mxu0 0.0
        %1620 = vmatpush2.msra.mxu0 0.0
        %1621 = vmatprep.subr.mxu0 0.0
        %1622 = vmatpush2.msra.mxu0 0.0
        %1623 = vmatprep.subr.mxu0 0.0
        %1624 = vmatpush2.msra.mxu0 0.0
        %1625 = vmatprep.subr.mxu0 0.0
        %1626 = vmatpush2.msra.mxu0 0.0
        %1627 = vmatprep.subr.mxu0 0.0
        %1628 = vmatpush2.msra.mxu0 0.0
        %1629 = vmatprep.subr.mxu0 0.0
        %1630 = vmatpush2.msra.mxu0 0.0
        %1631 = vmatprep.mubr.f32.mxu0 0.0
        %1632 = vmatmul.mubr.f32.gmra.mxu0 %v1562
        %v1633 = vpop.f32.mrf.mxu0
        %v1634 = vadd.f32 0.0, %v1633
        %v1635 = vpop.f32.mrf.mxu0
        %1636 = vmatprep.mubr.f32.mxu0 0.0
        %1637 = vmatmul.mubr.f32.gmra.mxu0 %v1565
        %v1638 = vpop.f32.mrf.mxu0
        %v1639 = vadd.f32 0.0, %v1638
        %v1640 = vpop.f32.mrf.mxu0
        %1641 = vdwg.mxu0
        %1642 = vrot.lane.b32.xlu0 %v1536, 65
        %v1643 = vpop.permute.xlu0 %1642
        %1644 = vrot.lane.b32.xlu0 %v1537, 65
        %v1645 = vpop.permute.xlu0 %1644
        %1646 = vrot.lane.b32.xlu0 %v1538, 65
        %v1647 = vpop.permute.xlu0 %1646
        %1648 = vrot.lane.b32.xlu0 %v1539, 65
        %v1649 = vpop.permute.xlu0 %1648
        %v1650 = vsel %vm939, %v1643, %v1645
        %v1651 = vsel %vm939, %v1647, %v1649
        %v1655 = vsel %vm752, %v1540, 0
        %v1658 = vsel %vm752, %v1541, 0
        %1660 = vmatprep.subr.mxu0 0.0
        %1661 = vmatpush1.msra.mxu0 0.0
        %1662 = vmatprep.subr.mxu0 0.0
        %1663 = vmatpush1.msra.mxu0 0.0
        %1664 = vmatprep.subr.mxu0 0.0
        %1665 = vmatpush1.msra.mxu0 0.0
        %1666 = vmatprep.subr.mxu0 0.0
        %1667 = vmatpush1.msra.mxu0 0.0
        %1668 = vmatprep.subr.mxu0 0.0
        %1669 = vmatpush1.msra.mxu0 0.0
        %1670 = vmatprep.subr.mxu0 0.0
        %1671 = vmatpush1.msra.mxu0 0.0
        %1672 = vmatprep.subr.mxu0 0.0
        %1673 = vmatpush1.msra.mxu0 0.0
        %1674 = vmatprep.subr.mxu0 0.0
        %1675 = vmatpush1.msra.mxu0 0.0
        %1676 = vmatprep.subr.mxu0 0.0
        %1677 = vmatpush1.msra.mxu0 0.0
        %1678 = vmatprep.subr.mxu0 0.0
        %1679 = vmatpush1.msra.mxu0 0.0
        %1680 = vmatprep.subr.mxu0 0.0
        %1681 = vmatpush1.msra.mxu0 0.0
        %1682 = vmatprep.subr.mxu0 0.0
        %1683 = vmatpush1.msra.mxu0 0.0
        %1684 = vmatprep.subr.mxu0 0.0
        %1685 = vmatpush1.msra.mxu0 0.0
        %1686 = vmatprep.subr.mxu0 0.0
        %1687 = vmatpush1.msra.mxu0 0.0
        %1688 = vmatprep.subr.mxu0 0.0
        %1689 = vmatpush1.msra.mxu0 %v1651
        %1690 = vmatprep.subr.mxu0 0.0
        %1691 = vmatpush1.msra.mxu0 %v1650
        %1692 = vmatprep.subr.mxu0 0.0
        %1693 = vmatpush2.msra.mxu0 0.0
        %1694 = vmatprep.subr.mxu0 0.0
        %1695 = vmatpush2.msra.mxu0 0.0
        %1696 = vmatprep.subr.mxu0 0.0
        %1697 = vmatpush2.msra.mxu0 0.0
        %1698 = vmatprep.subr.mxu0 0.0
        %1699 = vmatpush2.msra.mxu0 0.0
        %1700 = vmatprep.subr.mxu0 0.0
        %1701 = vmatpush2.msra.mxu0 0.0
        %1702 = vmatprep.subr.mxu0 0.0
        %1703 = vmatpush2.msra.mxu0 0.0
        %1704 = vmatprep.subr.mxu0 0.0
        %1705 = vmatpush2.msra.mxu0 0.0
        %1706 = vmatprep.subr.mxu0 0.0
        %1707 = vmatpush2.msra.mxu0 0.0
        %1708 = vmatprep.subr.mxu0 0.0
        %1709 = vmatpush2.msra.mxu0 0.0
        %1710 = vmatprep.subr.mxu0 0.0
        %1711 = vmatpush2.msra.mxu0 0.0
        %1712 = vmatprep.subr.mxu0 0.0
        %1713 = vmatpush2.msra.mxu0 0.0
        %1714 = vmatprep.subr.mxu0 0.0
        %1715 = vmatpush2.msra.mxu0 0.0
        %1716 = vmatprep.subr.mxu0 0.0
        %1717 = vmatpush2.msra.mxu0 0.0
        %1718 = vmatprep.subr.mxu0 0.0
        %1719 = vmatpush2.msra.mxu0 0.0
        %1720 = vmatprep.subr.mxu0 0.0
        %1721 = vmatpush2.msra.mxu0 0.0
        %1722 = vmatprep.subr.mxu0 0.0
        %1723 = vmatpush2.msra.mxu0 0.0
        %1724 = vmatprep.mubr.f32.mxu0 0.0
        %1725 = vmatmul.mubr.f32.gmra.mxu0 %v1655
        %v1726 = vpop.f32.mrf.mxu0
        %v1727 = vadd.f32 %v1634, %v1726
        %v1728 = vpop.f32.mrf.mxu0
        %1729 = vmatprep.mubr.f32.mxu0 0.0
        %1730 = vmatmul.mubr.f32.gmra.mxu0 %v1658
        %v1731 = vpop.f32.mrf.mxu0
        %v1732 = vadd.f32 %v1639, %v1731
        %v1733 = vpop.f32.mrf.mxu0
        %1734 = vdwg.mxu0
        %s1735 = scalar_lea.vmem %s5, 32
        %v1736 = vld [vmem:[%s1735] sm:$0xff]
        %v1737 = vld [vmem:[%s1735 + $0x8] sm:$0xff]
        %1738 = vrot.lane.b32.xlu0 %v1536, 63
        %v1739 = vpop.permute.xlu0 %1738
        %1740 = vrot.lane.b32.xlu0 %v1537, 63
        %v1741 = vpop.permute.xlu0 %1740
        %1742 = vrot.lane.b32.xlu0 %v1538, 63
        %v1743 = vpop.permute.xlu0 %1742
        %1744 = vrot.lane.b32.xlu0 %v1539, 63
        %v1745 = vpop.permute.xlu0 %1744
        %v1746 = vsel %vm1137, %v1739, %v1741
        %v1747 = vsel %vm1137, %v1743, %v1745
        %v1751 = vsel %vm752, %v1736, 0
        %v1754 = vsel %vm752, %v1737, 0
        %1756 = vmatprep.subr.mxu0 0.0
        %1757 = vmatpush1.msra.mxu0 0.0
        %1758 = vmatprep.subr.mxu0 0.0
        %1759 = vmatpush1.msra.mxu0 0.0
        %1760 = vmatprep.subr.mxu0 0.0
        %1761 = vmatpush1.msra.mxu0 0.0
        %1762 = vmatprep.subr.mxu0 0.0
        %1763 = vmatpush1.msra.mxu0 0.0
        %1764 = vmatprep.subr.mxu0 0.0
        %1765 = vmatpush1.msra.mxu0 0.0
        %1766 = vmatprep.subr.mxu0 0.0
        %1767 = vmatpush1.msra.mxu0 0.0
        %1768 = vmatprep.subr.mxu0 0.0
        %1769 = vmatpush1.msra.mxu0 0.0
        %1770 = vmatprep.subr.mxu0 0.0
        %1771 = vmatpush1.msra.mxu0 0.0
        %1772 = vmatprep.subr.mxu0 0.0
        %1773 = vmatpush1.msra.mxu0 0.0
        %1774 = vmatprep.subr.mxu0 0.0
        %1775 = vmatpush1.msra.mxu0 0.0
        %1776 = vmatprep.subr.mxu0 0.0
        %1777 = vmatpush1.msra.mxu0 0.0
        %1778 = vmatprep.subr.mxu0 0.0
        %1779 = vmatpush1.msra.mxu0 0.0
        %1780 = vmatprep.subr.mxu0 0.0
        %1781 = vmatpush1.msra.mxu0 0.0
        %1782 = vmatprep.subr.mxu0 0.0
        %1783 = vmatpush1.msra.mxu0 0.0
        %1784 = vmatprep.subr.mxu0 0.0
        %1785 = vmatpush1.msra.mxu0 %v1747
        %1786 = vmatprep.subr.mxu0 0.0
        %1787 = vmatpush1.msra.mxu0 %v1746
        %1788 = vmatprep.subr.mxu0 0.0
        %1789 = vmatpush2.msra.mxu0 0.0
        %1790 = vmatprep.subr.mxu0 0.0
        %1791 = vmatpush2.msra.mxu0 0.0
        %1792 = vmatprep.subr.mxu0 0.0
        %1793 = vmatpush2.msra.mxu0 0.0
        %1794 = vmatprep.subr.mxu0 0.0
        %1795 = vmatpush2.msra.mxu0 0.0
        %1796 = vmatprep.subr.mxu0 0.0
        %1797 = vmatpush2.msra.mxu0 0.0
        %1798 = vmatprep.subr.mxu0 0.0
        %1799 = vmatpush2.msra.mxu0 0.0
        %1800 = vmatprep.subr.mxu0 0.0
        %1801 = vmatpush2.msra.mxu0 0.0
        %1802 = vmatprep.subr.mxu0 0.0
        %1803 = vmatpush2.msra.mxu0 0.0
        %1804 = vmatprep.subr.mxu0 0.0
        %1805 = vmatpush2.msra.mxu0 0.0
        %1806 = vmatprep.subr.mxu0 0.0
        %1807 = vmatpush2.msra.mxu0 0.0
        %1808 = vmatprep.subr.mxu0 0.0
        %1809 = vmatpush2.msra.mxu0 0.0
        %1810 = vmatprep.subr.mxu0 0.0
        %1811 = vmatpush2.msra.mxu0 0.0
        %1812 = vmatprep.subr.mxu0 0.0
        %1813 = vmatpush2.msra.mxu0 0.0
        %1814 = vmatprep.subr.mxu0 0.0
        %1815 = vmatpush2.msra.mxu0 0.0
        %1816 = vmatprep.subr.mxu0 0.0
        %1817 = vmatpush2.msra.mxu0 0.0
        %1818 = vmatprep.subr.mxu0 0.0
        %1819 = vmatpush2.msra.mxu0 0.0
        %1820 = vmatprep.mubr.f32.mxu0 0.0
        %1821 = vmatmul.mubr.f32.gmra.mxu0 %v1751
        %v1822 = vpop.f32.mrf.mxu0
        %v1823 = vadd.f32 0.0, %v1822
        %v1824 = vpop.f32.mrf.mxu0
        %1825 = vmatprep.mubr.f32.mxu0 0.0
        %1826 = vmatmul.mubr.f32.gmra.mxu0 %v1754
        %v1827 = vpop.f32.mrf.mxu0
        %v1828 = vadd.f32 0.0, %v1827
        %v1829 = vpop.f32.mrf.mxu0
        %1830 = vdwg.mxu0
        %v1831 = vadd.f32 %v1727, %v1823
        %v1832 = vadd.f32 %v1732, %v1828
        %v1833 = vld [vmem:[%s6] sm:$0xff]
        %v1834 = vld [vmem:[%s6 + $0x8] sm:$0xff]
        %1836 = vset.pattern.permute.xlu0 0
        %1837 = vperm.xlu0 %1836, %v1833
        %v1838 = vpop.permute.xlu0 %1837
        %1841 = vset.pattern.permute.xlu0 0
        %1842 = vperm.xlu0 %1841, %v1834
        %v1843 = vpop.permute.xlu0 %1842
        %v1845 = vadd.f32 %v1831, %v1838
        %v1846 = vadd.f32 %v1832, %v1843
        %v1847 = vmax.f32 %v1845, 0.0
        %v1848 = vmax.f32 %v1846, 0.0
        %v1849 = vld [vmem:[#allocation6] sm:$0xff]
        %v1850 = vld [vmem:[#allocation6 + $0x8] sm:$0xff]
        %v1851 = vld [vmem:[%s4] sm:$0xff]
        %v1852 = vld [vmem:[%s4 + $0x8] sm:$0xff]
        %1854 = vset.pattern.permute.xlu0 0
        %1855 = vperm.xlu0 %1854, %v1851
        %v1856 = vpop.permute.xlu0 %1855
        %1859 = vset.pattern.permute.xlu0 0
        %1860 = vperm.xlu0 %1859, %v1852
        %v1861 = vpop.permute.xlu0 %1860
        %v1864 = vsel %vm752, %v1849, 0
        %v1867 = vsel %vm752, %v1850, 0
        %1869 = vmatprep.subr.mxu0 0.0
        %1870 = vmatpush1.msra.mxu0 0.0
        %1871 = vmatprep.subr.mxu0 0.0
        %1872 = vmatpush1.msra.mxu0 0.0
        %1873 = vmatprep.subr.mxu0 0.0
        %1874 = vmatpush1.msra.mxu0 0.0
        %1875 = vmatprep.subr.mxu0 0.0
        %1876 = vmatpush1.msra.mxu0 0.0
        %1877 = vmatprep.subr.mxu0 0.0
        %1878 = vmatpush1.msra.mxu0 0.0
        %1879 = vmatprep.subr.mxu0 0.0
        %1880 = vmatpush1.msra.mxu0 0.0
        %1881 = vmatprep.subr.mxu0 0.0
        %1882 = vmatpush1.msra.mxu0 0.0
        %1883 = vmatprep.subr.mxu0 0.0
        %1884 = vmatpush1.msra.mxu0 0.0
        %1885 = vmatprep.subr.mxu0 0.0
        %1886 = vmatpush1.msra.mxu0 0.0
        %1887 = vmatprep.subr.mxu0 0.0
        %1888 = vmatpush1.msra.mxu0 0.0
        %1889 = vmatprep.subr.mxu0 0.0
        %1890 = vmatpush1.msra.mxu0 0.0
        %1891 = vmatprep.subr.mxu0 0.0
        %1892 = vmatpush1.msra.mxu0 0.0
        %1893 = vmatprep.subr.mxu0 0.0
        %1894 = vmatpush1.msra.mxu0 0.0
        %1895 = vmatprep.subr.mxu0 0.0
        %1896 = vmatpush1.msra.mxu0 0.0
        %1897 = vmatprep.subr.mxu0 %v729
        %1898 = vmatpush1.msra.mxu0 %v728
        %1899 = vmatprep.subr.mxu0 %v727
        %1900 = vmatpush1.msra.mxu0 %v726
        %1901 = vmatprep.subr.mxu0 0.0
        %1902 = vmatpush2.msra.mxu0 0.0
        %1903 = vmatprep.subr.mxu0 0.0
        %1904 = vmatpush2.msra.mxu0 0.0
        %1905 = vmatprep.subr.mxu0 0.0
        %1906 = vmatpush2.msra.mxu0 0.0
        %1907 = vmatprep.subr.mxu0 0.0
        %1908 = vmatpush2.msra.mxu0 0.0
        %1909 = vmatprep.subr.mxu0 0.0
        %1910 = vmatpush2.msra.mxu0 0.0
        %1911 = vmatprep.subr.mxu0 0.0
        %1912 = vmatpush2.msra.mxu0 0.0
        %1913 = vmatprep.subr.mxu0 0.0
        %1914 = vmatpush2.msra.mxu0 0.0
        %1915 = vmatprep.subr.mxu0 0.0
        %1916 = vmatpush2.msra.mxu0 0.0
        %1917 = vmatprep.subr.mxu0 0.0
        %1918 = vmatpush2.msra.mxu0 0.0
        %1919 = vmatprep.subr.mxu0 0.0
        %1920 = vmatpush2.msra.mxu0 0.0
        %1921 = vmatprep.subr.mxu0 0.0
        %1922 = vmatpush2.msra.mxu0 0.0
        %1923 = vmatprep.subr.mxu0 0.0
        %1924 = vmatpush2.msra.mxu0 0.0
        %1925 = vmatprep.subr.mxu0 0.0
        %1926 = vmatpush2.msra.mxu0 0.0
        %1927 = vmatprep.subr.mxu0 0.0
        %1928 = vmatpush2.msra.mxu0 0.0
        %1929 = vmatprep.subr.mxu0 0.0
        %1930 = vmatpush2.msra.mxu0 0.0
        %1931 = vmatprep.subr.mxu0 0.0
        %1932 = vmatpush2.msra.mxu0 0.0
        %1933 = vmatprep.mubr.f32.mxu0 0.0
        %1934 = vmatmul.mubr.f32.gmra.mxu0 %v1864
        %v1935 = vpop.f32.mrf.mxu0
        %v1936 = vadd.f32 %v1856, %v1935
        %v1937 = vpop.f32.mrf.mxu0
        %v1938 = vadd.f32 %v1856, %v1937
        %1939 = vmatprep.mubr.f32.mxu0 0.0
        %1940 = vmatmul.mubr.f32.gmra.mxu0 %v1867
        %v1941 = vpop.f32.mrf.mxu0
        %v1942 = vadd.f32 %v1861, %v1941
        %v1943 = vpop.f32.mrf.mxu0
        %v1944 = vadd.f32 %v1861, %v1943
        %1945 = vdwg.mxu0
        %v1946 = vmax.f32 %v1936, 0.0
        %v1947 = vmax.f32 %v1938, 0.0
        %v1948 = vmax.f32 %v1942, 0.0
        %v1949 = vmax.f32 %v1944, 0.0
        %v1950 = vld [vmem:[%s17] sm:$0x3]
        %v1952 = vlaneseq
        %v1953 = vshrl.u32 %v1952, 7
        %v1954 = vsub.s32 0, %v1953
        %v1955 = vrot.slane %v1950, %v1954
        %v1956 = vlaneseq
        %v1957 = vshrl.u32 %v1956, 7
        %v1958 = vsub.s32 1, %v1957
        %v1959 = vrot.slane %v1950, %v1958
        %v1962 = vmul.f32 %v1946, %v1955
        %v1963 = vmul.f32 %v1947, %v1959
        %v1964 = vmul.f32 %v1948, %v1955
        %v1965 = vmul.f32 %v1949, %v1959
        %v1966 = vld [vmem:[%s7] sm:$0xff]
        %v1967 = vld [vmem:[%s7 + $0x8] sm:$0xff]
        %s1968 = scalar_lea.vmem %s7, 16
        %v1969 = vld [vmem:[%s1968] sm:$0xff]
        %v1970 = vld [vmem:[%s1968 + $0x8] sm:$0xff]
        %1975 = vrot.lane.b32.xlu0 %v1962, 66
        %v1976 = vpop.permute.xlu0 %1975
        %1977 = vrot.lane.b32.xlu0 %v1963, 66
        %v1978 = vpop.permute.xlu0 %1977
        %1979 = vrot.lane.b32.xlu0 %v1964, 66
        %v1980 = vpop.permute.xlu0 %1979
        %1981 = vrot.lane.b32.xlu0 %v1965, 66
        %v1982 = vpop.permute.xlu0 %1981
        %v1983 = vsel %vm747, %v1976, %v1978
        %v1984 = vsel %vm747, %v1980, %v1982
        %v1988 = vsel %vm752, %v1969, 0
        %v1991 = vsel %vm752, %v1970, 0
        %1993 = vmatprep.subr.mxu0 0.0
        %1994 = vmatpush1.msra.mxu0 0.0
        %1995 = vmatprep.subr.mxu0 0.0
        %1996 = vmatpush1.msra.mxu0 0.0
        %1997 = vmatprep.subr.mxu0 0.0
        %1998 = vmatpush1.msra.mxu0 0.0
        %1999 = vmatprep.subr.mxu0 0.0
        %2000 = vmatpush1.msra.mxu0 0.0
        %2001 = vmatprep.subr.mxu0 0.0
        %2002 = vmatpush1.msra.mxu0 0.0
        %2003 = vmatprep.subr.mxu0 0.0
        %2004 = vmatpush1.msra.mxu0 0.0
        %2005 = vmatprep.subr.mxu0 0.0
        %2006 = vmatpush1.msra.mxu0 0.0
        %2007 = vmatprep.subr.mxu0 0.0
        %2008 = vmatpush1.msra.mxu0 0.0
        %2009 = vmatprep.subr.mxu0 0.0
        %2010 = vmatpush1.msra.mxu0 0.0
        %2011 = vmatprep.subr.mxu0 0.0
        %2012 = vmatpush1.msra.mxu0 0.0
        %2013 = vmatprep.subr.mxu0 0.0
        %2014 = vmatpush1.msra.mxu0 0.0
        %2015 = vmatprep.subr.mxu0 0.0
        %2016 = vmatpush1.msra.mxu0 0.0
        %2017 = vmatprep.subr.mxu0 0.0
        %2018 = vmatpush1.msra.mxu0 0.0
        %2019 = vmatprep.subr.mxu0 0.0
        %2020 = vmatpush1.msra.mxu0 0.0
        %2021 = vmatprep.subr.mxu0 0.0
        %2022 = vmatpush1.msra.mxu0 %v1984
        %2023 = vmatprep.subr.mxu0 0.0
        %2024 = vmatpush1.msra.mxu0 %v1983
        %2025 = vmatprep.subr.mxu0 0.0
        %2026 = vmatpush2.msra.mxu0 0.0
        %2027 = vmatprep.subr.mxu0 0.0
        %2028 = vmatpush2.msra.mxu0 0.0
        %2029 = vmatprep.subr.mxu0 0.0
        %2030 = vmatpush2.msra.mxu0 0.0
        %2031 = vmatprep.subr.mxu0 0.0
        %2032 = vmatpush2.msra.mxu0 0.0
        %2033 = vmatprep.subr.mxu0 0.0
        %2034 = vmatpush2.msra.mxu0 0.0
        %2035 = vmatprep.subr.mxu0 0.0
        %2036 = vmatpush2.msra.mxu0 0.0
        %2037 = vmatprep.subr.mxu0 0.0
        %2038 = vmatpush2.msra.mxu0 0.0
        %2039 = vmatprep.subr.mxu0 0.0
        %2040 = vmatpush2.msra.mxu0 0.0
        %2041 = vmatprep.subr.mxu0 0.0
        %2042 = vmatpush2.msra.mxu0 0.0
        %2043 = vmatprep.subr.mxu0 0.0
        %2044 = vmatpush2.msra.mxu0 0.0
        %2045 = vmatprep.subr.mxu0 0.0
        %2046 = vmatpush2.msra.mxu0 0.0
        %2047 = vmatprep.subr.mxu0 0.0
        %2048 = vmatpush2.msra.mxu0 0.0
        %2049 = vmatprep.subr.mxu0 0.0
        %2050 = vmatpush2.msra.mxu0 0.0
        %2051 = vmatprep.subr.mxu0 0.0
        %2052 = vmatpush2.msra.mxu0 0.0
        %2053 = vmatprep.subr.mxu0 0.0
        %2054 = vmatpush2.msra.mxu0 0.0
        %2055 = vmatprep.subr.mxu0 0.0
        %2056 = vmatpush2.msra.mxu0 0.0
        %2057 = vmatprep.mubr.f32.mxu0 0.0
        %2058 = vmatmul.mubr.f32.gmra.mxu0 %v1988
        %v2059 = vpop.f32.mrf.mxu0
        %v2060 = vadd.f32 0.0, %v2059
        %v2061 = vpop.f32.mrf.mxu0
        %2062 = vmatprep.mubr.f32.mxu0 0.0
        %2063 = vmatmul.mubr.f32.gmra.mxu0 %v1991
        %v2064 = vpop.f32.mrf.mxu0
        %v2065 = vadd.f32 0.0, %v2064
        %v2066 = vpop.f32.mrf.mxu0
        %2067 = vdwg.mxu0
        %2068 = vrot.lane.b32.xlu0 %v1962, 68
        %v2069 = vpop.permute.xlu0 %2068
        %2070 = vrot.lane.b32.xlu0 %v1963, 68
        %v2071 = vpop.permute.xlu0 %2070
        %2072 = vrot.lane.b32.xlu0 %v1964, 68
        %v2073 = vpop.permute.xlu0 %2072
        %2074 = vrot.lane.b32.xlu0 %v1965, 68
        %v2075 = vpop.permute.xlu0 %2074
        %vm2076 = vcmask 556032
        %v2077 = vsel %vm2076, %v2069, %v2071
        %v2078 = vsel %vm2076, %v2073, %v2075
        %v2082 = vsel %vm752, %v1966, 0
        %v2085 = vsel %vm752, %v1967, 0
        %2087 = vmatprep.subr.mxu0 0.0
        %2088 = vmatpush1.msra.mxu0 0.0
        %2089 = vmatprep.subr.mxu0 0.0
        %2090 = vmatpush1.msra.mxu0 0.0
        %2091 = vmatprep.subr.mxu0 0.0
        %2092 = vmatpush1.msra.mxu0 0.0
        %2093 = vmatprep.subr.mxu0 0.0
        %2094 = vmatpush1.msra.mxu0 0.0
        %2095 = vmatprep.subr.mxu0 0.0
        %2096 = vmatpush1.msra.mxu0 0.0
        %2097 = vmatprep.subr.mxu0 0.0
        %2098 = vmatpush1.msra.mxu0 0.0
        %2099 = vmatprep.subr.mxu0 0.0
        %2100 = vmatpush1.msra.mxu0 0.0
        %2101 = vmatprep.subr.mxu0 0.0
        %2102 = vmatpush1.msra.mxu0 0.0
        %2103 = vmatprep.subr.mxu0 0.0
        %2104 = vmatpush1.msra.mxu0 0.0
        %2105 = vmatprep.subr.mxu0 0.0
        %2106 = vmatpush1.msra.mxu0 0.0
        %2107 = vmatprep.subr.mxu0 0.0
        %2108 = vmatpush1.msra.mxu0 0.0
        %2109 = vmatprep.subr.mxu0 0.0
        %2110 = vmatpush1.msra.mxu0 0.0
        %2111 = vmatprep.subr.mxu0 0.0
        %2112 = vmatpush1.msra.mxu0 0.0
        %2113 = vmatprep.subr.mxu0 0.0
        %2114 = vmatpush1.msra.mxu0 0.0
        %2115 = vmatprep.subr.mxu0 0.0
        %2116 = vmatpush1.msra.mxu0 %v2078
        %2117 = vmatprep.subr.mxu0 0.0
        %2118 = vmatpush1.msra.mxu0 %v2077
        %2119 = vmatprep.subr.mxu0 0.0
        %2120 = vmatpush2.msra.mxu0 0.0
        %2121 = vmatprep.subr.mxu0 0.0
        %2122 = vmatpush2.msra.mxu0 0.0
        %2123 = vmatprep.subr.mxu0 0.0
        %2124 = vmatpush2.msra.mxu0 0.0
        %2125 = vmatprep.subr.mxu0 0.0
        %2126 = vmatpush2.msra.mxu0 0.0
        %2127 = vmatprep.subr.mxu0 0.0
        %2128 = vmatpush2.msra.mxu0 0.0
        %2129 = vmatprep.subr.mxu0 0.0
        %2130 = vmatpush2.msra.mxu0 0.0
        %2131 = vmatprep.subr.mxu0 0.0
        %2132 = vmatpush2.msra.mxu0 0.0
        %2133 = vmatprep.subr.mxu0 0.0
        %2134 = vmatpush2.msra.mxu0 0.0
        %2135 = vmatprep.subr.mxu0 0.0
        %2136 = vmatpush2.msra.mxu0 0.0
        %2137 = vmatprep.subr.mxu0 0.0
        %2138 = vmatpush2.msra.mxu0 0.0
        %2139 = vmatprep.subr.mxu0 0.0
        %2140 = vmatpush2.msra.mxu0 0.0
        %2141 = vmatprep.subr.mxu0 0.0
        %2142 = vmatpush2.msra.mxu0 0.0
        %2143 = vmatprep.subr.mxu0 0.0
        %2144 = vmatpush2.msra.mxu0 0.0
        %2145 = vmatprep.subr.mxu0 0.0
        %2146 = vmatpush2.msra.mxu0 0.0
        %2147 = vmatprep.subr.mxu0 0.0
        %2148 = vmatpush2.msra.mxu0 0.0
        %2149 = vmatprep.subr.mxu0 0.0
        %2150 = vmatpush2.msra.mxu0 0.0
        %2151 = vmatprep.mubr.f32.mxu0 0.0
        %2152 = vmatmul.mubr.f32.gmra.mxu0 %v2082
        %v2153 = vpop.f32.mrf.mxu0
        %v2154 = vadd.f32 %v2060, %v2153
        %v2155 = vpop.f32.mrf.mxu0
        %2156 = vmatprep.mubr.f32.mxu0 0.0
        %2157 = vmatmul.mubr.f32.gmra.mxu0 %v2085
        %v2158 = vpop.f32.mrf.mxu0
        %v2159 = vadd.f32 %v2065, %v2158
        %v2160 = vpop.f32.mrf.mxu0
        %2161 = vdwg.mxu0
        %s2162 = scalar_lea.vmem %s7, 32
        %v2163 = vld [vmem:[%s2162] sm:$0xff]
        %v2164 = vld [vmem:[%s2162 + $0x8] sm:$0xff]
        %2165 = vrot.lane.b32.xlu0 %v1962, 64
        %v2166 = vpop.permute.xlu0 %2165
        %2167 = vrot.lane.b32.xlu0 %v1963, 64
        %v2168 = vpop.permute.xlu0 %2167
        %2169 = vrot.lane.b32.xlu0 %v1964, 64
        %v2170 = vpop.permute.xlu0 %2169
        %2171 = vrot.lane.b32.xlu0 %v1965, 64
        %v2172 = vpop.permute.xlu0 %2171
        %v2173 = vsel %vm1038, %v2166, %v2168
        %v2174 = vsel %vm1038, %v2170, %v2172
        %v2178 = vsel %vm752, %v2163, 0
        %v2181 = vsel %vm752, %v2164, 0
        %2183 = vmatprep.subr.mxu0 0.0
        %2184 = vmatpush1.msra.mxu0 0.0
        %2185 = vmatprep.subr.mxu0 0.0
        %2186 = vmatpush1.msra.mxu0 0.0
        %2187 = vmatprep.subr.mxu0 0.0
        %2188 = vmatpush1.msra.mxu0 0.0
        %2189 = vmatprep.subr.mxu0 0.0
        %2190 = vmatpush1.msra.mxu0 0.0
        %2191 = vmatprep.subr.mxu0 0.0
        %2192 = vmatpush1.msra.mxu0 0.0
        %2193 = vmatprep.subr.mxu0 0.0
        %2194 = vmatpush1.msra.mxu0 0.0
        %2195 = vmatprep.subr.mxu0 0.0
        %2196 = vmatpush1.msra.mxu0 0.0
        %2197 = vmatprep.subr.mxu0 0.0
        %2198 = vmatpush1.msra.mxu0 0.0
        %2199 = vmatprep.subr.mxu0 0.0
        %2200 = vmatpush1.msra.mxu0 0.0
        %2201 = vmatprep.subr.mxu0 0.0
        %2202 = vmatpush1.msra.mxu0 0.0
        %2203 = vmatprep.subr.mxu0 0.0
        %2204 = vmatpush1.msra.mxu0 0.0
        %2205 = vmatprep.subr.mxu0 0.0
        %2206 = vmatpush1.msra.mxu0 0.0
        %2207 = vmatprep.subr.mxu0 0.0
        %2208 = vmatpush1.msra.mxu0 0.0
        %2209 = vmatprep.subr.mxu0 0.0
        %2210 = vmatpush1.msra.mxu0 0.0
        %2211 = vmatprep.subr.mxu0 0.0
        %2212 = vmatpush1.msra.mxu0 %v2174
        %2213 = vmatprep.subr.mxu0 0.0
        %2214 = vmatpush1.msra.mxu0 %v2173
        %2215 = vmatprep.subr.mxu0 0.0
        %2216 = vmatpush2.msra.mxu0 0.0
        %2217 = vmatprep.subr.mxu0 0.0
        %2218 = vmatpush2.msra.mxu0 0.0
        %2219 = vmatprep.subr.mxu0 0.0
        %2220 = vmatpush2.msra.mxu0 0.0
        %2221 = vmatprep.subr.mxu0 0.0
        %2222 = vmatpush2.msra.mxu0 0.0
        %2223 = vmatprep.subr.mxu0 0.0
        %2224 = vmatpush2.msra.mxu0 0.0
        %2225 = vmatprep.subr.mxu0 0.0
        %2226 = vmatpush2.msra.mxu0 0.0
        %2227 = vmatprep.subr.mxu0 0.0
        %2228 = vmatpush2.msra.mxu0 0.0
        %2229 = vmatprep.subr.mxu0 0.0
        %2230 = vmatpush2.msra.mxu0 0.0
        %2231 = vmatprep.subr.mxu0 0.0
        %2232 = vmatpush2.msra.mxu0 0.0
        %2233 = vmatprep.subr.mxu0 0.0
        %2234 = vmatpush2.msra.mxu0 0.0
        %2235 = vmatprep.subr.mxu0 0.0
        %2236 = vmatpush2.msra.mxu0 0.0
        %2237 = vmatprep.subr.mxu0 0.0
        %2238 = vmatpush2.msra.mxu0 0.0
        %2239 = vmatprep.subr.mxu0 0.0
        %2240 = vmatpush2.msra.mxu0 0.0
        %2241 = vmatprep.subr.mxu0 0.0
        %2242 = vmatpush2.msra.mxu0 0.0
        %2243 = vmatprep.subr.mxu0 0.0
        %2244 = vmatpush2.msra.mxu0 0.0
        %2245 = vmatprep.subr.mxu0 0.0
        %2246 = vmatpush2.msra.mxu0 0.0
        %2247 = vmatprep.mubr.f32.mxu0 0.0
        %2248 = vmatmul.mubr.f32.gmra.mxu0 %v2178
        %v2249 = vpop.f32.mrf.mxu0
        %v2250 = vadd.f32 0.0, %v2249
        %v2251 = vpop.f32.mrf.mxu0
        %2252 = vmatprep.mubr.f32.mxu0 0.0
        %2253 = vmatmul.mubr.f32.gmra.mxu0 %v2181
        %v2254 = vpop.f32.mrf.mxu0
        %v2255 = vadd.f32 0.0, %v2254
        %v2256 = vpop.f32.mrf.mxu0
        %2257 = vdwg.mxu0
        %v2258 = vadd.f32 %v2154, %v2250
        %v2259 = vadd.f32 %v2159, %v2255
        %s2260 = scalar_lea.vmem %s7, 48
        %v2261 = vld [vmem:[%s2260] sm:$0xff]
        %v2262 = vld [vmem:[%s2260 + $0x8] sm:$0xff]
        %2263 = vrot.lane.b32.xlu0 %v1962, 62
        %v2264 = vpop.permute.xlu0 %2263
        %2265 = vrot.lane.b32.xlu0 %v1963, 62
        %v2266 = vpop.permute.xlu0 %2265
        %2267 = vrot.lane.b32.xlu0 %v1964, 62
        %v2268 = vpop.permute.xlu0 %2267
        %2269 = vrot.lane.b32.xlu0 %v1965, 62
        %v2270 = vpop.permute.xlu0 %2269
        %v2271 = vsel %vm1236, %v2264, %v2266
        %v2272 = vsel %vm1236, %v2268, %v2270
        %v2276 = vsel %vm752, %v2261, 0
        %v2279 = vsel %vm752, %v2262, 0
        %2281 = vmatprep.subr.mxu0 0.0
        %2282 = vmatpush1.msra.mxu0 0.0
        %2283 = vmatprep.subr.mxu0 0.0
        %2284 = vmatpush1.msra.mxu0 0.0
        %2285 = vmatprep.subr.mxu0 0.0
        %2286 = vmatpush1.msra.mxu0 0.0
        %2287 = vmatprep.subr.mxu0 0.0
        %2288 = vmatpush1.msra.mxu0 0.0
        %2289 = vmatprep.subr.mxu0 0.0
        %2290 = vmatpush1.msra.mxu0 0.0
        %2291 = vmatprep.subr.mxu0 0.0
        %2292 = vmatpush1.msra.mxu0 0.0
        %2293 = vmatprep.subr.mxu0 0.0
        %2294 = vmatpush1.msra.mxu0 0.0
        %2295 = vmatprep.subr.mxu0 0.0
        %2296 = vmatpush1.msra.mxu0 0.0
        %2297 = vmatprep.subr.mxu0 0.0
        %2298 = vmatpush1.msra.mxu0 0.0
        %2299 = vmatprep.subr.mxu0 0.0
        %2300 = vmatpush1.msra.mxu0 0.0
        %2301 = vmatprep.subr.mxu0 0.0
        %2302 = vmatpush1.msra.mxu0 0.0
        %2303 = vmatprep.subr.mxu0 0.0
        %2304 = vmatpush1.msra.mxu0 0.0
        %2305 = vmatprep.subr.mxu0 0.0
        %2306 = vmatpush1.msra.mxu0 0.0
        %2307 = vmatprep.subr.mxu0 0.0
        %2308 = vmatpush1.msra.mxu0 0.0
        %2309 = vmatprep.subr.mxu0 0.0
        %2310 = vmatpush1.msra.mxu0 %v2272
        %2311 = vmatprep.subr.mxu0 0.0
        %2312 = vmatpush1.msra.mxu0 %v2271
        %2313 = vmatprep.subr.mxu0 0.0
        %2314 = vmatpush2.msra.mxu0 0.0
        %2315 = vmatprep.subr.mxu0 0.0
        %2316 = vmatpush2.msra.mxu0 0.0
        %2317 = vmatprep.subr.mxu0 0.0
        %2318 = vmatpush2.msra.mxu0 0.0
        %2319 = vmatprep.subr.mxu0 0.0
        %2320 = vmatpush2.msra.mxu0 0.0
        %2321 = vmatprep.subr.mxu0 0.0
        %2322 = vmatpush2.msra.mxu0 0.0
        %2323 = vmatprep.subr.mxu0 0.0
        %2324 = vmatpush2.msra.mxu0 0.0
        %2325 = vmatprep.subr.mxu0 0.0
        %2326 = vmatpush2.msra.mxu0 0.0
        %2327 = vmatprep.subr.mxu0 0.0
        %2328 = vmatpush2.msra.mxu0 0.0
        %2329 = vmatprep.subr.mxu0 0.0
        %2330 = vmatpush2.msra.mxu0 0.0
        %2331 = vmatprep.subr.mxu0 0.0
        %2332 = vmatpush2.msra.mxu0 0.0
        %2333 = vmatprep.subr.mxu0 0.0
        %2334 = vmatpush2.msra.mxu0 0.0
        %2335 = vmatprep.subr.mxu0 0.0
        %2336 = vmatpush2.msra.mxu0 0.0
        %2337 = vmatprep.subr.mxu0 0.0
        %2338 = vmatpush2.msra.mxu0 0.0
        %2339 = vmatprep.subr.mxu0 0.0
        %2340 = vmatpush2.msra.mxu0 0.0
        %2341 = vmatprep.subr.mxu0 0.0
        %2342 = vmatpush2.msra.mxu0 0.0
        %2343 = vmatprep.subr.mxu0 0.0
        %2344 = vmatpush2.msra.mxu0 0.0
        %2345 = vmatprep.mubr.f32.mxu0 0.0
        %2346 = vmatmul.mubr.f32.gmra.mxu0 %v2276
        %v2347 = vpop.f32.mrf.mxu0
        %v2348 = vadd.f32 0.0, %v2347
        %v2349 = vpop.f32.mrf.mxu0
        %2350 = vmatprep.mubr.f32.mxu0 0.0
        %2351 = vmatmul.mubr.f32.gmra.mxu0 %v2279
        %v2352 = vpop.f32.mrf.mxu0
        %v2353 = vadd.f32 0.0, %v2352
        %v2354 = vpop.f32.mrf.mxu0
        %2355 = vdwg.mxu0
        %v2356 = vadd.f32 %v2258, %v2348
        %v2357 = vadd.f32 %v2259, %v2353
        %s2358 = scalar_lea.vmem %s7, 64
        %v2359 = vld [vmem:[%s2358] sm:$0xff]
        %v2360 = vld [vmem:[%s2358 + $0x8] sm:$0xff]
        %2361 = vrot.lane.b32.xlu0 %v1962, 60
        %v2362 = vpop.permute.xlu0 %2361
        %2363 = vrot.lane.b32.xlu0 %v1963, 60
        %v2364 = vpop.permute.xlu0 %2363
        %2365 = vrot.lane.b32.xlu0 %v1964, 60
        %v2366 = vpop.permute.xlu0 %2365
        %2367 = vrot.lane.b32.xlu0 %v1965, 60
        %v2368 = vpop.permute.xlu0 %2367
        %vm2369 = vcmask 490496
        %v2370 = vsel %vm2369, %v2362, %v2364
        %v2371 = vsel %vm2369, %v2366, %v2368
        %v2375 = vsel %vm752, %v2359, 0
        %v2378 = vsel %vm752, %v2360, 0
        %2380 = vmatprep.subr.mxu0 0.0
        %2381 = vmatpush1.msra.mxu0 0.0
        %2382 = vmatprep.subr.mxu0 0.0
        %2383 = vmatpush1.msra.mxu0 0.0
        %2384 = vmatprep.subr.mxu0 0.0
        %2385 = vmatpush1.msra.mxu0 0.0
        %2386 = vmatprep.subr.mxu0 0.0
        %2387 = vmatpush1.msra.mxu0 0.0
        %2388 = vmatprep.subr.mxu0 0.0
        %2389 = vmatpush1.msra.mxu0 0.0
        %2390 = vmatprep.subr.mxu0 0.0
        %2391 = vmatpush1.msra.mxu0 0.0
        %2392 = vmatprep.subr.mxu0 0.0
        %2393 = vmatpush1.msra.mxu0 0.0
        %2394 = vmatprep.subr.mxu0 0.0
        %2395 = vmatpush1.msra.mxu0 0.0
        %2396 = vmatprep.subr.mxu0 0.0
        %2397 = vmatpush1.msra.mxu0 0.0
        %2398 = vmatprep.subr.mxu0 0.0
        %2399 = vmatpush1.msra.mxu0 0.0
        %2400 = vmatprep.subr.mxu0 0.0
        %2401 = vmatpush1.msra.mxu0 0.0
        %2402 = vmatprep.subr.mxu0 0.0
        %2403 = vmatpush1.msra.mxu0 0.0
        %2404 = vmatprep.subr.mxu0 0.0
        %2405 = vmatpush1.msra.mxu0 0.0
        %2406 = vmatprep.subr.mxu0 0.0
        %2407 = vmatpush1.msra.mxu0 0.0
        %2408 = vmatprep.subr.mxu0 0.0
        %2409 = vmatpush1.msra.mxu0 %v2371
        %2410 = vmatprep.subr.mxu0 0.0
        %2411 = vmatpush1.msra.mxu0 %v2370
        %2412 = vmatprep.subr.mxu0 0.0
        %2413 = vmatpush2.msra.mxu0 0.0
        %2414 = vmatprep.subr.mxu0 0.0
        %2415 = vmatpush2.msra.mxu0 0.0
        %2416 = vmatprep.subr.mxu0 0.0
        %2417 = vmatpush2.msra.mxu0 0.0
        %2418 = vmatprep.subr.mxu0 0.0
        %2419 = vmatpush2.msra.mxu0 0.0
        %2420 = vmatprep.subr.mxu0 0.0
        %2421 = vmatpush2.msra.mxu0 0.0
        %2422 = vmatprep.subr.mxu0 0.0
        %2423 = vmatpush2.msra.mxu0 0.0
        %2424 = vmatprep.subr.mxu0 0.0
        %2425 = vmatpush2.msra.mxu0 0.0
        %2426 = vmatprep.subr.mxu0 0.0
        %2427 = vmatpush2.msra.mxu0 0.0
        %2428 = vmatprep.subr.mxu0 0.0
        %2429 = vmatpush2.msra.mxu0 0.0
        %2430 = vmatprep.subr.mxu0 0.0
        %2431 = vmatpush2.msra.mxu0 0.0
        %2432 = vmatprep.subr.mxu0 0.0
        %2433 = vmatpush2.msra.mxu0 0.0
        %2434 = vmatprep.subr.mxu0 0.0
        %2435 = vmatpush2.msra.mxu0 0.0
        %2436 = vmatprep.subr.mxu0 0.0
        %2437 = vmatpush2.msra.mxu0 0.0
        %2438 = vmatprep.subr.mxu0 0.0
        %2439 = vmatpush2.msra.mxu0 0.0
        %2440 = vmatprep.subr.mxu0 0.0
        %2441 = vmatpush2.msra.mxu0 0.0
        %2442 = vmatprep.subr.mxu0 0.0
        %2443 = vmatpush2.msra.mxu0 0.0
        %2444 = vmatprep.mubr.f32.mxu0 0.0
        %2445 = vmatmul.mubr.f32.gmra.mxu0 %v2375
        %v2446 = vpop.f32.mrf.mxu0
        %v2447 = vadd.f32 0.0, %v2446
        %v2448 = vpop.f32.mrf.mxu0
        %2449 = vmatprep.mubr.f32.mxu0 0.0
        %2450 = vmatmul.mubr.f32.gmra.mxu0 %v2378
        %v2451 = vpop.f32.mrf.mxu0
        %v2452 = vadd.f32 0.0, %v2451
        %v2453 = vpop.f32.mrf.mxu0
        %2454 = vdwg.mxu0
        %v2455 = vadd.f32 %v2356, %v2447
        %v2456 = vadd.f32 %v2357, %v2452
        %v2457 = vld [vmem:[%s8] sm:$0xff]
        %v2458 = vld [vmem:[%s8 + $0x8] sm:$0xff]
        %2460 = vset.pattern.permute.xlu0 0
        %2461 = vperm.xlu0 %2460, %v2457
        %v2462 = vpop.permute.xlu0 %2461
        %2465 = vset.pattern.permute.xlu0 0
        %2466 = vperm.xlu0 %2465, %v2458
        %v2467 = vpop.permute.xlu0 %2466
        %v2469 = vadd.f32 %v2455, %v2462
        %v2470 = vadd.f32 %v2456, %v2467
        %v2471 = vmax.f32 %v2469, 0.0
        %v2472 = vmax.f32 %v2470, 0.0
        %2473 = vrot.lane.b32.xlu0 %v726, 127
        %v2474 = vpop.permute.xlu0 %2473
        %2475 = vrot.lane.b32.xlu0 %v727, 127
        %v2476 = vpop.permute.xlu0 %2475
        %2477 = vrot.lane.b32.xlu0 %v728, 127
        %v2478 = vpop.permute.xlu0 %2477
        %2479 = vrot.lane.b32.xlu0 %v729, 127
        %v2480 = vpop.permute.xlu0 %2479
        %vm2481 = vcmask 1039360
        %v2482 = vsel %vm2481, %v2474, %v2476
        %v2483 = vsel %vm2481, %v2478, %v2480
        %v2488 = vmax.f32 %v726, %v2482
        %v2489 = vmax.f32 %v727, %v2476
        %v2490 = vmax.f32 %v728, %v2483
        %v2491 = vmax.f32 %v729, %v2480
        %2492 = vrot.lane.b32.xlu0 %v726, 126
        %v2493 = vpop.permute.xlu0 %2492
        %2494 = vrot.lane.b32.xlu0 %v727, 126
        %v2495 = vpop.permute.xlu0 %2494
        %2496 = vrot.lane.b32.xlu0 %v728, 126
        %v2497 = vpop.permute.xlu0 %2496
        %2498 = vrot.lane.b32.xlu0 %v729, 126
        %v2499 = vpop.permute.xlu0 %2498
        %vm2500 = vcmask 1031168
        %v2501 = vsel %vm2500, %v2493, %v2495
        %v2502 = vsel %vm2500, %v2497, %v2499
        %v2507 = vmax.f32 %v2488, %v2501
        %v2508 = vmax.f32 %v2489, %v2495
        %v2509 = vmax.f32 %v2490, %v2502
        %v2510 = vmax.f32 %v2491, %v2499
        %v2511 = vld [vmem:[%s18] sm:$0x1]
        %v2513 = vlaneseq
        %v2514 = vshrl.u32 %v2513, 7
        %v2515 = vsub.s32 0, %v2514
        %v2516 = vrot.slane %v2511, %v2515
        %2517 = vrot.lane.b32.xlu0 %v2516, 63
        %v2518 = vpop.permute.xlu0 %2517
        %v2520 = vmul.f32 %v2507, %v2518
        %v2521 = vmul.f32 %v2508, %v2518
        %v2522 = vmul.f32 %v2509, %v2518
        %v2523 = vmul.f32 %v2510, %v2518
        %v2524 = vld [vmem:[%s11] sm:$0xff]
        %v2525 = vld [vmem:[%s11 + $0x8] sm:$0xff]
        %v2526 = vld [vmem:[%s12] sm:$0xff]
        %v2527 = vld [vmem:[%s12 + $0x8] sm:$0xff]
        %2529 = vset.pattern.permute.xlu0 0
        %2530 = vperm.xlu0 %2529, %v2526
        %v2531 = vpop.permute.xlu0 %2530
        %2534 = vset.pattern.permute.xlu0 0
        %2535 = vperm.xlu0 %2534, %v2527
        %v2536 = vpop.permute.xlu0 %2535
        %2542 = vrot.lane.b32.xlu0 %v2520, 65
        %v2543 = vpop.permute.xlu0 %2542
        %2544 = vrot.lane.b32.xlu0 %v2521, 65
        %v2545 = vpop.permute.xlu0 %2544
        %2546 = vrot.lane.b32.xlu0 %v2522, 65
        %v2547 = vpop.permute.xlu0 %2546
        %2548 = vrot.lane.b32.xlu0 %v2523, 65
        %v2549 = vpop.permute.xlu0 %2548
        %v2550 = vsel %vm939, %v2543, %v2545
        %v2551 = vsel %vm939, %v2547, %v2549
        %v2555 = vsel %vm752, %v2524, 0
        %v2558 = vsel %vm752, %v2525, 0
        %2560 = vmatprep.subr.mxu0 0.0
        %2561 = vmatpush1.msra.mxu0 0.0
        %2562 = vmatprep.subr.mxu0 0.0
        %2563 = vmatpush1.msra.mxu0 0.0
        %2564 = vmatprep.subr.mxu0 0.0
        %2565 = vmatpush1.msra.mxu0 0.0
        %2566 = vmatprep.subr.mxu0 0.0
        %2567 = vmatpush1.msra.mxu0 0.0
        %2568 = vmatprep.subr.mxu0 0.0
        %2569 = vmatpush1.msra.mxu0 0.0
        %2570 = vmatprep.subr.mxu0 0.0
        %2571 = vmatpush1.msra.mxu0 0.0
        %2572 = vmatprep.subr.mxu0 0.0
        %2573 = vmatpush1.msra.mxu0 0.0
        %2574 = vmatprep.subr.mxu0 0.0
        %2575 = vmatpush1.msra.mxu0 0.0
        %2576 = vmatprep.subr.mxu0 0.0
        %2577 = vmatpush1.msra.mxu0 0.0
        %2578 = vmatprep.subr.mxu0 0.0
        %2579 = vmatpush1.msra.mxu0 0.0
        %2580 = vmatprep.subr.mxu0 0.0
        %2581 = vmatpush1.msra.mxu0 0.0
        %2582 = vmatprep.subr.mxu0 0.0
        %2583 = vmatpush1.msra.mxu0 0.0
        %2584 = vmatprep.subr.mxu0 0.0
        %2585 = vmatpush1.msra.mxu0 0.0
        %2586 = vmatprep.subr.mxu0 0.0
        %2587 = vmatpush1.msra.mxu0 0.0
        %2588 = vmatprep.subr.mxu0 0.0
        %2589 = vmatpush1.msra.mxu0 %v2551
        %2590 = vmatprep.subr.mxu0 0.0
        %2591 = vmatpush1.msra.mxu0 %v2550
        %2592 = vmatprep.subr.mxu0 0.0
        %2593 = vmatpush2.msra.mxu0 0.0
        %2594 = vmatprep.subr.mxu0 0.0
        %2595 = vmatpush2.msra.mxu0 0.0
        %2596 = vmatprep.subr.mxu0 0.0
        %2597 = vmatpush2.msra.mxu0 0.0
        %2598 = vmatprep.subr.mxu0 0.0
        %2599 = vmatpush2.msra.mxu0 0.0
        %2600 = vmatprep.subr.mxu0 0.0
        %2601 = vmatpush2.msra.mxu0 0.0
        %2602 = vmatprep.subr.mxu0 0.0
        %2603 = vmatpush2.msra.mxu0 0.0
        %2604 = vmatprep.subr.mxu0 0.0
        %2605 = vmatpush2.msra.mxu0 0.0
        %2606 = vmatprep.subr.mxu0 0.0
        %2607 = vmatpush2.msra.mxu0 0.0
        %2608 = vmatprep.subr.mxu0 0.0
        %2609 = vmatpush2.msra.mxu0 0.0
        %2610 = vmatprep.subr.mxu0 0.0
        %2611 = vmatpush2.msra.mxu0 0.0
        %2612 = vmatprep.subr.mxu0 0.0
        %2613 = vmatpush2.msra.mxu0 0.0
        %2614 = vmatprep.subr.mxu0 0.0
        %2615 = vmatpush2.msra.mxu0 0.0
        %2616 = vmatprep.subr.mxu0 0.0
        %2617 = vmatpush2.msra.mxu0 0.0
        %2618 = vmatprep.subr.mxu0 0.0
        %2619 = vmatpush2.msra.mxu0 0.0
        %2620 = vmatprep.subr.mxu0 0.0
        %2621 = vmatpush2.msra.mxu0 0.0
        %2622 = vmatprep.subr.mxu0 0.0
        %2623 = vmatpush2.msra.mxu0 0.0
        %2624 = vmatprep.mubr.f32.mxu0 0.0
        %2625 = vmatmul.mubr.f32.gmra.mxu0 %v2555
        %v2626 = vpop.f32.mrf.mxu0
        %v2627 = vadd.f32 %v2531, %v2626
        %v2628 = vpop.f32.mrf.mxu0
        %2629 = vmatprep.mubr.f32.mxu0 0.0
        %2630 = vmatmul.mubr.f32.gmra.mxu0 %v2558
        %v2631 = vpop.f32.mrf.mxu0
        %v2632 = vadd.f32 %v2536, %v2631
        %v2633 = vpop.f32.mrf.mxu0
        %2634 = vdwg.mxu0
        %v2635 = vmax.f32 %v2627, 0.0
        %v2636 = vmax.f32 %v2632, 0.0
        %v2637 = vld [vmem:[%s19] sm:$0xff]
        %v2638 = vld [vmem:[%s19 + $0x8] sm:$0xff]
        %v2639 = vld [vmem:[%s19 + $0x10] sm:$0xff]
        %v2640 = vld [vmem:[%s19 + $0x18] sm:$0xff]
        %v2641 = vld [vmem:[%s19 + $0x20] sm:$0xff]
        %v2642 = vld [vmem:[%s19 + $0x28] sm:$0xff]
        %v2643 = vld [vmem:[%s19 + $0x30] sm:$0xff]
        %v2644 = vld [vmem:[%s19 + $0x38] sm:$0xff]
        %v2645 = vld [vmem:[%s19 + $0x40] sm:$0xff]
        %v2646 = vld [vmem:[%s19 + $0x48] sm:$0xff]
        %v2647 = vld [vmem:[%s19 + $0x50] sm:$0xff]
        %v2648 = vld [vmem:[%s19 + $0x58] sm:$0xff]
        %v2649 = vld [vmem:[%s19 + $0x60] sm:$0xff]
        %v2650 = vld [vmem:[%s19 + $0x68] sm:$0xff]
        %v2651 = vld [vmem:[%s19 + $0x70] sm:$0xff]
        %v2652 = vld [vmem:[%s19 + $0x78] sm:$0xff]
        %2653 = vmatprep.subr.mxu0 0.0
        %2654 = vmatpush1.msra.mxu0 %v2652
        %2655 = vmatprep.subr.mxu0 0.0
        %2656 = vmatpush1.msra.mxu0 %v2651
        %2657 = vmatprep.subr.mxu0 0.0
        %2658 = vmatpush1.msra.mxu0 %v2650
        %2659 = vmatprep.subr.mxu0 0.0
        %2660 = vmatpush1.msra.mxu0 %v2649
        %2661 = vmatprep.subr.mxu0 0.0
        %2662 = vmatpush1.msra.mxu0 %v2648
        %2663 = vmatprep.subr.mxu0 0.0
        %2664 = vmatpush1.msra.mxu0 %v2647
        %2665 = vmatprep.subr.mxu0 0.0
        %2666 = vmatpush1.msra.mxu0 %v2646
        %2667 = vmatprep.subr.mxu0 0.0
        %2668 = vmatpush1.msra.mxu0 %v2645
        %2669 = vmatprep.subr.mxu0 0.0
        %2670 = vmatpush1.msra.mxu0 %v2644
        %2671 = vmatprep.subr.mxu0 0.0
        %2672 = vmatpush1.msra.mxu0 %v2643
        %2673 = vmatprep.subr.mxu0 0.0
        %2674 = vmatpush1.msra.mxu0 %v2642
        %2675 = vmatprep.subr.mxu0 0.0
        %2676 = vmatpush1.msra.mxu0 %v2641
        %2677 = vmatprep.subr.mxu0 0.0
        %2678 = vmatpush1.msra.mxu0 %v2640
        %2679 = vmatprep.subr.mxu0 0.0
        %2680 = vmatpush1.msra.mxu0 %v2639
        %2681 = vmatprep.subr.mxu0 0.0
        %2682 = vmatpush1.msra.mxu0 %v2638
        %2683 = vmatprep.subr.mxu0 0.0
        %2684 = vmatpush1.msra.mxu0 %v2637
        %2685 = vmatprep.subr.mxu0 0.0
        %2686 = vmatpush2.msra.mxu0 0.0
        %2687 = vmatprep.subr.mxu0 0.0
        %2688 = vmatpush2.msra.mxu0 0.0
        %2689 = vmatprep.subr.mxu0 0.0
        %2690 = vmatpush2.msra.mxu0 0.0
        %2691 = vmatprep.subr.mxu0 0.0
        %2692 = vmatpush2.msra.mxu0 0.0
        %2693 = vmatprep.subr.mxu0 0.0
        %2694 = vmatpush2.msra.mxu0 0.0
        %2695 = vmatprep.subr.mxu0 0.0
        %2696 = vmatpush2.msra.mxu0 0.0
        %2697 = vmatprep.subr.mxu0 0.0
        %2698 = vmatpush2.msra.mxu0 0.0
        %2699 = vmatprep.subr.mxu0 0.0
        %2700 = vmatpush2.msra.mxu0 0.0
        %2701 = vmatprep.subr.mxu0 0.0
        %2702 = vmatpush2.msra.mxu0 0.0
        %2703 = vmatprep.subr.mxu0 0.0
        %2704 = vmatpush2.msra.mxu0 0.0
        %2705 = vmatprep.subr.mxu0 0.0
        %2706 = vmatpush2.msra.mxu0 0.0
        %2707 = vmatprep.subr.mxu0 0.0
        %2708 = vmatpush2.msra.mxu0 0.0
        %2709 = vmatprep.subr.mxu0 0.0
        %2710 = vmatpush2.msra.mxu0 0.0
        %2711 = vmatprep.subr.mxu0 0.0
        %2712 = vmatpush2.msra.mxu0 0.0
        %2713 = vmatprep.subr.mxu0 0.0
        %2714 = vmatpush2.msra.mxu0 0.0
        %2715 = vmatprep.subr.mxu0 0.0
        %2716 = vmatpush2.msra.mxu0 0.0
        %2717 = vmatprep.mubr.f32.mxu0 0.0
        %2718 = vmatmul.mubr.f32.gmra.mxu0 %v1847
        %v2719 = vpop.f32.mrf.mxu0
        %v2720 = vadd.f32 0.0, %v2719
        %v2721 = vpop.f32.mrf.mxu0
        %2722 = vmatprep.mubr.f32.mxu0 0.0
        %2723 = vmatmul.mubr.f32.gmra.mxu0 %v1848
        %v2724 = vpop.f32.mrf.mxu0
        %v2725 = vadd.f32 0.0, %v2724
        %v2726 = vpop.f32.mrf.mxu0
        %2727 = vdwg.mxu0
        %2728 = vmatprep.subr.mxu0 0.0
        %2729 = vmatpush1.msra.mxu0 %v2652
        %2730 = vmatprep.subr.mxu0 0.0
        %2731 = vmatpush1.msra.mxu0 %v2651
        %2732 = vmatprep.subr.mxu0 0.0
        %2733 = vmatpush1.msra.mxu0 %v2650
        %2734 = vmatprep.subr.mxu0 0.0
        %2735 = vmatpush1.msra.mxu0 %v2649
        %2736 = vmatprep.subr.mxu0 0.0
        %2737 = vmatpush1.msra.mxu0 %v2648
        %2738 = vmatprep.subr.mxu0 0.0
        %2739 = vmatpush1.msra.mxu0 %v2647
        %2740 = vmatprep.subr.mxu0 0.0
        %2741 = vmatpush1.msra.mxu0 %v2646
        %2742 = vmatprep.subr.mxu0 0.0
        %2743 = vmatpush1.msra.mxu0 %v2645
        %2744 = vmatprep.subr.mxu0 0.0
        %2745 = vmatpush1.msra.mxu0 %v2644
        %2746 = vmatprep.subr.mxu0 0.0
        %2747 = vmatpush1.msra.mxu0 %v2643
        %2748 = vmatprep.subr.mxu0 0.0
        %2749 = vmatpush1.msra.mxu0 %v2642
        %2750 = vmatprep.subr.mxu0 0.0
        %2751 = vmatpush1.msra.mxu0 %v2641
        %2752 = vmatprep.subr.mxu0 0.0
        %2753 = vmatpush1.msra.mxu0 %v2640
        %2754 = vmatprep.subr.mxu0 0.0
        %2755 = vmatpush1.msra.mxu0 %v2639
        %2756 = vmatprep.subr.mxu0 0.0
        %2757 = vmatpush1.msra.mxu0 %v2638
        %2758 = vmatprep.subr.mxu0 0.0
        %2759 = vmatpush1.msra.mxu0 %v2637
        %2760 = vmatprep.subr.mxu0 0.0
        %2761 = vmatpush2.msra.mxu0 0.0
        %2762 = vmatprep.subr.mxu0 0.0
        %2763 = vmatpush2.msra.mxu0 0.0
        %2764 = vmatprep.subr.mxu0 0.0
        %2765 = vmatpush2.msra.mxu0 0.0
        %2766 = vmatprep.subr.mxu0 0.0
        %2767 = vmatpush2.msra.mxu0 0.0
        %2768 = vmatprep.subr.mxu0 0.0
        %2769 = vmatpush2.msra.mxu0 0.0
        %2770 = vmatprep.subr.mxu0 0.0
        %2771 = vmatpush2.msra.mxu0 0.0
        %2772 = vmatprep.subr.mxu0 0.0
        %2773 = vmatpush2.msra.mxu0 0.0
        %2774 = vmatprep.subr.mxu0 0.0
        %2775 = vmatpush2.msra.mxu0 0.0
        %2776 = vmatprep.subr.mxu0 0.0
        %2777 = vmatpush2.msra.mxu0 0.0
        %2778 = vmatprep.subr.mxu0 0.0
        %2779 = vmatpush2.msra.mxu0 0.0
        %2780 = vmatprep.subr.mxu0 0.0
        %2781 = vmatpush2.msra.mxu0 0.0
        %2782 = vmatprep.subr.mxu0 0.0
        %2783 = vmatpush2.msra.mxu0 0.0
        %2784 = vmatprep.subr.mxu0 0.0
        %2785 = vmatpush2.msra.mxu0 0.0
        %2786 = vmatprep.subr.mxu0 0.0
        %2787 = vmatpush2.msra.mxu0 0.0
        %2788 = vmatprep.subr.mxu0 0.0
        %2789 = vmatpush2.msra.mxu0 0.0
        %2790 = vmatprep.subr.mxu0 0.0
        %2791 = vmatpush2.msra.mxu0 0.0
        %2792 = vmatprep.mubr.f32.mxu0 0.0
        %2793 = vmatmul.mubr.f32.gmra.mxu0 %v2471
        %v2794 = vpop.f32.mrf.mxu0
        %v2795 = vadd.f32 0.0, %v2794
        %v2796 = vpop.f32.mrf.mxu0
        %2797 = vmatprep.mubr.f32.mxu0 0.0
        %2798 = vmatmul.mubr.f32.gmra.mxu0 %v2472
        %v2799 = vpop.f32.mrf.mxu0
        %v2800 = vadd.f32 0.0, %v2799
        %v2801 = vpop.f32.mrf.mxu0
        %2802 = vdwg.mxu0
        %2803 = vmatprep.subr.mxu0 0.0
        %2804 = vmatpush1.msra.mxu0 %v2652
        %2805 = vmatprep.subr.mxu0 0.0
        %2806 = vmatpush1.msra.mxu0 %v2651
        %2807 = vmatprep.subr.mxu0 0.0
        %2808 = vmatpush1.msra.mxu0 %v2650
        %2809 = vmatprep.subr.mxu0 0.0
        %2810 = vmatpush1.msra.mxu0 %v2649
        %2811 = vmatprep.subr.mxu0 0.0
        %2812 = vmatpush1.msra.mxu0 %v2648
        %2813 = vmatprep.subr.mxu0 0.0
        %2814 = vmatpush1.msra.mxu0 %v2647
        %2815 = vmatprep.subr.mxu0 0.0
        %2816 = vmatpush1.msra.mxu0 %v2646
        %2817 = vmatprep.subr.mxu0 0.0
        %2818 = vmatpush1.msra.mxu0 %v2645
        %2819 = vmatprep.subr.mxu0 0.0
        %2820 = vmatpush1.msra.mxu0 %v2644
        %2821 = vmatprep.subr.mxu0 0.0
        %2822 = vmatpush1.msra.mxu0 %v2643
        %2823 = vmatprep.subr.mxu0 0.0
        %2824 = vmatpush1.msra.mxu0 %v2642
        %2825 = vmatprep.subr.mxu0 0.0
        %2826 = vmatpush1.msra.mxu0 %v2641
        %2827 = vmatprep.subr.mxu0 0.0
        %2828 = vmatpush1.msra.mxu0 %v2640
        %2829 = vmatprep.subr.mxu0 0.0
        %2830 = vmatpush1.msra.mxu0 %v2639
        %2831 = vmatprep.subr.mxu0 0.0
        %2832 = vmatpush1.msra.mxu0 %v2638
        %2833 = vmatprep.subr.mxu0 0.0
        %2834 = vmatpush1.msra.mxu0 %v2637
        %2835 = vmatprep.subr.mxu0 0.0
        %2836 = vmatpush2.msra.mxu0 0.0
        %2837 = vmatprep.subr.mxu0 0.0
        %2838 = vmatpush2.msra.mxu0 0.0
        %2839 = vmatprep.subr.mxu0 0.0
        %2840 = vmatpush2.msra.mxu0 0.0
        %2841 = vmatprep.subr.mxu0 0.0
        %2842 = vmatpush2.msra.mxu0 0.0
        %2843 = vmatprep.subr.mxu0 0.0
        %2844 = vmatpush2.msra.mxu0 0.0
        %2845 = vmatprep.subr.mxu0 0.0
        %2846 = vmatpush2.msra.mxu0 0.0
        %2847 = vmatprep.subr.mxu0 0.0
        %2848 = vmatpush2.msra.mxu0 0.0
        %2849 = vmatprep.subr.mxu0 0.0
        %2850 = vmatpush2.msra.mxu0 0.0
        %2851 = vmatprep.subr.mxu0 0.0
        %2852 = vmatpush2.msra.mxu0 0.0
        %2853 = vmatprep.subr.mxu0 0.0
        %2854 = vmatpush2.msra.mxu0 0.0
        %2855 = vmatprep.subr.mxu0 0.0
        %2856 = vmatpush2.msra.mxu0 0.0
        %2857 = vmatprep.subr.mxu0 0.0
        %2858 = vmatpush2.msra.mxu0 0.0
        %2859 = vmatprep.subr.mxu0 0.0
        %2860 = vmatpush2.msra.mxu0 0.0
        %2861 = vmatprep.subr.mxu0 0.0
        %2862 = vmatpush2.msra.mxu0 0.0
        %2863 = vmatprep.subr.mxu0 0.0
        %2864 = vmatpush2.msra.mxu0 0.0
        %2865 = vmatprep.subr.mxu0 0.0
        %2866 = vmatpush2.msra.mxu0 0.0
        %2867 = vmatprep.mubr.f32.mxu0 0.0
        %2868 = vmatmul.mubr.f32.gmra.mxu0 %v1437
        %v2869 = vpop.f32.mrf.mxu0
        %v2870 = vadd.f32 0.0, %v2869
        %v2871 = vpop.f32.mrf.mxu0
        %2872 = vmatprep.mubr.f32.mxu0 0.0
        %2873 = vmatmul.mubr.f32.gmra.mxu0 %v1438
        %v2874 = vpop.f32.mrf.mxu0
        %v2875 = vadd.f32 0.0, %v2874
        %v2876 = vpop.f32.mrf.mxu0
        %2877 = vdwg.mxu0
        %2878 = vmatprep.subr.mxu0 0.0
        %2879 = vmatpush1.msra.mxu0 %v2652
        %2880 = vmatprep.subr.mxu0 0.0
        %2881 = vmatpush1.msra.mxu0 %v2651
        %2882 = vmatprep.subr.mxu0 0.0
        %2883 = vmatpush1.msra.mxu0 %v2650
        %2884 = vmatprep.subr.mxu0 0.0
        %2885 = vmatpush1.msra.mxu0 %v2649
        %2886 = vmatprep.subr.mxu0 0.0
        %2887 = vmatpush1.msra.mxu0 %v2648
        %2888 = vmatprep.subr.mxu0 0.0
        %2889 = vmatpush1.msra.mxu0 %v2647
        %2890 = vmatprep.subr.mxu0 0.0
        %2891 = vmatpush1.msra.mxu0 %v2646
        %2892 = vmatprep.subr.mxu0 0.0
        %2893 = vmatpush1.msra.mxu0 %v2645
        %2894 = vmatprep.subr.mxu0 0.0
        %2895 = vmatpush1.msra.mxu0 %v2644
        %2896 = vmatprep.subr.mxu0 0.0
        %2897 = vmatpush1.msra.mxu0 %v2643
        %2898 = vmatprep.subr.mxu0 0.0
        %2899 = vmatpush1.msra.mxu0 %v2642
        %2900 = vmatprep.subr.mxu0 0.0
        %2901 = vmatpush1.msra.mxu0 %v2641
        %2902 = vmatprep.subr.mxu0 0.0
        %2903 = vmatpush1.msra.mxu0 %v2640
        %2904 = vmatprep.subr.mxu0 0.0
        %2905 = vmatpush1.msra.mxu0 %v2639
        %2906 = vmatprep.subr.mxu0 0.0
        %2907 = vmatpush1.msra.mxu0 %v2638
        %2908 = vmatprep.subr.mxu0 0.0
        %2909 = vmatpush1.msra.mxu0 %v2637
        %2910 = vmatprep.subr.mxu0 0.0
        %2911 = vmatpush2.msra.mxu0 0.0
        %2912 = vmatprep.subr.mxu0 0.0
        %2913 = vmatpush2.msra.mxu0 0.0
        %2914 = vmatprep.subr.mxu0 0.0
        %2915 = vmatpush2.msra.mxu0 0.0
        %2916 = vmatprep.subr.mxu0 0.0
        %2917 = vmatpush2.msra.mxu0 0.0
        %2918 = vmatprep.subr.mxu0 0.0
        %2919 = vmatpush2.msra.mxu0 0.0
        %2920 = vmatprep.subr.mxu0 0.0
        %2921 = vmatpush2.msra.mxu0 0.0
        %2922 = vmatprep.subr.mxu0 0.0
        %2923 = vmatpush2.msra.mxu0 0.0
        %2924 = vmatprep.subr.mxu0 0.0
        %2925 = vmatpush2.msra.mxu0 0.0
        %2926 = vmatprep.subr.mxu0 0.0
        %2927 = vmatpush2.msra.mxu0 0.0
        %2928 = vmatprep.subr.mxu0 0.0
        %2929 = vmatpush2.msra.mxu0 0.0
        %2930 = vmatprep.subr.mxu0 0.0
        %2931 = vmatpush2.msra.mxu0 0.0
        %2932 = vmatprep.subr.mxu0 0.0
        %2933 = vmatpush2.msra.mxu0 0.0
        %2934 = vmatprep.subr.mxu0 0.0
        %2935 = vmatpush2.msra.mxu0 0.0
        %2936 = vmatprep.subr.mxu0 0.0
        %2937 = vmatpush2.msra.mxu0 0.0
        %2938 = vmatprep.subr.mxu0 0.0
        %2939 = vmatpush2.msra.mxu0 0.0
        %2940 = vmatprep.subr.mxu0 0.0
        %2941 = vmatpush2.msra.mxu0 0.0
        %2942 = vmatprep.mubr.f32.mxu0 0.0
        %2943 = vmatmul.mubr.f32.gmra.mxu0 %v2635
        %v2944 = vpop.f32.mrf.mxu0
        %v2945 = vadd.f32 0.0, %v2944
        %v2946 = vpop.f32.mrf.mxu0
        %2947 = vmatprep.mubr.f32.mxu0 0.0
        %2948 = vmatmul.mubr.f32.gmra.mxu0 %v2636
        %v2949 = vpop.f32.mrf.mxu0
        %v2950 = vadd.f32 0.0, %v2949
        %v2951 = vpop.f32.mrf.mxu0
        %2952 = vdwg.mxu0
        %v2953 = vmul.f32 %v2720, 0.0625
        %v2954 = vmul.f32 %v2725, 0.0625
        %v2955 = vmul.f32 %v2795, 0.0625
        %v2956 = vmul.f32 %v2800, 0.0625
        %v2957 = vmul.f32 %v2870, 0.0625
        %v2958 = vmul.f32 %v2875, 0.0625
        %v2959 = vmul.f32 %v2945, 0.0625
        %v2960 = vmul.f32 %v2950, 0.0625
        %v2961 = vld [vmem:[%s13] sm:$0x1]
        %v2963 = vsel %vm1038, %v2961, 0
        %2965 = vmatprep.subr.mxu0 0.0
        %2966 = vmatpush1.msra.mxu0 0.0
        %2967 = vmatprep.subr.mxu0 0.0
        %2968 = vmatpush1.msra.mxu0 0.0
        %2969 = vmatprep.subr.mxu0 0.0
        %2970 = vmatpush1.msra.mxu0 0.0
        %2971 = vmatprep.subr.mxu0 0.0
        %2972 = vmatpush1.msra.mxu0 0.0
        %2973 = vmatprep.subr.mxu0 0.0
        %2974 = vmatpush1.msra.mxu0 0.0
        %2975 = vmatprep.subr.mxu0 0.0
        %2976 = vmatpush1.msra.mxu0 0.0
        %2977 = vmatprep.subr.mxu0 0.0
        %2978 = vmatpush1.msra.mxu0 0.0
        %2979 = vmatprep.subr.mxu0 0.0
        %2980 = vmatpush1.msra.mxu0 0.0
        %2981 = vmatprep.subr.mxu0 0.0
        %2982 = vmatpush1.msra.mxu0 %v2960
        %2983 = vmatprep.subr.mxu0 0.0
        %2984 = vmatpush1.msra.mxu0 %v2959
        %2985 = vmatprep.subr.mxu0 0.0
        %2986 = vmatpush1.msra.mxu0 %v2958
        %2987 = vmatprep.subr.mxu0 0.0
        %2988 = vmatpush1.msra.mxu0 %v2957
        %2989 = vmatprep.subr.mxu0 0.0
        %2990 = vmatpush1.msra.mxu0 %v2956
        %2991 = vmatprep.subr.mxu0 0.0
        %2992 = vmatpush1.msra.mxu0 %v2955
        %2993 = vmatprep.subr.mxu0 0.0
        %2994 = vmatpush1.msra.mxu0 %v2954
        %2995 = vmatprep.subr.mxu0 0.0
        %2996 = vmatpush1.msra.mxu0 %v2953
        %2997 = vmatprep.subr.mxu0 0.0
        %2998 = vmatpush2.msra.mxu0 0.0
        %2999 = vmatprep.subr.mxu0 0.0
        %3000 = vmatpush2.msra.mxu0 0.0
        %3001 = vmatprep.subr.mxu0 0.0
        %3002 = vmatpush2.msra.mxu0 0.0
        %3003 = vmatprep.subr.mxu0 0.0
        %3004 = vmatpush2.msra.mxu0 0.0
        %3005 = vmatprep.subr.mxu0 0.0
        %3006 = vmatpush2.msra.mxu0 0.0
        %3007 = vmatprep.subr.mxu0 0.0
        %3008 = vmatpush2.msra.mxu0 0.0
        %3009 = vmatprep.subr.mxu0 0.0
        %3010 = vmatpush2.msra.mxu0 0.0
        %3011 = vmatprep.subr.mxu0 0.0
        %3012 = vmatpush2.msra.mxu0 0.0
        %3013 = vmatprep.subr.mxu0 0.0
        %3014 = vmatpush2.msra.mxu0 0.0
        %3015 = vmatprep.subr.mxu0 0.0
        %3016 = vmatpush2.msra.mxu0 0.0
        %3017 = vmatprep.subr.mxu0 0.0
        %3018 = vmatpush2.msra.mxu0 0.0
        %3019 = vmatprep.subr.mxu0 0.0
        %3020 = vmatpush2.msra.mxu0 0.0
        %3021 = vmatprep.subr.mxu0 0.0
        %3022 = vmatpush2.msra.mxu0 0.0
        %3023 = vmatprep.subr.mxu0 0.0
        %3024 = vmatpush2.msra.mxu0 0.0
        %3025 = vmatprep.subr.mxu0 0.0
        %3026 = vmatpush2.msra.mxu0 0.0
        %3027 = vmatprep.subr.mxu0 0.0
        %3028 = vmatpush2.msra.mxu0 0.0
        %3029 = vmatprep.mubr.f32.mxu0 0.0
        %3030 = vmatmul.mubr.f32.gmra.mxu0 %v2963
        %v3031 = vpop.f32.mrf.mxu0
        %v3032 = vadd.f32 0.0, %v3031
        %v3033 = vpop.f32.mrf.mxu0
        %3034 = vdwg.mxu0
        %v3035 = vmax.f32 %v3032, 0.0
        %v3036 = vld [vmem:[%s14] sm:$0xff]
        %v3037 = vld [vmem:[%s14 + $0x8] sm:$0xff]
        %v3038 = vld [vmem:[%s14 + $0x10] sm:$0xff]
        %v3039 = vld [vmem:[%s14 + $0x18] sm:$0xff]
        %v3040 = vld [vmem:[%s14 + $0x20] sm:$0xff]
        %v3041 = vld [vmem:[%s14 + $0x28] sm:$0xff]
        %v3042 = vld [vmem:[%s14 + $0x30] sm:$0xff]
        %v3043 = vld [vmem:[%s14 + $0x38] sm:$0xff]
        %vm3044 = vcmask 7168
        %v3046 = vsel %vm3044, %v3036, 0
        %v3049 = vsel %vm3044, %v3037, 0
        %v3052 = vsel %vm3044, %v3038, 0
        %v3055 = vsel %vm3044, %v3039, 0
        %v3058 = vsel %vm3044, %v3040, 0
        %v3061 = vsel %vm3044, %v3041, 0
        %v3064 = vsel %vm3044, %v3042, 0
        %v3067 = vsel %vm3044, %v3043, 0
        %vm3069 = vcmask 1040384
        %v3071 = vsel %vm3069, %v3035, 0
        %3073 = vmatprep.subr.mxu0 0.0
        %3074 = vmatpush1.msra.mxu0 0.0
        %3075 = vmatprep.subr.mxu0 0.0
        %3076 = vmatpush1.msra.mxu0 0.0
        %3077 = vmatprep.subr.mxu0 0.0
        %3078 = vmatpush1.msra.mxu0 0.0
        %3079 = vmatprep.subr.mxu0 0.0
        %3080 = vmatpush1.msra.mxu0 0.0
        %3081 = vmatprep.subr.mxu0 0.0
        %3082 = vmatpush1.msra.mxu0 0.0
        %3083 = vmatprep.subr.mxu0 0.0
        %3084 = vmatpush1.msra.mxu0 0.0
        %3085 = vmatprep.subr.mxu0 0.0
        %3086 = vmatpush1.msra.mxu0 0.0
        %3087 = vmatprep.subr.mxu0 0.0
        %3088 = vmatpush1.msra.mxu0 0.0
        %3089 = vmatprep.subr.mxu0 0.0
        %3090 = vmatpush1.msra.mxu0 0.0
        %3091 = vmatprep.subr.mxu0 0.0
        %3092 = vmatpush1.msra.mxu0 0.0
        %3093 = vmatprep.subr.mxu0 0.0
        %3094 = vmatpush1.msra.mxu0 0.0
        %3095 = vmatprep.subr.mxu0 0.0
        %3096 = vmatpush1.msra.mxu0 0.0
        %3097 = vmatprep.subr.mxu0 0.0
        %3098 = vmatpush1.msra.mxu0 0.0
        %3099 = vmatprep.subr.mxu0 0.0
        %3100 = vmatpush1.msra.mxu0 0.0
        %3101 = vmatprep.subr.mxu0 0.0
        %3102 = vmatpush1.msra.mxu0 0.0
        %3103 = vmatprep.subr.mxu0 0.0
        %3104 = vmatpush1.msra.mxu0 %v3071
        %3105 = vmatprep.subr.mxu0 0.0
        %3106 = vmatpush2.msra.mxu0 0.0
        %3107 = vmatprep.subr.mxu0 0.0
        %3108 = vmatpush2.msra.mxu0 0.0
        %3109 = vmatprep.subr.mxu0 0.0
        %3110 = vmatpush2.msra.mxu0 0.0
        %3111 = vmatprep.subr.mxu0 0.0
        %3112 = vmatpush2.msra.mxu0 0.0
        %3113 = vmatprep.subr.mxu0 0.0
        %3114 = vmatpush2.msra.mxu0 0.0
        %3115 = vmatprep.subr.mxu0 0.0
        %3116 = vmatpush2.msra.mxu0 0.0
        %3117 = vmatprep.subr.mxu0 0.0
        %3118 = vmatpush2.msra.mxu0 0.0
        %3119 = vmatprep.subr.mxu0 0.0
        %3120 = vmatpush2.msra.mxu0 0.0
        %3121 = vmatprep.subr.mxu0 0.0
        %3122 = vmatpush2.msra.mxu0 0.0
        %3123 = vmatprep.subr.mxu0 0.0
        %3124 = vmatpush2.msra.mxu0 0.0
        %3125 = vmatprep.subr.mxu0 0.0
        %3126 = vmatpush2.msra.mxu0 0.0
        %3127 = vmatprep.subr.mxu0 0.0
        %3128 = vmatpush2.msra.mxu0 0.0
        %3129 = vmatprep.subr.mxu0 0.0
        %3130 = vmatpush2.msra.mxu0 0.0
        %3131 = vmatprep.subr.mxu0 0.0
        %3132 = vmatpush2.msra.mxu0 0.0
        %3133 = vmatprep.subr.mxu0 0.0
        %3134 = vmatpush2.msra.mxu0 0.0
        %3135 = vmatprep.subr.mxu0 0.0
        %3136 = vmatpush2.msra.mxu0 0.0
        %3137 = vmatprep.mubr.f32.mxu0 0.0
        %3138 = vmatmul.mubr.f32.gmra.mxu0 %v3046
        %v3139 = vpop.f32.mrf.mxu0
        %v3140 = vadd.f32 0.0, %v3139
        %v3141 = vpop.f32.mrf.mxu0
        %3142 = vmatprep.mubr.f32.mxu0 0.0
        %3143 = vmatmul.mubr.f32.gmra.mxu0 %v3049
        %v3144 = vpop.f32.mrf.mxu0
        %v3145 = vadd.f32 0.0, %v3144
        %v3146 = vpop.f32.mrf.mxu0
        %3147 = vmatprep.mubr.f32.mxu0 0.0
        %3148 = vmatmul.mubr.f32.gmra.mxu0 %v3052
        %v3149 = vpop.f32.mrf.mxu0
        %v3150 = vadd.f32 0.0, %v3149
        %v3151 = vpop.f32.mrf.mxu0
        %3152 = vmatprep.mubr.f32.mxu0 0.0
        %3153 = vmatmul.mubr.f32.gmra.mxu0 %v3055
        %v3154 = vpop.f32.mrf.mxu0
        %v3155 = vadd.f32 0.0, %v3154
        %v3156 = vpop.f32.mrf.mxu0
        %3157 = vmatprep.mubr.f32.mxu0 0.0
        %3158 = vmatmul.mubr.f32.gmra.mxu0 %v3058
        %v3159 = vpop.f32.mrf.mxu0
        %v3160 = vadd.f32 0.0, %v3159
        %v3161 = vpop.f32.mrf.mxu0
        %3162 = vmatprep.mubr.f32.mxu0 0.0
        %3163 = vmatmul.mubr.f32.gmra.mxu0 %v3061
        %v3164 = vpop.f32.mrf.mxu0
        %v3165 = vadd.f32 0.0, %v3164
        %v3166 = vpop.f32.mrf.mxu0
        %3167 = vmatprep.mubr.f32.mxu0 0.0
        %3168 = vmatmul.mubr.f32.gmra.mxu0 %v3064
        %v3169 = vpop.f32.mrf.mxu0
        %v3170 = vadd.f32 0.0, %v3169
        %v3171 = vpop.f32.mrf.mxu0
        %3172 = vmatprep.mubr.f32.mxu0 0.0
        %3173 = vmatmul.mubr.f32.gmra.mxu0 %v3067
        %v3174 = vpop.f32.mrf.mxu0
        %v3175 = vadd.f32 0.0, %v3174
        %v3176 = vpop.f32.mrf.mxu0
        %3177 = vdwg.mxu0
        %v3178 = vxor.u32 %v3140, 2147483648
        %v3179 = vxor.u32 %v3145, 2147483648
        %v3180 = vxor.u32 %v3150, 2147483648
        %v3181 = vxor.u32 %v3155, 2147483648
        %v3182 = vxor.u32 %v3160, 2147483648
        %v3183 = vxor.u32 %v3165, 2147483648
        %v3184 = vxor.u32 %v3170, 2147483648
        %v3185 = vxor.u32 %v3175, 2147483648
        %v3186 = vmul.f32 %v3178, 1.442695
        %v3187 = vpow.pop %v3186
        %v3188 = vmul.f32 %v3179, 1.442695
        %v3189 = vpow.pop %v3188
        %v3190 = vmul.f32 %v3180, 1.442695
        %v3191 = vpow.pop %v3190
        %v3192 = vmul.f32 %v3181, 1.442695
        %v3193 = vpow.pop %v3192
        %v3194 = vmul.f32 %v3182, 1.442695
        %v3195 = vpow.pop %v3194
        %v3196 = vmul.f32 %v3183, 1.442695
        %v3197 = vpow.pop %v3196
        %v3198 = vmul.f32 %v3184, 1.442695
        %v3199 = vpow.pop %v3198
        %v3200 = vmul.f32 %v3185, 1.442695
        %v3201 = vpow.pop %v3200
        %v3202 = vadd.f32 %v3187, 1.0
        %v3203 = vadd.f32 %v3189, 1.0
        %v3204 = vadd.f32 %v3191, 1.0
        %v3205 = vadd.f32 %v3193, 1.0
        %v3206 = vadd.f32 %v3195, 1.0
        %v3207 = vadd.f32 %v3197, 1.0
        %v3208 = vadd.f32 %v3199, 1.0
        %v3209 = vadd.f32 %v3201, 1.0
        %v3210 = vrcp.pop %v3202
        %v3211 = vmul.f32 1.0, %v3210
        %v3212 = vrcp.pop %v3203
        %v3213 = vmul.f32 1.0, %v3212
        %v3214 = vrcp.pop %v3204
        %v3215 = vmul.f32 1.0, %v3214
        %v3216 = vrcp.pop %v3205
        %v3217 = vmul.f32 1.0, %v3216
        %v3218 = vrcp.pop %v3206
        %v3219 = vmul.f32 1.0, %v3218
        %v3220 = vrcp.pop %v3207
        %v3221 = vmul.f32 1.0, %v3220
        %v3222 = vrcp.pop %v3208
        %v3223 = vmul.f32 1.0, %v3222
        %v3224 = vrcp.pop %v3209
        %v3225 = vmul.f32 1.0, %v3224
        %v3226 = vld [vmem:[%s20] sm:$0x3]
        %vm3227 = vcmask 15360
        %v3229 = vsel %vm3227, %v3211, 0
        %v3232 = vsel %vm3227, %v3213, 0
        %v3235 = vsel %vm3227, %v3215, 0
        %v3238 = vsel %vm3227, %v3217, 0
        %v3241 = vsel %vm3227, %v3219, 0
        %v3244 = vsel %vm3227, %v3221, 0
        %v3247 = vsel %vm3227, %v3223, 0
        %v3250 = vsel %vm3227, %v3225, 0
        %vm3252 = vcmask 1041408
        %v3254 = vsel %vm3252, %v3226, 0
        %3256 = vmatprep.subr.mxu0 0.0
        %3257 = vmatpush1.msra.mxu0 0.0
        %3258 = vmatprep.subr.mxu0 0.0
        %3259 = vmatpush1.msra.mxu0 0.0
        %3260 = vmatprep.subr.mxu0 0.0
        %3261 = vmatpush1.msra.mxu0 0.0
        %3262 = vmatprep.subr.mxu0 0.0
        %3263 = vmatpush1.msra.mxu0 0.0
        %3264 = vmatprep.subr.mxu0 0.0
        %3265 = vmatpush1.msra.mxu0 0.0
        %3266 = vmatprep.subr.mxu0 0.0
        %3267 = vmatpush1.msra.mxu0 0.0
        %3268 = vmatprep.subr.mxu0 0.0
        %3269 = vmatpush1.msra.mxu0 0.0
        %3270 = vmatprep.subr.mxu0 0.0
        %3271 = vmatpush1.msra.mxu0 0.0
        %3272 = vmatprep.subr.mxu0 0.0
        %3273 = vmatpush1.msra.mxu0 0.0
        %3274 = vmatprep.subr.mxu0 0.0
        %3275 = vmatpush1.msra.mxu0 0.0
        %3276 = vmatprep.subr.mxu0 0.0
        %3277 = vmatpush1.msra.mxu0 0.0
        %3278 = vmatprep.subr.mxu0 0.0
        %3279 = vmatpush1.msra.mxu0 0.0
        %3280 = vmatprep.subr.mxu0 0.0
        %3281 = vmatpush1.msra.mxu0 0.0
        %3282 = vmatprep.subr.mxu0 0.0
        %3283 = vmatpush1.msra.mxu0 0.0
        %3284 = vmatprep.subr.mxu0 0.0
        %3285 = vmatpush1.msra.mxu0 0.0
        %3286 = vmatprep.subr.mxu0 0.0
        %3287 = vmatpush1.msra.mxu0 %v3254
        %3288 = vmatprep.subr.mxu0 0.0
        %3289 = vmatpush2.msra.mxu0 0.0
        %3290 = vmatprep.subr.mxu0 0.0
        %3291 = vmatpush2.msra.mxu0 0.0
        %3292 = vmatprep.subr.mxu0 0.0
        %3293 = vmatpush2.msra.mxu0 0.0
        %3294 = vmatprep.subr.mxu0 0.0
        %3295 = vmatpush2.msra.mxu0 0.0
        %3296 = vmatprep.subr.mxu0 0.0
        %3297 = vmatpush2.msra.mxu0 0.0
        %3298 = vmatprep.subr.mxu0 0.0
        %3299 = vmatpush2.msra.mxu0 0.0
        %3300 = vmatprep.subr.mxu0 0.0
        %3301 = vmatpush2.msra.mxu0 0.0
        %3302 = vmatprep.subr.mxu0 0.0
        %3303 = vmatpush2.msra.mxu0 0.0
        %3304 = vmatprep.subr.mxu0 0.0
        %3305 = vmatpush2.msra.mxu0 0.0
        %3306 = vmatprep.subr.mxu0 0.0
        %3307 = vmatpush2.msra.mxu0 0.0
        %3308 = vmatprep.subr.mxu0 0.0
        %3309 = vmatpush2.msra.mxu0 0.0
        %3310 = vmatprep.subr.mxu0 0.0
        %3311 = vmatpush2.msra.mxu0 0.0
        %3312 = vmatprep.subr.mxu0 0.0
        %3313 = vmatpush2.msra.mxu0 0.0
        %3314 = vmatprep.subr.mxu0 0.0
        %3315 = vmatpush2.msra.mxu0 0.0
        %3316 = vmatprep.subr.mxu0 0.0
        %3317 = vmatpush2.msra.mxu0 0.0
        %3318 = vmatprep.subr.mxu0 0.0
        %3319 = vmatpush2.msra.mxu0 0.0
        %3320 = vmatprep.mubr.f32.mxu0 0.0
        %3321 = vmatmul.mubr.f32.gmra.mxu0 %v3229
        %v3322 = vpop.f32.mrf.mxu0
        %v3323 = vadd.f32 0.0, %v3322
        %v3324 = vpop.f32.mrf.mxu0
        %3325 = vmatprep.mubr.f32.mxu0 0.0
        %3326 = vmatmul.mubr.f32.gmra.mxu0 %v3232
        %v3327 = vpop.f32.mrf.mxu0
        %v3328 = vadd.f32 0.0, %v3327
        %v3329 = vpop.f32.mrf.mxu0
        %3330 = vmatprep.mubr.f32.mxu0 0.0
        %3331 = vmatmul.mubr.f32.gmra.mxu0 %v3235
        %v3332 = vpop.f32.mrf.mxu0
        %v3333 = vadd.f32 0.0, %v3332
        %v3334 = vpop.f32.mrf.mxu0
        %3335 = vmatprep.mubr.f32.mxu0 0.0
        %3336 = vmatmul.mubr.f32.gmra.mxu0 %v3238
        %v3337 = vpop.f32.mrf.mxu0
        %v3338 = vadd.f32 0.0, %v3337
        %v3339 = vpop.f32.mrf.mxu0
        %3340 = vmatprep.mubr.f32.mxu0 0.0
        %3341 = vmatmul.mubr.f32.gmra.mxu0 %v3241
        %v3342 = vpop.f32.mrf.mxu0
        %v3343 = vadd.f32 0.0, %v3342
        %v3344 = vpop.f32.mrf.mxu0
        %3345 = vmatprep.mubr.f32.mxu0 0.0
        %3346 = vmatmul.mubr.f32.gmra.mxu0 %v3244
        %v3347 = vpop.f32.mrf.mxu0
        %v3348 = vadd.f32 0.0, %v3347
        %v3349 = vpop.f32.mrf.mxu0
        %3350 = vmatprep.mubr.f32.mxu0 0.0
        %3351 = vmatmul.mubr.f32.gmra.mxu0 %v3247
        %v3352 = vpop.f32.mrf.mxu0
        %v3353 = vadd.f32 0.0, %v3352
        %v3354 = vpop.f32.mrf.mxu0
        %3355 = vmatprep.mubr.f32.mxu0 0.0
        %3356 = vmatmul.mubr.f32.gmra.mxu0 %v3250
        %v3357 = vpop.f32.mrf.mxu0
        %v3358 = vadd.f32 0.0, %v3357
        %v3359 = vpop.f32.mrf.mxu0
        %3360 = vdwg.mxu0
        %v3361 = vld [vmem:[#allocation8] sm:$0xff]
        %v3362 = vmul.f32 %v1847, %v3323
        %v3363 = vmul.f32 %v1848, %v3328
        %s3364 = scalar_lea.vmem [#allocation8], 8
        %v3365 = vld [vmem:[%s3364] sm:$0xff]
        %v3366 = vmul.f32 %v2471, %v3333
        %v3367 = vmul.f32 %v2472, %v3338
        %v3369 = vsel %vm752, %v3365, 0
        %3371 = vmatprep.subr.mxu0 0.0
        %3372 = vmatpush1.msra.mxu0 0.0
        %3373 = vmatprep.subr.mxu0 0.0
        %3374 = vmatpush1.msra.mxu0 0.0
        %3375 = vmatprep.subr.mxu0 0.0
        %3376 = vmatpush1.msra.mxu0 0.0
        %3377 = vmatprep.subr.mxu0 0.0
        %3378 = vmatpush1.msra.mxu0 0.0
        %3379 = vmatprep.subr.mxu0 0.0
        %3380 = vmatpush1.msra.mxu0 0.0
        %3381 = vmatprep.subr.mxu0 0.0
        %3382 = vmatpush1.msra.mxu0 0.0
        %3383 = vmatprep.subr.mxu0 0.0
        %3384 = vmatpush1.msra.mxu0 0.0
        %3385 = vmatprep.subr.mxu0 0.0
        %3386 = vmatpush1.msra.mxu0 0.0
        %3387 = vmatprep.subr.mxu0 0.0
        %3388 = vmatpush1.msra.mxu0 0.0
        %3389 = vmatprep.subr.mxu0 0.0
        %3390 = vmatpush1.msra.mxu0 0.0
        %3391 = vmatprep.subr.mxu0 0.0
        %3392 = vmatpush1.msra.mxu0 0.0
        %3393 = vmatprep.subr.mxu0 0.0
        %3394 = vmatpush1.msra.mxu0 0.0
        %3395 = vmatprep.subr.mxu0 0.0
        %3396 = vmatpush1.msra.mxu0 0.0
        %3397 = vmatprep.subr.mxu0 0.0
        %3398 = vmatpush1.msra.mxu0 0.0
        %3399 = vmatprep.subr.mxu0 0.0
        %3400 = vmatpush1.msra.mxu0 %v3367
        %3401 = vmatprep.subr.mxu0 0.0
        %3402 = vmatpush1.msra.mxu0 %v3366
        %3403 = vmatprep.subr.mxu0 0.0
        %3404 = vmatpush2.msra.mxu0 0.0
        %3405 = vmatprep.subr.mxu0 0.0
        %3406 = vmatpush2.msra.mxu0 0.0
        %3407 = vmatprep.subr.mxu0 0.0
        %3408 = vmatpush2.msra.mxu0 0.0
        %3409 = vmatprep.subr.mxu0 0.0
        %3410 = vmatpush2.msra.mxu0 0.0
        %3411 = vmatprep.subr.mxu0 0.0
        %3412 = vmatpush2.msra.mxu0 0.0
        %3413 = vmatprep.subr.mxu0 0.0
        %3414 = vmatpush2.msra.mxu0 0.0
        %3415 = vmatprep.subr.mxu0 0.0
        %3416 = vmatpush2.msra.mxu0 0.0
        %3417 = vmatprep.subr.mxu0 0.0
        %3418 = vmatpush2.msra.mxu0 0.0
        %3419 = vmatprep.subr.mxu0 0.0
        %3420 = vmatpush2.msra.mxu0 0.0
        %3421 = vmatprep.subr.mxu0 0.0
        %3422 = vmatpush2.msra.mxu0 0.0
        %3423 = vmatprep.subr.mxu0 0.0
        %3424 = vmatpush2.msra.mxu0 0.0
        %3425 = vmatprep.subr.mxu0 0.0
        %3426 = vmatpush2.msra.mxu0 0.0
        %3427 = vmatprep.subr.mxu0 0.0
        %3428 = vmatpush2.msra.mxu0 0.0
        %3429 = vmatprep.subr.mxu0 0.0
        %3430 = vmatpush2.msra.mxu0 0.0
        %3431 = vmatprep.subr.mxu0 0.0
        %3432 = vmatpush2.msra.mxu0 0.0
        %3433 = vmatprep.subr.mxu0 0.0
        %3434 = vmatpush2.msra.mxu0 0.0
        %3435 = vmatprep.mubr.f32.mxu0 0.0
        %3436 = vmatmul.mubr.f32.gmra.mxu0 %v3369
        %v3437 = vpop.f32.mrf.mxu0
        %v3438 = vadd.f32 0.0, %v3437
        %v3439 = vpop.f32.mrf.mxu0
        %3440 = vdwg.mxu0
        %v3442 = vsel %vm752, %v3361, 0
        %3444 = vmatprep.subr.mxu0 0.0
        %3445 = vmatpush1.msra.mxu0 0.0
        %3446 = vmatprep.subr.mxu0 0.0
        %3447 = vmatpush1.msra.mxu0 0.0
        %3448 = vmatprep.subr.mxu0 0.0
        %3449 = vmatpush1.msra.mxu0 0.0
        %3450 = vmatprep.subr.mxu0 0.0
        %3451 = vmatpush1.msra.mxu0 0.0
        %3452 = vmatprep.subr.mxu0 0.0
        %3453 = vmatpush1.msra.mxu0 0.0
        %3454 = vmatprep.subr.mxu0 0.0
        %3455 = vmatpush1.msra.mxu0 0.0
        %3456 = vmatprep.subr.mxu0 0.0
        %3457 = vmatpush1.msra.mxu0 0.0
        %3458 = vmatprep.subr.mxu0 0.0
        %3459 = vmatpush1.msra.mxu0 0.0
        %3460 = vmatprep.subr.mxu0 0.0
        %3461 = vmatpush1.msra.mxu0 0.0
        %3462 = vmatprep.subr.mxu0 0.0
        %3463 = vmatpush1.msra.mxu0 0.0
        %3464 = vmatprep.subr.mxu0 0.0
        %3465 = vmatpush1.msra.mxu0 0.0
        %3466 = vmatprep.subr.mxu0 0.0
        %3467 = vmatpush1.msra.mxu0 0.0
        %3468 = vmatprep.subr.mxu0 0.0
        %3469 = vmatpush1.msra.mxu0 0.0
        %3470 = vmatprep.subr.mxu0 0.0
        %3471 = vmatpush1.msra.mxu0 0.0
        %3472 = vmatprep.subr.mxu0 0.0
        %3473 = vmatpush1.msra.mxu0 %v3363
        %3474 = vmatprep.subr.mxu0 0.0
        %3475 = vmatpush1.msra.mxu0 %v3362
        %3476 = vmatprep.subr.mxu0 0.0
        %3477 = vmatpush2.msra.mxu0 0.0
        %3478 = vmatprep.subr.mxu0 0.0
        %3479 = vmatpush2.msra.mxu0 0.0
        %3480 = vmatprep.subr.mxu0 0.0
        %3481 = vmatpush2.msra.mxu0 0.0
        %3482 = vmatprep.subr.mxu0 0.0
        %3483 = vmatpush2.msra.mxu0 0.0
        %3484 = vmatprep.subr.mxu0 0.0
        %3485 = vmatpush2.msra.mxu0 0.0
        %3486 = vmatprep.subr.mxu0 0.0
        %3487 = vmatpush2.msra.mxu0 0.0
        %3488 = vmatprep.subr.mxu0 0.0
        %3489 = vmatpush2.msra.mxu0 0.0
        %3490 = vmatprep.subr.mxu0 0.0
        %3491 = vmatpush2.msra.mxu0 0.0
        %3492 = vmatprep.subr.mxu0 0.0
        %3493 = vmatpush2.msra.mxu0 0.0
        %3494 = vmatprep.subr.mxu0 0.0
        %3495 = vmatpush2.msra.mxu0 0.0
        %3496 = vmatprep.subr.mxu0 0.0
        %3497 = vmatpush2.msra.mxu0 0.0
        %3498 = vmatprep.subr.mxu0 0.0
        %3499 = vmatpush2.msra.mxu0 0.0
        %3500 = vmatprep.subr.mxu0 0.0
        %3501 = vmatpush2.msra.mxu0 0.0
        %3502 = vmatprep.subr.mxu0 0.0
        %3503 = vmatpush2.msra.mxu0 0.0
        %3504 = vmatprep.subr.mxu0 0.0
        %3505 = vmatpush2.msra.mxu0 0.0
        %3506 = vmatprep.subr.mxu0 0.0
        %3507 = vmatpush2.msra.mxu0 0.0
        %3508 = vmatprep.mubr.f32.mxu0 0.0
        %3509 = vmatmul.mubr.f32.gmra.mxu0 %v3442
        %v3510 = vpop.f32.mrf.mxu0
        %v3511 = vadd.f32 %v3438, %v3510
        %v3512 = vpop.f32.mrf.mxu0
        %3513 = vdwg.mxu0
        %s3514 = scalar_lea.vmem [#allocation8], 16
        %v3515 = vld [vmem:[%s3514] sm:$0xff]
        %v3516 = vmul.f32 %v1437, %v3343
        %v3517 = vmul.f32 %v1438, %v3348
        %v3519 = vsel %vm752, %v3515, 0
        %3521 = vmatprep.subr.mxu0 0.0
        %3522 = vmatpush1.msra.mxu0 0.0
        %3523 = vmatprep.subr.mxu0 0.0
        %3524 = vmatpush1.msra.mxu0 0.0
        %3525 = vmatprep.subr.mxu0 0.0
        %3526 = vmatpush1.msra.mxu0 0.0
        %3527 = vmatprep.subr.mxu0 0.0
        %3528 = vmatpush1.msra.mxu0 0.0
        %3529 = vmatprep.subr.mxu0 0.0
        %3530 = vmatpush1.msra.mxu0 0.0
        %3531 = vmatprep.subr.mxu0 0.0
        %3532 = vmatpush1.msra.mxu0 0.0
        %3533 = vmatprep.subr.mxu0 0.0
        %3534 = vmatpush1.msra.mxu0 0.0
        %3535 = vmatprep.subr.mxu0 0.0
        %3536 = vmatpush1.msra.mxu0 0.0
        %3537 = vmatprep.subr.mxu0 0.0
        %3538 = vmatpush1.msra.mxu0 0.0
        %3539 = vmatprep.subr.mxu0 0.0
        %3540 = vmatpush1.msra.mxu0 0.0
        %3541 = vmatprep.subr.mxu0 0.0
        %3542 = vmatpush1.msra.mxu0 0.0
        %3543 = vmatprep.subr.mxu0 0.0
        %3544 = vmatpush1.msra.mxu0 0.0
        %3545 = vmatprep.subr.mxu0 0.0
        %3546 = vmatpush1.msra.mxu0 0.0
        %3547 = vmatprep.subr.mxu0 0.0
        %3548 = vmatpush1.msra.mxu0 0.0
        %3549 = vmatprep.subr.mxu0 0.0
        %3550 = vmatpush1.msra.mxu0 %v3517
        %3551 = vmatprep.subr.mxu0 0.0
        %3552 = vmatpush1.msra.mxu0 %v3516
        %3553 = vmatprep.subr.mxu0 0.0
        %3554 = vmatpush2.msra.mxu0 0.0
        %3555 = vmatprep.subr.mxu0 0.0
        %3556 = vmatpush2.msra.mxu0 0.0
        %3557 = vmatprep.subr.mxu0 0.0
        %3558 = vmatpush2.msra.mxu0 0.0
        %3559 = vmatprep.subr.mxu0 0.0
        %3560 = vmatpush2.msra.mxu0 0.0
        %3561 = vmatprep.subr.mxu0 0.0
        %3562 = vmatpush2.msra.mxu0 0.0
        %3563 = vmatprep.subr.mxu0 0.0
        %3564 = vmatpush2.msra.mxu0 0.0
        %3565 = vmatprep.subr.mxu0 0.0
        %3566 = vmatpush2.msra.mxu0 0.0
        %3567 = vmatprep.subr.mxu0 0.0
        %3568 = vmatpush2.msra.mxu0 0.0
        %3569 = vmatprep.subr.mxu0 0.0
        %3570 = vmatpush2.msra.mxu0 0.0
        %3571 = vmatprep.subr.mxu0 0.0
        %3572 = vmatpush2.msra.mxu0 0.0
        %3573 = vmatprep.subr.mxu0 0.0
        %3574 = vmatpush2.msra.mxu0 0.0
        %3575 = vmatprep.subr.mxu0 0.0
        %3576 = vmatpush2.msra.mxu0 0.0
        %3577 = vmatprep.subr.mxu0 0.0
        %3578 = vmatpush2.msra.mxu0 0.0
        %3579 = vmatprep.subr.mxu0 0.0
        %3580 = vmatpush2.msra.mxu0 0.0
        %3581 = vmatprep.subr.mxu0 0.0
        %3582 = vmatpush2.msra.mxu0 0.0
        %3583 = vmatprep.subr.mxu0 0.0
        %3584 = vmatpush2.msra.mxu0 0.0
        %3585 = vmatprep.mubr.f32.mxu0 0.0
        %3586 = vmatmul.mubr.f32.gmra.mxu0 %v3519
        %v3587 = vpop.f32.mrf.mxu0
        %v3588 = vadd.f32 0.0, %v3587
        %v3589 = vpop.f32.mrf.mxu0
        %3590 = vdwg.mxu0
        %v3591 = vadd.f32 %v3511, %v3588
        %s3592 = scalar_lea.vmem [#allocation8], 24
        %v3593 = vld [vmem:[%s3592] sm:$0xff]
        %v3594 = vmul.f32 %v2635, %v3353
        %v3595 = vmul.f32 %v2636, %v3358
        %v3597 = vsel %vm752, %v3593, 0
        %3599 = vmatprep.subr.mxu0 0.0
        %3600 = vmatpush1.msra.mxu0 0.0
        %3601 = vmatprep.subr.mxu0 0.0
        %3602 = vmatpush1.msra.mxu0 0.0
        %3603 = vmatprep.subr.mxu0 0.0
        %3604 = vmatpush1.msra.mxu0 0.0
        %3605 = vmatprep.subr.mxu0 0.0
        %3606 = vmatpush1.msra.mxu0 0.0
        %3607 = vmatprep.subr.mxu0 0.0
        %3608 = vmatpush1.msra.mxu0 0.0
        %3609 = vmatprep.subr.mxu0 0.0
        %3610 = vmatpush1.msra.mxu0 0.0
        %3611 = vmatprep.subr.mxu0 0.0
        %3612 = vmatpush1.msra.mxu0 0.0
        %3613 = vmatprep.subr.mxu0 0.0
        %3614 = vmatpush1.msra.mxu0 0.0
        %3615 = vmatprep.subr.mxu0 0.0
        %3616 = vmatpush1.msra.mxu0 0.0
        %3617 = vmatprep.subr.mxu0 0.0
        %3618 = vmatpush1.msra.mxu0 0.0
        %3619 = vmatprep.subr.mxu0 0.0
        %3620 = vmatpush1.msra.mxu0 0.0
        %3621 = vmatprep.subr.mxu0 0.0
        %3622 = vmatpush1.msra.mxu0 0.0
        %3623 = vmatprep.subr.mxu0 0.0
        %3624 = vmatpush1.msra.mxu0 0.0
        %3625 = vmatprep.subr.mxu0 0.0
        %3626 = vmatpush1.msra.mxu0 0.0
        %3627 = vmatprep.subr.mxu0 0.0
        %3628 = vmatpush1.msra.mxu0 %v3595
        %3629 = vmatprep.subr.mxu0 0.0
        %3630 = vmatpush1.msra.mxu0 %v3594
        %3631 = vmatprep.subr.mxu0 0.0
        %3632 = vmatpush2.msra.mxu0 0.0
        %3633 = vmatprep.subr.mxu0 0.0
        %3634 = vmatpush2.msra.mxu0 0.0
        %3635 = vmatprep.subr.mxu0 0.0
        %3636 = vmatpush2.msra.mxu0 0.0
        %3637 = vmatprep.subr.mxu0 0.0
        %3638 = vmatpush2.msra.mxu0 0.0
        %3639 = vmatprep.subr.mxu0 0.0
        %3640 = vmatpush2.msra.mxu0 0.0
        %3641 = vmatprep.subr.mxu0 0.0
        %3642 = vmatpush2.msra.mxu0 0.0
        %3643 = vmatprep.subr.mxu0 0.0
        %3644 = vmatpush2.msra.mxu0 0.0
        %3645 = vmatprep.subr.mxu0 0.0
        %3646 = vmatpush2.msra.mxu0 0.0
        %3647 = vmatprep.subr.mxu0 0.0
        %3648 = vmatpush2.msra.mxu0 0.0
        %3649 = vmatprep.subr.mxu0 0.0
        %3650 = vmatpush2.msra.mxu0 0.0
        %3651 = vmatprep.subr.mxu0 0.0
        %3652 = vmatpush2.msra.mxu0 0.0
        %3653 = vmatprep.subr.mxu0 0.0
        %3654 = vmatpush2.msra.mxu0 0.0
        %3655 = vmatprep.subr.mxu0 0.0
        %3656 = vmatpush2.msra.mxu0 0.0
        %3657 = vmatprep.subr.mxu0 0.0
        %3658 = vmatpush2.msra.mxu0 0.0
        %3659 = vmatprep.subr.mxu0 0.0
        %3660 = vmatpush2.msra.mxu0 0.0
        %3661 = vmatprep.subr.mxu0 0.0
        %3662 = vmatpush2.msra.mxu0 0.0
        %3663 = vmatprep.mubr.f32.mxu0 0.0
        %3664 = vmatmul.mubr.f32.gmra.mxu0 %v3597
        %v3665 = vpop.f32.mrf.mxu0
        %v3666 = vadd.f32 0.0, %v3665
        %v3667 = vpop.f32.mrf.mxu0
        %3668 = vdwg.mxu0
        %v3669 = vadd.f32 %v3591, %v3666
        %v3670 = vld [vmem:[%s16] sm:$0xff]
        %3672 = vset.pattern.permute.xlu0 0
        %3673 = vperm.xlu0 %3672, %v3670
        %v3674 = vpop.permute.xlu0 %3673
        %v3676 = vadd.f32 %v3669, %v3674
        %3677 = vst [vmem:[%s724] sm:$0xff] %v3676
        %s3678 = sand.u32 %s491, 1
        %s3679 = scalar_lea.sflag [#allocation5], %s3678
        %s3680 = sand.u32 %s491, 1
        %s3681 = smul.addr %s3680, 8
        %s3682 = scalar_lea.vmem [#allocation9], %s3681
        // Predicated region
        $region140: #{tpu_custom_call.1} parent=122 // pred_check
          %p3683 = pneg %p501
        $region141: #{tpu_custom_call.1} parent=122 // pred_check_branch
          %3685 = sbr.rel (%p3683) target = $region143
        $region142: #{tpu_custom_call.1} parent=122 // pred_region
          %s3687 = ssub.s32 128, 128
          %3688 = vsyncadd %s3679, %s3687
          %s3689 = smul.addr %s37, 128
          %s3690 = scalar_lea.hbm %s21, %s3689
          %s3692 = sshll.u32 %s3682, 4
          %s3693 = int_to_ptr.vmem [resolvable:$true] %s3692
          %3695 = dma.vmem_to_hbm [thread:$0]  %s3693, 128, %s3690, %s3679
        $region143: #{tpu_custom_call.1} parent=122 // pred_fallthru
          _
      $region123: #{tpu_custom_call.1} parent=5 // pred_fallthru
        _
      %p3696 = scmp.le.s32.totalorder 2, %s32
      // Predicated region
      $region144: #{tpu_custom_call.1} parent=5 // pred_check
        %p3697 = pneg %p3696
      $region145: #{tpu_custom_call.1} parent=5 // pred_check_branch
        %3699 = sbr.rel (%p3697) target = $region147
      $region146: #{tpu_custom_call.1} parent=5 // pred_region
        %s3700 = ssub.s32 %s32, 2
        // Predicated region
        $region148: #{tpu_custom_call.1} parent=146 // pred_check
          %p3701 = pneg %p507
        $region149: #{tpu_custom_call.1} parent=146 // pred_check_branch
          %3703 = sbr.rel (%p3701) target = $region151
        $region150: #{tpu_custom_call.1} parent=146 // pred_region
          %s3704 = sand.u32 %s492, 1
          %s3705 = scalar_lea.sflag [#allocation5], %s3704
          %s3706 = sand.u32 %s492, 1
          %s3707 = smul.addr %s3706, 8
          %s3708 = scalar_lea.vmem [#allocation9], %s3707
          %3709 = dma.done %s3705, 128
        $region151: #{tpu_custom_call.1} parent=146 // pred_fallthru
          _
      $region147: #{tpu_custom_call.1} parent=5 // pred_fallthru
        _
    $region6: #{tpu_custom_call.1} parent=1 // loop_footer
      %s36 = sadd.s32 1, %s32
    $region7: #{tpu_custom_call.1} parent=1 // loop_footer_branch
      %31 = sbr.rel target = $region3
    $region8: #{tpu_custom_call.1} parent=1 // loop_exit
      _
    %3710 = vsyncpa [#allocation4], 1
    %s3711 = scalar_lea.sflag [#allocation4], 1
    %3712 = vsyncpa %s3711, 1
    %3713 = vsyncpa [#allocation7], 1
    %3714 = vsyncpa [#allocation5], 1
    %s3715 = scalar_lea.sflag [#allocation5], 1
    %3716 = vsyncpa %s3715, 1

// kernel: tpu_custom_call.1
$region0: #{tpu_custom_call.1}
  #allocation0 [shape = 'u32[]', space=smem, size = 0x4, offset = 0x4, fixed_abs, tag = 'smem constant byte address 0x4 - core index']
  #allocation1 [shape = 'u32[144,128]{1,0:T(1,128)}', space=vmem, size = 0x12000, scoped, tag = 'internal scratch']
  %s0 = inlined_call_operand.vmem [shape: f32[16,512], index: 0, kind: input, shape index: {}]
  %s1 = inlined_call_operand.hbm [shape: f32[16,16], index: 1, kind: input, shape index: {}]
  %s2 = inlined_call_operand.vmem [shape: f32[16,1], index: 2, kind: input, shape index: {}]
  %s3 = inlined_call_operand.hbm [shape: f32[16,16], index: 3, kind: input, shape index: {}]
  %s4 = inlined_call_operand.vmem [shape: f32[16,1], index: 4, kind: input, shape index: {}]
  %s5 = inlined_call_operand.vmem [shape: f32[3,16,16], index: 5, kind: input, shape index: {}]
  %s6 = inlined_call_operand.vmem [shape: f32[16,1], index: 6, kind: input, shape index: {}]
  %s7 = inlined_call_operand.vmem [shape: f32[5,16,16], index: 7, kind: input, shape index: {}]
  %s8 = inlined_call_operand.vmem [shape: f32[16,1], index: 8, kind: input, shape index: {}]
  %s9 = inlined_call_operand.vmem [shape: f32[7,16,16], index: 9, kind: input, shape index: {}]
  %s10 = inlined_call_operand.vmem [shape: f32[16,1], index: 10, kind: input, shape index: {}]
  %s11 = inlined_call_operand.vmem [shape: f32[16,16], index: 11, kind: input, shape index: {}]
  %s12 = inlined_call_operand.vmem [shape: f32[16,1], index: 12, kind: input, shape index: {}]
  %s13 = inlined_call_operand.vmem [shape: f32[1,64], index: 13, kind: input, shape index: {}]
  %s14 = inlined_call_operand.vmem [shape: f32[64,1], index: 14, kind: input, shape index: {}]
  %s15 = inlined_call_operand.hbm [shape: f32[4,8,16], index: 15, kind: input, shape index: {}]
  %s16 = inlined_call_operand.vmem [shape: f32[8,1], index: 16, kind: input, shape index: {}]
  %s17 = inlined_call_operand.vmem [shape: f32[1,256], index: 17, kind: input, shape index: {}]
  %s18 = inlined_call_operand.vmem [shape: f32[1,128], index: 18, kind: input, shape index: {}]
  %s19 = inlined_call_operand.vmem [shape: f32[128,2], index: 19, kind: input, shape index: {}]
  %s20 = inlined_call_operand.vmem [shape: f32[2,128], index: 20, kind: input, shape index: {}]
  %s21 = inlined_call_operand.hbm [shape: f32[8,256], index: 21, kind: output, shape index: {}]
  %s22 = sld [smem:[#allocation0]]
  $region152: #{tpu_custom_call.1} parent=0
    _
  %s24 = ssub.s32 1, %s22
  %s25 = scalar_select 0, %s24, %s22
  $region1: #{tpu_custom_call.1} parent=0
    #allocation2 [shape = 'u8[32768]{0}', space=vmem, size = 0x8000, scoped, tag = 'input window, operand 0']
    #allocation3 [shape = 'u8[8192]{0}', space=vmem, size = 0x2000, scoped, tag = 'input window, operand 1, single buffered']
    #allocation4 [shape = 's32[2]{0}', space=sflag, size = 0x8, scoped, tag = 'scoped memory for tpu_custom_call.1']
    #allocation5 [shape = 's32[2]{0}', space=sflag, size = 0x8, scoped, tag = 'scoped memory for tpu_custom_call.1']
    #allocation6 [shape = 'u8[8192]{0}', space=vmem, size = 0x2000, scoped, tag = 'input window, operand 3, single buffered']
    #allocation7 [shape = 's32[1]{0}', space=sflag, size = 0x4, scoped, tag = 'scoped memory for tpu_custom_call.1']
    #allocation8 [shape = 'u8[16384]{0}', space=vmem, size = 0x4000, scoped, tag = 'input window, operand 15, single buffered']
    #allocation9 [shape = 'u8[8192]{0}', space=vmem, size = 0x2000, scoped, tag = 'output window, operand 0']
    %26 = vsyncpa [#allocation4], 0
    %27 = vsyncpa [#allocation7], 0
    %28 = vsyncpa [#allocation5], 0
    %s29 = scalar_lea.sflag [#allocation5], 1
    %30 = vsyncpa %s29, 0
    loop: start=0, step=1, limit=4
    $region2: #{tpu_custom_call.1} parent=1 // loop_pre_header
      _
    $region3: #{tpu_custom_call.1} parent=1 // loop_header
      %s32 = sphi 0, %s36
      %p33 = scmp.ge.s32.totalorder %s32, 4
      %s42 = sphi 0, %s44
      %s45 = sphi 0, %s42
      %s46 = sphi 0, %s45
      %s62 = sphi 0, %s46
      %s66 = sphi 0, %s66
      %s68 = sphi 0, %s66
      %s69 = sphi 0, %s68
      %s83 = sphi 0, %s69
      %s87 = sphi 0, %s87
      %s89 = sphi 0, %s87
      %s90 = sphi 0, %s89
      %s104 = sphi 0, %s90
      %s108 = sphi 0, %s108
      %s110 = sphi 0, %s108
      %s111 = sphi 0, %s110
      %s125 = sphi 0, %s111
      %s129 = sphi 0, %s129
      %s131 = sphi 0, %s129
      %s132 = sphi 0, %s131
      %s146 = sphi 0, %s132
      %s150 = sphi 0, %s150
      %s152 = sphi 0, %s150
      %s153 = sphi 0, %s152
      %s167 = sphi 0, %s153
      %s171 = sphi 0, %s171
      %s173 = sphi 0, %s171
      %s174 = sphi 0, %s173
      %s188 = sphi 0, %s174
      %s192 = sphi 0, %s192
      %s194 = sphi 0, %s192
      %s195 = sphi 0, %s194
      %s209 = sphi 0, %s195
      %s213 = sphi 0, %s213
      %s215 = sphi 0, %s213
      %s216 = sphi 0, %s215
      %s230 = sphi 0, %s216
      %s234 = sphi 0, %s234
      %s236 = sphi 0, %s234
      %s237 = sphi 0, %s236
      %s251 = sphi 0, %s237
      %s255 = sphi 0, %s255
      %s257 = sphi 0, %s255
      %s258 = sphi 0, %s257
      %s272 = sphi 0, %s258
      %s276 = sphi 0, %s276
      %s278 = sphi 0, %s276
      %s279 = sphi 0, %s278
      %s293 = sphi 0, %s279
      %s297 = sphi 0, %s297
      %s299 = sphi 0, %s297
      %s300 = sphi 0, %s299
      %s314 = sphi 0, %s300
      %s318 = sphi 0, %s318
      %s320 = sphi 0, %s318
      %s321 = sphi 0, %s320
      %s335 = sphi 0, %s321
      %s339 = sphi 0, %s339
      %s341 = sphi 0, %s339
      %s342 = sphi 0, %s341
      %s356 = sphi 0, %s342
      %s360 = sphi 0, %s360
      %s362 = sphi 0, %s360
      %s363 = sphi 0, %s362
      %s377 = sphi 0, %s363
      %s381 = sphi 0, %s381
      %s383 = sphi 0, %s381
      %s384 = sphi 0, %s383
      %s398 = sphi 0, %s384
      %s402 = sphi 0, %s402
      %s404 = sphi 0, %s402
      %s405 = sphi 0, %s404
      %s419 = sphi 0, %s405
      %s423 = sphi 0, %s423
      %s425 = sphi 0, %s423
      %s426 = sphi 0, %s425
      %s440 = sphi 0, %s426
      %s444 = sphi 0, %s444
      %s446 = sphi 0, %s444
      %s447 = sphi 0, %s446
      %s461 = sphi 0, %s447
      %s465 = sphi 0, %s465
      %s467 = sphi 0, %s465
      %s468 = sphi 0, %s467
      %s482 = sphi 0, %s468
      %s488 = sphi 0, %s490
      %s491 = sphi 0, %s488
      %s492 = sphi 0, %s491
      %s508 = sphi 0, %s492
    $region4: #{tpu_custom_call.1} parent=1 // loop_header_branch
      %35 = sbr.rel (%p33) target = $region8
    $region5: #{tpu_custom_call.1} parent=1 // loop_body
      %s37 = ssub.s32 %s32, 1
      %s38 = ssub.s32 %s32, 2
      %s39 = sadd.s32 %s32, 1
      %s40 = ssub.s32 %s32, %s39
      %p41 = scmp.eq.s32.totalorder %s40, 0
      %s43 = sadd.s32 %s42, 1
      %s44 = scalar_select %p41, %s42, %s43
      %p47 = pneg %p41
      %p48 = scmp.eq.s32.totalorder %s32, 1
      %p49 = por %p47, %p48
      %p50 = scmp.ne.s32.totalorder %s42, %s45
      %p51 = scmp.eq.s32.totalorder %s32, 0
      %p52 = por %p50, %p51
      %p53 = scmp.ne.s32.totalorder %s42, %s45
      %p54 = scmp.eq.s32.totalorder %s37, 1
      %p55 = por %p53, %p54
      %p56 = scmp.ne.s32.totalorder %s45, %s46
      %p57 = scmp.eq.s32.totalorder %s37, 0
      %p58 = por %p56, %p57
      %p59 = scmp.ne.s32.totalorder %s45, %s46
      %p60 = scmp.eq.s32.totalorder %s38, 1
      %p61 = por %p59, %p60
      %p63 = scmp.ne.s32.totalorder %s46, %s62
      %p64 = scmp.eq.s32.totalorder %s38, 0
      %p65 = por %p63, %p64
      %s67 = sadd.s32 %s66, 1
      %p70 = scmp.eq.s32.totalorder %s32, 1
      %p71 = scmp.ne.s32.totalorder %s66, %s68
      %p72 = scmp.eq.s32.totalorder %s32, 0
      %p73 = por %p71, %p72
      %p74 = scmp.ne.s32.totalorder %s66, %s68
      %p75 = scmp.eq.s32.totalorder %s37, 1
      %p76 = por %p74, %p75
      %p77 = scmp.ne.s32.totalorder %s68, %s69
      %p78 = scmp.eq.s32.totalorder %s37, 0
      %p79 = por %p77, %p78
      %p80 = scmp.ne.s32.totalorder %s68, %s69
      %p81 = scmp.eq.s32.totalorder %s38, 1
      %p82 = por %p80, %p81
      %p84 = scmp.ne.s32.totalorder %s69, %s83
      %p85 = scmp.eq.s32.totalorder %s38, 0
      %p86 = por %p84, %p85
      %s88 = sadd.s32 %s87, 1
      %p91 = scmp.eq.s32.totalorder %s32, 1
      %p92 = scmp.ne.s32.totalorder %s87, %s89
      %p93 = scmp.eq.s32.totalorder %s32, 0
      %p94 = por %p92, %p93
      %p95 = scmp.ne.s32.totalorder %s87, %s89
      %p96 = scmp.eq.s32.totalorder %s37, 1
      %p97 = por %p95, %p96
      %p98 = scmp.ne.s32.totalorder %s89, %s90
      %p99 = scmp.eq.s32.totalorder %s37, 0
      %p100 = por %p98, %p99
      %p101 = scmp.ne.s32.totalorder %s89, %s90
      %p102 = scmp.eq.s32.totalorder %s38, 1
      %p103 = por %p101, %p102
      %p105 = scmp.ne.s32.totalorder %s90, %s104
      %p106 = scmp.eq.s32.totalorder %s38, 0
      %p107 = por %p105, %p106
      %s109 = sadd.s32 %s108, 1
      %p112 = scmp.eq.s32.totalorder %s32, 1
      %p113 = scmp.ne.s32.totalorder %s108, %s110
      %p114 = scmp.eq.s32.totalorder %s32, 0
      %p115 = por %p113, %p114
      %p116 = scmp.ne.s32.totalorder %s108, %s110
      %p117 = scmp.eq.s32.totalorder %s37, 1
      %p118 = por %p116, %p117
      %p119 = scmp.ne.s32.totalorder %s110, %s111
      %p120 = scmp.eq.s32.totalorder %s37, 0
      %p121 = por %p119, %p120
      %p122 = scmp.ne.s32.totalorder %s110, %s111
      %p123 = scmp.eq.s32.totalorder %s38, 1
      %p124 = por %p122, %p123
      %p126 = scmp.ne.s32.totalorder %s111, %s125
      %p127 = scmp.eq.s32.totalorder %s38, 0
      %p128 = por %p126, %p127
      %s130 = sadd.s32 %s129, 1
      %p133 = scmp.eq.s32.totalorder %s32, 1
      %p134 = scmp.ne.s32.totalorder %s129, %s131
      %p135 = scmp.eq.s32.totalorder %s32, 0
      %p136 = por %p134, %p135
      %p137 = scmp.ne.s32.totalorder %s129, %s131
      %p138 = scmp.eq.s32.totalorder %s37, 1
      %p139 = por %p137, %p138
      %p140 = scmp.ne.s32.totalorder %s131, %s132
      %p141 = scmp.eq.s32.totalorder %s37, 0
      %p142 = por %p140, %p141
      %p143 = scmp.ne.s32.totalorder %s131, %s132
      %p144 = scmp.eq.s32.totalorder %s38, 1
      %p145 = por %p143, %p144
      %p147 = scmp.ne.s32.totalorder %s132, %s146
      %p148 = scmp.eq.s32.totalorder %s38, 0
      %p149 = por %p147, %p148
      %s151 = sadd.s32 %s150, 1
      %p154 = scmp.eq.s32.totalorder %s32, 1
      %p155 = scmp.ne.s32.totalorder %s150, %s152
      %p156 = scmp.eq.s32.totalorder %s32, 0
      %p157 = por %p155, %p156
      %p158 = scmp.ne.s32.totalorder %s150, %s152
      %p159 = scmp.eq.s32.totalorder %s37, 1
      %p160 = por %p158, %p159
      %p161 = scmp.ne.s32.totalorder %s152, %s153
      %p162 = scmp.eq.s32.totalorder %s37, 0
      %p163 = por %p161, %p162
      %p164 = scmp.ne.s32.totalorder %s152, %s153
      %p165 = scmp.eq.s32.totalorder %s38, 1
      %p166 = por %p164, %p165
      %p168 = scmp.ne.s32.totalorder %s153, %s167
      %p169 = scmp.eq.s32.totalorder %s38, 0
      %p170 = por %p168, %p169
      %s172 = sadd.s32 %s171, 1
      %p175 = scmp.eq.s32.totalorder %s32, 1
      %p176 = scmp.ne.s32.totalorder %s171, %s173
      %p177 = scmp.eq.s32.totalorder %s32, 0
      %p178 = por %p176, %p177
      %p179 = scmp.ne.s32.totalorder %s171, %s173
      %p180 = scmp.eq.s32.totalorder %s37, 1
      %p181 = por %p179, %p180
      %p182 = scmp.ne.s32.totalorder %s173, %s174
      %p183 = scmp.eq.s32.totalorder %s37, 0
      %p184 = por %p182, %p183
      %p185 = scmp.ne.s32.totalorder %s173, %s174
      %p186 = scmp.eq.s32.totalorder %s38, 1
      %p187 = por %p185, %p186
      %p189 = scmp.ne.s32.totalorder %s174, %s188
      %p190 = scmp.eq.s32.totalorder %s38, 0
      %p191 = por %p189, %p190
      %s193 = sadd.s32 %s192, 1
      %p196 = scmp.eq.s32.totalorder %s32, 1
      %p197 = scmp.ne.s32.totalorder %s192, %s194
      %p198 = scmp.eq.s32.totalorder %s32, 0
      %p199 = por %p197, %p198
      %p200 = scmp.ne.s32.totalorder %s192, %s194
      %p201 = scmp.eq.s32.totalorder %s37, 1
      %p202 = por %p200, %p201
      %p203 = scmp.ne.s32.totalorder %s194, %s195
      %p204 = scmp.eq.s32.totalorder %s37, 0
      %p205 = por %p203, %p204
      %p206 = scmp.ne.s32.totalorder %s194, %s195
      %p207 = scmp.eq.s32.totalorder %s38, 1
      %p208 = por %p206, %p207
      %p210 = scmp.ne.s32.totalorder %s195, %s209
      %p211 = scmp.eq.s32.totalorder %s38, 0
      %p212 = por %p210, %p211
      %s214 = sadd.s32 %s213, 1
      %p217 = scmp.eq.s32.totalorder %s32, 1
      %p218 = scmp.ne.s32.totalorder %s213, %s215
      %p219 = scmp.eq.s32.totalorder %s32, 0
      %p220 = por %p218, %p219
      %p221 = scmp.ne.s32.totalorder %s213, %s215
      %p222 = scmp.eq.s32.totalorder %s37, 1
      %p223 = por %p221, %p222
      %p224 = scmp.ne.s32.totalorder %s215, %s216
      %p225 = scmp.eq.s32.totalorder %s37, 0
      %p226 = por %p224, %p225
      %p227 = scmp.ne.s32.totalorder %s215, %s216
      %p228 = scmp.eq.s32.totalorder %s38, 1
      %p229 = por %p227, %p228
      %p231 = scmp.ne.s32.totalorder %s216, %s230
      %p232 = scmp.eq.s32.totalorder %s38, 0
      %p233 = por %p231, %p232
      %s235 = sadd.s32 %s234, 1
      %p238 = scmp.eq.s32.totalorder %s32, 1
      %p239 = scmp.ne.s32.totalorder %s234, %s236
      %p240 = scmp.eq.s32.totalorder %s32, 0
      %p241 = por %p239, %p240
      %p242 = scmp.ne.s32.totalorder %s234, %s236
      %p243 = scmp.eq.s32.totalorder %s37, 1
      %p244 = por %p242, %p243
      %p245 = scmp.ne.s32.totalorder %s236, %s237
      %p246 = scmp.eq.s32.totalorder %s37, 0
      %p247 = por %p245, %p246
      %p248 = scmp.ne.s32.totalorder %s236, %s237
      %p249 = scmp.eq.s32.totalorder %s38, 1
      %p250 = por %p248, %p249
      %p252 = scmp.ne.s32.totalorder %s237, %s251
      %p253 = scmp.eq.s32.totalorder %s38, 0
      %p254 = por %p252, %p253
      %s256 = sadd.s32 %s255, 1
      %p259 = scmp.eq.s32.totalorder %s32, 1
      %p260 = scmp.ne.s32.totalorder %s255, %s257
      %p261 = scmp.eq.s32.totalorder %s32, 0
      %p262 = por %p260, %p261
      %p263 = scmp.ne.s32.totalorder %s255, %s257
      %p264 = scmp.eq.s32.totalorder %s37, 1
      %p265 = por %p263, %p264
      %p266 = scmp.ne.s32.totalorder %s257, %s258
      %p267 = scmp.eq.s32.totalorder %s37, 0
      %p268 = por %p266, %p267
      %p269 = scmp.ne.s32.totalorder %s257, %s258
      %p270 = scmp.eq.s32.totalorder %s38, 1
      %p271 = por %p269, %p270
      %p273 = scmp.ne.s32.totalorder %s258, %s272
      %p274 = scmp.eq.s32.totalorder %s38, 0
      %p275 = por %p273, %p274
      %s277 = sadd.s32 %s276, 1
      %p280 = scmp.eq.s32.totalorder %s32, 1
      %p281 = scmp.ne.s32.totalorder %s276, %s278
      %p282 = scmp.eq.s32.totalorder %s32, 0
      %p283 = por %p281, %p282
      %p284 = scmp.ne.s32.totalorder %s276, %s278
      %p285 = scmp.eq.s32.totalorder %s37, 1
      %p286 = por %p284, %p285
      %p287 = scmp.ne.s32.totalorder %s278, %s279
      %p288 = scmp.eq.s32.totalorder %s37, 0
      %p289 = por %p287, %p288
      %p290 = scmp.ne.s32.totalorder %s278, %s279
      %p291 = scmp.eq.s32.totalorder %s38, 1
      %p292 = por %p290, %p291
      %p294 = scmp.ne.s32.totalorder %s279, %s293
      %p295 = scmp.eq.s32.totalorder %s38, 0
      %p296 = por %p294, %p295
      %s298 = sadd.s32 %s297, 1
      %p301 = scmp.eq.s32.totalorder %s32, 1
      %p302 = scmp.ne.s32.totalorder %s297, %s299
      %p303 = scmp.eq.s32.totalorder %s32, 0
      %p304 = por %p302, %p303
      %p305 = scmp.ne.s32.totalorder %s297, %s299
      %p306 = scmp.eq.s32.totalorder %s37, 1
      %p307 = por %p305, %p306
      %p308 = scmp.ne.s32.totalorder %s299, %s300
      %p309 = scmp.eq.s32.totalorder %s37, 0
      %p310 = por %p308, %p309
      %p311 = scmp.ne.s32.totalorder %s299, %s300
      %p312 = scmp.eq.s32.totalorder %s38, 1
      %p313 = por %p311, %p312
      %p315 = scmp.ne.s32.totalorder %s300, %s314
      %p316 = scmp.eq.s32.totalorder %s38, 0
      %p317 = por %p315, %p316
      %s319 = sadd.s32 %s318, 1
      %p322 = scmp.eq.s32.totalorder %s32, 1
      %p323 = scmp.ne.s32.totalorder %s318, %s320
      %p324 = scmp.eq.s32.totalorder %s32, 0
      %p325 = por %p323, %p324
      %p326 = scmp.ne.s32.totalorder %s318, %s320
      %p327 = scmp.eq.s32.totalorder %s37, 1
      %p328 = por %p326, %p327
      %p329 = scmp.ne.s32.totalorder %s320, %s321
      %p330 = scmp.eq.s32.totalorder %s37, 0
      %p331 = por %p329, %p330
      %p332 = scmp.ne.s32.totalorder %s320, %s321
      %p333 = scmp.eq.s32.totalorder %s38, 1
      %p334 = por %p332, %p333
      %p336 = scmp.ne.s32.totalorder %s321, %s335
      %p337 = scmp.eq.s32.totalorder %s38, 0
      %p338 = por %p336, %p337
      %s340 = sadd.s32 %s339, 1
      %p343 = scmp.eq.s32.totalorder %s32, 1
      %p344 = scmp.ne.s32.totalorder %s339, %s341
      %p345 = scmp.eq.s32.totalorder %s32, 0
      %p346 = por %p344, %p345
      %p347 = scmp.ne.s32.totalorder %s339, %s341
      %p348 = scmp.eq.s32.totalorder %s37, 1
      %p349 = por %p347, %p348
      %p350 = scmp.ne.s32.totalorder %s341, %s342
      %p351 = scmp.eq.s32.totalorder %s37, 0
      %p352 = por %p350, %p351
      %p353 = scmp.ne.s32.totalorder %s341, %s342
      %p354 = scmp.eq.s32.totalorder %s38, 1
      %p355 = por %p353, %p354
      %p357 = scmp.ne.s32.totalorder %s342, %s356
      %p358 = scmp.eq.s32.totalorder %s38, 0
      %p359 = por %p357, %p358
      %s361 = sadd.s32 %s360, 1
      %p364 = scmp.eq.s32.totalorder %s32, 1
      %p365 = scmp.ne.s32.totalorder %s360, %s362
      %p366 = scmp.eq.s32.totalorder %s32, 0
      %p367 = por %p365, %p366
      %p368 = scmp.ne.s32.totalorder %s360, %s362
      %p369 = scmp.eq.s32.totalorder %s37, 1
      %p370 = por %p368, %p369
      %p371 = scmp.ne.s32.totalorder %s362, %s363
      %p372 = scmp.eq.s32.totalorder %s37, 0
      %p373 = por %p371, %p372
      %p374 = scmp.ne.s32.totalorder %s362, %s363
      %p375 = scmp.eq.s32.totalorder %s38, 1
      %p376 = por %p374, %p375
      %p378 = scmp.ne.s32.totalorder %s363, %s377
      %p379 = scmp.eq.s32.totalorder %s38, 0
      %p380 = por %p378, %p379
      %s382 = sadd.s32 %s381, 1
      %p385 = scmp.eq.s32.totalorder %s32, 1
      %p386 = scmp.ne.s32.totalorder %s381, %s383
      %p387 = scmp.eq.s32.totalorder %s32, 0
      %p388 = por %p386, %p387
      %p389 = scmp.ne.s32.totalorder %s381, %s383
      %p390 = scmp.eq.s32.totalorder %s37, 1
      %p391 = por %p389, %p390
      %p392 = scmp.ne.s32.totalorder %s383, %s384
      %p393 = scmp.eq.s32.totalorder %s37, 0
      %p394 = por %p392, %p393
      %p395 = scmp.ne.s32.totalorder %s383, %s384
      %p396 = scmp.eq.s32.totalorder %s38, 1
      %p397 = por %p395, %p396
      %p399 = scmp.ne.s32.totalorder %s384, %s398
      %p400 = scmp.eq.s32.totalorder %s38, 0
      %p401 = por %p399, %p400
      %s403 = sadd.s32 %s402, 1
      %p406 = scmp.eq.s32.totalorder %s32, 1
      %p407 = scmp.ne.s32.totalorder %s402, %s404
      %p408 = scmp.eq.s32.totalorder %s32, 0
      %p409 = por %p407, %p408
      %p410 = scmp.ne.s32.totalorder %s402, %s404
      %p411 = scmp.eq.s32.totalorder %s37, 1
      %p412 = por %p410, %p411
      %p413 = scmp.ne.s32.totalorder %s404, %s405
      %p414 = scmp.eq.s32.totalorder %s37, 0
      %p415 = por %p413, %p414
      %p416 = scmp.ne.s32.totalorder %s404, %s405
      %p417 = scmp.eq.s32.totalorder %s38, 1
      %p418 = por %p416, %p417
      %p420 = scmp.ne.s32.totalorder %s405, %s419
      %p421 = scmp.eq.s32.totalorder %s38, 0
      %p422 = por %p420, %p421
      %s424 = sadd.s32 %s423, 1
      %p427 = scmp.eq.s32.totalorder %s32, 1
      %p428 = scmp.ne.s32.totalorder %s423, %s425
      %p429 = scmp.eq.s32.totalorder %s32, 0
      %p430 = por %p428, %p429
      %p431 = scmp.ne.s32.totalorder %s423, %s425
      %p432 = scmp.eq.s32.totalorder %s37, 1
      %p433 = por %p431, %p432
      %p434 = scmp.ne.s32.totalorder %s425, %s426
      %p435 = scmp.eq.s32.totalorder %s37, 0
      %p436 = por %p434, %p435
      %p437 = scmp.ne.s32.totalorder %s425, %s426
      %p438 = scmp.eq.s32.totalorder %s38, 1
      %p439 = por %p437, %p438
      %p441 = scmp.ne.s32.totalorder %s426, %s440
      %p442 = scmp.eq.s32.totalorder %s38, 0
      %p443 = por %p441, %p442
      %s445 = sadd.s32 %s444, 1
      %p448 = scmp.eq.s32.totalorder %s32, 1
      %p449 = scmp.ne.s32.totalorder %s444, %s446
      %p450 = scmp.eq.s32.totalorder %s32, 0
      %p451 = por %p449, %p450
      %p452 = scmp.ne.s32.totalorder %s444, %s446
      %p453 = scmp.eq.s32.totalorder %s37, 1
      %p454 = por %p452, %p453
      %p455 = scmp.ne.s32.totalorder %s446, %s447
      %p456 = scmp.eq.s32.totalorder %s37, 0
      %p457 = por %p455, %p456
      %p458 = scmp.ne.s32.totalorder %s446, %s447
      %p459 = scmp.eq.s32.totalorder %s38, 1
      %p460 = por %p458, %p459
      %p462 = scmp.ne.s32.totalorder %s447, %s461
      %p463 = scmp.eq.s32.totalorder %s38, 0
      %p464 = por %p462, %p463
      %s466 = sadd.s32 %s465, 1
      %p469 = scmp.eq.s32.totalorder %s32, 1
      %p470 = scmp.ne.s32.totalorder %s465, %s467
      %p471 = scmp.eq.s32.totalorder %s32, 0
      %p472 = por %p470, %p471
      %p473 = scmp.ne.s32.totalorder %s465, %s467
      %p474 = scmp.eq.s32.totalorder %s37, 1
      %p475 = por %p473, %p474
      %p476 = scmp.ne.s32.totalorder %s467, %s468
      %p477 = scmp.eq.s32.totalorder %s37, 0
      %p478 = por %p476, %p477
      %p479 = scmp.ne.s32.totalorder %s467, %s468
      %p480 = scmp.eq.s32.totalorder %s38, 1
      %p481 = por %p479, %p480
      %p483 = scmp.ne.s32.totalorder %s468, %s482
      %p484 = scmp.eq.s32.totalorder %s38, 0
      %p485 = por %p483, %p484
      %s486 = ssub.s32 %s32, %s39
      %p487 = scmp.eq.s32.totalorder %s486, 0
      %s489 = sadd.s32 %s488, 1
      %s490 = scalar_select %p487, %s488, %s489
      %p493 = pneg %p487
      %p494 = scmp.eq.s32.totalorder %s32, 1
      %p495 = por %p493, %p494
      %p496 = scmp.ne.s32.totalorder %s488, %s491
      %p497 = scmp.eq.s32.totalorder %s32, 0
      %p498 = por %p496, %p497
      %p499 = scmp.ne.s32.totalorder %s488, %s491
      %p500 = scmp.eq.s32.totalorder %s37, 1
      %p501 = por %p499, %p500
      %p502 = scmp.ne.s32.totalorder %s491, %s492
      %p503 = scmp.eq.s32.totalorder %s37, 0
      %p504 = por %p502, %p503
      %p505 = scmp.ne.s32.totalorder %s491, %s492
      %p506 = scmp.eq.s32.totalorder %s38, 1
      %p507 = por %p505, %p506
      %p509 = scmp.ne.s32.totalorder %s492, %s508
      %p510 = scmp.eq.s32.totalorder %s38, 0
      %p511 = por %p509, %p510
      %p512 = scmp.le.s32.totalorder 1, %s32
      %p513 = scmp.lt.s32.totalorder %s32, 3
      %p514 = pnand %p512, %p513
      %p515 = pneg %p514
      // Predicated region
      $region9: #{tpu_custom_call.1} parent=5 // pred_check
        _
      $region10: #{tpu_custom_call.1} parent=5 // pred_check_branch
        %517 = sbr.rel (%p514) target = $region12
      $region11: #{tpu_custom_call.1} parent=5 // pred_region
        %s518 = ssub.s32 %s32, 1
        // Predicated region
        $region13: #{tpu_custom_call.1} parent=11 // pred_check
          %p519 = pneg %p79
        $region14: #{tpu_custom_call.1} parent=11 // pred_check_branch
          %521 = sbr.rel (%p519) target = $region16
        $region15: #{tpu_custom_call.1} parent=11 // pred_region
          %s523 = ssub.s32 256, 256
          %524 = vsyncadd [#allocation4], %s523
          %s525 = sshll.u32 [#allocation3], 4
          %s526 = int_to_ptr.vmem [resolvable:$true] %s525
          %531 = dma.hbm_to_vmem [thread:$0]  %s1, 256, %s526, [#allocation4], 128, 128, 8
        $region16: #{tpu_custom_call.1} parent=11 // pred_fallthru
          _
        // Predicated region
        $region17: #{tpu_custom_call.1} parent=11 // pred_check
          %p532 = pneg %p100
        $region18: #{tpu_custom_call.1} parent=11 // pred_check_branch
          %534 = sbr.rel (%p532) target = $region20
        $region19: #{tpu_custom_call.1} parent=11 // pred_region
          _
        $region20: #{tpu_custom_call.1} parent=11 // pred_fallthru
          _
        // Predicated region
        $region21: #{tpu_custom_call.1} parent=11 // pred_check
          %p535 = pneg %p121
        $region22: #{tpu_custom_call.1} parent=11 // pred_check_branch
          %537 = sbr.rel (%p535) target = $region24
        $region23: #{tpu_custom_call.1} parent=11 // pred_region
          %s539 = ssub.s32 256, 256
          %540 = vsyncadd [#allocation7], %s539
          %s541 = sshll.u32 [#allocation6], 4
          %s542 = int_to_ptr.vmem [resolvable:$true] %s541
          %547 = dma.hbm_to_vmem [thread:$0]  %s3, 256, %s542, [#allocation7], 128, 128, 8
        $region24: #{tpu_custom_call.1} parent=11 // pred_fallthru
          _
        // Predicated region
        $region25: #{tpu_custom_call.1} parent=11 // pred_check
          %p548 = pneg %p142
        $region26: #{tpu_custom_call.1} parent=11 // pred_check_branch
          %550 = sbr.rel (%p548) target = $region28
        $region27: #{tpu_custom_call.1} parent=11 // pred_region
          _
        $region28: #{tpu_custom_call.1} parent=11 // pred_fallthru
          _
        // Predicated region
        $region29: #{tpu_custom_call.1} parent=11 // pred_check
          %p551 = pneg %p163
        $region30: #{tpu_custom_call.1} parent=11 // pred_check_branch
          %553 = sbr.rel (%p551) target = $region32
        $region31: #{tpu_custom_call.1} parent=11 // pred_region
          _
        $region32: #{tpu_custom_call.1} parent=11 // pred_fallthru
          _
        // Predicated region
        $region33: #{tpu_custom_call.1} parent=11 // pred_check
          %p554 = pneg %p184
        $region34: #{tpu_custom_call.1} parent=11 // pred_check_branch
          %556 = sbr.rel (%p554) target = $region36
        $region35: #{tpu_custom_call.1} parent=11 // pred_region
          _
        $region36: #{tpu_custom_call.1} parent=11 // pred_fallthru
          _
        // Predicated region
        $region37: #{tpu_custom_call.1} parent=11 // pred_check
          %p557 = pneg %p205
        $region38: #{tpu_custom_call.1} parent=11 // pred_check_branch
          %559 = sbr.rel (%p557) target = $region40
        $region39: #{tpu_custom_call.1} parent=11 // pred_region
          _
        $region40: #{tpu_custom_call.1} parent=11 // pred_fallthru
          _
        // Predicated region
        $region41: #{tpu_custom_call.1} parent=11 // pred_check
          %p560 = pneg %p226
        $region42: #{tpu_custom_call.1} parent=11 // pred_check_branch
          %562 = sbr.rel (%p560) target = $region44
        $region43: #{tpu_custom_call.1} parent=11 // pred_region
          _
        $region44: #{tpu_custom_call.1} parent=11 // pred_fallthru
          _
        // Predicated region
        $region45: #{tpu_custom_call.1} parent=11 // pred_check
          %p563 = pneg %p247
        $region46: #{tpu_custom_call.1} parent=11 // pred_check_branch
          %565 = sbr.rel (%p563) target = $region48
        $region47: #{tpu_custom_call.1} parent=11 // pred_region
          _
        $region48: #{tpu_custom_call.1} parent=11 // pred_fallthru
          _
        // Predicated region
        $region49: #{tpu_custom_call.1} parent=11 // pred_check
          %p566 = pneg %p268
        $region50: #{tpu_custom_call.1} parent=11 // pred_check_branch
          %568 = sbr.rel (%p566) target = $region52
        $region51: #{tpu_custom_call.1} parent=11 // pred_region
          _
        $region52: #{tpu_custom_call.1} parent=11 // pred_fallthru
          _
        // Predicated region
        $region53: #{tpu_custom_call.1} parent=11 // pred_check
          %p569 = pneg %p289
        $region54: #{tpu_custom_call.1} parent=11 // pred_check_branch
          %571 = sbr.rel (%p569) target = $region56
        $region55: #{tpu_custom_call.1} parent=11 // pred_region
          _
        $region56: #{tpu_custom_call.1} parent=11 // pred_fallthru
          _
        // Predicated region
        $region57: #{tpu_custom_call.1} parent=11 // pred_check
          %p572 = pneg %p310
        $region58: #{tpu_custom_call.1} parent=11 // pred_check_branch
          %574 = sbr.rel (%p572) target = $region60
        $region59: #{tpu_custom_call.1} parent=11 // pred_region
          _
        $region60: #{tpu_custom_call.1} parent=11 // pred_fallthru
          _
        // Predicated region
        $region61: #{tpu_custom_call.1} parent=11 // pred_check
          %p575 = pneg %p331
        $region62: #{tpu_custom_call.1} parent=11 // pred_check_branch
          %577 = sbr.rel (%p575) target = $region64
        $region63: #{tpu_custom_call.1} parent=11 // pred_region
          _
        $region64: #{tpu_custom_call.1} parent=11 // pred_fallthru
          _
        // Predicated region
        $region65: #{tpu_custom_call.1} parent=11 // pred_check
          %p578 = pneg %p352
        $region66: #{tpu_custom_call.1} parent=11 // pred_check_branch
          %580 = sbr.rel (%p578) target = $region68
        $region67: #{tpu_custom_call.1} parent=11 // pred_region
          _
        $region68: #{tpu_custom_call.1} parent=11 // pred_fallthru
          _
        // Predicated region
        $region69: #{tpu_custom_call.1} parent=11 // pred_check
          %p581 = pneg %p373
        $region70: #{tpu_custom_call.1} parent=11 // pred_check_branch
          %583 = sbr.rel (%p581) target = $region72
        $region71: #{tpu_custom_call.1} parent=11 // pred_region
          %s585 = ssub.s32 512, 512
          %586 = vsyncadd [#allocation7], %s585
          %s587 = sshll.u32 [#allocation8], 4
          %s588 = int_to_ptr.vmem [resolvable:$true] %s587
          %593 = dma.hbm_to_vmem [thread:$0]  %s15, 512, %s588, [#allocation7], 128, 128, 8
        $region72: #{tpu_custom_call.1} parent=11 // pred_fallthru
          _
        // Predicated region
        $region73: #{tpu_custom_call.1} parent=11 // pred_check
          %p594 = pneg %p394
        $region74: #{tpu_custom_call.1} parent=11 // pred_check_branch
          %596 = sbr.rel (%p594) target = $region76
        $region75: #{tpu_custom_call.1} parent=11 // pred_region
          _
        $region76: #{tpu_custom_call.1} parent=11 // pred_fallthru
          _
        // Predicated region
        $region77: #{tpu_custom_call.1} parent=11 // pred_check
          %p597 = pneg %p415
        $region78: #{tpu_custom_call.1} parent=11 // pred_check_branch
          %599 = sbr.rel (%p597) target = $region80
        $region79: #{tpu_custom_call.1} parent=11 // pred_region
          _
        $region80: #{tpu_custom_call.1} parent=11 // pred_fallthru
          _
        // Predicated region
        $region81: #{tpu_custom_call.1} parent=11 // pred_check
          %p600 = pneg %p436
        $region82: #{tpu_custom_call.1} parent=11 // pred_check_branch
          %602 = sbr.rel (%p600) target = $region84
        $region83: #{tpu_custom_call.1} parent=11 // pred_region
          _
        $region84: #{tpu_custom_call.1} parent=11 // pred_fallthru
          _
        // Predicated region
        $region85: #{tpu_custom_call.1} parent=11 // pred_check
          %p603 = pneg %p457
        $region86: #{tpu_custom_call.1} parent=11 // pred_check_branch
          %605 = sbr.rel (%p603) target = $region88
        $region87: #{tpu_custom_call.1} parent=11 // pred_region
          _
        $region88: #{tpu_custom_call.1} parent=11 // pred_fallthru
          _
        // Predicated region
        $region89: #{tpu_custom_call.1} parent=11 // pred_check
          %p606 = pneg %p478
        $region90: #{tpu_custom_call.1} parent=11 // pred_check_branch
          %608 = sbr.rel (%p606) target = $region92
        $region91: #{tpu_custom_call.1} parent=11 // pred_region
          _
        $region92: #{tpu_custom_call.1} parent=11 // pred_fallthru
          _
      $region12: #{tpu_custom_call.1} parent=5 // pred_fallthru
        _
      %p609 = scmp.lt.s32.totalorder %s32, 2
      // Predicated region
      $region93: #{tpu_custom_call.1} parent=5 // pred_check
        %p610 = pneg %p609
      $region94: #{tpu_custom_call.1} parent=5 // pred_check_branch
        %612 = sbr.rel (%p610) target = $region96
      $region95: #{tpu_custom_call.1} parent=5 // pred_region
        // Predicated region
        $region97: #{tpu_custom_call.1} parent=95 // pred_check
          %p613 = pneg %p52
        $region98: #{tpu_custom_call.1} parent=95 // pred_check_branch
          %615 = sbr.rel (%p613) target = $region100
        $region99: #{tpu_custom_call.1} parent=95 // pred_region
          %s616 = sand.u32 %s42, 1
          %s617 = sand.u32 %s42, 1
          %s618 = smul.addr %s617, 32
          %s619 = scalar_lea.vmem [#allocation2], %s618
          %s620 = smul.u32 2, %s32
          %s621 = smul.addr %s620, 8
          %s622 = scalar_lea.vmem %s0, %s621
          // Predicated region
          $region101: #{tpu_custom_call.1} parent=99 // pred_check
            _
          $region102: #{tpu_custom_call.1} parent=99 // pred_check_branch
            %624 = sbr.rel (0) target = $region104
          $region103: #{tpu_custom_call.1} parent=99 // pred_region
            // Predicated region
            $region105: #{tpu_custom_call.1} parent=103 // pred_check
              _
            $region106: #{tpu_custom_call.1} parent=103 // pred_check_branch
              %626 = sbr.rel (0) target = $region108
            $region107: #{tpu_custom_call.1} parent=103 // pred_region
              loop: start=0, step=1, limit=1
              $region109: #{tpu_custom_call.1} parent=107 // loop_pre_header
                _
              $region110: #{tpu_custom_call.1} parent=107 // loop_header
                %s628 = sphi 0, %s632
                %p629 = scmp.ge.s32.totalorder %s628, 1
                %s633 = sphi %s622, %s622
                %s634 = sphi %s619, %s619
              $region111: #{tpu_custom_call.1} parent=107 // loop_header_branch
                %631 = sbr.rel (%p629) target = $region115
              $region112: #{tpu_custom_call.1} parent=107 // loop_body
                %v635 = vld [vmem:[%s633] sm:$0xff]
                %636 = vst [vmem:[%s634] sm:$0xff] %v635
                %v637 = vld [vmem:[%s633 + $0x8] sm:$0xff]
                %638 = vst [vmem:[%s634 + $0x8] sm:$0xff] %v637
                %v639 = vld [vmem:[%s633 + $0x20] sm:$0xff]
                %640 = vst [vmem:[%s634 + $0x10] sm:$0xff] %v639
                %v641 = vld [vmem:[%s633 + $0x28] sm:$0xff]
                %642 = vst [vmem:[%s634 + $0x18] sm:$0xff] %v641
              $region113: #{tpu_custom_call.1} parent=107 // loop_footer
                %s632 = sadd.s32 1, %s628
              $region114: #{tpu_custom_call.1} parent=107 // loop_footer_branch
                %627 = sbr.rel target = $region110
              $region115: #{tpu_custom_call.1} parent=107 // loop_exit
                _
            $region108: #{tpu_custom_call.1} parent=103 // pred_fallthru
              _
            // Predicated region
            $region116: #{tpu_custom_call.1} parent=103 // pred_check
              _
            $region117: #{tpu_custom_call.1} parent=103 // pred_check_branch
              %644 = sbr.rel target = $region119
            $region118: #{tpu_custom_call.1} parent=103 // pred_region
              _
            $region119: #{tpu_custom_call.1} parent=103 // pred_fallthru
              _
          $region104: #{tpu_custom_call.1} parent=99 // pred_fallthru
            _
          %645 = vnop
        $region100: #{tpu_custom_call.1} parent=95 // pred_fallthru
          _
      $region96: #{tpu_custom_call.1} parent=5 // pred_fallthru
        _
      %p646 = scmp.le.s32.totalorder 1, %s32
      %p647 = scmp.lt.s32.totalorder %s32, 3
      %p648 = pnand %p646, %p647
      %p649 = pneg %p648
      // Predicated region
      $region120: #{tpu_custom_call.1} parent=5 // pred_check
        _
      $region121: #{tpu_custom_call.1} parent=5 // pred_check_branch
        %651 = sbr.rel (%p648) target = $region123
      $region122: #{tpu_custom_call.1} parent=5 // pred_region
        %s652 = ssub.s32 %s32, 1
        %s653 = sand.u32 %s45, 1
        %s654 = sand.u32 %s45, 1
        %s655 = smul.addr %s654, 32
        %s656 = scalar_lea.vmem [#allocation2], %s655
        // Predicated region
        $region124: #{tpu_custom_call.1} parent=122 // pred_check
          %p657 = pneg %p58
        $region125: #{tpu_custom_call.1} parent=122 // pred_check_branch
          %659 = sbr.rel (%p657) target = $region127
        $region126: #{tpu_custom_call.1} parent=122 // pred_region
          _
        $region127: #{tpu_custom_call.1} parent=122 // pred_fallthru
          _
        // Predicated region
        $region128: #{tpu_custom_call.1} parent=122 // pred_check
          %p660 = pneg %p79
        $region129: #{tpu_custom_call.1} parent=122 // pred_check_branch
          %662 = sbr.rel (%p660) target = $region131
        $region130: #{tpu_custom_call.1} parent=122 // pred_region
          %663 = dma.done [#allocation4], 256
        $region131: #{tpu_custom_call.1} parent=122 // pred_fallthru
          _
        // Predicated region
        $region132: #{tpu_custom_call.1} parent=122 // pred_check
          %p664 = pneg %p121
        $region133: #{tpu_custom_call.1} parent=122 // pred_check_branch
          %666 = sbr.rel (%p664) target = $region135
        $region134: #{tpu_custom_call.1} parent=122 // pred_region
          %667 = dma.done [#allocation7], 256
        $region135: #{tpu_custom_call.1} parent=122 // pred_fallthru
          _
        // Predicated region
        $region136: #{tpu_custom_call.1} parent=122 // pred_check
          %p668 = pneg %p373
        $region137: #{tpu_custom_call.1} parent=122 // pred_check_branch
          %670 = sbr.rel (%p668) target = $region139
        $region138: #{tpu_custom_call.1} parent=122 // pred_region
          %671 = dma.done [#allocation7], 512
        $region139: #{tpu_custom_call.1} parent=122 // pred_fallthru
          _
        %s672 = sand.u32 %s45, 1
        %s673 = sand.u32 %s45, 1
        %s674 = smul.addr %s673, 32
        %s675 = scalar_lea.vmem [#allocation2], %s674
        %p676 = pneg %p58
        %p677 = pneg %p55
        %p678 = pneg %p79
        %p679 = pneg %p76
        %p680 = pneg %p100
        %p681 = pneg %p97
        %p682 = pneg %p121
        %p683 = pneg %p118
        %p684 = pneg %p142
        %p685 = pneg %p139
        %p686 = pneg %p163
        %p687 = pneg %p160
        %p688 = pneg %p184
        %p689 = pneg %p181
        %p690 = pneg %p205
        %p691 = pneg %p202
        %p692 = pneg %p226
        %p693 = pneg %p223
        %p694 = pneg %p247
        %p695 = pneg %p244
        %p696 = pneg %p268
        %p697 = pneg %p265
        %p698 = pneg %p289
        %p699 = pneg %p286
        %p700 = pneg %p310
        %p701 = pneg %p307
        %p702 = pneg %p331
        %p703 = pneg %p328
        %p704 = pneg %p352
        %p705 = pneg %p349
        %p706 = pneg %p373
        %p707 = pneg %p370
        %p708 = pneg %p394
        %p709 = pneg %p391
        %p710 = pneg %p415
        %p711 = pneg %p412
        %p712 = pneg %p436
        %p713 = pneg %p433
        %p714 = pneg %p457
        %p715 = pneg %p454
        %p716 = pneg %p478
        %p717 = pneg %p475
        %p718 = pneg %p504
        %p719 = pneg %p501
        %s720 = sand.u32 %s491, 1
        %s721 = scalar_lea.sflag [#allocation5], %s720
        %s722 = sand.u32 %s491, 1
        %s723 = smul.addr %s722, 8
        %s724 = scalar_lea.vmem [#allocation9], %s723
        %s725 = smul.u32 2, %s37
        %v726 = vld [vmem:[%s656] sm:$0xff]
        %v727 = vld [vmem:[%s656 + $0x8] sm:$0xff]
        %v728 = vld [vmem:[%s656 + $0x10] sm:$0xff]
        %v729 = vld [vmem:[%s656 + $0x18] sm:$0xff]
        %v730 = vld [vmem:[%s9] sm:$0xff]
        %v731 = vld [vmem:[%s9 + $0x8] sm:$0xff]
        %s732 = scalar_lea.vmem %s9, 16
        %v733 = vld [vmem:[%s732] sm:$0xff]
        %v734 = vld [vmem:[%s732 + $0x8] sm:$0xff]
        %739 = vrot.lane.b32.xlu0 %v726, 66
        %v740 = vpop.permute.xlu0 %739
        %741 = vrot.lane.b32.xlu0 %v727, 66
        %v742 = vpop.permute.xlu0 %741
        %743 = vrot.lane.b32.xlu0 %v728, 66
        %v744 = vpop.permute.xlu0 %743
        %745 = vrot.lane.b32.xlu0 %v729, 66
        %v746 = vpop.permute.xlu0 %745
        %vm747 = vcmask 539648
        %v748 = vsel %vm747, %v740, %v742
        %v749 = vsel %vm747, %v744, %v746
        %vm752 = vcmask 130048
        %v754 = vsel %vm752, %v733, 0
        %v757 = vsel %vm752, %v734, 0
        %759 = vmatprep.subr.mxu0 0.0
        %760 = vmatpush1.msra.mxu0 0.0
        %761 = vmatprep.subr.mxu0 0.0
        %762 = vmatpush1.msra.mxu0 0.0
        %763 = vmatprep.subr.mxu0 0.0
        %764 = vmatpush1.msra.mxu0 0.0
        %765 = vmatprep.subr.mxu0 0.0
        %766 = vmatpush1.msra.mxu0 0.0
        %767 = vmatprep.subr.mxu0 0.0
        %768 = vmatpush1.msra.mxu0 0.0
        %769 = vmatprep.subr.mxu0 0.0
        %770 = vmatpush1.msra.mxu0 0.0
        %771 = vmatprep.subr.mxu0 0.0
        %772 = vmatpush1.msra.mxu0 0.0
        %773 = vmatprep.subr.mxu0 0.0
        %774 = vmatpush1.msra.mxu0 0.0
        %775 = vmatprep.subr.mxu0 0.0
        %776 = vmatpush1.msra.mxu0 0.0
        %777 = vmatprep.subr.mxu0 0.0
        %778 = vmatpush1.msra.mxu0 0.0
        %779 = vmatprep.subr.mxu0 0.0
        %780 = vmatpush1.msra.mxu0 0.0
        %781 = vmatprep.subr.mxu0 0.0
        %782 = vmatpush1.msra.mxu0 0.0
        %783 = vmatprep.subr.mxu0 0.0
        %784 = vmatpush1.msra.mxu0 0.0
        %785 = vmatprep.subr.mxu0 0.0
        %786 = vmatpush1.msra.mxu0 0.0
        %787 = vmatprep.subr.mxu0 0.0
        %788 = vmatpush1.msra.mxu0 %v749
        %789 = vmatprep.subr.mxu0 0.0
        %790 = vmatpush1.msra.mxu0 %v748
        %791 = vmatprep.subr.mxu0 0.0
        %792 = vmatpush2.msra.mxu0 0.0
        %793 = vmatprep.subr.mxu0 0.0
        %794 = vmatpush2.msra.mxu0 0.0
        %795 = vmatprep.subr.mxu0 0.0
        %796 = vmatpush2.msra.mxu0 0.0
        %797 = vmatprep.subr.mxu0 0.0
        %798 = vmatpush2.msra.mxu0 0.0
        %799 = vmatprep.subr.mxu0 0.0
        %800 = vmatpush2.msra.mxu0 0.0
        %801 = vmatprep.subr.mxu0 0.0
        %802 = vmatpush2.msra.mxu0 0.0
        %803 = vmatprep.subr.mxu0 0.0
        %804 = vmatpush2.msra.mxu0 0.0
        %805 = vmatprep.subr.mxu0 0.0
        %806 = vmatpush2.msra.mxu0 0.0
        %807 = vmatprep.subr.mxu0 0.0
        %808 = vmatpush2.msra.mxu0 0.0
        %809 = vmatprep.subr.mxu0 0.0
        %810 = vmatpush2.msra.mxu0 0.0
        %811 = vmatprep.subr.mxu0 0.0
        %812 = vmatpush2.msra.mxu0 0.0
        %813 = vmatprep.subr.mxu0 0.0
        %814 = vmatpush2.msra.mxu0 0.0
        %815 = vmatprep.subr.mxu0 0.0
        %816 = vmatpush2.msra.mxu0 0.0
        %817 = vmatprep.subr.mxu0 0.0
        %818 = vmatpush2.msra.mxu0 0.0
        %819 = vmatprep.subr.mxu0 0.0
        %820 = vmatpush2.msra.mxu0 0.0
        %821 = vmatprep.subr.mxu0 0.0
        %822 = vmatpush2.msra.mxu0 0.0
        %823 = vmatprep.mubr.f32.mxu0 0.0
        %824 = vmatmul.mubr.f32.gmra.mxu0 %v754
        %v825 = vpop.f32.mrf.mxu0
        %v826 = vadd.f32 0.0, %v825
        %v827 = vpop.f32.mrf.mxu0
        %828 = vmatprep.mubr.f32.mxu0 0.0
        %829 = vmatmul.mubr.f32.gmra.mxu0 %v757
        %v830 = vpop.f32.mrf.mxu0
        %v831 = vadd.f32 0.0, %v830
        %v832 = vpop.f32.mrf.mxu0
        %833 = vdwg.mxu0
        %834 = vrot.lane.b32.xlu0 %v726, 67
        %v835 = vpop.permute.xlu0 %834
        %836 = vrot.lane.b32.xlu0 %v727, 67
        %v837 = vpop.permute.xlu0 %836
        %838 = vrot.lane.b32.xlu0 %v728, 67
        %v839 = vpop.permute.xlu0 %838
        %840 = vrot.lane.b32.xlu0 %v729, 67
        %v841 = vpop.permute.xlu0 %840
        %vm842 = vcmask 547840
        %v843 = vsel %vm842, %v835, %v837
        %v844 = vsel %vm842, %v839, %v841
        %v848 = vsel %vm752, %v730, 0
        %v851 = vsel %vm752, %v731, 0
        %853 = vmatprep.subr.mxu0 0.0
        %854 = vmatpush1.msra.mxu0 0.0
        %855 = vmatprep.subr.mxu0 0.0
        %856 = vmatpush1.msra.mxu0 0.0
        %857 = vmatprep.subr.mxu0 0.0
        %858 = vmatpush1.msra.mxu0 0.0
        %859 = vmatprep.subr.mxu0 0.0
        %860 = vmatpush1.msra.mxu0 0.0
        %861 = vmatprep.subr.mxu0 0.0
        %862 = vmatpush1.msra.mxu0 0.0
        %863 = vmatprep.subr.mxu0 0.0
        %864 = vmatpush1.msra.mxu0 0.0
        %865 = vmatprep.subr.mxu0 0.0
        %866 = vmatpush1.msra.mxu0 0.0
        %867 = vmatprep.subr.mxu0 0.0
        %868 = vmatpush1.msra.mxu0 0.0
        %869 = vmatprep.subr.mxu0 0.0
        %870 = vmatpush1.msra.mxu0 0.0
        %871 = vmatprep.subr.mxu0 0.0
        %872 = vmatpush1.msra.mxu0 0.0
        %873 = vmatprep.subr.mxu0 0.0
        %874 = vmatpush1.msra.mxu0 0.0
        %875 = vmatprep.subr.mxu0 0.0
        %876 = vmatpush1.msra.mxu0 0.0
        %877 = vmatprep.subr.mxu0 0.0
        %878 = vmatpush1.msra.mxu0 0.0
        %879 = vmatprep.subr.mxu0 0.0
        %880 = vmatpush1.msra.mxu0 0.0
        %881 = vmatprep.subr.mxu0 0.0
        %882 = vmatpush1.msra.mxu0 %v844
        %883 = vmatprep.subr.mxu0 0.0
        %884 = vmatpush1.msra.mxu0 %v843
        %885 = vmatprep.subr.mxu0 0.0
        %886 = vmatpush2.msra.mxu0 0.0
        %887 = vmatprep.subr.mxu0 0.0
        %888 = vmatpush2.msra.mxu0 0.0
        %889 = vmatprep.subr.mxu0 0.0
        %890 = vmatpush2.msra.mxu0 0.0
        %891 = vmatprep.subr.mxu0 0.0
        %892 = vmatpush2.msra.mxu0 0.0
        %893 = vmatprep.subr.mxu0 0.0
        %894 = vmatpush2.msra.mxu0 0.0
        %895 = vmatprep.subr.mxu0 0.0
        %896 = vmatpush2.msra.mxu0 0.0
        %897 = vmatprep.subr.mxu0 0.0
        %898 = vmatpush2.msra.mxu0 0.0
        %899 = vmatprep.subr.mxu0 0.0
        %900 = vmatpush2.msra.mxu0 0.0
        %901 = vmatprep.subr.mxu0 0.0
        %902 = vmatpush2.msra.mxu0 0.0
        %903 = vmatprep.subr.mxu0 0.0
        %904 = vmatpush2.msra.mxu0 0.0
        %905 = vmatprep.subr.mxu0 0.0
        %906 = vmatpush2.msra.mxu0 0.0
        %907 = vmatprep.subr.mxu0 0.0
        %908 = vmatpush2.msra.mxu0 0.0
        %909 = vmatprep.subr.mxu0 0.0
        %910 = vmatpush2.msra.mxu0 0.0
        %911 = vmatprep.subr.mxu0 0.0
        %912 = vmatpush2.msra.mxu0 0.0
        %913 = vmatprep.subr.mxu0 0.0
        %914 = vmatpush2.msra.mxu0 0.0
        %915 = vmatprep.subr.mxu0 0.0
        %916 = vmatpush2.msra.mxu0 0.0
        %917 = vmatprep.mubr.f32.mxu0 0.0
        %918 = vmatmul.mubr.f32.gmra.mxu0 %v848
        %v919 = vpop.f32.mrf.mxu0
        %v920 = vadd.f32 %v826, %v919
        %v921 = vpop.f32.mrf.mxu0
        %922 = vmatprep.mubr.f32.mxu0 0.0
        %923 = vmatmul.mubr.f32.gmra.mxu0 %v851
        %v924 = vpop.f32.mrf.mxu0
        %v925 = vadd.f32 %v831, %v924
        %v926 = vpop.f32.mrf.mxu0
        %927 = vdwg.mxu0
        %s928 = scalar_lea.vmem %s9, 32
        %v929 = vld [vmem:[%s928] sm:$0xff]
        %v930 = vld [vmem:[%s928 + $0x8] sm:$0xff]
        %931 = vrot.lane.b32.xlu0 %v726, 65
        %v932 = vpop.permute.xlu0 %931
        %933 = vrot.lane.b32.xlu0 %v727, 65
        %v934 = vpop.permute.xlu0 %933
        %935 = vrot.lane.b32.xlu0 %v728, 65
        %v936 = vpop.permute.xlu0 %935
        %937 = vrot.lane.b32.xlu0 %v729, 65
        %v938 = vpop.permute.xlu0 %937
        %vm939 = vcmask 531456
        %v940 = vsel %vm939, %v932, %v934
        %v941 = vsel %vm939, %v936, %v938
        %v945 = vsel %vm752, %v929, 0
        %v948 = vsel %vm752, %v930, 0
        %950 = vmatprep.subr.mxu0 0.0
        %951 = vmatpush1.msra.mxu0 0.0
        %952 = vmatprep.subr.mxu0 0.0
        %953 = vmatpush1.msra.mxu0 0.0
        %954 = vmatprep.subr.mxu0 0.0
        %955 = vmatpush1.msra.mxu0 0.0
        %956 = vmatprep.subr.mxu0 0.0
        %957 = vmatpush1.msra.mxu0 0.0
        %958 = vmatprep.subr.mxu0 0.0
        %959 = vmatpush1.msra.mxu0 0.0
        %960 = vmatprep.subr.mxu0 0.0
        %961 = vmatpush1.msra.mxu0 0.0
        %962 = vmatprep.subr.mxu0 0.0
        %963 = vmatpush1.msra.mxu0 0.0
        %964 = vmatprep.subr.mxu0 0.0
        %965 = vmatpush1.msra.mxu0 0.0
        %966 = vmatprep.subr.mxu0 0.0
        %967 = vmatpush1.msra.mxu0 0.0
        %968 = vmatprep.subr.mxu0 0.0
        %969 = vmatpush1.msra.mxu0 0.0
        %970 = vmatprep.subr.mxu0 0.0
        %971 = vmatpush1.msra.mxu0 0.0
        %972 = vmatprep.subr.mxu0 0.0
        %973 = vmatpush1.msra.mxu0 0.0
        %974 = vmatprep.subr.mxu0 0.0
        %975 = vmatpush1.msra.mxu0 0.0
        %976 = vmatprep.subr.mxu0 0.0
        %977 = vmatpush1.msra.mxu0 0.0
        %978 = vmatprep.subr.mxu0 0.0
        %979 = vmatpush1.msra.mxu0 %v941
        %980 = vmatprep.subr.mxu0 0.0
        %981 = vmatpush1.msra.mxu0 %v940
        %982 = vmatprep.subr.mxu0 0.0
        %983 = vmatpush2.msra.mxu0 0.0
        %984 = vmatprep.subr.mxu0 0.0
        %985 = vmatpush2.msra.mxu0 0.0
        %986 = vmatprep.subr.mxu0 0.0
        %987 = vmatpush2.msra.mxu0 0.0
        %988 = vmatprep.subr.mxu0 0.0
        %989 = vmatpush2.msra.mxu0 0.0
        %990 = vmatprep.subr.mxu0 0.0
        %991 = vmatpush2.msra.mxu0 0.0
        %992 = vmatprep.subr.mxu0 0.0
        %993 = vmatpush2.msra.mxu0 0.0
        %994 = vmatprep.subr.mxu0 0.0
        %995 = vmatpush2.msra.mxu0 0.0
        %996 = vmatprep.subr.mxu0 0.0
        %997 = vmatpush2.msra.mxu0 0.0
        %998 = vmatprep.subr.mxu0 0.0
        %999 = vmatpush2.msra.mxu0 0.0
        %1000 = vmatprep.subr.mxu0 0.0
        %1001 = vmatpush2.msra.mxu0 0.0
        %1002 = vmatprep.subr.mxu0 0.0
        %1003 = vmatpush2.msra.mxu0 0.0
        %1004 = vmatprep.subr.mxu0 0.0
        %1005 = vmatpush2.msra.mxu0 0.0
        %1006 = vmatprep.subr.mxu0 0.0
        %1007 = vmatpush2.msra.mxu0 0.0
        %1008 = vmatprep.subr.mxu0 0.0
        %1009 = vmatpush2.msra.mxu0 0.0
        %1010 = vmatprep.subr.mxu0 0.0
        %1011 = vmatpush2.msra.mxu0 0.0
        %1012 = vmatprep.subr.mxu0 0.0
        %1013 = vmatpush2.msra.mxu0 0.0
        %1014 = vmatprep.mubr.f32.mxu0 0.0
        %1015 = vmatmul.mubr.f32.gmra.mxu0 %v945
        %v1016 = vpop.f32.mrf.mxu0
        %v1017 = vadd.f32 0.0, %v1016
        %v1018 = vpop.f32.mrf.mxu0
        %1019 = vmatprep.mubr.f32.mxu0 0.0
        %1020 = vmatmul.mubr.f32.gmra.mxu0 %v948
        %v1021 = vpop.f32.mrf.mxu0
        %v1022 = vadd.f32 0.0, %v1021
        %v1023 = vpop.f32.mrf.mxu0
        %1024 = vdwg.mxu0
        %v1025 = vadd.f32 %v920, %v1017
        %v1026 = vadd.f32 %v925, %v1022
        %s1027 = scalar_lea.vmem %s9, 48
        %v1028 = vld [vmem:[%s1027] sm:$0xff]
        %v1029 = vld [vmem:[%s1027 + $0x8] sm:$0xff]
        %1030 = vrot.lane.b32.xlu0 %v726, 64
        %v1031 = vpop.permute.xlu0 %1030
        %1032 = vrot.lane.b32.xlu0 %v727, 64
        %v1033 = vpop.permute.xlu0 %1032
        %1034 = vrot.lane.b32.xlu0 %v728, 64
        %v1035 = vpop.permute.xlu0 %1034
        %1036 = vrot.lane.b32.xlu0 %v729, 64
        %v1037 = vpop.permute.xlu0 %1036
        %vm1038 = vcmask 523264
        %v1039 = vsel %vm1038, %v1031, %v1033
        %v1040 = vsel %vm1038, %v1035, %v1037
        %v1044 = vsel %vm752, %v1028, 0
        %v1047 = vsel %vm752, %v1029, 0
        %1049 = vmatprep.subr.mxu0 0.0
        %1050 = vmatpush1.msra.mxu0 0.0
        %1051 = vmatprep.subr.mxu0 0.0
        %1052 = vmatpush1.msra.mxu0 0.0
        %1053 = vmatprep.subr.mxu0 0.0
        %1054 = vmatpush1.msra.mxu0 0.0
        %1055 = vmatprep.subr.mxu0 0.0
        %1056 = vmatpush1.msra.mxu0 0.0
        %1057 = vmatprep.subr.mxu0 0.0
        %1058 = vmatpush1.msra.mxu0 0.0
        %1059 = vmatprep.subr.mxu0 0.0
        %1060 = vmatpush1.msra.mxu0 0.0
        %1061 = vmatprep.subr.mxu0 0.0
        %1062 = vmatpush1.msra.mxu0 0.0
        %1063 = vmatprep.subr.mxu0 0.0
        %1064 = vmatpush1.msra.mxu0 0.0
        %1065 = vmatprep.subr.mxu0 0.0
        %1066 = vmatpush1.msra.mxu0 0.0
        %1067 = vmatprep.subr.mxu0 0.0
        %1068 = vmatpush1.msra.mxu0 0.0
        %1069 = vmatprep.subr.mxu0 0.0
        %1070 = vmatpush1.msra.mxu0 0.0
        %1071 = vmatprep.subr.mxu0 0.0
        %1072 = vmatpush1.msra.mxu0 0.0
        %1073 = vmatprep.subr.mxu0 0.0
        %1074 = vmatpush1.msra.mxu0 0.0
        %1075 = vmatprep.subr.mxu0 0.0
        %1076 = vmatpush1.msra.mxu0 0.0
        %1077 = vmatprep.subr.mxu0 0.0
        %1078 = vmatpush1.msra.mxu0 %v1040
        %1079 = vmatprep.subr.mxu0 0.0
        %1080 = vmatpush1.msra.mxu0 %v1039
        %1081 = vmatprep.subr.mxu0 0.0
        %1082 = vmatpush2.msra.mxu0 0.0
        %1083 = vmatprep.subr.mxu0 0.0
        %1084 = vmatpush2.msra.mxu0 0.0
        %1085 = vmatprep.subr.mxu0 0.0
        %1086 = vmatpush2.msra.mxu0 0.0
        %1087 = vmatprep.subr.mxu0 0.0
        %1088 = vmatpush2.msra.mxu0 0.0
        %1089 = vmatprep.subr.mxu0 0.0
        %1090 = vmatpush2.msra.mxu0 0.0
        %1091 = vmatprep.subr.mxu0 0.0
        %1092 = vmatpush2.msra.mxu0 0.0
        %1093 = vmatprep.subr.mxu0 0.0
        %1094 = vmatpush2.msra.mxu0 0.0
        %1095 = vmatprep.subr.mxu0 0.0
        %1096 = vmatpush2.msra.mxu0 0.0
        %1097 = vmatprep.subr.mxu0 0.0
        %1098 = vmatpush2.msra.mxu0 0.0
        %1099 = vmatprep.subr.mxu0 0.0
        %1100 = vmatpush2.msra.mxu0 0.0
        %1101 = vmatprep.subr.mxu0 0.0
        %1102 = vmatpush2.msra.mxu0 0.0
        %1103 = vmatprep.subr.mxu0 0.0
        %1104 = vmatpush2.msra.mxu0 0.0
        %1105 = vmatprep.subr.mxu0 0.0
        %1106 = vmatpush2.msra.mxu0 0.0
        %1107 = vmatprep.subr.mxu0 0.0
        %1108 = vmatpush2.msra.mxu0 0.0
        %1109 = vmatprep.subr.mxu0 0.0
        %1110 = vmatpush2.msra.mxu0 0.0
        %1111 = vmatprep.subr.mxu0 0.0
        %1112 = vmatpush2.msra.mxu0 0.0
        %1113 = vmatprep.mubr.f32.mxu0 0.0
        %1114 = vmatmul.mubr.f32.gmra.mxu0 %v1044
        %v1115 = vpop.f32.mrf.mxu0
        %v1116 = vadd.f32 0.0, %v1115
        %v1117 = vpop.f32.mrf.mxu0
        %1118 = vmatprep.mubr.f32.mxu0 0.0
        %1119 = vmatmul.mubr.f32.gmra.mxu0 %v1047
        %v1120 = vpop.f32.mrf.mxu0
        %v1121 = vadd.f32 0.0, %v1120
        %v1122 = vpop.f32.mrf.mxu0
        %1123 = vdwg.mxu0
        %v1124 = vadd.f32 %v1025, %v1116
        %v1125 = vadd.f32 %v1026, %v1121
        %s1126 = scalar_lea.vmem %s9, 64
        %v1127 = vld [vmem:[%s1126] sm:$0xff]
        %v1128 = vld [vmem:[%s1126 + $0x8] sm:$0xff]
        %1129 = vrot.lane.b32.xlu0 %v726, 63
        %v1130 = vpop.permute.xlu0 %1129
        %1131 = vrot.lane.b32.xlu0 %v727, 63
        %v1132 = vpop.permute.xlu0 %1131
        %1133 = vrot.lane.b32.xlu0 %v728, 63
        %v1134 = vpop.permute.xlu0 %1133
        %1135 = vrot.lane.b32.xlu0 %v729, 63
        %v1136 = vpop.permute.xlu0 %1135
        %vm1137 = vcmask 515072
        %v1138 = vsel %vm1137, %v1130, %v1132
        %v1139 = vsel %vm1137, %v1134, %v1136
        %v1143 = vsel %vm752, %v1127, 0
        %v1146 = vsel %vm752, %v1128, 0
        %1148 = vmatprep.subr.mxu0 0.0
        %1149 = vmatpush1.msra.mxu0 0.0
        %1150 = vmatprep.subr.mxu0 0.0
        %1151 = vmatpush1.msra.mxu0 0.0
        %1152 = vmatprep.subr.mxu0 0.0
        %1153 = vmatpush1.msra.mxu0 0.0
        %1154 = vmatprep.subr.mxu0 0.0
        %1155 = vmatpush1.msra.mxu0 0.0
        %1156 = vmatprep.subr.mxu0 0.0
        %1157 = vmatpush1.msra.mxu0 0.0
        %1158 = vmatprep.subr.mxu0 0.0
        %1159 = vmatpush1.msra.mxu0 0.0
        %1160 = vmatprep.subr.mxu0 0.0
        %1161 = vmatpush1.msra.mxu0 0.0
        %1162 = vmatprep.subr.mxu0 0.0
        %1163 = vmatpush1.msra.mxu0 0.0
        %1164 = vmatprep.subr.mxu0 0.0
        %1165 = vmatpush1.msra.mxu0 0.0
        %1166 = vmatprep.subr.mxu0 0.0
        %1167 = vmatpush1.msra.mxu0 0.0
        %1168 = vmatprep.subr.mxu0 0.0
        %1169 = vmatpush1.msra.mxu0 0.0
        %1170 = vmatprep.subr.mxu0 0.0
        %1171 = vmatpush1.msra.mxu0 0.0
        %1172 = vmatprep.subr.mxu0 0.0
        %1173 = vmatpush1.msra.mxu0 0.0
        %1174 = vmatprep.subr.mxu0 0.0
        %1175 = vmatpush1.msra.mxu0 0.0
        %1176 = vmatprep.subr.mxu0 0.0
        %1177 = vmatpush1.msra.mxu0 %v1139
        %1178 = vmatprep.subr.mxu0 0.0
        %1179 = vmatpush1.msra.mxu0 %v1138
        %1180 = vmatprep.subr.mxu0 0.0
        %1181 = vmatpush2.msra.mxu0 0.0
        %1182 = vmatprep.subr.mxu0 0.0
        %1183 = vmatpush2.msra.mxu0 0.0
        %1184 = vmatprep.subr.mxu0 0.0
        %1185 = vmatpush2.msra.mxu0 0.0
        %1186 = vmatprep.subr.mxu0 0.0
        %1187 = vmatpush2.msra.mxu0 0.0
        %1188 = vmatprep.subr.mxu0 0.0
        %1189 = vmatpush2.msra.mxu0 0.0
        %1190 = vmatprep.subr.mxu0 0.0
        %1191 = vmatpush2.msra.mxu0 0.0
        %1192 = vmatprep.subr.mxu0 0.0
        %1193 = vmatpush2.msra.mxu0 0.0
        %1194 = vmatprep.subr.mxu0 0.0
        %1195 = vmatpush2.msra.mxu0 0.0
        %1196 = vmatprep.subr.mxu0 0.0
        %1197 = vmatpush2.msra.mxu0 0.0
        %1198 = vmatprep.subr.mxu0 0.0
        %1199 = vmatpush2.msra.mxu0 0.0
        %1200 = vmatprep.subr.mxu0 0.0
        %1201 = vmatpush2.msra.mxu0 0.0
        %1202 = vmatprep.subr.mxu0 0.0
        %1203 = vmatpush2.msra.mxu0 0.0
        %1204 = vmatprep.subr.mxu0 0.0
        %1205 = vmatpush2.msra.mxu0 0.0
        %1206 = vmatprep.subr.mxu0 0.0
        %1207 = vmatpush2.msra.mxu0 0.0
        %1208 = vmatprep.subr.mxu0 0.0
        %1209 = vmatpush2.msra.mxu0 0.0
        %1210 = vmatprep.subr.mxu0 0.0
        %1211 = vmatpush2.msra.mxu0 0.0
        %1212 = vmatprep.mubr.f32.mxu0 0.0
        %1213 = vmatmul.mubr.f32.gmra.mxu0 %v1143
        %v1214 = vpop.f32.mrf.mxu0
        %v1215 = vadd.f32 0.0, %v1214
        %v1216 = vpop.f32.mrf.mxu0
        %1217 = vmatprep.mubr.f32.mxu0 0.0
        %1218 = vmatmul.mubr.f32.gmra.mxu0 %v1146
        %v1219 = vpop.f32.mrf.mxu0
        %v1220 = vadd.f32 0.0, %v1219
        %v1221 = vpop.f32.mrf.mxu0
        %1222 = vdwg.mxu0
        %v1223 = vadd.f32 %v1124, %v1215
        %v1224 = vadd.f32 %v1125, %v1220
        %s1225 = scalar_lea.vmem %s9, 80
        %v1226 = vld [vmem:[%s1225] sm:$0xff]
        %v1227 = vld [vmem:[%s1225 + $0x8] sm:$0xff]
        %1228 = vrot.lane.b32.xlu0 %v726, 62
        %v1229 = vpop.permute.xlu0 %1228
        %1230 = vrot.lane.b32.xlu0 %v727, 62
        %v1231 = vpop.permute.xlu0 %1230
        %1232 = vrot.lane.b32.xlu0 %v728, 62
        %v1233 = vpop.permute.xlu0 %1232
        %1234 = vrot.lane.b32.xlu0 %v729, 62
        %v1235 = vpop.permute.xlu0 %1234
        %vm1236 = vcmask 506880
        %v1237 = vsel %vm1236, %v1229, %v1231
        %v1238 = vsel %vm1236, %v1233, %v1235
        %v1242 = vsel %vm752, %v1226, 0
        %v1245 = vsel %vm752, %v1227, 0
        %1247 = vmatprep.subr.mxu0 0.0
        %1248 = vmatpush1.msra.mxu0 0.0
        %1249 = vmatprep.subr.mxu0 0.0
        %1250 = vmatpush1.msra.mxu0 0.0
        %1251 = vmatprep.subr.mxu0 0.0
        %1252 = vmatpush1.msra.mxu0 0.0
        %1253 = vmatprep.subr.mxu0 0.0
        %1254 = vmatpush1.msra.mxu0 0.0
        %1255 = vmatprep.subr.mxu0 0.0
        %1256 = vmatpush1.msra.mxu0 0.0
        %1257 = vmatprep.subr.mxu0 0.0
        %1258 = vmatpush1.msra.mxu0 0.0
        %1259 = vmatprep.subr.mxu0 0.0
        %1260 = vmatpush1.msra.mxu0 0.0
        %1261 = vmatprep.subr.mxu0 0.0
        %1262 = vmatpush1.msra.mxu0 0.0
        %1263 = vmatprep.subr.mxu0 0.0
        %1264 = vmatpush1.msra.mxu0 0.0
        %1265 = vmatprep.subr.mxu0 0.0
        %1266 = vmatpush1.msra.mxu0 0.0
        %1267 = vmatprep.subr.mxu0 0.0
        %1268 = vmatpush1.msra.mxu0 0.0
        %1269 = vmatprep.subr.mxu0 0.0
        %1270 = vmatpush1.msra.mxu0 0.0
        %1271 = vmatprep.subr.mxu0 0.0
        %1272 = vmatpush1.msra.mxu0 0.0
        %1273 = vmatprep.subr.mxu0 0.0
        %1274 = vmatpush1.msra.mxu0 0.0
        %1275 = vmatprep.subr.mxu0 0.0
        %1276 = vmatpush1.msra.mxu0 %v1238
        %1277 = vmatprep.subr.mxu0 0.0
        %1278 = vmatpush1.msra.mxu0 %v1237
        %1279 = vmatprep.subr.mxu0 0.0
        %1280 = vmatpush2.msra.mxu0 0.0
        %1281 = vmatprep.subr.mxu0 0.0
        %1282 = vmatpush2.msra.mxu0 0.0
        %1283 = vmatprep.subr.mxu0 0.0
        %1284 = vmatpush2.msra.mxu0 0.0
        %1285 = vmatprep.subr.mxu0 0.0
        %1286 = vmatpush2.msra.mxu0 0.0
        %1287 = vmatprep.subr.mxu0 0.0
        %1288 = vmatpush2.msra.mxu0 0.0
        %1289 = vmatprep.subr.mxu0 0.0
        %1290 = vmatpush2.msra.mxu0 0.0
        %1291 = vmatprep.subr.mxu0 0.0
        %1292 = vmatpush2.msra.mxu0 0.0
        %1293 = vmatprep.subr.mxu0 0.0
        %1294 = vmatpush2.msra.mxu0 0.0
        %1295 = vmatprep.subr.mxu0 0.0
        %1296 = vmatpush2.msra.mxu0 0.0
        %1297 = vmatprep.subr.mxu0 0.0
        %1298 = vmatpush2.msra.mxu0 0.0
        %1299 = vmatprep.subr.mxu0 0.0
        %1300 = vmatpush2.msra.mxu0 0.0
        %1301 = vmatprep.subr.mxu0 0.0
        %1302 = vmatpush2.msra.mxu0 0.0
        %1303 = vmatprep.subr.mxu0 0.0
        %1304 = vmatpush2.msra.mxu0 0.0
        %1305 = vmatprep.subr.mxu0 0.0
        %1306 = vmatpush2.msra.mxu0 0.0
        %1307 = vmatprep.subr.mxu0 0.0
        %1308 = vmatpush2.msra.mxu0 0.0
        %1309 = vmatprep.subr.mxu0 0.0
        %1310 = vmatpush2.msra.mxu0 0.0
        %1311 = vmatprep.mubr.f32.mxu0 0.0
        %1312 = vmatmul.mubr.f32.gmra.mxu0 %v1242
        %v1313 = vpop.f32.mrf.mxu0
        %v1314 = vadd.f32 0.0, %v1313
        %v1315 = vpop.f32.mrf.mxu0
        %1316 = vmatprep.mubr.f32.mxu0 0.0
        %1317 = vmatmul.mubr.f32.gmra.mxu0 %v1245
        %v1318 = vpop.f32.mrf.mxu0
        %v1319 = vadd.f32 0.0, %v1318
        %v1320 = vpop.f32.mrf.mxu0
        %1321 = vdwg.mxu0
        %v1322 = vadd.f32 %v1223, %v1314
        %v1323 = vadd.f32 %v1224, %v1319
        %s1324 = scalar_lea.vmem %s9, 96
        %v1325 = vld [vmem:[%s1324] sm:$0xff]
        %v1326 = vld [vmem:[%s1324 + $0x8] sm:$0xff]
        %1327 = vrot.lane.b32.xlu0 %v726, 61
        %v1328 = vpop.permute.xlu0 %1327
        %1329 = vrot.lane.b32.xlu0 %v727, 61
        %v1330 = vpop.permute.xlu0 %1329
        %1331 = vrot.lane.b32.xlu0 %v728, 61
        %v1332 = vpop.permute.xlu0 %1331
        %1333 = vrot.lane.b32.xlu0 %v729, 61
        %v1334 = vpop.permute.xlu0 %1333
        %vm1335 = vcmask 498688
        %v1336 = vsel %vm1335, %v1328, %v1330
        %v1337 = vsel %vm1335, %v1332, %v1334
        %v1341 = vsel %vm752, %v1325, 0
        %v1344 = vsel %vm752, %v1326, 0
        %1346 = vmatprep.subr.mxu0 0.0
        %1347 = vmatpush1.msra.mxu0 0.0
        %1348 = vmatprep.subr.mxu0 0.0
        %1349 = vmatpush1.msra.mxu0 0.0
        %1350 = vmatprep.subr.mxu0 0.0
        %1351 = vmatpush1.msra.mxu0 0.0
        %1352 = vmatprep.subr.mxu0 0.0
        %1353 = vmatpush1.msra.mxu0 0.0
        %1354 = vmatprep.subr.mxu0 0.0
        %1355 = vmatpush1.msra.mxu0 0.0
        %1356 = vmatprep.subr.mxu0 0.0
        %1357 = vmatpush1.msra.mxu0 0.0
        %1358 = vmatprep.subr.mxu0 0.0
        %1359 = vmatpush1.msra.mxu0 0.0
        %1360 = vmatprep.subr.mxu0 0.0
        %1361 = vmatpush1.msra.mxu0 0.0
        %1362 = vmatprep.subr.mxu0 0.0
        %1363 = vmatpush1.msra.mxu0 0.0
        %1364 = vmatprep.subr.mxu0 0.0
        %1365 = vmatpush1.msra.mxu0 0.0
        %1366 = vmatprep.subr.mxu0 0.0
        %1367 = vmatpush1.msra.mxu0 0.0
        %1368 = vmatprep.subr.mxu0 0.0
        %1369 = vmatpush1.msra.mxu0 0.0
        %1370 = vmatprep.subr.mxu0 0.0
        %1371 = vmatpush1.msra.mxu0 0.0
        %1372 = vmatprep.subr.mxu0 0.0
        %1373 = vmatpush1.msra.mxu0 0.0
        %1374 = vmatprep.subr.mxu0 0.0
        %1375 = vmatpush1.msra.mxu0 %v1337
        %1376 = vmatprep.subr.mxu0 0.0
        %1377 = vmatpush1.msra.mxu0 %v1336
        %1378 = vmatprep.subr.mxu0 0.0
        %1379 = vmatpush2.msra.mxu0 0.0
        %1380 = vmatprep.subr.mxu0 0.0
        %1381 = vmatpush2.msra.mxu0 0.0
        %1382 = vmatprep.subr.mxu0 0.0
        %1383 = vmatpush2.msra.mxu0 0.0
        %1384 = vmatprep.subr.mxu0 0.0
        %1385 = vmatpush2.msra.mxu0 0.0
        %1386 = vmatprep.subr.mxu0 0.0
        %1387 = vmatpush2.msra.mxu0 0.0
        %1388 = vmatprep.subr.mxu0 0.0
        %1389 = vmatpush2.msra.mxu0 0.0
        %1390 = vmatprep.subr.mxu0 0.0
        %1391 = vmatpush2.msra.mxu0 0.0
        %1392 = vmatprep.subr.mxu0 0.0
        %1393 = vmatpush2.msra.mxu0 0.0
        %1394 = vmatprep.subr.mxu0 0.0
        %1395 = vmatpush2.msra.mxu0 0.0
        %1396 = vmatprep.subr.mxu0 0.0
        %1397 = vmatpush2.msra.mxu0 0.0
        %1398 = vmatprep.subr.mxu0 0.0
        %1399 = vmatpush2.msra.mxu0 0.0
        %1400 = vmatprep.subr.mxu0 0.0
        %1401 = vmatpush2.msra.mxu0 0.0
        %1402 = vmatprep.subr.mxu0 0.0
        %1403 = vmatpush2.msra.mxu0 0.0
        %1404 = vmatprep.subr.mxu0 0.0
        %1405 = vmatpush2.msra.mxu0 0.0
        %1406 = vmatprep.subr.mxu0 0.0
        %1407 = vmatpush2.msra.mxu0 0.0
        %1408 = vmatprep.subr.mxu0 0.0
        %1409 = vmatpush2.msra.mxu0 0.0
        %1410 = vmatprep.mubr.f32.mxu0 0.0
        %1411 = vmatmul.mubr.f32.gmra.mxu0 %v1341
        %v1412 = vpop.f32.mrf.mxu0
        %v1413 = vadd.f32 0.0, %v1412
        %v1414 = vpop.f32.mrf.mxu0
        %1415 = vmatprep.mubr.f32.mxu0 0.0
        %1416 = vmatmul.mubr.f32.gmra.mxu0 %v1344
        %v1417 = vpop.f32.mrf.mxu0
        %v1418 = vadd.f32 0.0, %v1417
        %v1419 = vpop.f32.mrf.mxu0
        %1420 = vdwg.mxu0
        %v1421 = vadd.f32 %v1322, %v1413
        %v1422 = vadd.f32 %v1323, %v1418
        %v1423 = vld [vmem:[%s10] sm:$0xff]
        %v1424 = vld [vmem:[%s10 + $0x8] sm:$0xff]
        %1426 = vset.pattern.permute.xlu0 0
        %1427 = vperm.xlu0 %1426, %v1423
        %v1428 = vpop.permute.xlu0 %1427
        %1431 = vset.pattern.permute.xlu0 0
        %1432 = vperm.xlu0 %1431, %v1424
        %v1433 = vpop.permute.xlu0 %1432
        %v1435 = vadd.f32 %v1421, %v1428
        %v1436 = vadd.f32 %v1422, %v1433
        %v1437 = vmax.f32 %v1435, 0.0
        %v1438 = vmax.f32 %v1436, 0.0
        %v1439 = vld [vmem:[#allocation3] sm:$0xff]
        %v1440 = vld [vmem:[#allocation3 + $0x8] sm:$0xff]
        %v1441 = vld [vmem:[%s2] sm:$0xff]
        %v1442 = vld [vmem:[%s2 + $0x8] sm:$0xff]
        %1444 = vset.pattern.permute.xlu0 0
        %1445 = vperm.xlu0 %1444, %v1441
        %v1446 = vpop.permute.xlu0 %1445
        %1449 = vset.pattern.permute.xlu0 0
        %1450 = vperm.xlu0 %1449, %v1442
        %v1451 = vpop.permute.xlu0 %1450
        %v1454 = vsel %vm752, %v1439, 0
        %v1457 = vsel %vm752, %v1440, 0
        %1459 = vmatprep.subr.mxu0 0.0
        %1460 = vmatpush1.msra.mxu0 0.0
        %1461 = vmatprep.subr.mxu0 0.0
        %1462 = vmatpush1.msra.mxu0 0.0
        %1463 = vmatprep.subr.mxu0 0.0
        %1464 = vmatpush1.msra.mxu0 0.0
        %1465 = vmatprep.subr.mxu0 0.0
        %1466 = vmatpush1.msra.mxu0 0.0
        %1467 = vmatprep.subr.mxu0 0.0
        %1468 = vmatpush1.msra.mxu0 0.0
        %1469 = vmatprep.subr.mxu0 0.0
        %1470 = vmatpush1.msra.mxu0 0.0
        %1471 = vmatprep.subr.mxu0 0.0
        %1472 = vmatpush1.msra.mxu0 0.0
        %1473 = vmatprep.subr.mxu0 0.0
        %1474 = vmatpush1.msra.mxu0 0.0
        %1475 = vmatprep.subr.mxu0 0.0
        %1476 = vmatpush1.msra.mxu0 0.0
        %1477 = vmatprep.subr.mxu0 0.0
        %1478 = vmatpush1.msra.mxu0 0.0
        %1479 = vmatprep.subr.mxu0 0.0
        %1480 = vmatpush1.msra.mxu0 0.0
        %1481 = vmatprep.subr.mxu0 0.0
        %1482 = vmatpush1.msra.mxu0 0.0
        %1483 = vmatprep.subr.mxu0 0.0
        %1484 = vmatpush1.msra.mxu0 0.0
        %1485 = vmatprep.subr.mxu0 0.0
        %1486 = vmatpush1.msra.mxu0 0.0
        %1487 = vmatprep.subr.mxu0 %v729
        %1488 = vmatpush1.msra.mxu0 %v728
        %1489 = vmatprep.subr.mxu0 %v727
        %1490 = vmatpush1.msra.mxu0 %v726
        %1491 = vmatprep.subr.mxu0 0.0
        %1492 = vmatpush2.msra.mxu0 0.0
        %1493 = vmatprep.subr.mxu0 0.0
        %1494 = vmatpush2.msra.mxu0 0.0
        %1495 = vmatprep.subr.mxu0 0.0
        %1496 = vmatpush2.msra.mxu0 0.0
        %1497 = vmatprep.subr.mxu0 0.0
        %1498 = vmatpush2.msra.mxu0 0.0
        %1499 = vmatprep.subr.mxu0 0.0
        %1500 = vmatpush2.msra.mxu0 0.0
        %1501 = vmatprep.subr.mxu0 0.0
        %1502 = vmatpush2.msra.mxu0 0.0
        %1503 = vmatprep.subr.mxu0 0.0
        %1504 = vmatpush2.msra.mxu0 0.0
        %1505 = vmatprep.subr.mxu0 0.0
        %1506 = vmatpush2.msra.mxu0 0.0
        %1507 = vmatprep.subr.mxu0 0.0
        %1508 = vmatpush2.msra.mxu0 0.0
        %1509 = vmatprep.subr.mxu0 0.0
        %1510 = vmatpush2.msra.mxu0 0.0
        %1511 = vmatprep.subr.mxu0 0.0
        %1512 = vmatpush2.msra.mxu0 0.0
        %1513 = vmatprep.subr.mxu0 0.0
        %1514 = vmatpush2.msra.mxu0 0.0
        %1515 = vmatprep.subr.mxu0 0.0
        %1516 = vmatpush2.msra.mxu0 0.0
        %1517 = vmatprep.subr.mxu0 0.0
        %1518 = vmatpush2.msra.mxu0 0.0
        %1519 = vmatprep.subr.mxu0 0.0
        %1520 = vmatpush2.msra.mxu0 0.0
        %1521 = vmatprep.subr.mxu0 0.0
        %1522 = vmatpush2.msra.mxu0 0.0
        %1523 = vmatprep.mubr.f32.mxu0 0.0
        %1524 = vmatmul.mubr.f32.gmra.mxu0 %v1454
        %v1525 = vpop.f32.mrf.mxu0
        %v1526 = vadd.f32 %v1446, %v1525
        %v1527 = vpop.f32.mrf.mxu0
        %v1528 = vadd.f32 %v1446, %v1527
        %1529 = vmatprep.mubr.f32.mxu0 0.0
        %1530 = vmatmul.mubr.f32.gmra.mxu0 %v1457
        %v1531 = vpop.f32.mrf.mxu0
        %v1532 = vadd.f32 %v1451, %v1531
        %v1533 = vpop.f32.mrf.mxu0
        %v1534 = vadd.f32 %v1451, %v1533
        %1535 = vdwg.mxu0
        %v1536 = vmax.f32 %v1526, 0.0
        %v1537 = vmax.f32 %v1528, 0.0
        %v1538 = vmax.f32 %v1532, 0.0
        %v1539 = vmax.f32 %v1534, 0.0
        %v1540 = vld [vmem:[%s5] sm:$0xff]
        %v1541 = vld [vmem:[%s5 + $0x8] sm:$0xff]
        %s1542 = scalar_lea.vmem %s5, 16
        %v1543 = vld [vmem:[%s1542] sm:$0xff]
        %v1544 = vld [vmem:[%s1542 + $0x8] sm:$0xff]
        %1549 = vrot.lane.b32.xlu0 %v1536, 64
        %v1550 = vpop.permute.xlu0 %1549
        %1551 = vrot.lane.b32.xlu0 %v1537, 64
        %v1552 = vpop.permute.xlu0 %1551
        %1553 = vrot.lane.b32.xlu0 %v1538, 64
        %v1554 = vpop.permute.xlu0 %1553
        %1555 = vrot.lane.b32.xlu0 %v1539, 64
        %v1556 = vpop.permute.xlu0 %1555
        %v1557 = vsel %vm1038, %v1550, %v1552
        %v1558 = vsel %vm1038, %v1554, %v1556
        %v1562 = vsel %vm752, %v1543, 0
        %v1565 = vsel %vm752, %v1544, 0
        %1567 = vmatprep.subr.mxu0 0.0
        %1568 = vmatpush1.msra.mxu0 0.0
        %1569 = vmatprep.subr.mxu0 0.0
        %1570 = vmatpush1.msra.mxu0 0.0
        %1571 = vmatprep.subr.mxu0 0.0
        %1572 = vmatpush1.msra.mxu0 0.0
        %1573 = vmatprep.subr.mxu0 0.0
        %1574 = vmatpush1.msra.mxu0 0.0
        %1575 = vmatprep.subr.mxu0 0.0
        %1576 = vmatpush1.msra.mxu0 0.0
        %1577 = vmatprep.subr.mxu0 0.0
        %1578 = vmatpush1.msra.mxu0 0.0
        %1579 = vmatprep.subr.mxu0 0.0
        %1580 = vmatpush1.msra.mxu0 0.0
        %1581 = vmatprep.subr.mxu0 0.0
        %1582 = vmatpush1.msra.mxu0 0.0
        %1583 = vmatprep.subr.mxu0 0.0
        %1584 = vmatpush1.msra.mxu0 0.0
        %1585 = vmatprep.subr.mxu0 0.0
        %1586 = vmatpush1.msra.mxu0 0.0
        %1587 = vmatprep.subr.mxu0 0.0
        %1588 = vmatpush1.msra.mxu0 0.0
        %1589 = vmatprep.subr.mxu0 0.0
        %1590 = vmatpush1.msra.mxu0 0.0
        %1591 = vmatprep.subr.mxu0 0.0
        %1592 = vmatpush1.msra.mxu0 0.0
        %1593 = vmatprep.subr.mxu0 0.0
        %1594 = vmatpush1.msra.mxu0 0.0
        %1595 = vmatprep.subr.mxu0 0.0
        %1596 = vmatpush1.msra.mxu0 %v1558
        %1597 = vmatprep.subr.mxu0 0.0
        %1598 = vmatpush1.msra.mxu0 %v1557
        %1599 = vmatprep.subr.mxu0 0.0
        %1600 = vmatpush2.msra.mxu0 0.0
        %1601 = vmatprep.subr.mxu0 0.0
        %1602 = vmatpush2.msra.mxu0 0.0
        %1603 = vmatprep.subr.mxu0 0.0
        %1604 = vmatpush2.msra.mxu0 0.0
        %1605 = vmatprep.subr.mxu0 0.0
        %1606 = vmatpush2.msra.mxu0 0.0
        %1607 = vmatprep.subr.mxu0 0.0
        %1608 = vmatpush2.msra.mxu0 0.0
        %1609 = vmatprep.subr.mxu0 0.0
        %1610 = vmatpush2.msra.mxu0 0.0
        %1611 = vmatprep.subr.mxu0 0.0
        %1612 = vmatpush2.msra.mxu0 0.0
        %1613 = vmatprep.subr.mxu0 0.0
        %1614 = vmatpush2.msra.mxu0 0.0
        %1615 = vmatprep.subr.mxu0 0.0
        %1616 = vmatpush2.msra.mxu0 0.0
        %1617 = vmatprep.subr.mxu0 0.0
        %1618 = vmatpush2.msra.mxu0 0.0
        %1619 = vmatprep.subr.mxu0 0.0
        %1620 = vmatpush2.msra.mxu0 0.0
        %1621 = vmatprep.subr.mxu0 0.0
        %1622 = vmatpush2.msra.mxu0 0.0
        %1623 = vmatprep.subr.mxu0 0.0
        %1624 = vmatpush2.msra.mxu0 0.0
        %1625 = vmatprep.subr.mxu0 0.0
        %1626 = vmatpush2.msra.mxu0 0.0
        %1627 = vmatprep.subr.mxu0 0.0
        %1628 = vmatpush2.msra.mxu0 0.0
        %1629 = vmatprep.subr.mxu0 0.0
        %1630 = vmatpush2.msra.mxu0 0.0
        %1631 = vmatprep.mubr.f32.mxu0 0.0
        %1632 = vmatmul.mubr.f32.gmra.mxu0 %v1562
        %v1633 = vpop.f32.mrf.mxu0
        %v1634 = vadd.f32 0.0, %v1633
        %v1635 = vpop.f32.mrf.mxu0
        %1636 = vmatprep.mubr.f32.mxu0 0.0
        %1637 = vmatmul.mubr.f32.gmra.mxu0 %v1565
        %v1638 = vpop.f32.mrf.mxu0
        %v1639 = vadd.f32 0.0, %v1638
        %v1640 = vpop.f32.mrf.mxu0
        %1641 = vdwg.mxu0
        %1642 = vrot.lane.b32.xlu0 %v1536, 65
        %v1643 = vpop.permute.xlu0 %1642
        %1644 = vrot.lane.b32.xlu0 %v1537, 65
        %v1645 = vpop.permute.xlu0 %1644
        %1646 = vrot.lane.b32.xlu0 %v1538, 65
        %v1647 = vpop.permute.xlu0 %1646
        %1648 = vrot.lane.b32.xlu0 %v1539, 65
        %v1649 = vpop.permute.xlu0 %1648
        %v1650 = vsel %vm939, %v1643, %v1645
        %v1651 = vsel %vm939, %v1647, %v1649
        %v1655 = vsel %vm752, %v1540, 0
        %v1658 = vsel %vm752, %v1541, 0
        %1660 = vmatprep.subr.mxu0 0.0
        %1661 = vmatpush1.msra.mxu0 0.0
        %1662 = vmatprep.subr.mxu0 0.0
        %1663 = vmatpush1.msra.mxu0 0.0
        %1664 = vmatprep.subr.mxu0 0.0
        %1665 = vmatpush1.msra.mxu0 0.0
        %1666 = vmatprep.subr.mxu0 0.0
        %1667 = vmatpush1.msra.mxu0 0.0
        %1668 = vmatprep.subr.mxu0 0.0
        %1669 = vmatpush1.msra.mxu0 0.0
        %1670 = vmatprep.subr.mxu0 0.0
        %1671 = vmatpush1.msra.mxu0 0.0
        %1672 = vmatprep.subr.mxu0 0.0
        %1673 = vmatpush1.msra.mxu0 0.0
        %1674 = vmatprep.subr.mxu0 0.0
        %1675 = vmatpush1.msra.mxu0 0.0
        %1676 = vmatprep.subr.mxu0 0.0
        %1677 = vmatpush1.msra.mxu0 0.0
        %1678 = vmatprep.subr.mxu0 0.0
        %1679 = vmatpush1.msra.mxu0 0.0
        %1680 = vmatprep.subr.mxu0 0.0
        %1681 = vmatpush1.msra.mxu0 0.0
        %1682 = vmatprep.subr.mxu0 0.0
        %1683 = vmatpush1.msra.mxu0 0.0
        %1684 = vmatprep.subr.mxu0 0.0
        %1685 = vmatpush1.msra.mxu0 0.0
        %1686 = vmatprep.subr.mxu0 0.0
        %1687 = vmatpush1.msra.mxu0 0.0
        %1688 = vmatprep.subr.mxu0 0.0
        %1689 = vmatpush1.msra.mxu0 %v1651
        %1690 = vmatprep.subr.mxu0 0.0
        %1691 = vmatpush1.msra.mxu0 %v1650
        %1692 = vmatprep.subr.mxu0 0.0
        %1693 = vmatpush2.msra.mxu0 0.0
        %1694 = vmatprep.subr.mxu0 0.0
        %1695 = vmatpush2.msra.mxu0 0.0
        %1696 = vmatprep.subr.mxu0 0.0
        %1697 = vmatpush2.msra.mxu0 0.0
        %1698 = vmatprep.subr.mxu0 0.0
        %1699 = vmatpush2.msra.mxu0 0.0
        %1700 = vmatprep.subr.mxu0 0.0
        %1701 = vmatpush2.msra.mxu0 0.0
        %1702 = vmatprep.subr.mxu0 0.0
        %1703 = vmatpush2.msra.mxu0 0.0
        %1704 = vmatprep.subr.mxu0 0.0
        %1705 = vmatpush2.msra.mxu0 0.0
        %1706 = vmatprep.subr.mxu0 0.0
        %1707 = vmatpush2.msra.mxu0 0.0
        %1708 = vmatprep.subr.mxu0 0.0
        %1709 = vmatpush2.msra.mxu0 0.0
        %1710 = vmatprep.subr.mxu0 0.0
        %1711 = vmatpush2.msra.mxu0 0.0
        %1712 = vmatprep.subr.mxu0 0.0
        %1713 = vmatpush2.msra.mxu0 0.0
        %1714 = vmatprep.subr.mxu0 0.0
        %1715 = vmatpush2.msra.mxu0 0.0
        %1716 = vmatprep.subr.mxu0 0.0
        %1717 = vmatpush2.msra.mxu0 0.0
        %1718 = vmatprep.subr.mxu0 0.0
        %1719 = vmatpush2.msra.mxu0 0.0
        %1720 = vmatprep.subr.mxu0 0.0
        %1721 = vmatpush2.msra.mxu0 0.0
        %1722 = vmatprep.subr.mxu0 0.0
        %1723 = vmatpush2.msra.mxu0 0.0
        %1724 = vmatprep.mubr.f32.mxu0 0.0
        %1725 = vmatmul.mubr.f32.gmra.mxu0 %v1655
        %v1726 = vpop.f32.mrf.mxu0
        %v1727 = vadd.f32 %v1634, %v1726
        %v1728 = vpop.f32.mrf.mxu0
        %1729 = vmatprep.mubr.f32.mxu0 0.0
        %1730 = vmatmul.mubr.f32.gmra.mxu0 %v1658
        %v1731 = vpop.f32.mrf.mxu0
        %v1732 = vadd.f32 %v1639, %v1731
        %v1733 = vpop.f32.mrf.mxu0
        %1734 = vdwg.mxu0
        %s1735 = scalar_lea.vmem %s5, 32
        %v1736 = vld [vmem:[%s1735] sm:$0xff]
        %v1737 = vld [vmem:[%s1735 + $0x8] sm:$0xff]
        %1738 = vrot.lane.b32.xlu0 %v1536, 63
        %v1739 = vpop.permute.xlu0 %1738
        %1740 = vrot.lane.b32.xlu0 %v1537, 63
        %v1741 = vpop.permute.xlu0 %1740
        %1742 = vrot.lane.b32.xlu0 %v1538, 63
        %v1743 = vpop.permute.xlu0 %1742
        %1744 = vrot.lane.b32.xlu0 %v1539, 63
        %v1745 = vpop.permute.xlu0 %1744
        %v1746 = vsel %vm1137, %v1739, %v1741
        %v1747 = vsel %vm1137, %v1743, %v1745
        %v1751 = vsel %vm752, %v1736, 0
        %v1754 = vsel %vm752, %v1737, 0
        %1756 = vmatprep.subr.mxu0 0.0
        %1757 = vmatpush1.msra.mxu0 0.0
        %1758 = vmatprep.subr.mxu0 0.0
        %1759 = vmatpush1.msra.mxu0 0.0
        %1760 = vmatprep.subr.mxu0 0.0
        %1761 = vmatpush1.msra.mxu0 0.0
        %1762 = vmatprep.subr.mxu0 0.0
        %1763 = vmatpush1.msra.mxu0 0.0
        %1764 = vmatprep.subr.mxu0 0.0
        %1765 = vmatpush1.msra.mxu0 0.0
        %1766 = vmatprep.subr.mxu0 0.0
        %1767 = vmatpush1.msra.mxu0 0.0
        %1768 = vmatprep.subr.mxu0 0.0
        %1769 = vmatpush1.msra.mxu0 0.0
        %1770 = vmatprep.subr.mxu0 0.0
        %1771 = vmatpush1.msra.mxu0 0.0
        %1772 = vmatprep.subr.mxu0 0.0
        %1773 = vmatpush1.msra.mxu0 0.0
        %1774 = vmatprep.subr.mxu0 0.0
        %1775 = vmatpush1.msra.mxu0 0.0
        %1776 = vmatprep.subr.mxu0 0.0
        %1777 = vmatpush1.msra.mxu0 0.0
        %1778 = vmatprep.subr.mxu0 0.0
        %1779 = vmatpush1.msra.mxu0 0.0
        %1780 = vmatprep.subr.mxu0 0.0
        %1781 = vmatpush1.msra.mxu0 0.0
        %1782 = vmatprep.subr.mxu0 0.0
        %1783 = vmatpush1.msra.mxu0 0.0
        %1784 = vmatprep.subr.mxu0 0.0
        %1785 = vmatpush1.msra.mxu0 %v1747
        %1786 = vmatprep.subr.mxu0 0.0
        %1787 = vmatpush1.msra.mxu0 %v1746
        %1788 = vmatprep.subr.mxu0 0.0
        %1789 = vmatpush2.msra.mxu0 0.0
        %1790 = vmatprep.subr.mxu0 0.0
        %1791 = vmatpush2.msra.mxu0 0.0
        %1792 = vmatprep.subr.mxu0 0.0
        %1793 = vmatpush2.msra.mxu0 0.0
        %1794 = vmatprep.subr.mxu0 0.0
        %1795 = vmatpush2.msra.mxu0 0.0
        %1796 = vmatprep.subr.mxu0 0.0
        %1797 = vmatpush2.msra.mxu0 0.0
        %1798 = vmatprep.subr.mxu0 0.0
        %1799 = vmatpush2.msra.mxu0 0.0
        %1800 = vmatprep.subr.mxu0 0.0
        %1801 = vmatpush2.msra.mxu0 0.0
        %1802 = vmatprep.subr.mxu0 0.0
        %1803 = vmatpush2.msra.mxu0 0.0
        %1804 = vmatprep.subr.mxu0 0.0
        %1805 = vmatpush2.msra.mxu0 0.0
        %1806 = vmatprep.subr.mxu0 0.0
        %1807 = vmatpush2.msra.mxu0 0.0
        %1808 = vmatprep.subr.mxu0 0.0
        %1809 = vmatpush2.msra.mxu0 0.0
        %1810 = vmatprep.subr.mxu0 0.0
        %1811 = vmatpush2.msra.mxu0 0.0
        %1812 = vmatprep.subr.mxu0 0.0
        %1813 = vmatpush2.msra.mxu0 0.0
        %1814 = vmatprep.subr.mxu0 0.0
        %1815 = vmatpush2.msra.mxu0 0.0
        %1816 = vmatprep.subr.mxu0 0.0
        %1817 = vmatpush2.msra.mxu0 0.0
        %1818 = vmatprep.subr.mxu0 0.0
        %1819 = vmatpush2.msra.mxu0 0.0
        %1820 = vmatprep.mubr.f32.mxu0 0.0
        %1821 = vmatmul.mubr.f32.gmra.mxu0 %v1751
        %v1822 = vpop.f32.mrf.mxu0
        %v1823 = vadd.f32 0.0, %v1822
        %v1824 = vpop.f32.mrf.mxu0
        %1825 = vmatprep.mubr.f32.mxu0 0.0
        %1826 = vmatmul.mubr.f32.gmra.mxu0 %v1754
        %v1827 = vpop.f32.mrf.mxu0
        %v1828 = vadd.f32 0.0, %v1827
        %v1829 = vpop.f32.mrf.mxu0
        %1830 = vdwg.mxu0
        %v1831 = vadd.f32 %v1727, %v1823
        %v1832 = vadd.f32 %v1732, %v1828
        %v1833 = vld [vmem:[%s6] sm:$0xff]
        %v1834 = vld [vmem:[%s6 + $0x8] sm:$0xff]
        %1836 = vset.pattern.permute.xlu0 0
        %1837 = vperm.xlu0 %1836, %v1833
        %v1838 = vpop.permute.xlu0 %1837
        %1841 = vset.pattern.permute.xlu0 0
        %1842 = vperm.xlu0 %1841, %v1834
        %v1843 = vpop.permute.xlu0 %1842
        %v1845 = vadd.f32 %v1831, %v1838
        %v1846 = vadd.f32 %v1832, %v1843
        %v1847 = vmax.f32 %v1845, 0.0
        %v1848 = vmax.f32 %v1846, 0.0
        %v1849 = vld [vmem:[#allocation6] sm:$0xff]
        %v1850 = vld [vmem:[#allocation6 + $0x8] sm:$0xff]
        %v1851 = vld [vmem:[%s4] sm:$0xff]
        %v1852 = vld [vmem:[%s4 + $0x8] sm:$0xff]
        %1854 = vset.pattern.permute.xlu0 0
        %1855 = vperm.xlu0 %1854, %v1851
        %v1856 = vpop.permute.xlu0 %1855
        %1859 = vset.pattern.permute.xlu0 0
        %1860 = vperm.xlu0 %1859, %v1852
        %v1861 = vpop.permute.xlu0 %1860
        %v1864 = vsel %vm752, %v1849, 0
        %v1867 = vsel %vm752, %v1850, 0
        %1869 = vmatprep.subr.mxu0 0.0
        %1870 = vmatpush1.msra.mxu0 0.0
        %1871 = vmatprep.subr.mxu0 0.0
        %1872 = vmatpush1.msra.mxu0 0.0
        %1873 = vmatprep.subr.mxu0 0.0
        %1874 = vmatpush1.msra.mxu0 0.0
        %1875 = vmatprep.subr.mxu0 0.0
        %1876 = vmatpush1.msra.mxu0 0.0
        %1877 = vmatprep.subr.mxu0 0.0
        %1878 = vmatpush1.msra.mxu0 0.0
        %1879 = vmatprep.subr.mxu0 0.0
        %1880 = vmatpush1.msra.mxu0 0.0
        %1881 = vmatprep.subr.mxu0 0.0
        %1882 = vmatpush1.msra.mxu0 0.0
        %1883 = vmatprep.subr.mxu0 0.0
        %1884 = vmatpush1.msra.mxu0 0.0
        %1885 = vmatprep.subr.mxu0 0.0
        %1886 = vmatpush1.msra.mxu0 0.0
        %1887 = vmatprep.subr.mxu0 0.0
        %1888 = vmatpush1.msra.mxu0 0.0
        %1889 = vmatprep.subr.mxu0 0.0
        %1890 = vmatpush1.msra.mxu0 0.0
        %1891 = vmatprep.subr.mxu0 0.0
        %1892 = vmatpush1.msra.mxu0 0.0
        %1893 = vmatprep.subr.mxu0 0.0
        %1894 = vmatpush1.msra.mxu0 0.0
        %1895 = vmatprep.subr.mxu0 0.0
        %1896 = vmatpush1.msra.mxu0 0.0
        %1897 = vmatprep.subr.mxu0 %v729
        %1898 = vmatpush1.msra.mxu0 %v728
        %1899 = vmatprep.subr.mxu0 %v727
        %1900 = vmatpush1.msra.mxu0 %v726
        %1901 = vmatprep.subr.mxu0 0.0
        %1902 = vmatpush2.msra.mxu0 0.0
        %1903 = vmatprep.subr.mxu0 0.0
        %1904 = vmatpush2.msra.mxu0 0.0
        %1905 = vmatprep.subr.mxu0 0.0
        %1906 = vmatpush2.msra.mxu0 0.0
        %1907 = vmatprep.subr.mxu0 0.0
        %1908 = vmatpush2.msra.mxu0 0.0
        %1909 = vmatprep.subr.mxu0 0.0
        %1910 = vmatpush2.msra.mxu0 0.0
        %1911 = vmatprep.subr.mxu0 0.0
        %1912 = vmatpush2.msra.mxu0 0.0
        %1913 = vmatprep.subr.mxu0 0.0
        %1914 = vmatpush2.msra.mxu0 0.0
        %1915 = vmatprep.subr.mxu0 0.0
        %1916 = vmatpush2.msra.mxu0 0.0
        %1917 = vmatprep.subr.mxu0 0.0
        %1918 = vmatpush2.msra.mxu0 0.0
        %1919 = vmatprep.subr.mxu0 0.0
        %1920 = vmatpush2.msra.mxu0 0.0
        %1921 = vmatprep.subr.mxu0 0.0
        %1922 = vmatpush2.msra.mxu0 0.0
        %1923 = vmatprep.subr.mxu0 0.0
        %1924 = vmatpush2.msra.mxu0 0.0
        %1925 = vmatprep.subr.mxu0 0.0
        %1926 = vmatpush2.msra.mxu0 0.0
        %1927 = vmatprep.subr.mxu0 0.0
        %1928 = vmatpush2.msra.mxu0 0.0
        %1929 = vmatprep.subr.mxu0 0.0
        %1930 = vmatpush2.msra.mxu0 0.0
        %1931 = vmatprep.subr.mxu0 0.0
        %1932 = vmatpush2.msra.mxu0 0.0
        %1933 = vmatprep.mubr.f32.mxu0 0.0
        %1934 = vmatmul.mubr.f32.gmra.mxu0 %v1864
        %v1935 = vpop.f32.mrf.mxu0
        %v1936 = vadd.f32 %v1856, %v1935
        %v1937 = vpop.f32.mrf.mxu0
        %v1938 = vadd.f32 %v1856, %v1937
        %1939 = vmatprep.mubr.f32.mxu0 0.0
        %1940 = vmatmul.mubr.f32.gmra.mxu0 %v1867
        %v1941 = vpop.f32.mrf.mxu0
        %v1942 = vadd.f32 %v1861, %v1941
        %v1943 = vpop.f32.mrf.mxu0
        %v1944 = vadd.f32 %v1861, %v1943
        %1945 = vdwg.mxu0
        %v1946 = vmax.f32 %v1936, 0.0
        %v1947 = vmax.f32 %v1938, 0.0
        %v1948 = vmax.f32 %v1942, 0.0
        %v1949 = vmax.f32 %v1944, 0.0
        %v1950 = vld [vmem:[%s17] sm:$0x3]
        %v1952 = vlaneseq
        %v1953 = vshrl.u32 %v1952, 7
        %v1954 = vsub.s32 0, %v1953
        %v1955 = vrot.slane %v1950, %v1954
        %v1956 = vlaneseq
        %v1957 = vshrl.u32 %v1956, 7
        %v1958 = vsub.s32 1, %v1957
        %v1959 = vrot.slane %v1950, %v1958
        %v1962 = vmul.f32 %v1946, %v1955
        %v1963 = vmul.f32 %v1947, %v1959
        %v1964 = vmul.f32 %v1948, %v1955
        %v1965 = vmul.f32 %v1949, %v1959
        %v1966 = vld [vmem:[%s7] sm:$0xff]
        %v1967 = vld [vmem:[%s7 + $0x8] sm:$0xff]
        %s1968 = scalar_lea.vmem %s7, 16
        %v1969 = vld [vmem:[%s1968] sm:$0xff]
        %v1970 = vld [vmem:[%s1968 + $0x8] sm:$0xff]
        %1975 = vrot.lane.b32.xlu0 %v1962, 66
        %v1976 = vpop.permute.xlu0 %1975
        %1977 = vrot.lane.b32.xlu0 %v1963, 66
        %v1978 = vpop.permute.xlu0 %1977
        %1979 = vrot.lane.b32.xlu0 %v1964, 66
        %v1980 = vpop.permute.xlu0 %1979
        %1981 = vrot.lane.b32.xlu0 %v1965, 66
        %v1982 = vpop.permute.xlu0 %1981
        %v1983 = vsel %vm747, %v1976, %v1978
        %v1984 = vsel %vm747, %v1980, %v1982
        %v1988 = vsel %vm752, %v1969, 0
        %v1991 = vsel %vm752, %v1970, 0
        %1993 = vmatprep.subr.mxu0 0.0
        %1994 = vmatpush1.msra.mxu0 0.0
        %1995 = vmatprep.subr.mxu0 0.0
        %1996 = vmatpush1.msra.mxu0 0.0
        %1997 = vmatprep.subr.mxu0 0.0
        %1998 = vmatpush1.msra.mxu0 0.0
        %1999 = vmatprep.subr.mxu0 0.0
        %2000 = vmatpush1.msra.mxu0 0.0
        %2001 = vmatprep.subr.mxu0 0.0
        %2002 = vmatpush1.msra.mxu0 0.0
        %2003 = vmatprep.subr.mxu0 0.0
        %2004 = vmatpush1.msra.mxu0 0.0
        %2005 = vmatprep.subr.mxu0 0.0
        %2006 = vmatpush1.msra.mxu0 0.0
        %2007 = vmatprep.subr.mxu0 0.0
        %2008 = vmatpush1.msra.mxu0 0.0
        %2009 = vmatprep.subr.mxu0 0.0
        %2010 = vmatpush1.msra.mxu0 0.0
        %2011 = vmatprep.subr.mxu0 0.0
        %2012 = vmatpush1.msra.mxu0 0.0
        %2013 = vmatprep.subr.mxu0 0.0
        %2014 = vmatpush1.msra.mxu0 0.0
        %2015 = vmatprep.subr.mxu0 0.0
        %2016 = vmatpush1.msra.mxu0 0.0
        %2017 = vmatprep.subr.mxu0 0.0
        %2018 = vmatpush1.msra.mxu0 0.0
        %2019 = vmatprep.subr.mxu0 0.0
        %2020 = vmatpush1.msra.mxu0 0.0
        %2021 = vmatprep.subr.mxu0 0.0
        %2022 = vmatpush1.msra.mxu0 %v1984
        %2023 = vmatprep.subr.mxu0 0.0
        %2024 = vmatpush1.msra.mxu0 %v1983
        %2025 = vmatprep.subr.mxu0 0.0
        %2026 = vmatpush2.msra.mxu0 0.0
        %2027 = vmatprep.subr.mxu0 0.0
        %2028 = vmatpush2.msra.mxu0 0.0
        %2029 = vmatprep.subr.mxu0 0.0
        %2030 = vmatpush2.msra.mxu0 0.0
        %2031 = vmatprep.subr.mxu0 0.0
        %2032 = vmatpush2.msra.mxu0 0.0
        %2033 = vmatprep.subr.mxu0 0.0
        %2034 = vmatpush2.msra.mxu0 0.0
        %2035 = vmatprep.subr.mxu0 0.0
        %2036 = vmatpush2.msra.mxu0 0.0
        %2037 = vmatprep.subr.mxu0 0.0
        %2038 = vmatpush2.msra.mxu0 0.0
        %2039 = vmatprep.subr.mxu0 0.0
        %2040 = vmatpush2.msra.mxu0 0.0
        %2041 = vmatprep.subr.mxu0 0.0
        %2042 = vmatpush2.msra.mxu0 0.0
        %2043 = vmatprep.subr.mxu0 0.0
        %2044 = vmatpush2.msra.mxu0 0.0
        %2045 = vmatprep.subr.mxu0 0.0
        %2046 = vmatpush2.msra.mxu0 0.0
        %2047 = vmatprep.subr.mxu0 0.0
        %2048 = vmatpush2.msra.mxu0 0.0
        %2049 = vmatprep.subr.mxu0 0.0
        %2050 = vmatpush2.msra.mxu0 0.0
        %2051 = vmatprep.subr.mxu0 0.0
        %2052 = vmatpush2.msra.mxu0 0.0
        %2053 = vmatprep.subr.mxu0 0.0
        %2054 = vmatpush2.msra.mxu0 0.0
        %2055 = vmatprep.subr.mxu0 0.0
        %2056 = vmatpush2.msra.mxu0 0.0
        %2057 = vmatprep.mubr.f32.mxu0 0.0
        %2058 = vmatmul.mubr.f32.gmra.mxu0 %v1988
        %v2059 = vpop.f32.mrf.mxu0
        %v2060 = vadd.f32 0.0, %v2059
        %v2061 = vpop.f32.mrf.mxu0
        %2062 = vmatprep.mubr.f32.mxu0 0.0
        %2063 = vmatmul.mubr.f32.gmra.mxu0 %v1991
        %v2064 = vpop.f32.mrf.mxu0
        %v2065 = vadd.f32 0.0, %v2064
        %v2066 = vpop.f32.mrf.mxu0
        %2067 = vdwg.mxu0
        %2068 = vrot.lane.b32.xlu0 %v1962, 68
        %v2069 = vpop.permute.xlu0 %2068
        %2070 = vrot.lane.b32.xlu0 %v1963, 68
        %v2071 = vpop.permute.xlu0 %2070
        %2072 = vrot.lane.b32.xlu0 %v1964, 68
        %v2073 = vpop.permute.xlu0 %2072
        %2074 = vrot.lane.b32.xlu0 %v1965, 68
        %v2075 = vpop.permute.xlu0 %2074
        %vm2076 = vcmask 556032
        %v2077 = vsel %vm2076, %v2069, %v2071
        %v2078 = vsel %vm2076, %v2073, %v2075
        %v2082 = vsel %vm752, %v1966, 0
        %v2085 = vsel %vm752, %v1967, 0
        %2087 = vmatprep.subr.mxu0 0.0
        %2088 = vmatpush1.msra.mxu0 0.0
        %2089 = vmatprep.subr.mxu0 0.0
        %2090 = vmatpush1.msra.mxu0 0.0
        %2091 = vmatprep.subr.mxu0 0.0
        %2092 = vmatpush1.msra.mxu0 0.0
        %2093 = vmatprep.subr.mxu0 0.0
        %2094 = vmatpush1.msra.mxu0 0.0
        %2095 = vmatprep.subr.mxu0 0.0
        %2096 = vmatpush1.msra.mxu0 0.0
        %2097 = vmatprep.subr.mxu0 0.0
        %2098 = vmatpush1.msra.mxu0 0.0
        %2099 = vmatprep.subr.mxu0 0.0
        %2100 = vmatpush1.msra.mxu0 0.0
        %2101 = vmatprep.subr.mxu0 0.0
        %2102 = vmatpush1.msra.mxu0 0.0
        %2103 = vmatprep.subr.mxu0 0.0
        %2104 = vmatpush1.msra.mxu0 0.0
        %2105 = vmatprep.subr.mxu0 0.0
        %2106 = vmatpush1.msra.mxu0 0.0
        %2107 = vmatprep.subr.mxu0 0.0
        %2108 = vmatpush1.msra.mxu0 0.0
        %2109 = vmatprep.subr.mxu0 0.0
        %2110 = vmatpush1.msra.mxu0 0.0
        %2111 = vmatprep.subr.mxu0 0.0
        %2112 = vmatpush1.msra.mxu0 0.0
        %2113 = vmatprep.subr.mxu0 0.0
        %2114 = vmatpush1.msra.mxu0 0.0
        %2115 = vmatprep.subr.mxu0 0.0
        %2116 = vmatpush1.msra.mxu0 %v2078
        %2117 = vmatprep.subr.mxu0 0.0
        %2118 = vmatpush1.msra.mxu0 %v2077
        %2119 = vmatprep.subr.mxu0 0.0
        %2120 = vmatpush2.msra.mxu0 0.0
        %2121 = vmatprep.subr.mxu0 0.0
        %2122 = vmatpush2.msra.mxu0 0.0
        %2123 = vmatprep.subr.mxu0 0.0
        %2124 = vmatpush2.msra.mxu0 0.0
        %2125 = vmatprep.subr.mxu0 0.0
        %2126 = vmatpush2.msra.mxu0 0.0
        %2127 = vmatprep.subr.mxu0 0.0
        %2128 = vmatpush2.msra.mxu0 0.0
        %2129 = vmatprep.subr.mxu0 0.0
        %2130 = vmatpush2.msra.mxu0 0.0
        %2131 = vmatprep.subr.mxu0 0.0
        %2132 = vmatpush2.msra.mxu0 0.0
        %2133 = vmatprep.subr.mxu0 0.0
        %2134 = vmatpush2.msra.mxu0 0.0
        %2135 = vmatprep.subr.mxu0 0.0
        %2136 = vmatpush2.msra.mxu0 0.0
        %2137 = vmatprep.subr.mxu0 0.0
        %2138 = vmatpush2.msra.mxu0 0.0
        %2139 = vmatprep.subr.mxu0 0.0
        %2140 = vmatpush2.msra.mxu0 0.0
        %2141 = vmatprep.subr.mxu0 0.0
        %2142 = vmatpush2.msra.mxu0 0.0
        %2143 = vmatprep.subr.mxu0 0.0
        %2144 = vmatpush2.msra.mxu0 0.0
        %2145 = vmatprep.subr.mxu0 0.0
        %2146 = vmatpush2.msra.mxu0 0.0
        %2147 = vmatprep.subr.mxu0 0.0
        %2148 = vmatpush2.msra.mxu0 0.0
        %2149 = vmatprep.subr.mxu0 0.0
        %2150 = vmatpush2.msra.mxu0 0.0
        %2151 = vmatprep.mubr.f32.mxu0 0.0
        %2152 = vmatmul.mubr.f32.gmra.mxu0 %v2082
        %v2153 = vpop.f32.mrf.mxu0
        %v2154 = vadd.f32 %v2060, %v2153
        %v2155 = vpop.f32.mrf.mxu0
        %2156 = vmatprep.mubr.f32.mxu0 0.0
        %2157 = vmatmul.mubr.f32.gmra.mxu0 %v2085
        %v2158 = vpop.f32.mrf.mxu0
        %v2159 = vadd.f32 %v2065, %v2158
        %v2160 = vpop.f32.mrf.mxu0
        %2161 = vdwg.mxu0
        %s2162 = scalar_lea.vmem %s7, 32
        %v2163 = vld [vmem:[%s2162] sm:$0xff]
        %v2164 = vld [vmem:[%s2162 + $0x8] sm:$0xff]
        %2165 = vrot.lane.b32.xlu0 %v1962, 64
        %v2166 = vpop.permute.xlu0 %2165
        %2167 = vrot.lane.b32.xlu0 %v1963, 64
        %v2168 = vpop.permute.xlu0 %2167
        %2169 = vrot.lane.b32.xlu0 %v1964, 64
        %v2170 = vpop.permute.xlu0 %2169
        %2171 = vrot.lane.b32.xlu0 %v1965, 64
        %v2172 = vpop.permute.xlu0 %2171
        %v2173 = vsel %vm1038, %v2166, %v2168
        %v2174 = vsel %vm1038, %v2170, %v2172
        %v2178 = vsel %vm752, %v2163, 0
        %v2181 = vsel %vm752, %v2164, 0
        %2183 = vmatprep.subr.mxu0 0.0
        %2184 = vmatpush1.msra.mxu0 0.0
        %2185 = vmatprep.subr.mxu0 0.0
        %2186 = vmatpush1.msra.mxu0 0.0
        %2187 = vmatprep.subr.mxu0 0.0
        %2188 = vmatpush1.msra.mxu0 0.0
        %2189 = vmatprep.subr.mxu0 0.0
        %2190 = vmatpush1.msra.mxu0 0.0
        %2191 = vmatprep.subr.mxu0 0.0
        %2192 = vmatpush1.msra.mxu0 0.0
        %2193 = vmatprep.subr.mxu0 0.0
        %2194 = vmatpush1.msra.mxu0 0.0
        %2195 = vmatprep.subr.mxu0 0.0
        %2196 = vmatpush1.msra.mxu0 0.0
        %2197 = vmatprep.subr.mxu0 0.0
        %2198 = vmatpush1.msra.mxu0 0.0
        %2199 = vmatprep.subr.mxu0 0.0
        %2200 = vmatpush1.msra.mxu0 0.0
        %2201 = vmatprep.subr.mxu0 0.0
        %2202 = vmatpush1.msra.mxu0 0.0
        %2203 = vmatprep.subr.mxu0 0.0
        %2204 = vmatpush1.msra.mxu0 0.0
        %2205 = vmatprep.subr.mxu0 0.0
        %2206 = vmatpush1.msra.mxu0 0.0
        %2207 = vmatprep.subr.mxu0 0.0
        %2208 = vmatpush1.msra.mxu0 0.0
        %2209 = vmatprep.subr.mxu0 0.0
        %2210 = vmatpush1.msra.mxu0 0.0
        %2211 = vmatprep.subr.mxu0 0.0
        %2212 = vmatpush1.msra.mxu0 %v2174
        %2213 = vmatprep.subr.mxu0 0.0
        %2214 = vmatpush1.msra.mxu0 %v2173
        %2215 = vmatprep.subr.mxu0 0.0
        %2216 = vmatpush2.msra.mxu0 0.0
        %2217 = vmatprep.subr.mxu0 0.0
        %2218 = vmatpush2.msra.mxu0 0.0
        %2219 = vmatprep.subr.mxu0 0.0
        %2220 = vmatpush2.msra.mxu0 0.0
        %2221 = vmatprep.subr.mxu0 0.0
        %2222 = vmatpush2.msra.mxu0 0.0
        %2223 = vmatprep.subr.mxu0 0.0
        %2224 = vmatpush2.msra.mxu0 0.0
        %2225 = vmatprep.subr.mxu0 0.0
        %2226 = vmatpush2.msra.mxu0 0.0
        %2227 = vmatprep.subr.mxu0 0.0
        %2228 = vmatpush2.msra.mxu0 0.0
        %2229 = vmatprep.subr.mxu0 0.0
        %2230 = vmatpush2.msra.mxu0 0.0
        %2231 = vmatprep.subr.mxu0 0.0
        %2232 = vmatpush2.msra.mxu0 0.0
        %2233 = vmatprep.subr.mxu0 0.0
        %2234 = vmatpush2.msra.mxu0 0.0
        %2235 = vmatprep.subr.mxu0 0.0
        %2236 = vmatpush2.msra.mxu0 0.0
        %2237 = vmatprep.subr.mxu0 0.0
        %2238 = vmatpush2.msra.mxu0 0.0
        %2239 = vmatprep.subr.mxu0 0.0
        %2240 = vmatpush2.msra.mxu0 0.0
        %2241 = vmatprep.subr.mxu0 0.0
        %2242 = vmatpush2.msra.mxu0 0.0
        %2243 = vmatprep.subr.mxu0 0.0
        %2244 = vmatpush2.msra.mxu0 0.0
        %2245 = vmatprep.subr.mxu0 0.0
        %2246 = vmatpush2.msra.mxu0 0.0
        %2247 = vmatprep.mubr.f32.mxu0 0.0
        %2248 = vmatmul.mubr.f32.gmra.mxu0 %v2178
        %v2249 = vpop.f32.mrf.mxu0
        %v2250 = vadd.f32 0.0, %v2249
        %v2251 = vpop.f32.mrf.mxu0
        %2252 = vmatprep.mubr.f32.mxu0 0.0
        %2253 = vmatmul.mubr.f32.gmra.mxu0 %v2181
        %v2254 = vpop.f32.mrf.mxu0
        %v2255 = vadd.f32 0.0, %v2254
        %v2256 = vpop.f32.mrf.mxu0
        %2257 = vdwg.mxu0
        %v2258 = vadd.f32 %v2154, %v2250
        %v2259 = vadd.f32 %v2159, %v2255
        %s2260 = scalar_lea.vmem %s7, 48
        %v2261 = vld [vmem:[%s2260] sm:$0xff]
        %v2262 = vld [vmem:[%s2260 + $0x8] sm:$0xff]
        %2263 = vrot.lane.b32.xlu0 %v1962, 62
        %v2264 = vpop.permute.xlu0 %2263
        %2265 = vrot.lane.b32.xlu0 %v1963, 62
        %v2266 = vpop.permute.xlu0 %2265
        %2267 = vrot.lane.b32.xlu0 %v1964, 62
        %v2268 = vpop.permute.xlu0 %2267
        %2269 = vrot.lane.b32.xlu0 %v1965, 62
        %v2270 = vpop.permute.xlu0 %2269
        %v2271 = vsel %vm1236, %v2264, %v2266
        %v2272 = vsel %vm1236, %v2268, %v2270
        %v2276 = vsel %vm752, %v2261, 0
        %v2279 = vsel %vm752, %v2262, 0
        %2281 = vmatprep.subr.mxu0 0.0
        %2282 = vmatpush1.msra.mxu0 0.0
        %2283 = vmatprep.subr.mxu0 0.0
        %2284 = vmatpush1.msra.mxu0 0.0
        %2285 = vmatprep.subr.mxu0 0.0
        %2286 = vmatpush1.msra.mxu0 0.0
        %2287 = vmatprep.subr.mxu0 0.0
        %2288 = vmatpush1.msra.mxu0 0.0
        %2289 = vmatprep.subr.mxu0 0.0
        %2290 = vmatpush1.msra.mxu0 0.0
        %2291 = vmatprep.subr.mxu0 0.0
        %2292 = vmatpush1.msra.mxu0 0.0
        %2293 = vmatprep.subr.mxu0 0.0
        %2294 = vmatpush1.msra.mxu0 0.0
        %2295 = vmatprep.subr.mxu0 0.0
        %2296 = vmatpush1.msra.mxu0 0.0
        %2297 = vmatprep.subr.mxu0 0.0
        %2298 = vmatpush1.msra.mxu0 0.0
        %2299 = vmatprep.subr.mxu0 0.0
        %2300 = vmatpush1.msra.mxu0 0.0
        %2301 = vmatprep.subr.mxu0 0.0
        %2302 = vmatpush1.msra.mxu0 0.0
        %2303 = vmatprep.subr.mxu0 0.0
        %2304 = vmatpush1.msra.mxu0 0.0
        %2305 = vmatprep.subr.mxu0 0.0
        %2306 = vmatpush1.msra.mxu0 0.0
        %2307 = vmatprep.subr.mxu0 0.0
        %2308 = vmatpush1.msra.mxu0 0.0
        %2309 = vmatprep.subr.mxu0 0.0
        %2310 = vmatpush1.msra.mxu0 %v2272
        %2311 = vmatprep.subr.mxu0 0.0
        %2312 = vmatpush1.msra.mxu0 %v2271
        %2313 = vmatprep.subr.mxu0 0.0
        %2314 = vmatpush2.msra.mxu0 0.0
        %2315 = vmatprep.subr.mxu0 0.0
        %2316 = vmatpush2.msra.mxu0 0.0
        %2317 = vmatprep.subr.mxu0 0.0
        %2318 = vmatpush2.msra.mxu0 0.0
        %2319 = vmatprep.subr.mxu0 0.0
        %2320 = vmatpush2.msra.mxu0 0.0
        %2321 = vmatprep.subr.mxu0 0.0
        %2322 = vmatpush2.msra.mxu0 0.0
        %2323 = vmatprep.subr.mxu0 0.0
        %2324 = vmatpush2.msra.mxu0 0.0
        %2325 = vmatprep.subr.mxu0 0.0
        %2326 = vmatpush2.msra.mxu0 0.0
        %2327 = vmatprep.subr.mxu0 0.0
        %2328 = vmatpush2.msra.mxu0 0.0
        %2329 = vmatprep.subr.mxu0 0.0
        %2330 = vmatpush2.msra.mxu0 0.0
        %2331 = vmatprep.subr.mxu0 0.0
        %2332 = vmatpush2.msra.mxu0 0.0
        %2333 = vmatprep.subr.mxu0 0.0
        %2334 = vmatpush2.msra.mxu0 0.0
        %2335 = vmatprep.subr.mxu0 0.0
        %2336 = vmatpush2.msra.mxu0 0.0
        %2337 = vmatprep.subr.mxu0 0.0
        %2338 = vmatpush2.msra.mxu0 0.0
        %2339 = vmatprep.subr.mxu0 0.0
        %2340 = vmatpush2.msra.mxu0 0.0
        %2341 = vmatprep.subr.mxu0 0.0
        %2342 = vmatpush2.msra.mxu0 0.0
        %2343 = vmatprep.subr.mxu0 0.0
        %2344 = vmatpush2.msra.mxu0 0.0
        %2345 = vmatprep.mubr.f32.mxu0 0.0
        %2346 = vmatmul.mubr.f32.gmra.mxu0 %v2276
        %v2347 = vpop.f32.mrf.mxu0
        %v2348 = vadd.f32 0.0, %v2347
        %v2349 = vpop.f32.mrf.mxu0
        %2350 = vmatprep.mubr.f32.mxu0 0.0
        %2351 = vmatmul.mubr.f32.gmra.mxu0 %v2279
        %v2352 = vpop.f32.mrf.mxu0
        %v2353 = vadd.f32 0.0, %v2352
        %v2354 = vpop.f32.mrf.mxu0
        %2355 = vdwg.mxu0
        %v2356 = vadd.f32 %v2258, %v2348
        %v2357 = vadd.f32 %v2259, %v2353
        %s2358 = scalar_lea.vmem %s7, 64
        %v2359 = vld [vmem:[%s2358] sm:$0xff]
        %v2360 = vld [vmem:[%s2358 + $0x8] sm:$0xff]
        %2361 = vrot.lane.b32.xlu0 %v1962, 60
        %v2362 = vpop.permute.xlu0 %2361
        %2363 = vrot.lane.b32.xlu0 %v1963, 60
        %v2364 = vpop.permute.xlu0 %2363
        %2365 = vrot.lane.b32.xlu0 %v1964, 60
        %v2366 = vpop.permute.xlu0 %2365
        %2367 = vrot.lane.b32.xlu0 %v1965, 60
        %v2368 = vpop.permute.xlu0 %2367
        %vm2369 = vcmask 490496
        %v2370 = vsel %vm2369, %v2362, %v2364
        %v2371 = vsel %vm2369, %v2366, %v2368
        %v2375 = vsel %vm752, %v2359, 0
        %v2378 = vsel %vm752, %v2360, 0
        %2380 = vmatprep.subr.mxu0 0.0
        %2381 = vmatpush1.msra.mxu0 0.0
        %2382 = vmatprep.subr.mxu0 0.0
        %2383 = vmatpush1.msra.mxu0 0.0
        %2384 = vmatprep.subr.mxu0 0.0
        %2385 = vmatpush1.msra.mxu0 0.0
        %2386 = vmatprep.subr.mxu0 0.0
        %2387 = vmatpush1.msra.mxu0 0.0
        %2388 = vmatprep.subr.mxu0 0.0
        %2389 = vmatpush1.msra.mxu0 0.0
        %2390 = vmatprep.subr.mxu0 0.0
        %2391 = vmatpush1.msra.mxu0 0.0
        %2392 = vmatprep.subr.mxu0 0.0
        %2393 = vmatpush1.msra.mxu0 0.0
        %2394 = vmatprep.subr.mxu0 0.0
        %2395 = vmatpush1.msra.mxu0 0.0
        %2396 = vmatprep.subr.mxu0 0.0
        %2397 = vmatpush1.msra.mxu0 0.0
        %2398 = vmatprep.subr.mxu0 0.0
        %2399 = vmatpush1.msra.mxu0 0.0
        %2400 = vmatprep.subr.mxu0 0.0
        %2401 = vmatpush1.msra.mxu0 0.0
        %2402 = vmatprep.subr.mxu0 0.0
        %2403 = vmatpush1.msra.mxu0 0.0
        %2404 = vmatprep.subr.mxu0 0.0
        %2405 = vmatpush1.msra.mxu0 0.0
        %2406 = vmatprep.subr.mxu0 0.0
        %2407 = vmatpush1.msra.mxu0 0.0
        %2408 = vmatprep.subr.mxu0 0.0
        %2409 = vmatpush1.msra.mxu0 %v2371
        %2410 = vmatprep.subr.mxu0 0.0
        %2411 = vmatpush1.msra.mxu0 %v2370
        %2412 = vmatprep.subr.mxu0 0.0
        %2413 = vmatpush2.msra.mxu0 0.0
        %2414 = vmatprep.subr.mxu0 0.0
        %2415 = vmatpush2.msra.mxu0 0.0
        %2416 = vmatprep.subr.mxu0 0.0
        %2417 = vmatpush2.msra.mxu0 0.0
        %2418 = vmatprep.subr.mxu0 0.0
        %2419 = vmatpush2.msra.mxu0 0.0
        %2420 = vmatprep.subr.mxu0 0.0
        %2421 = vmatpush2.msra.mxu0 0.0
        %2422 = vmatprep.subr.mxu0 0.0
        %2423 = vmatpush2.msra.mxu0 0.0
        %2424 = vmatprep.subr.mxu0 0.0
        %2425 = vmatpush2.msra.mxu0 0.0
        %2426 = vmatprep.subr.mxu0 0.0
        %2427 = vmatpush2.msra.mxu0 0.0
        %2428 = vmatprep.subr.mxu0 0.0
        %2429 = vmatpush2.msra.mxu0 0.0
        %2430 = vmatprep.subr.mxu0 0.0
        %2431 = vmatpush2.msra.mxu0 0.0
        %2432 = vmatprep.subr.mxu0 0.0
        %2433 = vmatpush2.msra.mxu0 0.0
        %2434 = vmatprep.subr.mxu0 0.0
        %2435 = vmatpush2.msra.mxu0 0.0
        %2436 = vmatprep.subr.mxu0 0.0
        %2437 = vmatpush2.msra.mxu0 0.0
        %2438 = vmatprep.subr.mxu0 0.0
        %2439 = vmatpush2.msra.mxu0 0.0
        %2440 = vmatprep.subr.mxu0 0.0
        %2441 = vmatpush2.msra.mxu0 0.0
        %2442 = vmatprep.subr.mxu0 0.0
        %2443 = vmatpush2.msra.mxu0 0.0
        %2444 = vmatprep.mubr.f32.mxu0 0.0
        %2445 = vmatmul.mubr.f32.gmra.mxu0 %v2375
        %v2446 = vpop.f32.mrf.mxu0
        %v2447 = vadd.f32 0.0, %v2446
        %v2448 = vpop.f32.mrf.mxu0
        %2449 = vmatprep.mubr.f32.mxu0 0.0
        %2450 = vmatmul.mubr.f32.gmra.mxu0 %v2378
        %v2451 = vpop.f32.mrf.mxu0
        %v2452 = vadd.f32 0.0, %v2451
        %v2453 = vpop.f32.mrf.mxu0
        %2454 = vdwg.mxu0
        %v2455 = vadd.f32 %v2356, %v2447
        %v2456 = vadd.f32 %v2357, %v2452
        %v2457 = vld [vmem:[%s8] sm:$0xff]
        %v2458 = vld [vmem:[%s8 + $0x8] sm:$0xff]
        %2460 = vset.pattern.permute.xlu0 0
        %2461 = vperm.xlu0 %2460, %v2457
        %v2462 = vpop.permute.xlu0 %2461
        %2465 = vset.pattern.permute.xlu0 0
        %2466 = vperm.xlu0 %2465, %v2458
        %v2467 = vpop.permute.xlu0 %2466
        %v2469 = vadd.f32 %v2455, %v2462
        %v2470 = vadd.f32 %v2456, %v2467
        %v2471 = vmax.f32 %v2469, 0.0
        %v2472 = vmax.f32 %v2470, 0.0
        %2473 = vrot.lane.b32.xlu0 %v726, 127
        %v2474 = vpop.permute.xlu0 %2473
        %2475 = vrot.lane.b32.xlu0 %v727, 127
        %v2476 = vpop.permute.xlu0 %2475
        %2477 = vrot.lane.b32.xlu0 %v728, 127
        %v2478 = vpop.permute.xlu0 %2477
        %2479 = vrot.lane.b32.xlu0 %v729, 127
        %v2480 = vpop.permute.xlu0 %2479
        %vm2481 = vcmask 1039360
        %v2482 = vsel %vm2481, %v2474, %v2476
        %v2483 = vsel %vm2481, %v2478, %v2480
        %v2488 = vmax.f32 %v726, %v2482
        %v2489 = vmax.f32 %v727, %v2476
        %v2490 = vmax.f32 %v728, %v2483
        %v2491 = vmax.f32 %v729, %v2480
        %2492 = vrot.lane.b32.xlu0 %v726, 126
        %v2493 = vpop.permute.xlu0 %2492
        %2494 = vrot.lane.b32.xlu0 %v727, 126
        %v2495 = vpop.permute.xlu0 %2494
        %2496 = vrot.lane.b32.xlu0 %v728, 126
        %v2497 = vpop.permute.xlu0 %2496
        %2498 = vrot.lane.b32.xlu0 %v729, 126
        %v2499 = vpop.permute.xlu0 %2498
        %vm2500 = vcmask 1031168
        %v2501 = vsel %vm2500, %v2493, %v2495
        %v2502 = vsel %vm2500, %v2497, %v2499
        %v2507 = vmax.f32 %v2488, %v2501
        %v2508 = vmax.f32 %v2489, %v2495
        %v2509 = vmax.f32 %v2490, %v2502
        %v2510 = vmax.f32 %v2491, %v2499
        %v2511 = vld [vmem:[%s18] sm:$0x1]
        %v2513 = vlaneseq
        %v2514 = vshrl.u32 %v2513, 7
        %v2515 = vsub.s32 0, %v2514
        %v2516 = vrot.slane %v2511, %v2515
        %2517 = vrot.lane.b32.xlu0 %v2516, 63
        %v2518 = vpop.permute.xlu0 %2517
        %v2520 = vmul.f32 %v2507, %v2518
        %v2521 = vmul.f32 %v2508, %v2518
        %v2522 = vmul.f32 %v2509, %v2518
        %v2523 = vmul.f32 %v2510, %v2518
        %v2524 = vld [vmem:[%s11] sm:$0xff]
        %v2525 = vld [vmem:[%s11 + $0x8] sm:$0xff]
        %v2526 = vld [vmem:[%s12] sm:$0xff]
        %v2527 = vld [vmem:[%s12 + $0x8] sm:$0xff]
        %2529 = vset.pattern.permute.xlu0 0
        %2530 = vperm.xlu0 %2529, %v2526
        %v2531 = vpop.permute.xlu0 %2530
        %2534 = vset.pattern.permute.xlu0 0
        %2535 = vperm.xlu0 %2534, %v2527
        %v2536 = vpop.permute.xlu0 %2535
        %2542 = vrot.lane.b32.xlu0 %v2520, 65
        %v2543 = vpop.permute.xlu0 %2542
        %2544 = vrot.lane.b32.xlu0 %v2521, 65
        %v2545 = vpop.permute.xlu0 %2544
        %2546 = vrot.lane.b32.xlu0 %v2522, 65
        %v2547 = vpop.permute.xlu0 %2546
        %2548 = vrot.lane.b32.xlu0 %v2523, 65
        %v2549 = vpop.permute.xlu0 %2548
        %v2550 = vsel %vm939, %v2543, %v2545
        %v2551 = vsel %vm939, %v2547, %v2549
        %v2555 = vsel %vm752, %v2524, 0
        %v2558 = vsel %vm752, %v2525, 0
        %2560 = vmatprep.subr.mxu0 0.0
        %2561 = vmatpush1.msra.mxu0 0.0
        %2562 = vmatprep.subr.mxu0 0.0
        %2563 = vmatpush1.msra.mxu0 0.0
        %2564 = vmatprep.subr.mxu0 0.0
        %2565 = vmatpush1.msra.mxu0 0.0
        %2566 = vmatprep.subr.mxu0 0.0
        %2567 = vmatpush1.msra.mxu0 0.0
        %2568 = vmatprep.subr.mxu0 0.0
        %2569 = vmatpush1.msra.mxu0 0.0
        %2570 = vmatprep.subr.mxu0 0.0
        %2571 = vmatpush1.msra.mxu0 0.0
        %2572 = vmatprep.subr.mxu0 0.0
        %2573 = vmatpush1.msra.mxu0 0.0
        %2574 = vmatprep.subr.mxu0 0.0
        %2575 = vmatpush1.msra.mxu0 0.0
        %2576 = vmatprep.subr.mxu0 0.0
        %2577 = vmatpush1.msra.mxu0 0.0
        %2578 = vmatprep.subr.mxu0 0.0
        %2579 = vmatpush1.msra.mxu0 0.0
        %2580 = vmatprep.subr.mxu0 0.0
        %2581 = vmatpush1.msra.mxu0 0.0
        %2582 = vmatprep.subr.mxu0 0.0
        %2583 = vmatpush1.msra.mxu0 0.0
        %2584 = vmatprep.subr.mxu0 0.0
        %2585 = vmatpush1.msra.mxu0 0.0
        %2586 = vmatprep.subr.mxu0 0.0
        %2587 = vmatpush1.msra.mxu0 0.0
        %2588 = vmatprep.subr.mxu0 0.0
        %2589 = vmatpush1.msra.mxu0 %v2551
        %2590 = vmatprep.subr.mxu0 0.0
        %2591 = vmatpush1.msra.mxu0 %v2550
        %2592 = vmatprep.subr.mxu0 0.0
        %2593 = vmatpush2.msra.mxu0 0.0
        %2594 = vmatprep.subr.mxu0 0.0
        %2595 = vmatpush2.msra.mxu0 0.0
        %2596 = vmatprep.subr.mxu0 0.0
        %2597 = vmatpush2.msra.mxu0 0.0
        %2598 = vmatprep.subr.mxu0 0.0
        %2599 = vmatpush2.msra.mxu0 0.0
        %2600 = vmatprep.subr.mxu0 0.0
        %2601 = vmatpush2.msra.mxu0 0.0
        %2602 = vmatprep.subr.mxu0 0.0
        %2603 = vmatpush2.msra.mxu0 0.0
        %2604 = vmatprep.subr.mxu0 0.0
        %2605 = vmatpush2.msra.mxu0 0.0
        %2606 = vmatprep.subr.mxu0 0.0
        %2607 = vmatpush2.msra.mxu0 0.0
        %2608 = vmatprep.subr.mxu0 0.0
        %2609 = vmatpush2.msra.mxu0 0.0
        %2610 = vmatprep.subr.mxu0 0.0
        %2611 = vmatpush2.msra.mxu0 0.0
        %2612 = vmatprep.subr.mxu0 0.0
        %2613 = vmatpush2.msra.mxu0 0.0
        %2614 = vmatprep.subr.mxu0 0.0
        %2615 = vmatpush2.msra.mxu0 0.0
        %2616 = vmatprep.subr.mxu0 0.0
        %2617 = vmatpush2.msra.mxu0 0.0
        %2618 = vmatprep.subr.mxu0 0.0
        %2619 = vmatpush2.msra.mxu0 0.0
        %2620 = vmatprep.subr.mxu0 0.0
        %2621 = vmatpush2.msra.mxu0 0.0
        %2622 = vmatprep.subr.mxu0 0.0
        %2623 = vmatpush2.msra.mxu0 0.0
        %2624 = vmatprep.mubr.f32.mxu0 0.0
        %2625 = vmatmul.mubr.f32.gmra.mxu0 %v2555
        %v2626 = vpop.f32.mrf.mxu0
        %v2627 = vadd.f32 %v2531, %v2626
        %v2628 = vpop.f32.mrf.mxu0
        %2629 = vmatprep.mubr.f32.mxu0 0.0
        %2630 = vmatmul.mubr.f32.gmra.mxu0 %v2558
        %v2631 = vpop.f32.mrf.mxu0
        %v2632 = vadd.f32 %v2536, %v2631
        %v2633 = vpop.f32.mrf.mxu0
        %2634 = vdwg.mxu0
        %v2635 = vmax.f32 %v2627, 0.0
        %v2636 = vmax.f32 %v2632, 0.0
        %v2637 = vld [vmem:[%s19] sm:$0xff]
        %v2638 = vld [vmem:[%s19 + $0x8] sm:$0xff]
        %v2639 = vld [vmem:[%s19 + $0x10] sm:$0xff]
        %v2640 = vld [vmem:[%s19 + $0x18] sm:$0xff]
        %v2641 = vld [vmem:[%s19 + $0x20] sm:$0xff]
        %v2642 = vld [vmem:[%s19 + $0x28] sm:$0xff]
        %v2643 = vld [vmem:[%s19 + $0x30] sm:$0xff]
        %v2644 = vld [vmem:[%s19 + $0x38] sm:$0xff]
        %v2645 = vld [vmem:[%s19 + $0x40] sm:$0xff]
        %v2646 = vld [vmem:[%s19 + $0x48] sm:$0xff]
        %v2647 = vld [vmem:[%s19 + $0x50] sm:$0xff]
        %v2648 = vld [vmem:[%s19 + $0x58] sm:$0xff]
        %v2649 = vld [vmem:[%s19 + $0x60] sm:$0xff]
        %v2650 = vld [vmem:[%s19 + $0x68] sm:$0xff]
        %v2651 = vld [vmem:[%s19 + $0x70] sm:$0xff]
        %v2652 = vld [vmem:[%s19 + $0x78] sm:$0xff]
        %2653 = vmatprep.subr.mxu0 0.0
        %2654 = vmatpush1.msra.mxu0 %v2652
        %2655 = vmatprep.subr.mxu0 0.0
        %2656 = vmatpush1.msra.mxu0 %v2651
        %2657 = vmatprep.subr.mxu0 0.0
        %2658 = vmatpush1.msra.mxu0 %v2650
        %2659 = vmatprep.subr.mxu0 0.0
        %2660 = vmatpush1.msra.mxu0 %v2649
        %2661 = vmatprep.subr.mxu0 0.0
        %2662 = vmatpush1.msra.mxu0 %v2648
        %2663 = vmatprep.subr.mxu0 0.0
        %2664 = vmatpush1.msra.mxu0 %v2647
        %2665 = vmatprep.subr.mxu0 0.0
        %2666 = vmatpush1.msra.mxu0 %v2646
        %2667 = vmatprep.subr.mxu0 0.0
        %2668 = vmatpush1.msra.mxu0 %v2645
        %2669 = vmatprep.subr.mxu0 0.0
        %2670 = vmatpush1.msra.mxu0 %v2644
        %2671 = vmatprep.subr.mxu0 0.0
        %2672 = vmatpush1.msra.mxu0 %v2643
        %2673 = vmatprep.subr.mxu0 0.0
        %2674 = vmatpush1.msra.mxu0 %v2642
        %2675 = vmatprep.subr.mxu0 0.0
        %2676 = vmatpush1.msra.mxu0 %v2641
        %2677 = vmatprep.subr.mxu0 0.0
        %2678 = vmatpush1.msra.mxu0 %v2640
        %2679 = vmatprep.subr.mxu0 0.0
        %2680 = vmatpush1.msra.mxu0 %v2639
        %2681 = vmatprep.subr.mxu0 0.0
        %2682 = vmatpush1.msra.mxu0 %v2638
        %2683 = vmatprep.subr.mxu0 0.0
        %2684 = vmatpush1.msra.mxu0 %v2637
        %2685 = vmatprep.subr.mxu0 0.0
        %2686 = vmatpush2.msra.mxu0 0.0
        %2687 = vmatprep.subr.mxu0 0.0
        %2688 = vmatpush2.msra.mxu0 0.0
        %2689 = vmatprep.subr.mxu0 0.0
        %2690 = vmatpush2.msra.mxu0 0.0
        %2691 = vmatprep.subr.mxu0 0.0
        %2692 = vmatpush2.msra.mxu0 0.0
        %2693 = vmatprep.subr.mxu0 0.0
        %2694 = vmatpush2.msra.mxu0 0.0
        %2695 = vmatprep.subr.mxu0 0.0
        %2696 = vmatpush2.msra.mxu0 0.0
        %2697 = vmatprep.subr.mxu0 0.0
        %2698 = vmatpush2.msra.mxu0 0.0
        %2699 = vmatprep.subr.mxu0 0.0
        %2700 = vmatpush2.msra.mxu0 0.0
        %2701 = vmatprep.subr.mxu0 0.0
        %2702 = vmatpush2.msra.mxu0 0.0
        %2703 = vmatprep.subr.mxu0 0.0
        %2704 = vmatpush2.msra.mxu0 0.0
        %2705 = vmatprep.subr.mxu0 0.0
        %2706 = vmatpush2.msra.mxu0 0.0
        %2707 = vmatprep.subr.mxu0 0.0
        %2708 = vmatpush2.msra.mxu0 0.0
        %2709 = vmatprep.subr.mxu0 0.0
        %2710 = vmatpush2.msra.mxu0 0.0
        %2711 = vmatprep.subr.mxu0 0.0
        %2712 = vmatpush2.msra.mxu0 0.0
        %2713 = vmatprep.subr.mxu0 0.0
        %2714 = vmatpush2.msra.mxu0 0.0
        %2715 = vmatprep.subr.mxu0 0.0
        %2716 = vmatpush2.msra.mxu0 0.0
        %2717 = vmatprep.mubr.f32.mxu0 0.0
        %2718 = vmatmul.mubr.f32.gmra.mxu0 %v1847
        %v2719 = vpop.f32.mrf.mxu0
        %v2720 = vadd.f32 0.0, %v2719
        %v2721 = vpop.f32.mrf.mxu0
        %2722 = vmatprep.mubr.f32.mxu0 0.0
        %2723 = vmatmul.mubr.f32.gmra.mxu0 %v1848
        %v2724 = vpop.f32.mrf.mxu0
        %v2725 = vadd.f32 0.0, %v2724
        %v2726 = vpop.f32.mrf.mxu0
        %2727 = vdwg.mxu0
        %2728 = vmatprep.subr.mxu0 0.0
        %2729 = vmatpush1.msra.mxu0 %v2652
        %2730 = vmatprep.subr.mxu0 0.0
        %2731 = vmatpush1.msra.mxu0 %v2651
        %2732 = vmatprep.subr.mxu0 0.0
        %2733 = vmatpush1.msra.mxu0 %v2650
        %2734 = vmatprep.subr.mxu0 0.0
        %2735 = vmatpush1.msra.mxu0 %v2649
        %2736 = vmatprep.subr.mxu0 0.0
        %2737 = vmatpush1.msra.mxu0 %v2648
        %2738 = vmatprep.subr.mxu0 0.0
        %2739 = vmatpush1.msra.mxu0 %v2647
        %2740 = vmatprep.subr.mxu0 0.0
        %2741 = vmatpush1.msra.mxu0 %v2646
        %2742 = vmatprep.subr.mxu0 0.0
        %2743 = vmatpush1.msra.mxu0 %v2645
        %2744 = vmatprep.subr.mxu0 0.0
        %2745 = vmatpush1.msra.mxu0 %v2644
        %2746 = vmatprep.subr.mxu0 0.0
        %2747 = vmatpush1.msra.mxu0 %v2643
        %2748 = vmatprep.subr.mxu0 0.0
        %2749 = vmatpush1.msra.mxu0 %v2642
        %2750 = vmatprep.subr.mxu0 0.0
        %2751 = vmatpush1.msra.mxu0 %v2641
        %2752 = vmatprep.subr.mxu0 0.0
        %2753 = vmatpush1.msra.mxu0 %v2640
        %2754 = vmatprep.subr.mxu0 0.0
        %2755 = vmatpush1.msra.mxu0 %v2639
        %2756 = vmatprep.subr.mxu0 0.0
        %2757 = vmatpush1.msra.mxu0 %v2638
        %2758 = vmatprep.subr.mxu0 0.0
        %2759 = vmatpush1.msra.mxu0 %v2637
        %2760 = vmatprep.subr.mxu0 0.0
        %2761 = vmatpush2.msra.mxu0 0.0
        %2762 = vmatprep.subr.mxu0 0.0
        %2763 = vmatpush2.msra.mxu0 0.0
        %2764 = vmatprep.subr.mxu0 0.0
        %2765 = vmatpush2.msra.mxu0 0.0
        %2766 = vmatprep.subr.mxu0 0.0
        %2767 = vmatpush2.msra.mxu0 0.0
        %2768 = vmatprep.subr.mxu0 0.0
        %2769 = vmatpush2.msra.mxu0 0.0
        %2770 = vmatprep.subr.mxu0 0.0
        %2771 = vmatpush2.msra.mxu0 0.0
        %2772 = vmatprep.subr.mxu0 0.0
        %2773 = vmatpush2.msra.mxu0 0.0
        %2774 = vmatprep.subr.mxu0 0.0
        %2775 = vmatpush2.msra.mxu0 0.0
        %2776 = vmatprep.subr.mxu0 0.0
        %2777 = vmatpush2.msra.mxu0 0.0
        %2778 = vmatprep.subr.mxu0 0.0
        %2779 = vmatpush2.msra.mxu0 0.0
        %2780 = vmatprep.subr.mxu0 0.0
        %2781 = vmatpush2.msra.mxu0 0.0
        %2782 = vmatprep.subr.mxu0 0.0
        %2783 = vmatpush2.msra.mxu0 0.0
        %2784 = vmatprep.subr.mxu0 0.0
        %2785 = vmatpush2.msra.mxu0 0.0
        %2786 = vmatprep.subr.mxu0 0.0
        %2787 = vmatpush2.msra.mxu0 0.0
        %2788 = vmatprep.subr.mxu0 0.0
        %2789 = vmatpush2.msra.mxu0 0.0
        %2790 = vmatprep.subr.mxu0 0.0
        %2791 = vmatpush2.msra.mxu0 0.0
        %2792 = vmatprep.mubr.f32.mxu0 0.0
        %2793 = vmatmul.mubr.f32.gmra.mxu0 %v2471
        %v2794 = vpop.f32.mrf.mxu0
        %v2795 = vadd.f32 0.0, %v2794
        %v2796 = vpop.f32.mrf.mxu0
        %2797 = vmatprep.mubr.f32.mxu0 0.0
        %2798 = vmatmul.mubr.f32.gmra.mxu0 %v2472
        %v2799 = vpop.f32.mrf.mxu0
        %v2800 = vadd.f32 0.0, %v2799
        %v2801 = vpop.f32.mrf.mxu0
        %2802 = vdwg.mxu0
        %2803 = vmatprep.subr.mxu0 0.0
        %2804 = vmatpush1.msra.mxu0 %v2652
        %2805 = vmatprep.subr.mxu0 0.0
        %2806 = vmatpush1.msra.mxu0 %v2651
        %2807 = vmatprep.subr.mxu0 0.0
        %2808 = vmatpush1.msra.mxu0 %v2650
        %2809 = vmatprep.subr.mxu0 0.0
        %2810 = vmatpush1.msra.mxu0 %v2649
        %2811 = vmatprep.subr.mxu0 0.0
        %2812 = vmatpush1.msra.mxu0 %v2648
        %2813 = vmatprep.subr.mxu0 0.0
        %2814 = vmatpush1.msra.mxu0 %v2647
        %2815 = vmatprep.subr.mxu0 0.0
        %2816 = vmatpush1.msra.mxu0 %v2646
        %2817 = vmatprep.subr.mxu0 0.0
        %2818 = vmatpush1.msra.mxu0 %v2645
        %2819 = vmatprep.subr.mxu0 0.0
        %2820 = vmatpush1.msra.mxu0 %v2644
        %2821 = vmatprep.subr.mxu0 0.0
        %2822 = vmatpush1.msra.mxu0 %v2643
        %2823 = vmatprep.subr.mxu0 0.0
        %2824 = vmatpush1.msra.mxu0 %v2642
        %2825 = vmatprep.subr.mxu0 0.0
        %2826 = vmatpush1.msra.mxu0 %v2641
        %2827 = vmatprep.subr.mxu0 0.0
        %2828 = vmatpush1.msra.mxu0 %v2640
        %2829 = vmatprep.subr.mxu0 0.0
        %2830 = vmatpush1.msra.mxu0 %v2639
        %2831 = vmatprep.subr.mxu0 0.0
        %2832 = vmatpush1.msra.mxu0 %v2638
        %2833 = vmatprep.subr.mxu0 0.0
        %2834 = vmatpush1.msra.mxu0 %v2637
        %2835 = vmatprep.subr.mxu0 0.0
        %2836 = vmatpush2.msra.mxu0 0.0
        %2837 = vmatprep.subr.mxu0 0.0
        %2838 = vmatpush2.msra.mxu0 0.0
        %2839 = vmatprep.subr.mxu0 0.0
        %2840 = vmatpush2.msra.mxu0 0.0
        %2841 = vmatprep.subr.mxu0 0.0
        %2842 = vmatpush2.msra.mxu0 0.0
        %2843 = vmatprep.subr.mxu0 0.0
        %2844 = vmatpush2.msra.mxu0 0.0
        %2845 = vmatprep.subr.mxu0 0.0
        %2846 = vmatpush2.msra.mxu0 0.0
        %2847 = vmatprep.subr.mxu0 0.0
        %2848 = vmatpush2.msra.mxu0 0.0
        %2849 = vmatprep.subr.mxu0 0.0
        %2850 = vmatpush2.msra.mxu0 0.0
        %2851 = vmatprep.subr.mxu0 0.0
        %2852 = vmatpush2.msra.mxu0 0.0
        %2853 = vmatprep.subr.mxu0 0.0
        %2854 = vmatpush2.msra.mxu0 0.0
        %2855 = vmatprep.subr.mxu0 0.0
        %2856 = vmatpush2.msra.mxu0 0.0
        %2857 = vmatprep.subr.mxu0 0.0
        %2858 = vmatpush2.msra.mxu0 0.0
        %2859 = vmatprep.subr.mxu0 0.0
        %2860 = vmatpush2.msra.mxu0 0.0
        %2861 = vmatprep.subr.mxu0 0.0
        %2862 = vmatpush2.msra.mxu0 0.0
        %2863 = vmatprep.subr.mxu0 0.0
        %2864 = vmatpush2.msra.mxu0 0.0
        %2865 = vmatprep.subr.mxu0 0.0
        %2866 = vmatpush2.msra.mxu0 0.0
        %2867 = vmatprep.mubr.f32.mxu0 0.0
        %2868 = vmatmul.mubr.f32.gmra.mxu0 %v1437
        %v2869 = vpop.f32.mrf.mxu0
        %v2870 = vadd.f32 0.0, %v2869
        %v2871 = vpop.f32.mrf.mxu0
        %2872 = vmatprep.mubr.f32.mxu0 0.0
        %2873 = vmatmul.mubr.f32.gmra.mxu0 %v1438
        %v2874 = vpop.f32.mrf.mxu0
        %v2875 = vadd.f32 0.0, %v2874
        %v2876 = vpop.f32.mrf.mxu0
        %2877 = vdwg.mxu0
        %2878 = vmatprep.subr.mxu0 0.0
        %2879 = vmatpush1.msra.mxu0 %v2652
        %2880 = vmatprep.subr.mxu0 0.0
        %2881 = vmatpush1.msra.mxu0 %v2651
        %2882 = vmatprep.subr.mxu0 0.0
        %2883 = vmatpush1.msra.mxu0 %v2650
        %2884 = vmatprep.subr.mxu0 0.0
        %2885 = vmatpush1.msra.mxu0 %v2649
        %2886 = vmatprep.subr.mxu0 0.0
        %2887 = vmatpush1.msra.mxu0 %v2648
        %2888 = vmatprep.subr.mxu0 0.0
        %2889 = vmatpush1.msra.mxu0 %v2647
        %2890 = vmatprep.subr.mxu0 0.0
        %2891 = vmatpush1.msra.mxu0 %v2646
        %2892 = vmatprep.subr.mxu0 0.0
        %2893 = vmatpush1.msra.mxu0 %v2645
        %2894 = vmatprep.subr.mxu0 0.0
        %2895 = vmatpush1.msra.mxu0 %v2644
        %2896 = vmatprep.subr.mxu0 0.0
        %2897 = vmatpush1.msra.mxu0 %v2643
        %2898 = vmatprep.subr.mxu0 0.0
        %2899 = vmatpush1.msra.mxu0 %v2642
        %2900 = vmatprep.subr.mxu0 0.0
        %2901 = vmatpush1.msra.mxu0 %v2641
        %2902 = vmatprep.subr.mxu0 0.0
        %2903 = vmatpush1.msra.mxu0 %v2640
        %2904 = vmatprep.subr.mxu0 0.0
        %2905 = vmatpush1.msra.mxu0 %v2639
        %2906 = vmatprep.subr.mxu0 0.0
        %2907 = vmatpush1.msra.mxu0 %v2638
        %2908 = vmatprep.subr.mxu0 0.0
        %2909 = vmatpush1.msra.mxu0 %v2637
        %2910 = vmatprep.subr.mxu0 0.0
        %2911 = vmatpush2.msra.mxu0 0.0
        %2912 = vmatprep.subr.mxu0 0.0
        %2913 = vmatpush2.msra.mxu0 0.0
        %2914 = vmatprep.subr.mxu0 0.0
        %2915 = vmatpush2.msra.mxu0 0.0
        %2916 = vmatprep.subr.mxu0 0.0
        %2917 = vmatpush2.msra.mxu0 0.0
        %2918 = vmatprep.subr.mxu0 0.0
        %2919 = vmatpush2.msra.mxu0 0.0
        %2920 = vmatprep.subr.mxu0 0.0
        %2921 = vmatpush2.msra.mxu0 0.0
        %2922 = vmatprep.subr.mxu0 0.0
        %2923 = vmatpush2.msra.mxu0 0.0
        %2924 = vmatprep.subr.mxu0 0.0
        %2925 = vmatpush2.msra.mxu0 0.0
        %2926 = vmatprep.subr.mxu0 0.0
        %2927 = vmatpush2.msra.mxu0 0.0
        %2928 = vmatprep.subr.mxu0 0.0
        %2929 = vmatpush2.msra.mxu0 0.0
        %2930 = vmatprep.subr.mxu0 0.0
        %2931 = vmatpush2.msra.mxu0 0.0
        %2932 = vmatprep.subr.mxu0 0.0
        %2933 = vmatpush2.msra.mxu0 0.0
        %2934 = vmatprep.subr.mxu0 0.0
        %2935 = vmatpush2.msra.mxu0 0.0
        %2936 = vmatprep.subr.mxu0 0.0
        %2937 = vmatpush2.msra.mxu0 0.0
        %2938 = vmatprep.subr.mxu0 0.0
        %2939 = vmatpush2.msra.mxu0 0.0
        %2940 = vmatprep.subr.mxu0 0.0
        %2941 = vmatpush2.msra.mxu0 0.0
        %2942 = vmatprep.mubr.f32.mxu0 0.0
        %2943 = vmatmul.mubr.f32.gmra.mxu0 %v2635
        %v2944 = vpop.f32.mrf.mxu0
        %v2945 = vadd.f32 0.0, %v2944
        %v2946 = vpop.f32.mrf.mxu0
        %2947 = vmatprep.mubr.f32.mxu0 0.0
        %2948 = vmatmul.mubr.f32.gmra.mxu0 %v2636
        %v2949 = vpop.f32.mrf.mxu0
        %v2950 = vadd.f32 0.0, %v2949
        %v2951 = vpop.f32.mrf.mxu0
        %2952 = vdwg.mxu0
        %v2953 = vmul.f32 %v2720, 0.0625
        %v2954 = vmul.f32 %v2725, 0.0625
        %v2955 = vmul.f32 %v2795, 0.0625
        %v2956 = vmul.f32 %v2800, 0.0625
        %v2957 = vmul.f32 %v2870, 0.0625
        %v2958 = vmul.f32 %v2875, 0.0625
        %v2959 = vmul.f32 %v2945, 0.0625
        %v2960 = vmul.f32 %v2950, 0.0625
        %v2961 = vld [vmem:[%s13] sm:$0x1]
        %v2963 = vsel %vm1038, %v2961, 0
        %2965 = vmatprep.subr.mxu0 0.0
        %2966 = vmatpush1.msra.mxu0 0.0
        %2967 = vmatprep.subr.mxu0 0.0
        %2968 = vmatpush1.msra.mxu0 0.0
        %2969 = vmatprep.subr.mxu0 0.0
        %2970 = vmatpush1.msra.mxu0 0.0
        %2971 = vmatprep.subr.mxu0 0.0
        %2972 = vmatpush1.msra.mxu0 0.0
        %2973 = vmatprep.subr.mxu0 0.0
        %2974 = vmatpush1.msra.mxu0 0.0
        %2975 = vmatprep.subr.mxu0 0.0
        %2976 = vmatpush1.msra.mxu0 0.0
        %2977 = vmatprep.subr.mxu0 0.0
        %2978 = vmatpush1.msra.mxu0 0.0
        %2979 = vmatprep.subr.mxu0 0.0
        %2980 = vmatpush1.msra.mxu0 0.0
        %2981 = vmatprep.subr.mxu0 0.0
        %2982 = vmatpush1.msra.mxu0 %v2960
        %2983 = vmatprep.subr.mxu0 0.0
        %2984 = vmatpush1.msra.mxu0 %v2959
        %2985 = vmatprep.subr.mxu0 0.0
        %2986 = vmatpush1.msra.mxu0 %v2958
        %2987 = vmatprep.subr.mxu0 0.0
        %2988 = vmatpush1.msra.mxu0 %v2957
        %2989 = vmatprep.subr.mxu0 0.0
        %2990 = vmatpush1.msra.mxu0 %v2956
        %2991 = vmatprep.subr.mxu0 0.0
        %2992 = vmatpush1.msra.mxu0 %v2955
        %2993 = vmatprep.subr.mxu0 0.0
        %2994 = vmatpush1.msra.mxu0 %v2954
        %2995 = vmatprep.subr.mxu0 0.0
        %2996 = vmatpush1.msra.mxu0 %v2953
        %2997 = vmatprep.subr.mxu0 0.0
        %2998 = vmatpush2.msra.mxu0 0.0
        %2999 = vmatprep.subr.mxu0 0.0
        %3000 = vmatpush2.msra.mxu0 0.0
        %3001 = vmatprep.subr.mxu0 0.0
        %3002 = vmatpush2.msra.mxu0 0.0
        %3003 = vmatprep.subr.mxu0 0.0
        %3004 = vmatpush2.msra.mxu0 0.0
        %3005 = vmatprep.subr.mxu0 0.0
        %3006 = vmatpush2.msra.mxu0 0.0
        %3007 = vmatprep.subr.mxu0 0.0
        %3008 = vmatpush2.msra.mxu0 0.0
        %3009 = vmatprep.subr.mxu0 0.0
        %3010 = vmatpush2.msra.mxu0 0.0
        %3011 = vmatprep.subr.mxu0 0.0
        %3012 = vmatpush2.msra.mxu0 0.0
        %3013 = vmatprep.subr.mxu0 0.0
        %3014 = vmatpush2.msra.mxu0 0.0
        %3015 = vmatprep.subr.mxu0 0.0
        %3016 = vmatpush2.msra.mxu0 0.0
        %3017 = vmatprep.subr.mxu0 0.0
        %3018 = vmatpush2.msra.mxu0 0.0
        %3019 = vmatprep.subr.mxu0 0.0
        %3020 = vmatpush2.msra.mxu0 0.0
        %3021 = vmatprep.subr.mxu0 0.0
        %3022 = vmatpush2.msra.mxu0 0.0
        %3023 = vmatprep.subr.mxu0 0.0
        %3024 = vmatpush2.msra.mxu0 0.0
        %3025 = vmatprep.subr.mxu0 0.0
        %3026 = vmatpush2.msra.mxu0 0.0
        %3027 = vmatprep.subr.mxu0 0.0
        %3028 = vmatpush2.msra.mxu0 0.0
        %3029 = vmatprep.mubr.f32.mxu0 0.0
        %3030 = vmatmul.mubr.f32.gmra.mxu0 %v2963
        %v3031 = vpop.f32.mrf.mxu0
        %v3032 = vadd.f32 0.0, %v3031
        %v3033 = vpop.f32.mrf.mxu0
        %3034 = vdwg.mxu0
        %v3035 = vmax.f32 %v3032, 0.0
        %v3036 = vld [vmem:[%s14] sm:$0xff]
        %v3037 = vld [vmem:[%s14 + $0x8] sm:$0xff]
        %v3038 = vld [vmem:[%s14 + $0x10] sm:$0xff]
        %v3039 = vld [vmem:[%s14 + $0x18] sm:$0xff]
        %v3040 = vld [vmem:[%s14 + $0x20] sm:$0xff]
        %v3041 = vld [vmem:[%s14 + $0x28] sm:$0xff]
        %v3042 = vld [vmem:[%s14 + $0x30] sm:$0xff]
        %v3043 = vld [vmem:[%s14 + $0x38] sm:$0xff]
        %vm3044 = vcmask 7168
        %v3046 = vsel %vm3044, %v3036, 0
        %v3049 = vsel %vm3044, %v3037, 0
        %v3052 = vsel %vm3044, %v3038, 0
        %v3055 = vsel %vm3044, %v3039, 0
        %v3058 = vsel %vm3044, %v3040, 0
        %v3061 = vsel %vm3044, %v3041, 0
        %v3064 = vsel %vm3044, %v3042, 0
        %v3067 = vsel %vm3044, %v3043, 0
        %vm3069 = vcmask 1040384
        %v3071 = vsel %vm3069, %v3035, 0
        %3073 = vmatprep.subr.mxu0 0.0
        %3074 = vmatpush1.msra.mxu0 0.0
        %3075 = vmatprep.subr.mxu0 0.0
        %3076 = vmatpush1.msra.mxu0 0.0
        %3077 = vmatprep.subr.mxu0 0.0
        %3078 = vmatpush1.msra.mxu0 0.0
        %3079 = vmatprep.subr.mxu0 0.0
        %3080 = vmatpush1.msra.mxu0 0.0
        %3081 = vmatprep.subr.mxu0 0.0
        %3082 = vmatpush1.msra.mxu0 0.0
        %3083 = vmatprep.subr.mxu0 0.0
        %3084 = vmatpush1.msra.mxu0 0.0
        %3085 = vmatprep.subr.mxu0 0.0
        %3086 = vmatpush1.msra.mxu0 0.0
        %3087 = vmatprep.subr.mxu0 0.0
        %3088 = vmatpush1.msra.mxu0 0.0
        %3089 = vmatprep.subr.mxu0 0.0
        %3090 = vmatpush1.msra.mxu0 0.0
        %3091 = vmatprep.subr.mxu0 0.0
        %3092 = vmatpush1.msra.mxu0 0.0
        %3093 = vmatprep.subr.mxu0 0.0
        %3094 = vmatpush1.msra.mxu0 0.0
        %3095 = vmatprep.subr.mxu0 0.0
        %3096 = vmatpush1.msra.mxu0 0.0
        %3097 = vmatprep.subr.mxu0 0.0
        %3098 = vmatpush1.msra.mxu0 0.0
        %3099 = vmatprep.subr.mxu0 0.0
        %3100 = vmatpush1.msra.mxu0 0.0
        %3101 = vmatprep.subr.mxu0 0.0
        %3102 = vmatpush1.msra.mxu0 0.0
        %3103 = vmatprep.subr.mxu0 0.0
        %3104 = vmatpush1.msra.mxu0 %v3071
        %3105 = vmatprep.subr.mxu0 0.0
        %3106 = vmatpush2.msra.mxu0 0.0
        %3107 = vmatprep.subr.mxu0 0.0
        %3108 = vmatpush2.msra.mxu0 0.0
        %3109 = vmatprep.subr.mxu0 0.0
        %3110 = vmatpush2.msra.mxu0 0.0
        %3111 = vmatprep.subr.mxu0 0.0
        %3112 = vmatpush2.msra.mxu0 0.0
        %3113 = vmatprep.subr.mxu0 0.0
        %3114 = vmatpush2.msra.mxu0 0.0
        %3115 = vmatprep.subr.mxu0 0.0
        %3116 = vmatpush2.msra.mxu0 0.0
        %3117 = vmatprep.subr.mxu0 0.0
        %3118 = vmatpush2.msra.mxu0 0.0
        %3119 = vmatprep.subr.mxu0 0.0
        %3120 = vmatpush2.msra.mxu0 0.0
        %3121 = vmatprep.subr.mxu0 0.0
        %3122 = vmatpush2.msra.mxu0 0.0
        %3123 = vmatprep.subr.mxu0 0.0
        %3124 = vmatpush2.msra.mxu0 0.0
        %3125 = vmatprep.subr.mxu0 0.0
        %3126 = vmatpush2.msra.mxu0 0.0
        %3127 = vmatprep.subr.mxu0 0.0
        %3128 = vmatpush2.msra.mxu0 0.0
        %3129 = vmatprep.subr.mxu0 0.0
        %3130 = vmatpush2.msra.mxu0 0.0
        %3131 = vmatprep.subr.mxu0 0.0
        %3132 = vmatpush2.msra.mxu0 0.0
        %3133 = vmatprep.subr.mxu0 0.0
        %3134 = vmatpush2.msra.mxu0 0.0
        %3135 = vmatprep.subr.mxu0 0.0
        %3136 = vmatpush2.msra.mxu0 0.0
        %3137 = vmatprep.mubr.f32.mxu0 0.0
        %3138 = vmatmul.mubr.f32.gmra.mxu0 %v3046
        %v3139 = vpop.f32.mrf.mxu0
        %v3140 = vadd.f32 0.0, %v3139
        %v3141 = vpop.f32.mrf.mxu0
        %3142 = vmatprep.mubr.f32.mxu0 0.0
        %3143 = vmatmul.mubr.f32.gmra.mxu0 %v3049
        %v3144 = vpop.f32.mrf.mxu0
        %v3145 = vadd.f32 0.0, %v3144
        %v3146 = vpop.f32.mrf.mxu0
        %3147 = vmatprep.mubr.f32.mxu0 0.0
        %3148 = vmatmul.mubr.f32.gmra.mxu0 %v3052
        %v3149 = vpop.f32.mrf.mxu0
        %v3150 = vadd.f32 0.0, %v3149
        %v3151 = vpop.f32.mrf.mxu0
        %3152 = vmatprep.mubr.f32.mxu0 0.0
        %3153 = vmatmul.mubr.f32.gmra.mxu0 %v3055
        %v3154 = vpop.f32.mrf.mxu0
        %v3155 = vadd.f32 0.0, %v3154
        %v3156 = vpop.f32.mrf.mxu0
        %3157 = vmatprep.mubr.f32.mxu0 0.0
        %3158 = vmatmul.mubr.f32.gmra.mxu0 %v3058
        %v3159 = vpop.f32.mrf.mxu0
        %v3160 = vadd.f32 0.0, %v3159
        %v3161 = vpop.f32.mrf.mxu0
        %3162 = vmatprep.mubr.f32.mxu0 0.0
        %3163 = vmatmul.mubr.f32.gmra.mxu0 %v3061
        %v3164 = vpop.f32.mrf.mxu0
        %v3165 = vadd.f32 0.0, %v3164
        %v3166 = vpop.f32.mrf.mxu0
        %3167 = vmatprep.mubr.f32.mxu0 0.0
        %3168 = vmatmul.mubr.f32.gmra.mxu0 %v3064
        %v3169 = vpop.f32.mrf.mxu0
        %v3170 = vadd.f32 0.0, %v3169
        %v3171 = vpop.f32.mrf.mxu0
        %3172 = vmatprep.mubr.f32.mxu0 0.0
        %3173 = vmatmul.mubr.f32.gmra.mxu0 %v3067
        %v3174 = vpop.f32.mrf.mxu0
        %v3175 = vadd.f32 0.0, %v3174
        %v3176 = vpop.f32.mrf.mxu0
        %3177 = vdwg.mxu0
        %v3178 = vxor.u32 %v3140, 2147483648
        %v3179 = vxor.u32 %v3145, 2147483648
        %v3180 = vxor.u32 %v3150, 2147483648
        %v3181 = vxor.u32 %v3155, 2147483648
        %v3182 = vxor.u32 %v3160, 2147483648
        %v3183 = vxor.u32 %v3165, 2147483648
        %v3184 = vxor.u32 %v3170, 2147483648
        %v3185 = vxor.u32 %v3175, 2147483648
        %v3186 = vmul.f32 %v3178, 1.442695
        %v3187 = vpow.pop %v3186
        %v3188 = vmul.f32 %v3179, 1.442695
        %v3189 = vpow.pop %v3188
        %v3190 = vmul.f32 %v3180, 1.442695
        %v3191 = vpow.pop %v3190
        %v3192 = vmul.f32 %v3181, 1.442695
        %v3193 = vpow.pop %v3192
        %v3194 = vmul.f32 %v3182, 1.442695
        %v3195 = vpow.pop %v3194
        %v3196 = vmul.f32 %v3183, 1.442695
        %v3197 = vpow.pop %v3196
        %v3198 = vmul.f32 %v3184, 1.442695
        %v3199 = vpow.pop %v3198
        %v3200 = vmul.f32 %v3185, 1.442695
        %v3201 = vpow.pop %v3200
        %v3202 = vadd.f32 %v3187, 1.0
        %v3203 = vadd.f32 %v3189, 1.0
        %v3204 = vadd.f32 %v3191, 1.0
        %v3205 = vadd.f32 %v3193, 1.0
        %v3206 = vadd.f32 %v3195, 1.0
        %v3207 = vadd.f32 %v3197, 1.0
        %v3208 = vadd.f32 %v3199, 1.0
        %v3209 = vadd.f32 %v3201, 1.0
        %v3210 = vrcp.pop %v3202
        %v3211 = vmul.f32 1.0, %v3210
        %v3212 = vrcp.pop %v3203
        %v3213 = vmul.f32 1.0, %v3212
        %v3214 = vrcp.pop %v3204
        %v3215 = vmul.f32 1.0, %v3214
        %v3216 = vrcp.pop %v3205
        %v3217 = vmul.f32 1.0, %v3216
        %v3218 = vrcp.pop %v3206
        %v3219 = vmul.f32 1.0, %v3218
        %v3220 = vrcp.pop %v3207
        %v3221 = vmul.f32 1.0, %v3220
        %v3222 = vrcp.pop %v3208
        %v3223 = vmul.f32 1.0, %v3222
        %v3224 = vrcp.pop %v3209
        %v3225 = vmul.f32 1.0, %v3224
        %v3226 = vld [vmem:[%s20] sm:$0x3]
        %vm3227 = vcmask 15360
        %v3229 = vsel %vm3227, %v3211, 0
        %v3232 = vsel %vm3227, %v3213, 0
        %v3235 = vsel %vm3227, %v3215, 0
        %v3238 = vsel %vm3227, %v3217, 0
        %v3241 = vsel %vm3227, %v3219, 0
        %v3244 = vsel %vm3227, %v3221, 0
        %v3247 = vsel %vm3227, %v3223, 0
        %v3250 = vsel %vm3227, %v3225, 0
        %vm3252 = vcmask 1041408
        %v3254 = vsel %vm3252, %v3226, 0
        %3256 = vmatprep.subr.mxu0 0.0
        %3257 = vmatpush1.msra.mxu0 0.0
        %3258 = vmatprep.subr.mxu0 0.0
        %3259 = vmatpush1.msra.mxu0 0.0
        %3260 = vmatprep.subr.mxu0 0.0
        %3261 = vmatpush1.msra.mxu0 0.0
        %3262 = vmatprep.subr.mxu0 0.0
        %3263 = vmatpush1.msra.mxu0 0.0
        %3264 = vmatprep.subr.mxu0 0.0
        %3265 = vmatpush1.msra.mxu0 0.0
        %3266 = vmatprep.subr.mxu0 0.0
        %3267 = vmatpush1.msra.mxu0 0.0
        %3268 = vmatprep.subr.mxu0 0.0
        %3269 = vmatpush1.msra.mxu0 0.0
        %3270 = vmatprep.subr.mxu0 0.0
        %3271 = vmatpush1.msra.mxu0 0.0
        %3272 = vmatprep.subr.mxu0 0.0
        %3273 = vmatpush1.msra.mxu0 0.0
        %3274 = vmatprep.subr.mxu0 0.0
        %3275 = vmatpush1.msra.mxu0 0.0
        %3276 = vmatprep.subr.mxu0 0.0
        %3277 = vmatpush1.msra.mxu0 0.0
        %3278 = vmatprep.subr.mxu0 0.0
        %3279 = vmatpush1.msra.mxu0 0.0
        %3280 = vmatprep.subr.mxu0 0.0
        %3281 = vmatpush1.msra.mxu0 0.0
        %3282 = vmatprep.subr.mxu0 0.0
        %3283 = vmatpush1.msra.mxu0 0.0
        %3284 = vmatprep.subr.mxu0 0.0
        %3285 = vmatpush1.msra.mxu0 0.0
        %3286 = vmatprep.subr.mxu0 0.0
        %3287 = vmatpush1.msra.mxu0 %v3254
        %3288 = vmatprep.subr.mxu0 0.0
        %3289 = vmatpush2.msra.mxu0 0.0
        %3290 = vmatprep.subr.mxu0 0.0
        %3291 = vmatpush2.msra.mxu0 0.0
        %3292 = vmatprep.subr.mxu0 0.0
        %3293 = vmatpush2.msra.mxu0 0.0
        %3294 = vmatprep.subr.mxu0 0.0
        %3295 = vmatpush2.msra.mxu0 0.0
        %3296 = vmatprep.subr.mxu0 0.0
        %3297 = vmatpush2.msra.mxu0 0.0
        %3298 = vmatprep.subr.mxu0 0.0
        %3299 = vmatpush2.msra.mxu0 0.0
        %3300 = vmatprep.subr.mxu0 0.0
        %3301 = vmatpush2.msra.mxu0 0.0
        %3302 = vmatprep.subr.mxu0 0.0
        %3303 = vmatpush2.msra.mxu0 0.0
        %3304 = vmatprep.subr.mxu0 0.0
        %3305 = vmatpush2.msra.mxu0 0.0
        %3306 = vmatprep.subr.mxu0 0.0
        %3307 = vmatpush2.msra.mxu0 0.0
        %3308 = vmatprep.subr.mxu0 0.0
        %3309 = vmatpush2.msra.mxu0 0.0
        %3310 = vmatprep.subr.mxu0 0.0
        %3311 = vmatpush2.msra.mxu0 0.0
        %3312 = vmatprep.subr.mxu0 0.0
        %3313 = vmatpush2.msra.mxu0 0.0
        %3314 = vmatprep.subr.mxu0 0.0
        %3315 = vmatpush2.msra.mxu0 0.0
        %3316 = vmatprep.subr.mxu0 0.0
        %3317 = vmatpush2.msra.mxu0 0.0
        %3318 = vmatprep.subr.mxu0 0.0
        %3319 = vmatpush2.msra.mxu0 0.0
        %3320 = vmatprep.mubr.f32.mxu0 0.0
        %3321 = vmatmul.mubr.f32.gmra.mxu0 %v3229
        %v3322 = vpop.f32.mrf.mxu0
        %v3323 = vadd.f32 0.0, %v3322
        %v3324 = vpop.f32.mrf.mxu0
        %3325 = vmatprep.mubr.f32.mxu0 0.0
        %3326 = vmatmul.mubr.f32.gmra.mxu0 %v3232
        %v3327 = vpop.f32.mrf.mxu0
        %v3328 = vadd.f32 0.0, %v3327
        %v3329 = vpop.f32.mrf.mxu0
        %3330 = vmatprep.mubr.f32.mxu0 0.0
        %3331 = vmatmul.mubr.f32.gmra.mxu0 %v3235
        %v3332 = vpop.f32.mrf.mxu0
        %v3333 = vadd.f32 0.0, %v3332
        %v3334 = vpop.f32.mrf.mxu0
        %3335 = vmatprep.mubr.f32.mxu0 0.0
        %3336 = vmatmul.mubr.f32.gmra.mxu0 %v3238
        %v3337 = vpop.f32.mrf.mxu0
        %v3338 = vadd.f32 0.0, %v3337
        %v3339 = vpop.f32.mrf.mxu0
        %3340 = vmatprep.mubr.f32.mxu0 0.0
        %3341 = vmatmul.mubr.f32.gmra.mxu0 %v3241
        %v3342 = vpop.f32.mrf.mxu0
        %v3343 = vadd.f32 0.0, %v3342
        %v3344 = vpop.f32.mrf.mxu0
        %3345 = vmatprep.mubr.f32.mxu0 0.0
        %3346 = vmatmul.mubr.f32.gmra.mxu0 %v3244
        %v3347 = vpop.f32.mrf.mxu0
        %v3348 = vadd.f32 0.0, %v3347
        %v3349 = vpop.f32.mrf.mxu0
        %3350 = vmatprep.mubr.f32.mxu0 0.0
        %3351 = vmatmul.mubr.f32.gmra.mxu0 %v3247
        %v3352 = vpop.f32.mrf.mxu0
        %v3353 = vadd.f32 0.0, %v3352
        %v3354 = vpop.f32.mrf.mxu0
        %3355 = vmatprep.mubr.f32.mxu0 0.0
        %3356 = vmatmul.mubr.f32.gmra.mxu0 %v3250
        %v3357 = vpop.f32.mrf.mxu0
        %v3358 = vadd.f32 0.0, %v3357
        %v3359 = vpop.f32.mrf.mxu0
        %3360 = vdwg.mxu0
        %v3361 = vld [vmem:[#allocation8] sm:$0xff]
        %v3362 = vmul.f32 %v1847, %v3323
        %v3363 = vmul.f32 %v1848, %v3328
        %s3364 = scalar_lea.vmem [#allocation8], 8
        %v3365 = vld [vmem:[%s3364] sm:$0xff]
        %v3366 = vmul.f32 %v2471, %v3333
        %v3367 = vmul.f32 %v2472, %v3338
        %v3369 = vsel %vm752, %v3365, 0
        %3371 = vmatprep.subr.mxu0 0.0
        %3372 = vmatpush1.msra.mxu0 0.0
        %3373 = vmatprep.subr.mxu0 0.0
        %3374 = vmatpush1.msra.mxu0 0.0
        %3375 = vmatprep.subr.mxu0 0.0
        %3376 = vmatpush1.msra.mxu0 0.0
        %3377 = vmatprep.subr.mxu0 0.0
        %3378 = vmatpush1.msra.mxu0 0.0
        %3379 = vmatprep.subr.mxu0 0.0
        %3380 = vmatpush1.msra.mxu0 0.0
        %3381 = vmatprep.subr.mxu0 0.0
        %3382 = vmatpush1.msra.mxu0 0.0
        %3383 = vmatprep.subr.mxu0 0.0
        %3384 = vmatpush1.msra.mxu0 0.0
        %3385 = vmatprep.subr.mxu0 0.0
        %3386 = vmatpush1.msra.mxu0 0.0
        %3387 = vmatprep.subr.mxu0 0.0
        %3388 = vmatpush1.msra.mxu0 0.0
        %3389 = vmatprep.subr.mxu0 0.0
        %3390 = vmatpush1.msra.mxu0 0.0
        %3391 = vmatprep.subr.mxu0 0.0
        %3392 = vmatpush1.msra.mxu0 0.0
        %3393 = vmatprep.subr.mxu0 0.0
        %3394 = vmatpush1.msra.mxu0 0.0
        %3395 = vmatprep.subr.mxu0 0.0
        %3396 = vmatpush1.msra.mxu0 0.0
        %3397 = vmatprep.subr.mxu0 0.0
        %3398 = vmatpush1.msra.mxu0 0.0
        %3399 = vmatprep.subr.mxu0 0.0
        %3400 = vmatpush1.msra.mxu0 %v3367
        %3401 = vmatprep.subr.mxu0 0.0
        %3402 = vmatpush1.msra.mxu0 %v3366
        %3403 = vmatprep.subr.mxu0 0.0
        %3404 = vmatpush2.msra.mxu0 0.0
        %3405 = vmatprep.subr.mxu0 0.0
        %3406 = vmatpush2.msra.mxu0 0.0
        %3407 = vmatprep.subr.mxu0 0.0
        %3408 = vmatpush2.msra.mxu0 0.0
        %3409 = vmatprep.subr.mxu0 0.0
        %3410 = vmatpush2.msra.mxu0 0.0
        %3411 = vmatprep.subr.mxu0 0.0
        %3412 = vmatpush2.msra.mxu0 0.0
        %3413 = vmatprep.subr.mxu0 0.0
        %3414 = vmatpush2.msra.mxu0 0.0
        %3415 = vmatprep.subr.mxu0 0.0
        %3416 = vmatpush2.msra.mxu0 0.0
        %3417 = vmatprep.subr.mxu0 0.0
        %3418 = vmatpush2.msra.mxu0 0.0
        %3419 = vmatprep.subr.mxu0 0.0
        %3420 = vmatpush2.msra.mxu0 0.0
        %3421 = vmatprep.subr.mxu0 0.0
        %3422 = vmatpush2.msra.mxu0 0.0
        %3423 = vmatprep.subr.mxu0 0.0
        %3424 = vmatpush2.msra.mxu0 0.0
        %3425 = vmatprep.subr.mxu0 0.0
        %3426 = vmatpush2.msra.mxu0 0.0
        %3427 = vmatprep.subr.mxu0 0.0
        %3428 = vmatpush2.msra.mxu0 0.0
        %3429 = vmatprep.subr.mxu0 0.0
        %3430 = vmatpush2.msra.mxu0 0.0
        %3431 = vmatprep.subr.mxu0 0.0
        %3432 = vmatpush2.msra.mxu0 0.0
        %3433 = vmatprep.subr.mxu0 0.0
        %3434 = vmatpush2.msra.mxu0 0.0
        %3435 = vmatprep.mubr.f32.mxu0 0.0
        %3436 = vmatmul.mubr.f32.gmra.mxu0 %v3369
        %v3437 = vpop.f32.mrf.mxu0
        %v3438 = vadd.f32 0.0, %v3437
        %v3439 = vpop.f32.mrf.mxu0
        %3440 = vdwg.mxu0
        %v3442 = vsel %vm752, %v3361, 0
        %3444 = vmatprep.subr.mxu0 0.0
        %3445 = vmatpush1.msra.mxu0 0.0
        %3446 = vmatprep.subr.mxu0 0.0
        %3447 = vmatpush1.msra.mxu0 0.0
        %3448 = vmatprep.subr.mxu0 0.0
        %3449 = vmatpush1.msra.mxu0 0.0
        %3450 = vmatprep.subr.mxu0 0.0
        %3451 = vmatpush1.msra.mxu0 0.0
        %3452 = vmatprep.subr.mxu0 0.0
        %3453 = vmatpush1.msra.mxu0 0.0
        %3454 = vmatprep.subr.mxu0 0.0
        %3455 = vmatpush1.msra.mxu0 0.0
        %3456 = vmatprep.subr.mxu0 0.0
        %3457 = vmatpush1.msra.mxu0 0.0
        %3458 = vmatprep.subr.mxu0 0.0
        %3459 = vmatpush1.msra.mxu0 0.0
        %3460 = vmatprep.subr.mxu0 0.0
        %3461 = vmatpush1.msra.mxu0 0.0
        %3462 = vmatprep.subr.mxu0 0.0
        %3463 = vmatpush1.msra.mxu0 0.0
        %3464 = vmatprep.subr.mxu0 0.0
        %3465 = vmatpush1.msra.mxu0 0.0
        %3466 = vmatprep.subr.mxu0 0.0
        %3467 = vmatpush1.msra.mxu0 0.0
        %3468 = vmatprep.subr.mxu0 0.0
        %3469 = vmatpush1.msra.mxu0 0.0
        %3470 = vmatprep.subr.mxu0 0.0
        %3471 = vmatpush1.msra.mxu0 0.0
        %3472 = vmatprep.subr.mxu0 0.0
        %3473 = vmatpush1.msra.mxu0 %v3363
        %3474 = vmatprep.subr.mxu0 0.0
        %3475 = vmatpush1.msra.mxu0 %v3362
        %3476 = vmatprep.subr.mxu0 0.0
        %3477 = vmatpush2.msra.mxu0 0.0
        %3478 = vmatprep.subr.mxu0 0.0
        %3479 = vmatpush2.msra.mxu0 0.0
        %3480 = vmatprep.subr.mxu0 0.0
        %3481 = vmatpush2.msra.mxu0 0.0
        %3482 = vmatprep.subr.mxu0 0.0
        %3483 = vmatpush2.msra.mxu0 0.0
        %3484 = vmatprep.subr.mxu0 0.0
        %3485 = vmatpush2.msra.mxu0 0.0
        %3486 = vmatprep.subr.mxu0 0.0
        %3487 = vmatpush2.msra.mxu0 0.0
        %3488 = vmatprep.subr.mxu0 0.0
        %3489 = vmatpush2.msra.mxu0 0.0
        %3490 = vmatprep.subr.mxu0 0.0
        %3491 = vmatpush2.msra.mxu0 0.0
        %3492 = vmatprep.subr.mxu0 0.0
        %3493 = vmatpush2.msra.mxu0 0.0
        %3494 = vmatprep.subr.mxu0 0.0
        %3495 = vmatpush2.msra.mxu0 0.0
        %3496 = vmatprep.subr.mxu0 0.0
        %3497 = vmatpush2.msra.mxu0 0.0
        %3498 = vmatprep.subr.mxu0 0.0
        %3499 = vmatpush2.msra.mxu0 0.0
        %3500 = vmatprep.subr.mxu0 0.0
        %3501 = vmatpush2.msra.mxu0 0.0
        %3502 = vmatprep.subr.mxu0 0.0
        %3503 = vmatpush2.msra.mxu0 0.0
        %3504 = vmatprep.subr.mxu0 0.0
        %3505 = vmatpush2.msra.mxu0 0.0
        %3506 = vmatprep.subr.mxu0 0.0
        %3507 = vmatpush2.msra.mxu0 0.0
        %3508 = vmatprep.mubr.f32.mxu0 0.0
        %3509 = vmatmul.mubr.f32.gmra.mxu0 %v3442
        %v3510 = vpop.f32.mrf.mxu0
        %v3511 = vadd.f32 %v3438, %v3510
        %v3512 = vpop.f32.mrf.mxu0
        %3513 = vdwg.mxu0
        %s3514 = scalar_lea.vmem [#allocation8], 16
        %v3515 = vld [vmem:[%s3514] sm:$0xff]
        %v3516 = vmul.f32 %v1437, %v3343
        %v3517 = vmul.f32 %v1438, %v3348
        %v3519 = vsel %vm752, %v3515, 0
        %3521 = vmatprep.subr.mxu0 0.0
        %3522 = vmatpush1.msra.mxu0 0.0
        %3523 = vmatprep.subr.mxu0 0.0
        %3524 = vmatpush1.msra.mxu0 0.0
        %3525 = vmatprep.subr.mxu0 0.0
        %3526 = vmatpush1.msra.mxu0 0.0
        %3527 = vmatprep.subr.mxu0 0.0
        %3528 = vmatpush1.msra.mxu0 0.0
        %3529 = vmatprep.subr.mxu0 0.0
        %3530 = vmatpush1.msra.mxu0 0.0
        %3531 = vmatprep.subr.mxu0 0.0
        %3532 = vmatpush1.msra.mxu0 0.0
        %3533 = vmatprep.subr.mxu0 0.0
        %3534 = vmatpush1.msra.mxu0 0.0
        %3535 = vmatprep.subr.mxu0 0.0
        %3536 = vmatpush1.msra.mxu0 0.0
        %3537 = vmatprep.subr.mxu0 0.0
        %3538 = vmatpush1.msra.mxu0 0.0
        %3539 = vmatprep.subr.mxu0 0.0
        %3540 = vmatpush1.msra.mxu0 0.0
        %3541 = vmatprep.subr.mxu0 0.0
        %3542 = vmatpush1.msra.mxu0 0.0
        %3543 = vmatprep.subr.mxu0 0.0
        %3544 = vmatpush1.msra.mxu0 0.0
        %3545 = vmatprep.subr.mxu0 0.0
        %3546 = vmatpush1.msra.mxu0 0.0
        %3547 = vmatprep.subr.mxu0 0.0
        %3548 = vmatpush1.msra.mxu0 0.0
        %3549 = vmatprep.subr.mxu0 0.0
        %3550 = vmatpush1.msra.mxu0 %v3517
        %3551 = vmatprep.subr.mxu0 0.0
        %3552 = vmatpush1.msra.mxu0 %v3516
        %3553 = vmatprep.subr.mxu0 0.0
        %3554 = vmatpush2.msra.mxu0 0.0
        %3555 = vmatprep.subr.mxu0 0.0
        %3556 = vmatpush2.msra.mxu0 0.0
        %3557 = vmatprep.subr.mxu0 0.0
        %3558 = vmatpush2.msra.mxu0 0.0
        %3559 = vmatprep.subr.mxu0 0.0
        %3560 = vmatpush2.msra.mxu0 0.0
        %3561 = vmatprep.subr.mxu0 0.0
        %3562 = vmatpush2.msra.mxu0 0.0
        %3563 = vmatprep.subr.mxu0 0.0
        %3564 = vmatpush2.msra.mxu0 0.0
        %3565 = vmatprep.subr.mxu0 0.0
        %3566 = vmatpush2.msra.mxu0 0.0
        %3567 = vmatprep.subr.mxu0 0.0
        %3568 = vmatpush2.msra.mxu0 0.0
        %3569 = vmatprep.subr.mxu0 0.0
        %3570 = vmatpush2.msra.mxu0 0.0
        %3571 = vmatprep.subr.mxu0 0.0
        %3572 = vmatpush2.msra.mxu0 0.0
        %3573 = vmatprep.subr.mxu0 0.0
        %3574 = vmatpush2.msra.mxu0 0.0
        %3575 = vmatprep.subr.mxu0 0.0
        %3576 = vmatpush2.msra.mxu0 0.0
        %3577 = vmatprep.subr.mxu0 0.0
        %3578 = vmatpush2.msra.mxu0 0.0
        %3579 = vmatprep.subr.mxu0 0.0
        %3580 = vmatpush2.msra.mxu0 0.0
        %3581 = vmatprep.subr.mxu0 0.0
        %3582 = vmatpush2.msra.mxu0 0.0
        %3583 = vmatprep.subr.mxu0 0.0
        %3584 = vmatpush2.msra.mxu0 0.0
        %3585 = vmatprep.mubr.f32.mxu0 0.0
        %3586 = vmatmul.mubr.f32.gmra.mxu0 %v3519
        %v3587 = vpop.f32.mrf.mxu0
        %v3588 = vadd.f32 0.0, %v3587
        %v3589 = vpop.f32.mrf.mxu0
        %3590 = vdwg.mxu0
        %v3591 = vadd.f32 %v3511, %v3588
        %s3592 = scalar_lea.vmem [#allocation8], 24
        %v3593 = vld [vmem:[%s3592] sm:$0xff]
        %v3594 = vmul.f32 %v2635, %v3353
        %v3595 = vmul.f32 %v2636, %v3358
        %v3597 = vsel %vm752, %v3593, 0
        %3599 = vmatprep.subr.mxu0 0.0
        %3600 = vmatpush1.msra.mxu0 0.0
        %3601 = vmatprep.subr.mxu0 0.0
        %3602 = vmatpush1.msra.mxu0 0.0
        %3603 = vmatprep.subr.mxu0 0.0
        %3604 = vmatpush1.msra.mxu0 0.0
        %3605 = vmatprep.subr.mxu0 0.0
        %3606 = vmatpush1.msra.mxu0 0.0
        %3607 = vmatprep.subr.mxu0 0.0
        %3608 = vmatpush1.msra.mxu0 0.0
        %3609 = vmatprep.subr.mxu0 0.0
        %3610 = vmatpush1.msra.mxu0 0.0
        %3611 = vmatprep.subr.mxu0 0.0
        %3612 = vmatpush1.msra.mxu0 0.0
        %3613 = vmatprep.subr.mxu0 0.0
        %3614 = vmatpush1.msra.mxu0 0.0
        %3615 = vmatprep.subr.mxu0 0.0
        %3616 = vmatpush1.msra.mxu0 0.0
        %3617 = vmatprep.subr.mxu0 0.0
        %3618 = vmatpush1.msra.mxu0 0.0
        %3619 = vmatprep.subr.mxu0 0.0
        %3620 = vmatpush1.msra.mxu0 0.0
        %3621 = vmatprep.subr.mxu0 0.0
        %3622 = vmatpush1.msra.mxu0 0.0
        %3623 = vmatprep.subr.mxu0 0.0
        %3624 = vmatpush1.msra.mxu0 0.0
        %3625 = vmatprep.subr.mxu0 0.0
        %3626 = vmatpush1.msra.mxu0 0.0
        %3627 = vmatprep.subr.mxu0 0.0
        %3628 = vmatpush1.msra.mxu0 %v3595
        %3629 = vmatprep.subr.mxu0 0.0
        %3630 = vmatpush1.msra.mxu0 %v3594
        %3631 = vmatprep.subr.mxu0 0.0
        %3632 = vmatpush2.msra.mxu0 0.0
        %3633 = vmatprep.subr.mxu0 0.0
        %3634 = vmatpush2.msra.mxu0 0.0
        %3635 = vmatprep.subr.mxu0 0.0
        %3636 = vmatpush2.msra.mxu0 0.0
        %3637 = vmatprep.subr.mxu0 0.0
        %3638 = vmatpush2.msra.mxu0 0.0
        %3639 = vmatprep.subr.mxu0 0.0
        %3640 = vmatpush2.msra.mxu0 0.0
        %3641 = vmatprep.subr.mxu0 0.0
        %3642 = vmatpush2.msra.mxu0 0.0
        %3643 = vmatprep.subr.mxu0 0.0
        %3644 = vmatpush2.msra.mxu0 0.0
        %3645 = vmatprep.subr.mxu0 0.0
        %3646 = vmatpush2.msra.mxu0 0.0
        %3647 = vmatprep.subr.mxu0 0.0
        %3648 = vmatpush2.msra.mxu0 0.0
        %3649 = vmatprep.subr.mxu0 0.0
        %3650 = vmatpush2.msra.mxu0 0.0
        %3651 = vmatprep.subr.mxu0 0.0
        %3652 = vmatpush2.msra.mxu0 0.0
        %3653 = vmatprep.subr.mxu0 0.0
        %3654 = vmatpush2.msra.mxu0 0.0
        %3655 = vmatprep.subr.mxu0 0.0
        %3656 = vmatpush2.msra.mxu0 0.0
        %3657 = vmatprep.subr.mxu0 0.0
        %3658 = vmatpush2.msra.mxu0 0.0
        %3659 = vmatprep.subr.mxu0 0.0
        %3660 = vmatpush2.msra.mxu0 0.0
        %3661 = vmatprep.subr.mxu0 0.0
        %3662 = vmatpush2.msra.mxu0 0.0
        %3663 = vmatprep.mubr.f32.mxu0 0.0
        %3664 = vmatmul.mubr.f32.gmra.mxu0 %v3597
        %v3665 = vpop.f32.mrf.mxu0
        %v3666 = vadd.f32 0.0, %v3665
        %v3667 = vpop.f32.mrf.mxu0
        %3668 = vdwg.mxu0
        %v3669 = vadd.f32 %v3591, %v3666
        %v3670 = vld [vmem:[%s16] sm:$0xff]
        %3672 = vset.pattern.permute.xlu0 0
        %3673 = vperm.xlu0 %3672, %v3670
        %v3674 = vpop.permute.xlu0 %3673
        %v3676 = vadd.f32 %v3669, %v3674
        %3677 = vst [vmem:[%s724] sm:$0xff] %v3676
        %s3678 = sand.u32 %s491, 1
        %s3679 = scalar_lea.sflag [#allocation5], %s3678
        %s3680 = sand.u32 %s491, 1
        %s3681 = smul.addr %s3680, 8
        %s3682 = scalar_lea.vmem [#allocation9], %s3681
        // Predicated region
        $region140: #{tpu_custom_call.1} parent=122 // pred_check
          %p3683 = pneg %p501
        $region141: #{tpu_custom_call.1} parent=122 // pred_check_branch
          %3685 = sbr.rel (%p3683) target = $region143
        $region142: #{tpu_custom_call.1} parent=122 // pred_region
          %s3687 = ssub.s32 128, 128
          %3688 = vsyncadd %s3679, %s3687
          %s3689 = smul.addr %s37, 128
          %s3690 = scalar_lea.hbm %s21, %s3689
          %s3692 = sshll.u32 %s3682, 4
          %s3693 = int_to_ptr.vmem [resolvable:$true] %s3692
          %3695 = dma.vmem_to_hbm [thread:$0]  %s3693, 128, %s3690, %s3679
        $region143: #{tpu_custom_call.1} parent=122 // pred_fallthru
          _
      $region123: #{tpu_custom_call.1} parent=5 // pred_fallthru
        _
      %p3696 = scmp.le.s32.totalorder 2, %s32
      // Predicated region
      $region144: #{tpu_custom_call.1} parent=5 // pred_check
        %p3697 = pneg %p3696
      $region145: #{tpu_custom_call.1} parent=5 // pred_check_branch
        %3699 = sbr.rel (%p3697) target = $region147
      $region146: #{tpu_custom_call.1} parent=5 // pred_region
        %s3700 = ssub.s32 %s32, 2
        // Predicated region
        $region148: #{tpu_custom_call.1} parent=146 // pred_check
          %p3701 = pneg %p507
        $region149: #{tpu_custom_call.1} parent=146 // pred_check_branch
          %3703 = sbr.rel (%p3701) target = $region151
        $region150: #{tpu_custom_call.1} parent=146 // pred_region
          %s3704 = sand.u32 %s492, 1
          %s3705 = scalar_lea.sflag [#allocation5], %s3704
          %s3706 = sand.u32 %s492, 1
          %s3707 = smul.addr %s3706, 8
          %s3708 = scalar_lea.vmem [#allocation9], %s3707
          %3709 = dma.done %s3705, 128
        $region151: #{tpu_custom_call.1} parent=146 // pred_fallthru
          _
      $region147: #{tpu_custom_call.1} parent=5 // pred_fallthru
        _
    $region6: #{tpu_custom_call.1} parent=1 // loop_footer
      %s36 = sadd.s32 1, %s32
    $region7: #{tpu_custom_call.1} parent=1 // loop_footer_branch
      %31 = sbr.rel target = $region3
    $region8: #{tpu_custom_call.1} parent=1 // loop_exit
      _
    %3710 = vsyncpa [#allocation4], 1
    %s3711 = scalar_lea.sflag [#allocation4], 1
    %3712 = vsyncpa %s3711, 1
    %3713 = vsyncpa [#allocation7], 1
    %3714 = vsyncpa [#allocation5], 1
    %s3715 = scalar_lea.sflag [#allocation5], 1
    %3716 = vsyncpa %s3715, 1

</llo_original>
